<compile_context>
chip_gen: v7x
topology: tpu7x:2x2x1
jax: 0.10.0
libtpu: 0.0.40
codegen_flags: <defaults>
</compile_context>

<pallas_src>
import numpy as np
import jax
import jax.numpy as jnp
from jax import lax
from jax.experimental import pallas as pl
from jax.experimental.pallas import tpu as pltpu

# ----------------------------- model hyper-params (from __init__ defaults) ------------
BOUND = 16.0
NUM_LEVELS = 16
FEATS_PER_LEVEL = 2
LOG2_HASHMAP_SIZE = 19
BASE_RESOLUTION = 16
HIDDEN_DIM = 128            # sigma_net neurons
GEO_FEAT_DIM = 30
HIDDEN_DIM_COLOR = 64       # color_net neurons
ENC_DIM = NUM_LEVELS * FEATS_PER_LEVEL          # 32
SH_DIM = 16                                     # SphericalHarmonics degree 4
IN_DIM_COLOR = SH_DIM + GEO_FEAT_DIM            # 46
CAT_DIM = HIDDEN_DIM + SH_DIM                   # 144 (fused K for the big matmul)
OUT_BIG = HIDDEN_DIM_COLOR + 1                  # 65  (64 color-hidden cols + 1 sigma)
PER_LEVEL_SCALE = float(np.exp2(np.log2(2048.0 * BOUND / 16.0) / (NUM_LEVELS - 1)))

TN = 2048  # samples per Pallas tile (multiple of 256; keep grid >= 2 for megacore)


# ----------------------------- HashGrid encoding (plain JAX glue, vectorized) ---------
# TODO(synk): tcnn uses dense (non-hashed) indexing for coarse levels whose grids fit in
# the hashmap; here all levels use the InstantNGP spatial hash (tables are synthetic
# random anyway, so the MLP-side semantics are unchanged).
def hash_grid_encode(x01, table_flat):
    """x01: [N,3] in [0,1]. table_flat: [L*2^19, F] bf16. Returns [N, L*F] float32."""
    n = x01.shape[0]
    T = 1 << LOG2_HASHMAP_SIZE

    scales = np.exp2(np.arange(NUM_LEVELS) * np.log2(PER_LEVEL_SCALE)) \
        * BASE_RESOLUTION - 1.0
    scales = jnp.asarray(scales, jnp.float32)                          # [L]

    pos = x01[:, None, :] * scales[None, :, None] + 0.5                # [N,L,3]
    grid_f = jnp.floor(pos)
    frac = pos - grid_f                                                # [N,L,3]
    grid = grid_f.astype(jnp.uint32)                                   # [N,L,3]

    corners = np.array([[(c >> d) & 1 for d in range(3)] for c in range(8)],
                       dtype=np.uint32)                                # [8,3]
    corners_u = jnp.asarray(corners)
    corners_f = jnp.asarray(corners, jnp.float32)

    cpos = grid[:, :, None, :] + corners_u[None, None, :, :]           # [N,L,8,3] u32
    primes = jnp.array([1, 2654435761, 805459861], dtype=jnp.uint32)
    idx = (cpos[..., 0] * primes[0]) ^ (cpos[..., 1] * primes[1]) \
        ^ (cpos[..., 2] * primes[2])
    idx = (idx & jnp.uint32(T - 1)).astype(jnp.int32)                  # [N,L,8]
    level_off = (jnp.arange(NUM_LEVELS, dtype=jnp.int32) * T)[None, :, None]
    idx = idx + level_off                                              # [N,L,8]

    feats = table_flat[idx].astype(jnp.float32)                        # [N,L,8,F]
    w = jnp.prod(corners_f[None, None, :, :] * frac[:, :, None, :]
                 + (1.0 - corners_f[None, None, :, :]) * (1.0 - frac[:, :, None, :]),
                 axis=-1)                                              # [N,L,8]
    enc = jnp.sum(w[..., None] * feats, axis=2)                        # [N,L,F]
    return enc.reshape(n, NUM_LEVELS * FEATS_PER_LEVEL)


# ----------------------------- Pallas kernel: SH encoding + fused MLPs ----------------
def _nerf_mlp_kernel(enc_ref, dT_ref, w1t_ref, wbig_ref, wc2t_ref, wc3t_ref, out_ref):
    # ---- sigma_net layer 1 (32 -> 128, ReLU), channels-major output:
    #      h1_T = relu(W1^T @ enc^T) done as an NT matmul (contract the two minor dims),
    #      so enc stays in its natural [samples, 32] layout (no transpose needed).
    h1t = lax.dot_general(
        w1t_ref[...], enc_ref[...], (((1,), (1,)), ((), ())),
        preferred_element_type=jnp.float32)                    # (128, TN) f32
    h1t = jnp.maximum(h1t, 0.0).astype(jnp.bfloat16)

    # ---- SphericalHarmonics degree 4 on raw directions, lane-dense (rows = channels)
    dT = dT_ref[...]                                           # (3, TN) f32
    x = dT[0:1, :]
    y = dT[1:2, :]
    z = dT[2:3, :]
    xy = x * y; xz = x * z; yz = y * z
    x2 = x * x; y2 = y * y; z2 = z * z
    sh_t = jnp.concatenate([
        jnp.full_like(x, 0.28209479177387814),
        -0.48860251190291987 * y,
        0.48860251190291987 * z,
        -0.48860251190291987 * x,
        1.0925484305920792 * xy,
        -1.0925484305920792 * yz,
        0.94617469575755997 * z2 - 0.31539156525251999,
        -1.0925484305920792 * xz,
        0.54627421529603959 * x2 - 0.54627421529603959 * y2,
        0.59004358992664352 * y * (-3.0 * x2 + y2),
        2.8906114426405538 * xy * z,
        0.45704579946446572 * y * (1.0 - 5.0 * z2),
        0.3731763325901154 * z * (5.0 * z2 - 3.0),
        0.45704579946446572 * x * (1.0 - 5.0 * z2),
        1.4453057213202769 * z * (x2 - y2),
        0.59004358992664352 * x * (-x2 + 3.0 * y2),
    ], axis=0).astype(jnp.bfloat16)                            # (16, TN) bf16

    # ---- fused matmul: [sigma_net layer 2 | color layer-1] over K = 128 (h1) + 16 (sh)
    #      W_big^T is (65, 144); rows 0..63 -> color hidden pre-activation,
    #      row 64 -> raw sigma (no activation in the reference forward).
    act = jnp.concatenate([h1t, sh_t], axis=0)                 # (144, TN) bf16
    hgt = jnp.dot(wbig_ref[...], act,
                  preferred_element_type=jnp.float32)          # (65, TN) f32
    hc = jnp.maximum(hgt[:HIDDEN_DIM_COLOR, :], 0.0).astype(jnp.bfloat16)   # (64, TN)
    sigma = hgt[HIDDEN_DIM_COLOR:HIDDEN_DIM_COLOR + 1, :]      # (1, TN) raw density

    # ---- color_net layers 2,3: 64 -> 64 (ReLU) -> 3, then sigmoid
    h2 = jnp.maximum(jnp.dot(wc2t_ref[...], hc,
                             preferred_element_type=jnp.float32), 0.0)      # (64, TN)
    h3 = jnp.dot(wc3t_ref[...], h2.astype(jnp.bfloat16),
                 preferred_element_type=jnp.float32)           # (3, TN)
    color = 0.5 * (jnp.tanh(0.5 * h3) + 1.0)                   # stable sigmoid (EUP)

    # ---- outputs = cat([color, sigma], channel axis) -> (4, TN), lane-dense store
    out_ref[...] = jnp.concatenate([color, sigma], axis=0)


def nerf_mlp_pallas(enc, d, params):
    """enc: [N, 32] f32 hash-grid features.  d: [N, 3] raw unit directions."""
    n = enc.shape[0]
    n_pad = -(-n // TN) * TN
    enc = enc.astype(jnp.bfloat16)
    if n_pad != n:
        enc = jnp.pad(enc, ((0, n_pad - n), (0, 0)))
        d = jnp.pad(d, ((0, n_pad - n), (0, 0)))
    d_t = d.astype(jnp.float32).T                              # (3, n_pad), lane-dense

    def full(shape):
        return pl.BlockSpec(shape, lambda i: (0, 0))

    flops = n_pad * 2 * (ENC_DIM * HIDDEN_DIM + CAT_DIM * OUT_BIG
                         + HIDDEN_DIM_COLOR * HIDDEN_DIM_COLOR + HIDDEN_DIM_COLOR * 3)
    weight_bytes = 2 * (HIDDEN_DIM * ENC_DIM + OUT_BIG * CAT_DIM
                        + HIDDEN_DIM_COLOR * HIDDEN_DIM_COLOR + 3 * HIDDEN_DIM_COLOR)
    cost = pl.CostEstimate(flops=int(flops), transcendentals=int(3 * n_pad),
                           bytes_accessed=int(n_pad * (ENC_DIM * 2 + 3 * 4 + 4 * 4)
                                              + weight_bytes))

    out_t = pl.pallas_call(
        _nerf_mlp_kernel,
        out_shape=jax.ShapeDtypeStruct((4, n_pad), jnp.float32),
        grid=(n_pad // TN,),
        in_specs=[
            pl.BlockSpec((TN, ENC_DIM), lambda i: (i, 0)),     # enc   [samples, 32]
            pl.BlockSpec((3, TN), lambda i: (0, i)),           # dirs  [3, samples]
            full((HIDDEN_DIM, ENC_DIM)),                       # W1^T      (128, 32)
            full((OUT_BIG, CAT_DIM)),                          # W_big^T   (65, 144)
            full((HIDDEN_DIM_COLOR, HIDDEN_DIM_COLOR)),        # Wc2^T     (64, 64)
            full((3, HIDDEN_DIM_COLOR)),                       # Wc3^T     (3, 64)
        ],
        out_specs=pl.BlockSpec((4, TN), lambda i: (0, i)),
        compiler_params=pltpu.CompilerParams(dimension_semantics=("parallel",)),
        cost_estimate=cost,
    )(enc, d_t, params["w1_t"], params["w_big_t"], params["wc2_t"], params["wc3_t"])
    return out_t.T[:n]                                         # (N, 4) f32


# ----------------------------- parameter init (deterministic, synthetic) --------------
def init_params(key):
    ks = jax.random.split(key, 6)

    def he(k, fan_in, shape):
        return jax.random.normal(k, shape, jnp.float32) * np.sqrt(2.0 / fan_in)

    T = 1 << LOG2_HASHMAP_SIZE
    # hash-grid feature tables, tcnn default init U(-1e-4, 1e-4); stored flat & bf16
    table = jax.random.uniform(ks[0], (NUM_LEVELS * T, FEATS_PER_LEVEL),
                               jnp.float32, -1e-4, 1e-4)

    w1 = he(ks[1], ENC_DIM, (ENC_DIM, HIDDEN_DIM))                    # (32, 128)
    w2 = he(ks[2], HIDDEN_DIM, (HIDDEN_DIM, 1 + GEO_FEAT_DIM))        # (128, 31)
    wc1 = he(ks[3], IN_DIM_COLOR, (IN_DIM_COLOR, HIDDEN_DIM_COLOR))   # (46, 64)
    wc2 = he(ks[4], HIDDEN_DIM_COLOR, (HIDDEN_DIM_COLOR, HIDDEN_DIM_COLOR))
    wc3 = he(ks[5], HIDDEN_DIM_COLOR, (HIDDEN_DIM_COLOR, 3))

    # Exact linear fold (no nonlinearity between sigma_net layer-2 and color layer-1):
    #   geo contribution  = h1 @ (w2[:,1:] @ wc1_geo)
    #   sigma             = h1 @ w2[:,0]
    #   sh contribution   = sh @ wc1_sh
    # packed into one (144, 65) matrix; columns 0..63 = color hidden, column 64 = sigma.
    w_geo_fused = w2[:, 1:] @ wc1[SH_DIM:]                            # (128, 64)
    top = jnp.concatenate([w_geo_fused, w2[:, 0:1]], axis=1)          # (128, 65)
    bot = jnp.concatenate([wc1[:SH_DIM],
                           jnp.zeros((SH_DIM, 1), jnp.float32)], axis=1)  # (16, 65)
    w_big = jnp.concatenate([top, bot], axis=0)                       # (144, 65)

    params = {
        "table": table.astype(jnp.bfloat16),
        "w1_t": w1.T.astype(jnp.bfloat16),        # (128, 32)
        "w_big_t": w_big.T.astype(jnp.bfloat16),  # (65, 144)
        "wc2_t": wc2.T.astype(jnp.bfloat16),      # (64, 64)
        "wc3_t": wc3.T.astype(jnp.bfloat16),      # (3, 64)
    }
    return params


# ----------------------------- full forward (glue + Pallas hot path) -------------------
def nerf_tcnn_forward(inp, params):
    """inp: [N, 6] = (xyz, dir). Returns [N, 4] = (rgb, sigma)."""
    x = inp[:, :3]
    d = inp[:, 3:]
    x01 = (x + BOUND) / (2.0 * BOUND)
    enc = hash_grid_encode(x01, params["table"])     # [N, 32] f32
    # NOTE: reference maps d -> (d+1)/2 and the SH encoder maps back; both cancel, so
    # the raw direction is used directly (saves the roundtrip and the narrow buffer).
    return nerf_mlp_pallas(enc, d, params)


if __name__ == "__main__":
    key = jax.random.PRNGKey(0)
    kp, kpos, kdir = jax.random.split(key, 3)

    N = 4096   # 2 grid steps at TN=2048 -> both TensorCores busy on v7x
    pos = jax.random.uniform(kpos, (N, 3), jnp.float32, -BOUND, BOUND)
    dirs = jax.random.normal(kdir, (N, 3), jnp.float32)
    dirs = dirs / jnp.linalg.norm(dirs, axis=-1, keepdims=True)
    inp = jnp.concatenate([pos, dirs], axis=-1)      # [N, 6]

    params = init_params(kp)

    fwd = jax.jit(nerf_tcnn_forward)
    out = jax.block_until_ready(fwd(inp, params))

    assert out.shape == (N, 4) and out.dtype == jnp.float32
    assert bool(jnp.all(jnp.isfinite(out)))
    # color channels went through sigmoid -> must lie in [0, 1]
    assert bool(jnp.all((out[:, :3] >= 0.0) & (out[:, :3] <= 1.0)))
    print("KERNEL_OK")
</pallas_src>

<mosaic_0001>
module attributes {stable_mosaic.version = 11 : i64} {
  func.func private @main(%arg0: i32) attributes {dimension_semantics = [#tpu.dimension_semantics<core_parallel>], iteration_bounds = array<i64: 2>, tpu.core_type = #tpu.core_type<sc_scalar_subcore>, window_params = []} {
    return
  }
}

module attributes {stable_mosaic.version = 11 : i64} {
  func.func private @main(%arg0: i32) attributes {dimension_semantics = [#tpu.dimension_semantics<core_parallel>], iteration_bounds = array<i64: 2>, tpu.core_type = #tpu.core_type<sc_scalar_subcore>, window_params = []} {
    return
  }
}

module attributes {stable_mosaic.version = 11 : i64} {
  func.func @_nerf_mlp_kernel(%arg0: i32, %arg1: memref<2048x32xbf16, #tpu.memory_space<vmem>>, %arg2: memref<3x2048xf32, #tpu.memory_space<vmem>>, %arg3: memref<128x32xbf16, #tpu.memory_space<vmem>>, %arg4: memref<65x144xbf16, #tpu.memory_space<vmem>>, %arg5: memref<64x64xbf16, #tpu.memory_space<vmem>>, %arg6: memref<3x64xbf16, #tpu.memory_space<vmem>>, %arg7: memref<4x2048xf32, #tpu.memory_space<vmem>>) attributes {dimension_semantics = [#tpu.dimension_semantics<parallel>], iteration_bounds = array<i64: 2>, scalar_prefetch = 0 : i64, scratch_operands = 0 : i64, tpu.core_type = #tpu.core_type<tc>, window_params = [{transform_indices = @transform_0, window_bounds = array<i64: 2048, 32>}, {transform_indices = @transform_1, window_bounds = array<i64: 3, 2048>}, {pipeline_mode = #tpu.pipeline_mode<synchronous>, transform_indices = @transform_2, window_bounds = array<i64: 128, 32>}, {pipeline_mode = #tpu.pipeline_mode<synchronous>, transform_indices = @transform_3, window_bounds = array<i64: 65, 144>}, {pipeline_mode = #tpu.pipeline_mode<synchronous>, transform_indices = @transform_4, window_bounds = array<i64: 64, 64>}, {pipeline_mode = #tpu.pipeline_mode<synchronous>, transform_indices = @transform_5, window_bounds = array<i64: 3, 64>}, {transform_indices = @transform_6, window_bounds = array<i64: 4, 2048>}]} {
    %c0 = arith.constant 0 : index
    %c0_0 = arith.constant 0 : index
    %0 = vector.load %arg3[%c0, %c0_0] : memref<128x32xbf16, #tpu.memory_space<vmem>>, vector<128x32xbf16>
    %c0_1 = arith.constant 0 : index
    %c0_2 = arith.constant 0 : index
    %1 = vector.load %arg1[%c0_1, %c0_2] : memref<2048x32xbf16, #tpu.memory_space<vmem>>, vector<2048x32xbf16>
    %cst = arith.constant dense<0.000000e+00> : vector<128x2048xf32>
    %2 = tpu.matmul %0, %1, %cst {dimension_numbers = #tpu.dot_dimension_numbers<[1], [1], [0], [0], [0, 0, 1, 0], [], []>} : vector<128x32xbf16>, vector<2048x32xbf16>, vector<128x2048xf32> -> vector<128x2048xf32>
    %cst_3 = arith.constant 0.000000e+00 : f32
    %3 = vector.broadcast %cst_3 : f32 to vector<128x2048xf32>
    %4 = arith.maximumf %2, %3 : vector<128x2048xf32>
    %5 = arith.truncf %4 : vector<128x2048xf32> to vector<128x2048xbf16>
    %c0_4 = arith.constant 0 : index
    %c0_5 = arith.constant 0 : index
    %6 = vector.load %arg2[%c0_4, %c0_5] : memref<3x2048xf32, #tpu.memory_space<vmem>>, vector<3x2048xf32>
    %7 = vector.extract_strided_slice %6 {offsets = [0, 0], sizes = [1, 2048], strides = [1, 1]} : vector<3x2048xf32> to vector<1x2048xf32>
    %8 = vector.extract_strided_slice %6 {offsets = [1, 0], sizes = [1, 2048], strides = [1, 1]} : vector<3x2048xf32> to vector<1x2048xf32>
    %9 = vector.extract_strided_slice %6 {offsets = [2, 0], sizes = [1, 2048], strides = [1, 1]} : vector<3x2048xf32> to vector<1x2048xf32>
    %10 = arith.mulf %7, %8 : vector<1x2048xf32>
    %11 = arith.mulf %7, %9 : vector<1x2048xf32>
    %12 = arith.mulf %8, %9 : vector<1x2048xf32>
    %13 = arith.mulf %7, %7 : vector<1x2048xf32>
    %14 = arith.mulf %8, %8 : vector<1x2048xf32>
    %15 = arith.mulf %9, %9 : vector<1x2048xf32>
    %cst_6 = arith.constant 0.282094806 : f32
    %16 = vector.broadcast %cst_6 : f32 to vector<1x2048xf32>
    %cst_7 = arith.constant -0.488602519 : f32
    %17 = vector.broadcast %cst_7 : f32 to vector<1x2048xf32>
    %18 = arith.mulf %17, %8 : vector<1x2048xf32>
    %cst_8 = arith.constant 0.488602519 : f32
    %19 = vector.broadcast %cst_8 : f32 to vector<1x2048xf32>
    %20 = arith.mulf %19, %9 : vector<1x2048xf32>
    %cst_9 = arith.constant -0.488602519 : f32
    %21 = vector.broadcast %cst_9 : f32 to vector<1x2048xf32>
    %22 = arith.mulf %21, %7 : vector<1x2048xf32>
    %cst_10 = arith.constant 1.09254849 : f32
    %23 = vector.broadcast %cst_10 : f32 to vector<1x2048xf32>
    %24 = arith.mulf %23, %10 : vector<1x2048xf32>
    %cst_11 = arith.constant -1.09254849 : f32
    %25 = vector.broadcast %cst_11 : f32 to vector<1x2048xf32>
    %26 = arith.mulf %25, %12 : vector<1x2048xf32>
    %cst_12 = arith.constant 0.946174681 : f32
    %27 = vector.broadcast %cst_12 : f32 to vector<1x2048xf32>
    %28 = arith.mulf %27, %15 : vector<1x2048xf32>
    %cst_13 = arith.constant 0.31539157 : f32
    %29 = vector.broadcast %cst_13 : f32 to vector<1x2048xf32>
    %30 = arith.subf %28, %29 : vector<1x2048xf32>
    %cst_14 = arith.constant -1.09254849 : f32
    %31 = vector.broadcast %cst_14 : f32 to vector<1x2048xf32>
    %32 = arith.mulf %31, %11 : vector<1x2048xf32>
    %cst_15 = arith.constant 0.546274245 : f32
    %33 = vector.broadcast %cst_15 : f32 to vector<1x2048xf32>
    %34 = arith.mulf %33, %13 : vector<1x2048xf32>
    %cst_16 = arith.constant 0.546274245 : f32
    %35 = vector.broadcast %cst_16 : f32 to vector<1x2048xf32>
    %36 = arith.mulf %35, %14 : vector<1x2048xf32>
    %37 = arith.subf %34, %36 : vector<1x2048xf32>
    %cst_17 = arith.constant 0.590043604 : f32
    %38 = vector.broadcast %cst_17 : f32 to vector<1x2048xf32>
    %39 = arith.mulf %38, %8 : vector<1x2048xf32>
    %cst_18 = arith.constant -3.000000e+00 : f32
    %40 = vector.broadcast %cst_18 : f32 to vector<1x2048xf32>
    %41 = arith.mulf %40, %13 : vector<1x2048xf32>
    %42 = arith.addf %41, %14 : vector<1x2048xf32>
    %43 = arith.mulf %39, %42 : vector<1x2048xf32>
    %cst_19 = arith.constant 2.89061141 : f32
    %44 = vector.broadcast %cst_19 : f32 to vector<1x2048xf32>
    %45 = arith.mulf %44, %10 : vector<1x2048xf32>
    %46 = arith.mulf %45, %9 : vector<1x2048xf32>
    %cst_20 = arith.constant 0.457045794 : f32
    %47 = vector.broadcast %cst_20 : f32 to vector<1x2048xf32>
    %48 = arith.mulf %47, %8 : vector<1x2048xf32>
    %cst_21 = arith.constant 5.000000e+00 : f32
    %49 = vector.broadcast %cst_21 : f32 to vector<1x2048xf32>
    %50 = arith.mulf %49, %15 : vector<1x2048xf32>
    %cst_22 = arith.constant 1.000000e+00 : f32
    %51 = vector.broadcast %cst_22 : f32 to vector<1x2048xf32>
    %52 = arith.subf %51, %50 : vector<1x2048xf32>
    %53 = arith.mulf %48, %52 : vector<1x2048xf32>
    %cst_23 = arith.constant 0.373176336 : f32
    %54 = vector.broadcast %cst_23 : f32 to vector<1x2048xf32>
    %55 = arith.mulf %54, %9 : vector<1x2048xf32>
    %cst_24 = arith.constant 5.000000e+00 : f32
    %56 = vector.broadcast %cst_24 : f32 to vector<1x2048xf32>
    %57 = arith.mulf %56, %15 : vector<1x2048xf32>
    %cst_25 = arith.constant 3.000000e+00 : f32
    %58 = vector.broadcast %cst_25 : f32 to vector<1x2048xf32>
    %59 = arith.subf %57, %58 : vector<1x2048xf32>
    %60 = arith.mulf %55, %59 : vector<1x2048xf32>
    %cst_26 = arith.constant 0.457045794 : f32
    %61 = vector.broadcast %cst_26 : f32 to vector<1x2048xf32>
    %62 = arith.mulf %61, %7 : vector<1x2048xf32>
    %cst_27 = arith.constant 5.000000e+00 : f32
    %63 = vector.broadcast %cst_27 : f32 to vector<1x2048xf32>
    %64 = arith.mulf %63, %15 : vector<1x2048xf32>
    %cst_28 = arith.constant 1.000000e+00 : f32
    %65 = vector.broadcast %cst_28 : f32 to vector<1x2048xf32>
    %66 = arith.subf %65, %64 : vector<1x2048xf32>
    %67 = arith.mulf %62, %66 : vector<1x2048xf32>
    %cst_29 = arith.constant 1.44530571 : f32
    %68 = vector.broadcast %cst_29 : f32 to vector<1x2048xf32>
    %69 = arith.mulf %68, %9 : vector<1x2048xf32>
    %70 = arith.subf %13, %14 : vector<1x2048xf32>
    %71 = arith.mulf %69, %70 : vector<1x2048xf32>
    %cst_30 = arith.constant 0.590043604 : f32
    %72 = vector.broadcast %cst_30 : f32 to vector<1x2048xf32>
    %73 = arith.mulf %72, %7 : vector<1x2048xf32>
    %cst_31 = arith.constant 0.000000e+00 : f32
    %74 = vector.broadcast %cst_31 : f32 to vector<1x2048xf32>
    %75 = arith.subf %74, %13 : vector<1x2048xf32>
    %cst_32 = arith.constant 3.000000e+00 : f32
    %76 = vector.broadcast %cst_32 : f32 to vector<1x2048xf32>
    %77 = arith.mulf %76, %14 : vector<1x2048xf32>
    %78 = arith.addf %75, %77 : vector<1x2048xf32>
    %79 = arith.mulf %73, %78 : vector<1x2048xf32>
    %80 = tpu.concatenate %16, %18, %20, %22, %24, %26, %30, %32, %37, %43, %46, %53, %60, %67, %71, %79 in 0 : vector<1x2048xf32>, vector<1x2048xf32>, vector<1x2048xf32>, vector<1x2048xf32>, vector<1x2048xf32>, vector<1x2048xf32>, vector<1x2048xf32>, vector<1x2048xf32>, vector<1x2048xf32>, vector<1x2048xf32>, vector<1x2048xf32>, vector<1x2048xf32>, vector<1x2048xf32>, vector<1x2048xf32>, vector<1x2048xf32>, vector<1x2048xf32> -> vector<16x2048xf32>
    %81 = arith.truncf %80 : vector<16x2048xf32> to vector<16x2048xbf16>
    %82 = tpu.concatenate %5, %81 in 0 : vector<128x2048xbf16>, vector<16x2048xbf16> -> vector<144x2048xbf16>
    %c0_33 = arith.constant 0 : index
    %c0_34 = arith.constant 0 : index
    %83 = vector.load %arg4[%c0_33, %c0_34] : memref<65x144xbf16, #tpu.memory_space<vmem>>, vector<65x144xbf16>
    %cst_35 = arith.constant dense<0.000000e+00> : vector<65x2048xf32>
    %84 = tpu.matmul %83, %82, %cst_35 {dimension_numbers = #tpu.dot_dimension_numbers<[1], [0], [0], [1], [0, 0, 1, 1], [], []>} : vector<65x144xbf16>, vector<144x2048xbf16>, vector<65x2048xf32> -> vector<65x2048xf32>
    %85 = vector.extract_strided_slice %84 {offsets = [0, 0], sizes = [64, 2048], strides = [1, 1]} : vector<65x2048xf32> to vector<64x2048xf32>
    %cst_36 = arith.constant 0.000000e+00 : f32
    %86 = vector.broadcast %cst_36 : f32 to vector<64x2048xf32>
    %87 = arith.maximumf %85, %86 : vector<64x2048xf32>
    %88 = arith.truncf %87 : vector<64x2048xf32> to vector<64x2048xbf16>
    %89 = vector.extract_strided_slice %84 {offsets = [64, 0], sizes = [1, 2048], strides = [1, 1]} : vector<65x2048xf32> to vector<1x2048xf32>
    %c0_37 = arith.constant 0 : index
    %c0_38 = arith.constant 0 : index
    %90 = vector.load %arg5[%c0_37, %c0_38] : memref<64x64xbf16, #tpu.memory_space<vmem>>, vector<64x64xbf16>
    %cst_39 = arith.constant dense<0.000000e+00> : vector<64x2048xf32>
    %91 = tpu.matmul %90, %88, %cst_39 {dimension_numbers = #tpu.dot_dimension_numbers<[1], [0], [0], [1], [0, 0, 1, 1], [], []>} : vector<64x64xbf16>, vector<64x2048xbf16>, vector<64x2048xf32> -> vector<64x2048xf32>
    %cst_40 = arith.constant 0.000000e+00 : f32
    %92 = vector.broadcast %cst_40 : f32 to vector<64x2048xf32>
    %93 = arith.maximumf %91, %92 : vector<64x2048xf32>
    %c0_41 = arith.constant 0 : index
    %c0_42 = arith.constant 0 : index
    %94 = vector.load %arg6[%c0_41, %c0_42] : memref<3x64xbf16, #tpu.memory_space<vmem>>, vector<3x64xbf16>
    %95 = arith.truncf %93 : vector<64x2048xf32> to vector<64x2048xbf16>
    %cst_43 = arith.constant dense<0.000000e+00> : vector<3x2048xf32>
    %96 = tpu.matmul %94, %95, %cst_43 {dimension_numbers = #tpu.dot_dimension_numbers<[1], [0], [0], [1], [0, 0, 1, 1], [], []>} : vector<3x64xbf16>, vector<64x2048xbf16>, vector<3x2048xf32> -> vector<3x2048xf32>
    %cst_44 = arith.constant 5.000000e-01 : f32
    %97 = vector.broadcast %cst_44 : f32 to vector<3x2048xf32>
    %98 = arith.mulf %97, %96 : vector<3x2048xf32>
    %99 = math.tanh %98 : vector<3x2048xf32>
    %cst_45 = arith.constant 1.000000e+00 : f32
    %100 = vector.broadcast %cst_45 : f32 to vector<3x2048xf32>
    %101 = arith.addf %99, %100 : vector<3x2048xf32>
    %cst_46 = arith.constant 5.000000e-01 : f32
    %102 = vector.broadcast %cst_46 : f32 to vector<3x2048xf32>
    %103 = arith.mulf %102, %101 : vector<3x2048xf32>
    %104 = tpu.concatenate %103, %89 in 0 : vector<3x2048xf32>, vector<1x2048xf32> -> vector<4x2048xf32>
    %c0_47 = arith.constant 0 : index
    %c0_48 = arith.constant 0 : index
    %105 = vector.load %arg7[%c0_47, %c0_48] : memref<4x2048xf32, #tpu.memory_space<vmem>>, vector<4x2048xf32>
    tpu.vector_store %arg7[%c0_47, %c0_48], %104 {strides = array<i32>} : memref<4x2048xf32, #tpu.memory_space<vmem>>, vector<4x2048xf32>,
    return
  }
  func.func @transform_0(%arg0: i32) -> (i32, i32) {
    %c0_i32 = arith.constant 0 : i32
    %c0_i32_0 = arith.constant 0 : i32
    return %arg0, %c0_i32 : i32, i32
  }
  func.func @transform_1(%arg0: i32) -> (i32, i32) {
    %c0_i32 = arith.constant 0 : i32
    %c0_i32_0 = arith.constant 0 : i32
    return %c0_i32, %arg0 : i32, i32
  }
  func.func @transform_2(%arg0: i32) -> (i32, i32) {
    %c0_i32 = arith.constant 0 : i32
    %c0_i32_0 = arith.constant 0 : i32
    %c0_i32_1 = arith.constant 0 : i32
    return %c0_i32, %c0_i32_0 : i32, i32
  }
  func.func @transform_3(%arg0: i32) -> (i32, i32) {
    %c0_i32 = arith.constant 0 : i32
    %c0_i32_0 = arith.constant 0 : i32
    %c0_i32_1 = arith.constant 0 : i32
    return %c0_i32, %c0_i32_0 : i32, i32
  }
  func.func @transform_4(%arg0: i32) -> (i32, i32) {
    %c0_i32 = arith.constant 0 : i32
    %c0_i32_0 = arith.constant 0 : i32
    %c0_i32_1 = arith.constant 0 : i32
    return %c0_i32, %c0_i32_0 : i32, i32
  }
  func.func @transform_5(%arg0: i32) -> (i32, i32) {
    %c0_i32 = arith.constant 0 : i32
    %c0_i32_0 = arith.constant 0 : i32
    %c0_i32_1 = arith.constant 0 : i32
    return %c0_i32, %c0_i32_0 : i32, i32
  }
  func.func @transform_6(%arg0: i32) -> (i32, i32) {
    %c0_i32 = arith.constant 0 : i32
    %c0_i32_0 = arith.constant 0 : i32
    return %c0_i32, %arg0 : i32, i32
  }
}

</mosaic_0001>

<llo_original>
// kernel: nerf_tcnn_forward.1
$region0: #{nerf_tcnn_forward.1}
  #allocation0 [shape = 'u32[]', space=smem, size = 0x4, offset = 0x4, fixed_abs, tag = 'smem constant byte address 0x4 - core index']
  #allocation1 [shape = 'u32[144,128]{1,0:T(1,128)}', space=vmem, size = 0x12000, scoped, tag = 'internal scratch']
  %s0 = inlined_call_operand.vmem [shape: bf16[4096,32], index: 0, kind: input, shape index: {}]
  %s1 = inlined_call_operand.hbm [shape: f32[3,4096], index: 1, kind: input, shape index: {}]
  %s2 = inlined_call_operand.hbm [shape: bf16[128,32], index: 2, kind: input, shape index: {}]
  %s3 = inlined_call_operand.hbm [shape: bf16[65,144], index: 3, kind: input, shape index: {}]
  %s4 = inlined_call_operand.hbm [shape: bf16[64,64], index: 4, kind: input, shape index: {}]
  %s5 = inlined_call_operand.hbm [shape: bf16[3,64], index: 5, kind: input, shape index: {}]
  %s6 = inlined_call_operand.hbm [shape: f32[4,4096], index: 6, kind: output, shape index: {}]
  %s7 = sld [smem:[#allocation0]]
  $region77: #{nerf_tcnn_forward.1} parent=0
    _
  %s9 = ssub.s32 1, %s7
  %s10 = scalar_select 0, %s9, %s7
  $region1: #{nerf_tcnn_forward.1} parent=0
    #allocation2 [shape = 'u8[65536]{0}', space=vmem, size = 0x10000, scoped, tag = 'input window, operand 1']
    #allocation3 [shape = 's32[2]{0}', space=sflag, size = 0x8, scoped, tag = 'scoped memory for nerf_tcnn_forward.1']
    #allocation4 [shape = 's32[2]{0}', space=sflag, size = 0x8, scoped, tag = 'scoped memory for nerf_tcnn_forward.1']
    #allocation5 [shape = 'u8[32768]{0}', space=vmem, size = 0x8000, scoped, tag = 'input window, operand 2, single buffered']
    #allocation6 [shape = 's32[1]{0}', space=sflag, size = 0x4, scoped, tag = 'scoped memory for nerf_tcnn_forward.1']
    #allocation7 [shape = 'u8[36864]{0}', space=vmem, size = 0x9000, scoped, tag = 'input window, operand 3, single buffered']
    #allocation8 [shape = 'u8[16384]{0}', space=vmem, size = 0x4000, scoped, tag = 'input window, operand 4, single buffered']
    #allocation9 [shape = 's32[1]{0}', space=sflag, size = 0x4, scoped, tag = 'scoped memory for nerf_tcnn_forward.1']
    #allocation10 [shape = 'u8[1024]{0}', space=vmem, size = 0x400, scoped, tag = 'input window, operand 5, single buffered']
    #allocation11 [shape = 'u8[65536]{0}', space=vmem, size = 0x10000, scoped, tag = 'output window, operand 0']
    %11 = vsyncpa [#allocation3], 0
    %s12 = scalar_lea.sflag [#allocation3], 1
    %13 = vsyncpa %s12, 0
    %14 = vsyncpa [#allocation6], 0
    %15 = vsyncpa [#allocation9], 0
    %16 = vsyncpa [#allocation4], 0
    %s17 = scalar_lea.sflag [#allocation4], 1
    %18 = vsyncpa %s17, 0
    loop: start=0, step=1, limit=4
    $region2: #{nerf_tcnn_forward.1} parent=1 // loop_pre_header
      _
    $region3: #{nerf_tcnn_forward.1} parent=1 // loop_header
      %s20 = sphi 0, %s24
      %p21 = scmp.ge.s32.totalorder %s20, 4
      %s30 = sphi 0, %s32
      %s33 = sphi 0, %s30
      %s34 = sphi 0, %s33
      %s50 = sphi 0, %s34
      %s56 = sphi 0, %s58
      %s59 = sphi 0, %s56
      %s60 = sphi 0, %s59
      %s76 = sphi 0, %s60
      %s80 = sphi 0, %s80
      %s82 = sphi 0, %s80
      %s83 = sphi 0, %s82
      %s97 = sphi 0, %s83
      %s101 = sphi 0, %s101
      %s103 = sphi 0, %s101
      %s104 = sphi 0, %s103
      %s118 = sphi 0, %s104
      %s122 = sphi 0, %s122
      %s124 = sphi 0, %s122
      %s125 = sphi 0, %s124
      %s139 = sphi 0, %s125
      %s143 = sphi 0, %s143
      %s145 = sphi 0, %s143
      %s146 = sphi 0, %s145
      %s160 = sphi 0, %s146
      %s166 = sphi 0, %s168
      %s169 = sphi 0, %s166
      %s170 = sphi 0, %s169
      %s186 = sphi 0, %s170
    $region4: #{nerf_tcnn_forward.1} parent=1 // loop_header_branch
      %23 = sbr.rel (%p21) target = $region8
    $region5: #{nerf_tcnn_forward.1} parent=1 // loop_body
      %s25 = ssub.s32 %s20, 1
      %s26 = ssub.s32 %s20, 2
      %s27 = sadd.s32 %s20, 1
      %s28 = ssub.s32 %s20, %s27
      %p29 = scmp.eq.s32.totalorder %s28, 0
      %s31 = sadd.s32 %s30, 1
      %s32 = scalar_select %p29, %s30, %s31
      %p35 = pneg %p29
      %p36 = scmp.eq.s32.totalorder %s20, 1
      %p37 = por %p35, %p36
      %p38 = scmp.ne.s32.totalorder %s30, %s33
      %p39 = scmp.eq.s32.totalorder %s20, 0
      %p40 = por %p38, %p39
      %p41 = scmp.ne.s32.totalorder %s30, %s33
      %p42 = scmp.eq.s32.totalorder %s25, 1
      %p43 = por %p41, %p42
      %p44 = scmp.ne.s32.totalorder %s33, %s34
      %p45 = scmp.eq.s32.totalorder %s25, 0
      %p46 = por %p44, %p45
      %p47 = scmp.ne.s32.totalorder %s33, %s34
      %p48 = scmp.eq.s32.totalorder %s26, 1
      %p49 = por %p47, %p48
      %p51 = scmp.ne.s32.totalorder %s34, %s50
      %p52 = scmp.eq.s32.totalorder %s26, 0
      %p53 = por %p51, %p52
      %s54 = ssub.s32 %s20, %s27
      %p55 = scmp.eq.s32.totalorder %s54, 0
      %s57 = sadd.s32 %s56, 1
      %s58 = scalar_select %p55, %s56, %s57
      %p61 = pneg %p55
      %p62 = scmp.eq.s32.totalorder %s20, 1
      %p63 = por %p61, %p62
      %p64 = scmp.ne.s32.totalorder %s56, %s59
      %p65 = scmp.eq.s32.totalorder %s20, 0
      %p66 = por %p64, %p65
      %p67 = scmp.ne.s32.totalorder %s56, %s59
      %p68 = scmp.eq.s32.totalorder %s25, 1
      %p69 = por %p67, %p68
      %p70 = scmp.ne.s32.totalorder %s59, %s60
      %p71 = scmp.eq.s32.totalorder %s25, 0
      %p72 = por %p70, %p71
      %p73 = scmp.ne.s32.totalorder %s59, %s60
      %p74 = scmp.eq.s32.totalorder %s26, 1
      %p75 = por %p73, %p74
      %p77 = scmp.ne.s32.totalorder %s60, %s76
      %p78 = scmp.eq.s32.totalorder %s26, 0
      %p79 = por %p77, %p78
      %s81 = sadd.s32 %s80, 1
      %p84 = scmp.eq.s32.totalorder %s20, 1
      %p85 = scmp.ne.s32.totalorder %s80, %s82
      %p86 = scmp.eq.s32.totalorder %s20, 0
      %p87 = por %p85, %p86
      %p88 = scmp.ne.s32.totalorder %s80, %s82
      %p89 = scmp.eq.s32.totalorder %s25, 1
      %p90 = por %p88, %p89
      %p91 = scmp.ne.s32.totalorder %s82, %s83
      %p92 = scmp.eq.s32.totalorder %s25, 0
      %p93 = por %p91, %p92
      %p94 = scmp.ne.s32.totalorder %s82, %s83
      %p95 = scmp.eq.s32.totalorder %s26, 1
      %p96 = por %p94, %p95
      %p98 = scmp.ne.s32.totalorder %s83, %s97
      %p99 = scmp.eq.s32.totalorder %s26, 0
      %p100 = por %p98, %p99
      %s102 = sadd.s32 %s101, 1
      %p105 = scmp.eq.s32.totalorder %s20, 1
      %p106 = scmp.ne.s32.totalorder %s101, %s103
      %p107 = scmp.eq.s32.totalorder %s20, 0
      %p108 = por %p106, %p107
      %p109 = scmp.ne.s32.totalorder %s101, %s103
      %p110 = scmp.eq.s32.totalorder %s25, 1
      %p111 = por %p109, %p110
      %p112 = scmp.ne.s32.totalorder %s103, %s104
      %p113 = scmp.eq.s32.totalorder %s25, 0
      %p114 = por %p112, %p113
      %p115 = scmp.ne.s32.totalorder %s103, %s104
      %p116 = scmp.eq.s32.totalorder %s26, 1
      %p117 = por %p115, %p116
      %p119 = scmp.ne.s32.totalorder %s104, %s118
      %p120 = scmp.eq.s32.totalorder %s26, 0
      %p121 = por %p119, %p120
      %s123 = sadd.s32 %s122, 1
      %p126 = scmp.eq.s32.totalorder %s20, 1
      %p127 = scmp.ne.s32.totalorder %s122, %s124
      %p128 = scmp.eq.s32.totalorder %s20, 0
      %p129 = por %p127, %p128
      %p130 = scmp.ne.s32.totalorder %s122, %s124
      %p131 = scmp.eq.s32.totalorder %s25, 1
      %p132 = por %p130, %p131
      %p133 = scmp.ne.s32.totalorder %s124, %s125
      %p134 = scmp.eq.s32.totalorder %s25, 0
      %p135 = por %p133, %p134
      %p136 = scmp.ne.s32.totalorder %s124, %s125
      %p137 = scmp.eq.s32.totalorder %s26, 1
      %p138 = por %p136, %p137
      %p140 = scmp.ne.s32.totalorder %s125, %s139
      %p141 = scmp.eq.s32.totalorder %s26, 0
      %p142 = por %p140, %p141
      %s144 = sadd.s32 %s143, 1
      %p147 = scmp.eq.s32.totalorder %s20, 1
      %p148 = scmp.ne.s32.totalorder %s143, %s145
      %p149 = scmp.eq.s32.totalorder %s20, 0
      %p150 = por %p148, %p149
      %p151 = scmp.ne.s32.totalorder %s143, %s145
      %p152 = scmp.eq.s32.totalorder %s25, 1
      %p153 = por %p151, %p152
      %p154 = scmp.ne.s32.totalorder %s145, %s146
      %p155 = scmp.eq.s32.totalorder %s25, 0
      %p156 = por %p154, %p155
      %p157 = scmp.ne.s32.totalorder %s145, %s146
      %p158 = scmp.eq.s32.totalorder %s26, 1
      %p159 = por %p157, %p158
      %p161 = scmp.ne.s32.totalorder %s146, %s160
      %p162 = scmp.eq.s32.totalorder %s26, 0
      %p163 = por %p161, %p162
      %s164 = ssub.s32 %s20, %s27
      %p165 = scmp.eq.s32.totalorder %s164, 0
      %s167 = sadd.s32 %s166, 1
      %s168 = scalar_select %p165, %s166, %s167
      %p171 = pneg %p165
      %p172 = scmp.eq.s32.totalorder %s20, 1
      %p173 = por %p171, %p172
      %p174 = scmp.ne.s32.totalorder %s166, %s169
      %p175 = scmp.eq.s32.totalorder %s20, 0
      %p176 = por %p174, %p175
      %p177 = scmp.ne.s32.totalorder %s166, %s169
      %p178 = scmp.eq.s32.totalorder %s25, 1
      %p179 = por %p177, %p178
      %p180 = scmp.ne.s32.totalorder %s169, %s170
      %p181 = scmp.eq.s32.totalorder %s25, 0
      %p182 = por %p180, %p181
      %p183 = scmp.ne.s32.totalorder %s169, %s170
      %p184 = scmp.eq.s32.totalorder %s26, 1
      %p185 = por %p183, %p184
      %p187 = scmp.ne.s32.totalorder %s170, %s186
      %p188 = scmp.eq.s32.totalorder %s26, 0
      %p189 = por %p187, %p188
      %p190 = scmp.le.s32.totalorder 1, %s20
      %p191 = scmp.lt.s32.totalorder %s20, 3
      %p192 = pnand %p190, %p191
      %p193 = pneg %p192
      // Predicated region
      $region9: #{nerf_tcnn_forward.1} parent=5 // pred_check
        _
      $region10: #{nerf_tcnn_forward.1} parent=5 // pred_check_branch
        %195 = sbr.rel (%p192) target = $region12
      $region11: #{nerf_tcnn_forward.1} parent=5 // pred_region
        %s196 = ssub.s32 %s20, 1
        // Predicated region
        $region13: #{nerf_tcnn_forward.1} parent=11 // pred_check
          %p197 = pneg %p93
        $region14: #{nerf_tcnn_forward.1} parent=11 // pred_check_branch
          %199 = sbr.rel (%p197) target = $region16
        $region15: #{nerf_tcnn_forward.1} parent=11 // pred_region
          %s201 = ssub.s32 1024, 1024
          %202 = vsyncadd [#allocation6], %s201
          %s203 = sshll.u32 [#allocation5], 4
          %s204 = int_to_ptr.vmem [resolvable:$true] %s203
          %209 = dma.hbm_to_vmem [thread:$0]  %s2, 1024, %s204, [#allocation6], 64, 64, 4
        $region16: #{nerf_tcnn_forward.1} parent=11 // pred_fallthru
          _
        // Predicated region
        $region17: #{nerf_tcnn_forward.1} parent=11 // pred_check
          %p210 = pneg %p114
        $region18: #{nerf_tcnn_forward.1} parent=11 // pred_check_branch
          %212 = sbr.rel (%p210) target = $region20
        $region19: #{nerf_tcnn_forward.1} parent=11 // pred_region
          %s214 = ssub.s32 1152, 1152
          %215 = vsyncadd [#allocation6], %s214
          %s216 = sshll.u32 [#allocation7], 4
          %s217 = int_to_ptr.vmem [resolvable:$true] %s216
          %222 = dma.hbm_to_vmem [thread:$0]  %s3, 1152, %s217, [#allocation6], 128, 128, 8
        $region20: #{nerf_tcnn_forward.1} parent=11 // pred_fallthru
          _
        // Predicated region
        $region21: #{nerf_tcnn_forward.1} parent=11 // pred_check
          %p223 = pneg %p135
        $region22: #{nerf_tcnn_forward.1} parent=11 // pred_check_branch
          %225 = sbr.rel (%p223) target = $region24
        $region23: #{nerf_tcnn_forward.1} parent=11 // pred_region
          %s227 = ssub.s32 512, 512
          %228 = vsyncadd [#allocation9], %s227
          %s229 = sshll.u32 [#allocation8], 4
          %s230 = int_to_ptr.vmem [resolvable:$true] %s229
          %235 = dma.hbm_to_vmem [thread:$0]  %s4, 512, %s230, [#allocation9], 64, 64, 4
        $region24: #{nerf_tcnn_forward.1} parent=11 // pred_fallthru
          _
        // Predicated region
        $region25: #{nerf_tcnn_forward.1} parent=11 // pred_check
          %p236 = pneg %p156
        $region26: #{nerf_tcnn_forward.1} parent=11 // pred_check_branch
          %238 = sbr.rel (%p236) target = $region28
        $region27: #{nerf_tcnn_forward.1} parent=11 // pred_region
          %s240 = ssub.s32 32, 32
          %241 = vsyncadd [#allocation9], %s240
          %s243 = sshll.u32 [#allocation10], 4
          %s244 = int_to_ptr.vmem [resolvable:$true] %s243
          %246 = dma.hbm_to_vmem [thread:$0]  %s5, 32, %s244, [#allocation9]
        $region28: #{nerf_tcnn_forward.1} parent=11 // pred_fallthru
          _
      $region12: #{nerf_tcnn_forward.1} parent=5 // pred_fallthru
        _
      %p247 = scmp.lt.s32.totalorder %s20, 2
      // Predicated region
      $region29: #{nerf_tcnn_forward.1} parent=5 // pred_check
        %p248 = pneg %p247
      $region30: #{nerf_tcnn_forward.1} parent=5 // pred_check_branch
        %250 = sbr.rel (%p248) target = $region32
      $region31: #{nerf_tcnn_forward.1} parent=5 // pred_region
        // Predicated region
        $region33: #{nerf_tcnn_forward.1} parent=31 // pred_check
          %p251 = pneg %p40
        $region34: #{nerf_tcnn_forward.1} parent=31 // pred_check_branch
          %253 = sbr.rel (%p251) target = $region36
        $region35: #{nerf_tcnn_forward.1} parent=31 // pred_region
          %s254 = smul.u32 256, %s20
          %p255 = scmp.lt.s32.totalorder %s254, 511
          %s256 = scalar_select %p255, %s254, 511
          %s257 = smul.addr %s256, 4
          %s258 = scalar_lea.vmem %s0, %s257
          %s259 = smul.u32 256, %s20
        $region36: #{nerf_tcnn_forward.1} parent=31 // pred_fallthru
          _
        // Predicated region
        $region37: #{nerf_tcnn_forward.1} parent=31 // pred_check
          %p260 = pneg %p66
        $region38: #{nerf_tcnn_forward.1} parent=31 // pred_check_branch
          %262 = sbr.rel (%p260) target = $region40
        $region39: #{nerf_tcnn_forward.1} parent=31 // pred_region
          %s263 = sand.u32 %s56, 1
          %s264 = scalar_lea.sflag [#allocation3], %s263
          %s265 = sand.u32 %s56, 1
          %s266 = smul.addr %s265, 64
          %s267 = scalar_lea.vmem [#allocation2], %s266
          %s268 = smul.u32 16, %s20
          %s270 = ssub.s32 1024, 1024
          %271 = vsyncadd %s264, %s270
          %s272 = smul.addr %s268, 64
          %s273 = scalar_lea.hbm %s1, %s272
          %s275 = sshll.u32 %s267, 4
          %s276 = int_to_ptr.vmem [resolvable:$true] %s275
          %278 = dma.hbm_to_vmem [thread:$0]  %s273, 1024, %s276, %s264
        $region40: #{nerf_tcnn_forward.1} parent=31 // pred_fallthru
          _
      $region32: #{nerf_tcnn_forward.1} parent=5 // pred_fallthru
        _
      %p279 = scmp.le.s32.totalorder 1, %s20
      %p280 = scmp.lt.s32.totalorder %s20, 3
      %p281 = pnand %p279, %p280
      %p282 = pneg %p281
      // Predicated region
      $region41: #{nerf_tcnn_forward.1} parent=5 // pred_check
        _
      $region42: #{nerf_tcnn_forward.1} parent=5 // pred_check_branch
        %284 = sbr.rel (%p281) target = $region44
      $region43: #{nerf_tcnn_forward.1} parent=5 // pred_region
        %s285 = ssub.s32 %s20, 1
        %s286 = sand.u32 %s59, 1
        %s287 = scalar_lea.sflag [#allocation3], %s286
        %s288 = sand.u32 %s59, 1
        %s289 = smul.addr %s288, 64
        %s290 = scalar_lea.vmem [#allocation2], %s289
        // Predicated region
        $region45: #{nerf_tcnn_forward.1} parent=43 // pred_check
          %p291 = pneg %p72
        $region46: #{nerf_tcnn_forward.1} parent=43 // pred_check_branch
          %293 = sbr.rel (%p291) target = $region48
        $region47: #{nerf_tcnn_forward.1} parent=43 // pred_region
          %294 = dma.done %s287, 1024
        $region48: #{nerf_tcnn_forward.1} parent=43 // pred_fallthru
          _
        // Predicated region
        $region49: #{nerf_tcnn_forward.1} parent=43 // pred_check
          %p295 = pneg %p93
        $region50: #{nerf_tcnn_forward.1} parent=43 // pred_check_branch
          %297 = sbr.rel (%p295) target = $region52
        $region51: #{nerf_tcnn_forward.1} parent=43 // pred_region
          %298 = dma.done [#allocation6], 1024
        $region52: #{nerf_tcnn_forward.1} parent=43 // pred_fallthru
          _
        // Predicated region
        $region53: #{nerf_tcnn_forward.1} parent=43 // pred_check
          %p299 = pneg %p114
        $region54: #{nerf_tcnn_forward.1} parent=43 // pred_check_branch
          %301 = sbr.rel (%p299) target = $region56
        $region55: #{nerf_tcnn_forward.1} parent=43 // pred_region
          %302 = dma.done [#allocation6], 1152
        $region56: #{nerf_tcnn_forward.1} parent=43 // pred_fallthru
          _
        // Predicated region
        $region57: #{nerf_tcnn_forward.1} parent=43 // pred_check
          %p303 = pneg %p135
        $region58: #{nerf_tcnn_forward.1} parent=43 // pred_check_branch
          %305 = sbr.rel (%p303) target = $region60
        $region59: #{nerf_tcnn_forward.1} parent=43 // pred_region
          %306 = dma.done [#allocation9], 512
        $region60: #{nerf_tcnn_forward.1} parent=43 // pred_fallthru
          _
        // Predicated region
        $region61: #{nerf_tcnn_forward.1} parent=43 // pred_check
          %p307 = pneg %p156
        $region62: #{nerf_tcnn_forward.1} parent=43 // pred_check_branch
          %309 = sbr.rel (%p307) target = $region64
        $region63: #{nerf_tcnn_forward.1} parent=43 // pred_region
          %310 = dma.done [#allocation9], 32
        $region64: #{nerf_tcnn_forward.1} parent=43 // pred_fallthru
          _
        %s311 = smul.u32 256, %s25
        %p312 = scmp.lt.s32.totalorder %s311, 511
        %s313 = scalar_select %p312, %s311, 511
        %s314 = smul.addr %s313, 4
        %s315 = scalar_lea.vmem %s0, %s314
        %p316 = pneg %p46
        %p317 = pneg %p43
        %s318 = sand.u32 %s59, 1
        %s319 = scalar_lea.sflag [#allocation3], %s318
        %s320 = sand.u32 %s59, 1
        %s321 = smul.addr %s320, 64
        %s322 = scalar_lea.vmem [#allocation2], %s321
        %p323 = pneg %p72
        %p324 = pneg %p69
        %p325 = pneg %p93
        %p326 = pneg %p90
        %p327 = pneg %p114
        %p328 = pneg %p111
        %p329 = pneg %p135
        %p330 = pneg %p132
        %p331 = pneg %p156
        %p332 = pneg %p153
        %p333 = pneg %p182
        %p334 = pneg %p179
        %s335 = sand.u32 %s169, 1
        %s336 = scalar_lea.sflag [#allocation4], %s335
        %s337 = sand.u32 %s169, 1
        %s338 = smul.addr %s337, 64
        %s339 = scalar_lea.vmem [#allocation11], %s338
        %s340 = smul.u32 256, %s25
        %p341 = scmp.lt.s32.totalorder %s340, 511
        %s342 = scalar_select %p341, %s340, 511
        %s343 = smul.addr %s342, 4
        %s344 = scalar_lea.vmem %s0, %s343
        %s345 = smul.u32 256, %s25
        %s346 = smul.u32 16, %s25
        %s347 = smul.u32 16, %s25
        %v349 = vld [vmem:[#allocation5] sm:$0xf]
        %v350 = vld [vmem:[#allocation5 + $0x4] sm:$0xf]
        %v351 = vld [vmem:[#allocation5 + $0x8] sm:$0xf]
        %v352 = vld [vmem:[#allocation5 + $0xc] sm:$0xf]
        %v353 = vld [vmem:[#allocation5 + $0x10] sm:$0xf]
        %v354 = vld [vmem:[#allocation5 + $0x14] sm:$0xf]
        %v355 = vld [vmem:[#allocation5 + $0x18] sm:$0xf]
        %v356 = vld [vmem:[#allocation5 + $0x1c] sm:$0xf]
        %v357 = vld [vmem:[#allocation5 + $0x20] sm:$0xf]
        %v358 = vld [vmem:[#allocation5 + $0x24] sm:$0xf]
        %v359 = vld [vmem:[#allocation5 + $0x28] sm:$0xf]
        %v360 = vld [vmem:[#allocation5 + $0x2c] sm:$0xf]
        %v361 = vld [vmem:[#allocation5 + $0x30] sm:$0xf]
        %v362 = vld [vmem:[#allocation5 + $0x34] sm:$0xf]
        %v363 = vld [vmem:[#allocation5 + $0x38] sm:$0xf]
        %v364 = vld [vmem:[#allocation5 + $0x3c] sm:$0xf]
        %v365 = vld [vmem:[%s344] sm:$0xf]
        %v366 = vld [vmem:[%s344 + $0x4] sm:$0xf]
        %v367 = vld [vmem:[%s344 + $0x8] sm:$0xf]
        %v368 = vld [vmem:[%s344 + $0xc] sm:$0xf]
        %v369 = vld [vmem:[%s344 + $0x10] sm:$0xf]
        %v370 = vld [vmem:[%s344 + $0x14] sm:$0xf]
        %v371 = vld [vmem:[%s344 + $0x18] sm:$0xf]
        %v372 = vld [vmem:[%s344 + $0x1c] sm:$0xf]
        %v373 = vld [vmem:[%s344 + $0x20] sm:$0xf]
        %v374 = vld [vmem:[%s344 + $0x24] sm:$0xf]
        %v375 = vld [vmem:[%s344 + $0x28] sm:$0xf]
        %v376 = vld [vmem:[%s344 + $0x2c] sm:$0xf]
        %v377 = vld [vmem:[%s344 + $0x30] sm:$0xf]
        %v378 = vld [vmem:[%s344 + $0x34] sm:$0xf]
        %v379 = vld [vmem:[%s344 + $0x38] sm:$0xf]
        %v380 = vld [vmem:[%s344 + $0x3c] sm:$0xf]
        %v381 = vld [vmem:[%s344 + $0x40] sm:$0xf]
        %v382 = vld [vmem:[%s344 + $0x44] sm:$0xf]
        %v383 = vld [vmem:[%s344 + $0x48] sm:$0xf]
        %v384 = vld [vmem:[%s344 + $0x4c] sm:$0xf]
        %v385 = vld [vmem:[%s344 + $0x50] sm:$0xf]
        %v386 = vld [vmem:[%s344 + $0x54] sm:$0xf]
        %v387 = vld [vmem:[%s344 + $0x58] sm:$0xf]
        %v388 = vld [vmem:[%s344 + $0x5c] sm:$0xf]
        %v389 = vld [vmem:[%s344 + $0x60] sm:$0xf]
        %v390 = vld [vmem:[%s344 + $0x64] sm:$0xf]
        %v391 = vld [vmem:[%s344 + $0x68] sm:$0xf]
        %v392 = vld [vmem:[%s344 + $0x6c] sm:$0xf]
        %v393 = vld [vmem:[%s344 + $0x70] sm:$0xf]
        %v394 = vld [vmem:[%s344 + $0x74] sm:$0xf]
        %v395 = vld [vmem:[%s344 + $0x78] sm:$0xf]
        %v396 = vld [vmem:[%s344 + $0x7c] sm:$0xf]
        %v397 = vld [vmem:[%s344 + $0x80] sm:$0xf]
        %v398 = vld [vmem:[%s344 + $0x84] sm:$0xf]
        %v399 = vld [vmem:[%s344 + $0x88] sm:$0xf]
        %v400 = vld [vmem:[%s344 + $0x8c] sm:$0xf]
        %v401 = vld [vmem:[%s344 + $0x90] sm:$0xf]
        %v402 = vld [vmem:[%s344 + $0x94] sm:$0xf]
        %v403 = vld [vmem:[%s344 + $0x98] sm:$0xf]
        %v404 = vld [vmem:[%s344 + $0x9c] sm:$0xf]
        %v405 = vld [vmem:[%s344 + $0xa0] sm:$0xf]
        %v406 = vld [vmem:[%s344 + $0xa4] sm:$0xf]
        %v407 = vld [vmem:[%s344 + $0xa8] sm:$0xf]
        %v408 = vld [vmem:[%s344 + $0xac] sm:$0xf]
        %v409 = vld [vmem:[%s344 + $0xb0] sm:$0xf]
        %v410 = vld [vmem:[%s344 + $0xb4] sm:$0xf]
        %v411 = vld [vmem:[%s344 + $0xb8] sm:$0xf]
        %v412 = vld [vmem:[%s344 + $0xbc] sm:$0xf]
        %v413 = vld [vmem:[%s344 + $0xc0] sm:$0xf]
        %v414 = vld [vmem:[%s344 + $0xc4] sm:$0xf]
        %v415 = vld [vmem:[%s344 + $0xc8] sm:$0xf]
        %v416 = vld [vmem:[%s344 + $0xcc] sm:$0xf]
        %v417 = vld [vmem:[%s344 + $0xd0] sm:$0xf]
        %v418 = vld [vmem:[%s344 + $0xd4] sm:$0xf]
        %v419 = vld [vmem:[%s344 + $0xd8] sm:$0xf]
        %v420 = vld [vmem:[%s344 + $0xdc] sm:$0xf]
        %v421 = vld [vmem:[%s344 + $0xe0] sm:$0xf]
        %v422 = vld [vmem:[%s344 + $0xe4] sm:$0xf]
        %v423 = vld [vmem:[%s344 + $0xe8] sm:$0xf]
        %v424 = vld [vmem:[%s344 + $0xec] sm:$0xf]
        %v425 = vld [vmem:[%s344 + $0xf0] sm:$0xf]
        %v426 = vld [vmem:[%s344 + $0xf4] sm:$0xf]
        %v427 = vld [vmem:[%s344 + $0xf8] sm:$0xf]
        %v428 = vld [vmem:[%s344 + $0xfc] sm:$0xf]
        %v429 = vld [vmem:[%s344 + $0x100] sm:$0xf]
        %v430 = vld [vmem:[%s344 + $0x104] sm:$0xf]
        %v431 = vld [vmem:[%s344 + $0x108] sm:$0xf]
        %v432 = vld [vmem:[%s344 + $0x10c] sm:$0xf]
        %v433 = vld [vmem:[%s344 + $0x110] sm:$0xf]
        %v434 = vld [vmem:[%s344 + $0x114] sm:$0xf]
        %v435 = vld [vmem:[%s344 + $0x118] sm:$0xf]
        %v436 = vld [vmem:[%s344 + $0x11c] sm:$0xf]
        %v437 = vld [vmem:[%s344 + $0x120] sm:$0xf]
        %v438 = vld [vmem:[%s344 + $0x124] sm:$0xf]
        %v439 = vld [vmem:[%s344 + $0x128] sm:$0xf]
        %v440 = vld [vmem:[%s344 + $0x12c] sm:$0xf]
        %v441 = vld [vmem:[%s344 + $0x130] sm:$0xf]
        %v442 = vld [vmem:[%s344 + $0x134] sm:$0xf]
        %v443 = vld [vmem:[%s344 + $0x138] sm:$0xf]
        %v444 = vld [vmem:[%s344 + $0x13c] sm:$0xf]
        %v445 = vld [vmem:[%s344 + $0x140] sm:$0xf]
        %v446 = vld [vmem:[%s344 + $0x144] sm:$0xf]
        %v447 = vld [vmem:[%s344 + $0x148] sm:$0xf]
        %v448 = vld [vmem:[%s344 + $0x14c] sm:$0xf]
        %v449 = vld [vmem:[%s344 + $0x150] sm:$0xf]
        %v450 = vld [vmem:[%s344 + $0x154] sm:$0xf]
        %v451 = vld [vmem:[%s344 + $0x158] sm:$0xf]
        %v452 = vld [vmem:[%s344 + $0x15c] sm:$0xf]
        %v453 = vld [vmem:[%s344 + $0x160] sm:$0xf]
        %v454 = vld [vmem:[%s344 + $0x164] sm:$0xf]
        %v455 = vld [vmem:[%s344 + $0x168] sm:$0xf]
        %v456 = vld [vmem:[%s344 + $0x16c] sm:$0xf]
        %v457 = vld [vmem:[%s344 + $0x170] sm:$0xf]
        %v458 = vld [vmem:[%s344 + $0x174] sm:$0xf]
        %v459 = vld [vmem:[%s344 + $0x178] sm:$0xf]
        %v460 = vld [vmem:[%s344 + $0x17c] sm:$0xf]
        %v461 = vld [vmem:[%s344 + $0x180] sm:$0xf]
        %v462 = vld [vmem:[%s344 + $0x184] sm:$0xf]
        %v463 = vld [vmem:[%s344 + $0x188] sm:$0xf]
        %v464 = vld [vmem:[%s344 + $0x18c] sm:$0xf]
        %v465 = vld [vmem:[%s344 + $0x190] sm:$0xf]
        %v466 = vld [vmem:[%s344 + $0x194] sm:$0xf]
        %v467 = vld [vmem:[%s344 + $0x198] sm:$0xf]
        %v468 = vld [vmem:[%s344 + $0x19c] sm:$0xf]
        %v469 = vld [vmem:[%s344 + $0x1a0] sm:$0xf]
        %v470 = vld [vmem:[%s344 + $0x1a4] sm:$0xf]
        %v471 = vld [vmem:[%s344 + $0x1a8] sm:$0xf]
        %v472 = vld [vmem:[%s344 + $0x1ac] sm:$0xf]
        %v473 = vld [vmem:[%s344 + $0x1b0] sm:$0xf]
        %v474 = vld [vmem:[%s344 + $0x1b4] sm:$0xf]
        %v475 = vld [vmem:[%s344 + $0x1b8] sm:$0xf]
        %v476 = vld [vmem:[%s344 + $0x1bc] sm:$0xf]
        %v477 = vld [vmem:[%s344 + $0x1c0] sm:$0xf]
        %v478 = vld [vmem:[%s344 + $0x1c4] sm:$0xf]
        %v479 = vld [vmem:[%s344 + $0x1c8] sm:$0xf]
        %v480 = vld [vmem:[%s344 + $0x1cc] sm:$0xf]
        %v481 = vld [vmem:[%s344 + $0x1d0] sm:$0xf]
        %v482 = vld [vmem:[%s344 + $0x1d4] sm:$0xf]
        %v483 = vld [vmem:[%s344 + $0x1d8] sm:$0xf]
        %v484 = vld [vmem:[%s344 + $0x1dc] sm:$0xf]
        %v485 = vld [vmem:[%s344 + $0x1e0] sm:$0xf]
        %v486 = vld [vmem:[%s344 + $0x1e4] sm:$0xf]
        %v487 = vld [vmem:[%s344 + $0x1e8] sm:$0xf]
        %v488 = vld [vmem:[%s344 + $0x1ec] sm:$0xf]
        %v489 = vld [vmem:[%s344 + $0x1f0] sm:$0xf]
        %v490 = vld [vmem:[%s344 + $0x1f4] sm:$0xf]
        %v491 = vld [vmem:[%s344 + $0x1f8] sm:$0xf]
        %v492 = vld [vmem:[%s344 + $0x1fc] sm:$0xf]
        %v493 = vld [vmem:[%s344 + $0x200] sm:$0xf]
        %v494 = vld [vmem:[%s344 + $0x204] sm:$0xf]
        %v495 = vld [vmem:[%s344 + $0x208] sm:$0xf]
        %v496 = vld [vmem:[%s344 + $0x20c] sm:$0xf]
        %v497 = vld [vmem:[%s344 + $0x210] sm:$0xf]
        %v498 = vld [vmem:[%s344 + $0x214] sm:$0xf]
        %v499 = vld [vmem:[%s344 + $0x218] sm:$0xf]
        %v500 = vld [vmem:[%s344 + $0x21c] sm:$0xf]
        %v501 = vld [vmem:[%s344 + $0x220] sm:$0xf]
        %v502 = vld [vmem:[%s344 + $0x224] sm:$0xf]
        %v503 = vld [vmem:[%s344 + $0x228] sm:$0xf]
        %v504 = vld [vmem:[%s344 + $0x22c] sm:$0xf]
        %v505 = vld [vmem:[%s344 + $0x230] sm:$0xf]
        %v506 = vld [vmem:[%s344 + $0x234] sm:$0xf]
        %v507 = vld [vmem:[%s344 + $0x238] sm:$0xf]
        %v508 = vld [vmem:[%s344 + $0x23c] sm:$0xf]
        %v509 = vld [vmem:[%s344 + $0x240] sm:$0xf]
        %v510 = vld [vmem:[%s344 + $0x244] sm:$0xf]
        %v511 = vld [vmem:[%s344 + $0x248] sm:$0xf]
        %v512 = vld [vmem:[%s344 + $0x24c] sm:$0xf]
        %v513 = vld [vmem:[%s344 + $0x250] sm:$0xf]
        %v514 = vld [vmem:[%s344 + $0x254] sm:$0xf]
        %v515 = vld [vmem:[%s344 + $0x258] sm:$0xf]
        %v516 = vld [vmem:[%s344 + $0x25c] sm:$0xf]
        %v517 = vld [vmem:[%s344 + $0x260] sm:$0xf]
        %v518 = vld [vmem:[%s344 + $0x264] sm:$0xf]
        %v519 = vld [vmem:[%s344 + $0x268] sm:$0xf]
        %v520 = vld [vmem:[%s344 + $0x26c] sm:$0xf]
        %v521 = vld [vmem:[%s344 + $0x270] sm:$0xf]
        %v522 = vld [vmem:[%s344 + $0x274] sm:$0xf]
        %v523 = vld [vmem:[%s344 + $0x278] sm:$0xf]
        %v524 = vld [vmem:[%s344 + $0x27c] sm:$0xf]
        %v525 = vld [vmem:[%s344 + $0x280] sm:$0xf]
        %v526 = vld [vmem:[%s344 + $0x284] sm:$0xf]
        %v527 = vld [vmem:[%s344 + $0x288] sm:$0xf]
        %v528 = vld [vmem:[%s344 + $0x28c] sm:$0xf]
        %v529 = vld [vmem:[%s344 + $0x290] sm:$0xf]
        %v530 = vld [vmem:[%s344 + $0x294] sm:$0xf]
        %v531 = vld [vmem:[%s344 + $0x298] sm:$0xf]
        %v532 = vld [vmem:[%s344 + $0x29c] sm:$0xf]
        %v533 = vld [vmem:[%s344 + $0x2a0] sm:$0xf]
        %v534 = vld [vmem:[%s344 + $0x2a4] sm:$0xf]
        %v535 = vld [vmem:[%s344 + $0x2a8] sm:$0xf]
        %v536 = vld [vmem:[%s344 + $0x2ac] sm:$0xf]
        %v537 = vld [vmem:[%s344 + $0x2b0] sm:$0xf]
        %v538 = vld [vmem:[%s344 + $0x2b4] sm:$0xf]
        %v539 = vld [vmem:[%s344 + $0x2b8] sm:$0xf]
        %v540 = vld [vmem:[%s344 + $0x2bc] sm:$0xf]
        %v541 = vld [vmem:[%s344 + $0x2c0] sm:$0xf]
        %v542 = vld [vmem:[%s344 + $0x2c4] sm:$0xf]
        %v543 = vld [vmem:[%s344 + $0x2c8] sm:$0xf]
        %v544 = vld [vmem:[%s344 + $0x2cc] sm:$0xf]
        %v545 = vld [vmem:[%s344 + $0x2d0] sm:$0xf]
        %v546 = vld [vmem:[%s344 + $0x2d4] sm:$0xf]
        %v547 = vld [vmem:[%s344 + $0x2d8] sm:$0xf]
        %v548 = vld [vmem:[%s344 + $0x2dc] sm:$0xf]
        %v549 = vld [vmem:[%s344 + $0x2e0] sm:$0xf]
        %v550 = vld [vmem:[%s344 + $0x2e4] sm:$0xf]
        %v551 = vld [vmem:[%s344 + $0x2e8] sm:$0xf]
        %v552 = vld [vmem:[%s344 + $0x2ec] sm:$0xf]
        %v553 = vld [vmem:[%s344 + $0x2f0] sm:$0xf]
        %v554 = vld [vmem:[%s344 + $0x2f4] sm:$0xf]
        %v555 = vld [vmem:[%s344 + $0x2f8] sm:$0xf]
        %v556 = vld [vmem:[%s344 + $0x2fc] sm:$0xf]
        %v557 = vld [vmem:[%s344 + $0x300] sm:$0xf]
        %v558 = vld [vmem:[%s344 + $0x304] sm:$0xf]
        %v559 = vld [vmem:[%s344 + $0x308] sm:$0xf]
        %v560 = vld [vmem:[%s344 + $0x30c] sm:$0xf]
        %v561 = vld [vmem:[%s344 + $0x310] sm:$0xf]
        %v562 = vld [vmem:[%s344 + $0x314] sm:$0xf]
        %v563 = vld [vmem:[%s344 + $0x318] sm:$0xf]
        %v564 = vld [vmem:[%s344 + $0x31c] sm:$0xf]
        %v565 = vld [vmem:[%s344 + $0x320] sm:$0xf]
        %v566 = vld [vmem:[%s344 + $0x324] sm:$0xf]
        %v567 = vld [vmem:[%s344 + $0x328] sm:$0xf]
        %v568 = vld [vmem:[%s344 + $0x32c] sm:$0xf]
        %v569 = vld [vmem:[%s344 + $0x330] sm:$0xf]
        %v570 = vld [vmem:[%s344 + $0x334] sm:$0xf]
        %v571 = vld [vmem:[%s344 + $0x338] sm:$0xf]
        %v572 = vld [vmem:[%s344 + $0x33c] sm:$0xf]
        %v573 = vld [vmem:[%s344 + $0x340] sm:$0xf]
        %v574 = vld [vmem:[%s344 + $0x344] sm:$0xf]
        %v575 = vld [vmem:[%s344 + $0x348] sm:$0xf]
        %v576 = vld [vmem:[%s344 + $0x34c] sm:$0xf]
        %v577 = vld [vmem:[%s344 + $0x350] sm:$0xf]
        %v578 = vld [vmem:[%s344 + $0x354] sm:$0xf]
        %v579 = vld [vmem:[%s344 + $0x358] sm:$0xf]
        %v580 = vld [vmem:[%s344 + $0x35c] sm:$0xf]
        %v581 = vld [vmem:[%s344 + $0x360] sm:$0xf]
        %v582 = vld [vmem:[%s344 + $0x364] sm:$0xf]
        %v583 = vld [vmem:[%s344 + $0x368] sm:$0xf]
        %v584 = vld [vmem:[%s344 + $0x36c] sm:$0xf]
        %v585 = vld [vmem:[%s344 + $0x370] sm:$0xf]
        %v586 = vld [vmem:[%s344 + $0x374] sm:$0xf]
        %v587 = vld [vmem:[%s344 + $0x378] sm:$0xf]
        %v588 = vld [vmem:[%s344 + $0x37c] sm:$0xf]
        %v589 = vld [vmem:[%s344 + $0x380] sm:$0xf]
        %v590 = vld [vmem:[%s344 + $0x384] sm:$0xf]
        %v591 = vld [vmem:[%s344 + $0x388] sm:$0xf]
        %v592 = vld [vmem:[%s344 + $0x38c] sm:$0xf]
        %v593 = vld [vmem:[%s344 + $0x390] sm:$0xf]
        %v594 = vld [vmem:[%s344 + $0x394] sm:$0xf]
        %v595 = vld [vmem:[%s344 + $0x398] sm:$0xf]
        %v596 = vld [vmem:[%s344 + $0x39c] sm:$0xf]
        %v597 = vld [vmem:[%s344 + $0x3a0] sm:$0xf]
        %v598 = vld [vmem:[%s344 + $0x3a4] sm:$0xf]
        %v599 = vld [vmem:[%s344 + $0x3a8] sm:$0xf]
        %v600 = vld [vmem:[%s344 + $0x3ac] sm:$0xf]
        %v601 = vld [vmem:[%s344 + $0x3b0] sm:$0xf]
        %v602 = vld [vmem:[%s344 + $0x3b4] sm:$0xf]
        %v603 = vld [vmem:[%s344 + $0x3b8] sm:$0xf]
        %v604 = vld [vmem:[%s344 + $0x3bc] sm:$0xf]
        %v605 = vld [vmem:[%s344 + $0x3c0] sm:$0xf]
        %v606 = vld [vmem:[%s344 + $0x3c4] sm:$0xf]
        %v607 = vld [vmem:[%s344 + $0x3c8] sm:$0xf]
        %v608 = vld [vmem:[%s344 + $0x3cc] sm:$0xf]
        %v609 = vld [vmem:[%s344 + $0x3d0] sm:$0xf]
        %v610 = vld [vmem:[%s344 + $0x3d4] sm:$0xf]
        %v611 = vld [vmem:[%s344 + $0x3d8] sm:$0xf]
        %v612 = vld [vmem:[%s344 + $0x3dc] sm:$0xf]
        %v613 = vld [vmem:[%s344 + $0x3e0] sm:$0xf]
        %v614 = vld [vmem:[%s344 + $0x3e4] sm:$0xf]
        %v615 = vld [vmem:[%s344 + $0x3e8] sm:$0xf]
        %v616 = vld [vmem:[%s344 + $0x3ec] sm:$0xf]
        %v617 = vld [vmem:[%s344 + $0x3f0] sm:$0xf]
        %v618 = vld [vmem:[%s344 + $0x3f4] sm:$0xf]
        %v619 = vld [vmem:[%s344 + $0x3f8] sm:$0xf]
        %v620 = vld [vmem:[%s344 + $0x3fc] sm:$0xf]
        %v637 = vunpack.c.l.b16 %v349
        %v638 = vunpack.c.l.b16 %v350
        %v639 = vunpack.c.l.b16 %v351
        %v640 = vunpack.c.l.b16 %v352
        %v641 = vunpack.c.l.b16 %v353
        %v642 = vunpack.c.l.b16 %v354
        %v643 = vunpack.c.l.b16 %v355
        %v644 = vunpack.c.l.b16 %v356
        %v645 = vunpack.c.l.b16 %v357
        %v646 = vunpack.c.l.b16 %v358
        %v647 = vunpack.c.l.b16 %v359
        %v648 = vunpack.c.l.b16 %v360
        %v649 = vunpack.c.l.b16 %v361
        %v650 = vunpack.c.l.b16 %v362
        %v651 = vunpack.c.l.b16 %v363
        %v652 = vunpack.c.l.b16 %v364
        %v653 = vpack.c.b16 %v638, %v637
        %v654 = vpack.c.b16 %v640, %v639
        %v655 = vpack.c.b16 %v642, %v641
        %v656 = vpack.c.b16 %v644, %v643
        %v657 = vpack.c.b16 %v646, %v645
        %v658 = vpack.c.b16 %v648, %v647
        %v659 = vpack.c.b16 %v650, %v649
        %v660 = vpack.c.b16 %v652, %v651
        %v917 = vunpack.c.l.b16 %v365
        %v918 = vunpack.c.l.b16 %v366
        %v919 = vunpack.c.l.b16 %v367
        %v920 = vunpack.c.l.b16 %v368
        %v921 = vunpack.c.l.b16 %v369
        %v922 = vunpack.c.l.b16 %v370
        %v923 = vunpack.c.l.b16 %v371
        %v924 = vunpack.c.l.b16 %v372
        %v925 = vunpack.c.l.b16 %v373
        %v926 = vunpack.c.l.b16 %v374
        %v927 = vunpack.c.l.b16 %v375
        %v928 = vunpack.c.l.b16 %v376
        %v929 = vunpack.c.l.b16 %v377
        %v930 = vunpack.c.l.b16 %v378
        %v931 = vunpack.c.l.b16 %v379
        %v932 = vunpack.c.l.b16 %v380
        %v933 = vunpack.c.l.b16 %v381
        %v934 = vunpack.c.l.b16 %v382
        %v935 = vunpack.c.l.b16 %v383
        %v936 = vunpack.c.l.b16 %v384
        %v937 = vunpack.c.l.b16 %v385
        %v938 = vunpack.c.l.b16 %v386
        %v939 = vunpack.c.l.b16 %v387
        %v940 = vunpack.c.l.b16 %v388
        %v941 = vunpack.c.l.b16 %v389
        %v942 = vunpack.c.l.b16 %v390
        %v943 = vunpack.c.l.b16 %v391
        %v944 = vunpack.c.l.b16 %v392
        %v945 = vunpack.c.l.b16 %v393
        %v946 = vunpack.c.l.b16 %v394
        %v947 = vunpack.c.l.b16 %v395
        %v948 = vunpack.c.l.b16 %v396
        %v949 = vunpack.c.l.b16 %v397
        %v950 = vunpack.c.l.b16 %v398
        %v951 = vunpack.c.l.b16 %v399
        %v952 = vunpack.c.l.b16 %v400
        %v953 = vunpack.c.l.b16 %v401
        %v954 = vunpack.c.l.b16 %v402
        %v955 = vunpack.c.l.b16 %v403
        %v956 = vunpack.c.l.b16 %v404
        %v957 = vunpack.c.l.b16 %v405
        %v958 = vunpack.c.l.b16 %v406
        %v959 = vunpack.c.l.b16 %v407
        %v960 = vunpack.c.l.b16 %v408
        %v961 = vunpack.c.l.b16 %v409
        %v962 = vunpack.c.l.b16 %v410
        %v963 = vunpack.c.l.b16 %v411
        %v964 = vunpack.c.l.b16 %v412
        %v965 = vunpack.c.l.b16 %v413
        %v966 = vunpack.c.l.b16 %v414
        %v967 = vunpack.c.l.b16 %v415
        %v968 = vunpack.c.l.b16 %v416
        %v969 = vunpack.c.l.b16 %v417
        %v970 = vunpack.c.l.b16 %v418
        %v971 = vunpack.c.l.b16 %v419
        %v972 = vunpack.c.l.b16 %v420
        %v973 = vunpack.c.l.b16 %v421
        %v974 = vunpack.c.l.b16 %v422
        %v975 = vunpack.c.l.b16 %v423
        %v976 = vunpack.c.l.b16 %v424
        %v977 = vunpack.c.l.b16 %v425
        %v978 = vunpack.c.l.b16 %v426
        %v979 = vunpack.c.l.b16 %v427
        %v980 = vunpack.c.l.b16 %v428
        %v981 = vunpack.c.l.b16 %v429
        %v982 = vunpack.c.l.b16 %v430
        %v983 = vunpack.c.l.b16 %v431
        %v984 = vunpack.c.l.b16 %v432
        %v985 = vunpack.c.l.b16 %v433
        %v986 = vunpack.c.l.b16 %v434
        %v987 = vunpack.c.l.b16 %v435
        %v988 = vunpack.c.l.b16 %v436
        %v989 = vunpack.c.l.b16 %v437
        %v990 = vunpack.c.l.b16 %v438
        %v991 = vunpack.c.l.b16 %v439
        %v992 = vunpack.c.l.b16 %v440
        %v993 = vunpack.c.l.b16 %v441
        %v994 = vunpack.c.l.b16 %v442
        %v995 = vunpack.c.l.b16 %v443
        %v996 = vunpack.c.l.b16 %v444
        %v997 = vunpack.c.l.b16 %v445
        %v998 = vunpack.c.l.b16 %v446
        %v999 = vunpack.c.l.b16 %v447
        %v1000 = vunpack.c.l.b16 %v448
        %v1001 = vunpack.c.l.b16 %v449
        %v1002 = vunpack.c.l.b16 %v450
        %v1003 = vunpack.c.l.b16 %v451
        %v1004 = vunpack.c.l.b16 %v452
        %v1005 = vunpack.c.l.b16 %v453
        %v1006 = vunpack.c.l.b16 %v454
        %v1007 = vunpack.c.l.b16 %v455
        %v1008 = vunpack.c.l.b16 %v456
        %v1009 = vunpack.c.l.b16 %v457
        %v1010 = vunpack.c.l.b16 %v458
        %v1011 = vunpack.c.l.b16 %v459
        %v1012 = vunpack.c.l.b16 %v460
        %v1013 = vunpack.c.l.b16 %v461
        %v1014 = vunpack.c.l.b16 %v462
        %v1015 = vunpack.c.l.b16 %v463
        %v1016 = vunpack.c.l.b16 %v464
        %v1017 = vunpack.c.l.b16 %v465
        %v1018 = vunpack.c.l.b16 %v466
        %v1019 = vunpack.c.l.b16 %v467
        %v1020 = vunpack.c.l.b16 %v468
        %v1021 = vunpack.c.l.b16 %v469
        %v1022 = vunpack.c.l.b16 %v470
        %v1023 = vunpack.c.l.b16 %v471
        %v1024 = vunpack.c.l.b16 %v472
        %v1025 = vunpack.c.l.b16 %v473
        %v1026 = vunpack.c.l.b16 %v474
        %v1027 = vunpack.c.l.b16 %v475
        %v1028 = vunpack.c.l.b16 %v476
        %v1029 = vunpack.c.l.b16 %v477
        %v1030 = vunpack.c.l.b16 %v478
        %v1031 = vunpack.c.l.b16 %v479
        %v1032 = vunpack.c.l.b16 %v480
        %v1033 = vunpack.c.l.b16 %v481
        %v1034 = vunpack.c.l.b16 %v482
        %v1035 = vunpack.c.l.b16 %v483
        %v1036 = vunpack.c.l.b16 %v484
        %v1037 = vunpack.c.l.b16 %v485
        %v1038 = vunpack.c.l.b16 %v486
        %v1039 = vunpack.c.l.b16 %v487
        %v1040 = vunpack.c.l.b16 %v488
        %v1041 = vunpack.c.l.b16 %v489
        %v1042 = vunpack.c.l.b16 %v490
        %v1043 = vunpack.c.l.b16 %v491
        %v1044 = vunpack.c.l.b16 %v492
        %v1045 = vunpack.c.l.b16 %v493
        %v1046 = vunpack.c.l.b16 %v494
        %v1047 = vunpack.c.l.b16 %v495
        %v1048 = vunpack.c.l.b16 %v496
        %v1049 = vunpack.c.l.b16 %v497
        %v1050 = vunpack.c.l.b16 %v498
        %v1051 = vunpack.c.l.b16 %v499
        %v1052 = vunpack.c.l.b16 %v500
        %v1053 = vunpack.c.l.b16 %v501
        %v1054 = vunpack.c.l.b16 %v502
        %v1055 = vunpack.c.l.b16 %v503
        %v1056 = vunpack.c.l.b16 %v504
        %v1057 = vunpack.c.l.b16 %v505
        %v1058 = vunpack.c.l.b16 %v506
        %v1059 = vunpack.c.l.b16 %v507
        %v1060 = vunpack.c.l.b16 %v508
        %v1061 = vunpack.c.l.b16 %v509
        %v1062 = vunpack.c.l.b16 %v510
        %v1063 = vunpack.c.l.b16 %v511
        %v1064 = vunpack.c.l.b16 %v512
        %v1065 = vunpack.c.l.b16 %v513
        %v1066 = vunpack.c.l.b16 %v514
        %v1067 = vunpack.c.l.b16 %v515
        %v1068 = vunpack.c.l.b16 %v516
        %v1069 = vunpack.c.l.b16 %v517
        %v1070 = vunpack.c.l.b16 %v518
        %v1071 = vunpack.c.l.b16 %v519
        %v1072 = vunpack.c.l.b16 %v520
        %v1073 = vunpack.c.l.b16 %v521
        %v1074 = vunpack.c.l.b16 %v522
        %v1075 = vunpack.c.l.b16 %v523
        %v1076 = vunpack.c.l.b16 %v524
        %v1077 = vunpack.c.l.b16 %v525
        %v1078 = vunpack.c.l.b16 %v526
        %v1079 = vunpack.c.l.b16 %v527
        %v1080 = vunpack.c.l.b16 %v528
        %v1081 = vunpack.c.l.b16 %v529
        %v1082 = vunpack.c.l.b16 %v530
        %v1083 = vunpack.c.l.b16 %v531
        %v1084 = vunpack.c.l.b16 %v532
        %v1085 = vunpack.c.l.b16 %v533
        %v1086 = vunpack.c.l.b16 %v534
        %v1087 = vunpack.c.l.b16 %v535
        %v1088 = vunpack.c.l.b16 %v536
        %v1089 = vunpack.c.l.b16 %v537
        %v1090 = vunpack.c.l.b16 %v538
        %v1091 = vunpack.c.l.b16 %v539
        %v1092 = vunpack.c.l.b16 %v540
        %v1093 = vunpack.c.l.b16 %v541
        %v1094 = vunpack.c.l.b16 %v542
        %v1095 = vunpack.c.l.b16 %v543
        %v1096 = vunpack.c.l.b16 %v544
        %v1097 = vunpack.c.l.b16 %v545
        %v1098 = vunpack.c.l.b16 %v546
        %v1099 = vunpack.c.l.b16 %v547
        %v1100 = vunpack.c.l.b16 %v548
        %v1101 = vunpack.c.l.b16 %v549
        %v1102 = vunpack.c.l.b16 %v550
        %v1103 = vunpack.c.l.b16 %v551
        %v1104 = vunpack.c.l.b16 %v552
        %v1105 = vunpack.c.l.b16 %v553
        %v1106 = vunpack.c.l.b16 %v554
        %v1107 = vunpack.c.l.b16 %v555
        %v1108 = vunpack.c.l.b16 %v556
        %v1109 = vunpack.c.l.b16 %v557
        %v1110 = vunpack.c.l.b16 %v558
        %v1111 = vunpack.c.l.b16 %v559
        %v1112 = vunpack.c.l.b16 %v560
        %v1113 = vunpack.c.l.b16 %v561
        %v1114 = vunpack.c.l.b16 %v562
        %v1115 = vunpack.c.l.b16 %v563
        %v1116 = vunpack.c.l.b16 %v564
        %v1117 = vunpack.c.l.b16 %v565
        %v1118 = vunpack.c.l.b16 %v566
        %v1119 = vunpack.c.l.b16 %v567
        %v1120 = vunpack.c.l.b16 %v568
        %v1121 = vunpack.c.l.b16 %v569
        %v1122 = vunpack.c.l.b16 %v570
        %v1123 = vunpack.c.l.b16 %v571
        %v1124 = vunpack.c.l.b16 %v572
        %v1125 = vunpack.c.l.b16 %v573
        %v1126 = vunpack.c.l.b16 %v574
        %v1127 = vunpack.c.l.b16 %v575
        %v1128 = vunpack.c.l.b16 %v576
        %v1129 = vunpack.c.l.b16 %v577
        %v1130 = vunpack.c.l.b16 %v578
        %v1131 = vunpack.c.l.b16 %v579
        %v1132 = vunpack.c.l.b16 %v580
        %v1133 = vunpack.c.l.b16 %v581
        %v1134 = vunpack.c.l.b16 %v582
        %v1135 = vunpack.c.l.b16 %v583
        %v1136 = vunpack.c.l.b16 %v584
        %v1137 = vunpack.c.l.b16 %v585
        %v1138 = vunpack.c.l.b16 %v586
        %v1139 = vunpack.c.l.b16 %v587
        %v1140 = vunpack.c.l.b16 %v588
        %v1141 = vunpack.c.l.b16 %v589
        %v1142 = vunpack.c.l.b16 %v590
        %v1143 = vunpack.c.l.b16 %v591
        %v1144 = vunpack.c.l.b16 %v592
        %v1145 = vunpack.c.l.b16 %v593
        %v1146 = vunpack.c.l.b16 %v594
        %v1147 = vunpack.c.l.b16 %v595
        %v1148 = vunpack.c.l.b16 %v596
        %v1149 = vunpack.c.l.b16 %v597
        %v1150 = vunpack.c.l.b16 %v598
        %v1151 = vunpack.c.l.b16 %v599
        %v1152 = vunpack.c.l.b16 %v600
        %v1153 = vunpack.c.l.b16 %v601
        %v1154 = vunpack.c.l.b16 %v602
        %v1155 = vunpack.c.l.b16 %v603
        %v1156 = vunpack.c.l.b16 %v604
        %v1157 = vunpack.c.l.b16 %v605
        %v1158 = vunpack.c.l.b16 %v606
        %v1159 = vunpack.c.l.b16 %v607
        %v1160 = vunpack.c.l.b16 %v608
        %v1161 = vunpack.c.l.b16 %v609
        %v1162 = vunpack.c.l.b16 %v610
        %v1163 = vunpack.c.l.b16 %v611
        %v1164 = vunpack.c.l.b16 %v612
        %v1165 = vunpack.c.l.b16 %v613
        %v1166 = vunpack.c.l.b16 %v614
        %v1167 = vunpack.c.l.b16 %v615
        %v1168 = vunpack.c.l.b16 %v616
        %v1169 = vunpack.c.l.b16 %v617
        %v1170 = vunpack.c.l.b16 %v618
        %v1171 = vunpack.c.l.b16 %v619
        %v1172 = vunpack.c.l.b16 %v620
        %v1173 = vpack.c.b16 %v918, %v917
        %v1174 = vpack.c.b16 %v920, %v919
        %v1175 = vpack.c.b16 %v922, %v921
        %v1176 = vpack.c.b16 %v924, %v923
        %v1177 = vpack.c.b16 %v926, %v925
        %v1178 = vpack.c.b16 %v928, %v927
        %v1179 = vpack.c.b16 %v930, %v929
        %v1180 = vpack.c.b16 %v932, %v931
        %v1181 = vpack.c.b16 %v934, %v933
        %v1182 = vpack.c.b16 %v936, %v935
        %v1183 = vpack.c.b16 %v938, %v937
        %v1184 = vpack.c.b16 %v940, %v939
        %v1185 = vpack.c.b16 %v942, %v941
        %v1186 = vpack.c.b16 %v944, %v943
        %v1187 = vpack.c.b16 %v946, %v945
        %v1188 = vpack.c.b16 %v948, %v947
        %v1189 = vpack.c.b16 %v950, %v949
        %v1190 = vpack.c.b16 %v952, %v951
        %v1191 = vpack.c.b16 %v954, %v953
        %v1192 = vpack.c.b16 %v956, %v955
        %v1193 = vpack.c.b16 %v958, %v957
        %v1194 = vpack.c.b16 %v960, %v959
        %v1195 = vpack.c.b16 %v962, %v961
        %v1196 = vpack.c.b16 %v964, %v963
        %v1197 = vpack.c.b16 %v966, %v965
        %v1198 = vpack.c.b16 %v968, %v967
        %v1199 = vpack.c.b16 %v970, %v969
        %v1200 = vpack.c.b16 %v972, %v971
        %v1201 = vpack.c.b16 %v974, %v973
        %v1202 = vpack.c.b16 %v976, %v975
        %v1203 = vpack.c.b16 %v978, %v977
        %v1204 = vpack.c.b16 %v980, %v979
        %v1205 = vpack.c.b16 %v982, %v981
        %v1206 = vpack.c.b16 %v984, %v983
        %v1207 = vpack.c.b16 %v986, %v985
        %v1208 = vpack.c.b16 %v988, %v987
        %v1209 = vpack.c.b16 %v990, %v989
        %v1210 = vpack.c.b16 %v992, %v991
        %v1211 = vpack.c.b16 %v994, %v993
        %v1212 = vpack.c.b16 %v996, %v995
        %v1213 = vpack.c.b16 %v998, %v997
        %v1214 = vpack.c.b16 %v1000, %v999
        %v1215 = vpack.c.b16 %v1002, %v1001
        %v1216 = vpack.c.b16 %v1004, %v1003
        %v1217 = vpack.c.b16 %v1006, %v1005
        %v1218 = vpack.c.b16 %v1008, %v1007
        %v1219 = vpack.c.b16 %v1010, %v1009
        %v1220 = vpack.c.b16 %v1012, %v1011
        %v1221 = vpack.c.b16 %v1014, %v1013
        %v1222 = vpack.c.b16 %v1016, %v1015
        %v1223 = vpack.c.b16 %v1018, %v1017
        %v1224 = vpack.c.b16 %v1020, %v1019
        %v1225 = vpack.c.b16 %v1022, %v1021
        %v1226 = vpack.c.b16 %v1024, %v1023
        %v1227 = vpack.c.b16 %v1026, %v1025
        %v1228 = vpack.c.b16 %v1028, %v1027
        %v1229 = vpack.c.b16 %v1030, %v1029
        %v1230 = vpack.c.b16 %v1032, %v1031
        %v1231 = vpack.c.b16 %v1034, %v1033
        %v1232 = vpack.c.b16 %v1036, %v1035
        %v1233 = vpack.c.b16 %v1038, %v1037
        %v1234 = vpack.c.b16 %v1040, %v1039
        %v1235 = vpack.c.b16 %v1042, %v1041
        %v1236 = vpack.c.b16 %v1044, %v1043
        %v1237 = vpack.c.b16 %v1046, %v1045
        %v1238 = vpack.c.b16 %v1048, %v1047
        %v1239 = vpack.c.b16 %v1050, %v1049
        %v1240 = vpack.c.b16 %v1052, %v1051
        %v1241 = vpack.c.b16 %v1054, %v1053
        %v1242 = vpack.c.b16 %v1056, %v1055
        %v1243 = vpack.c.b16 %v1058, %v1057
        %v1244 = vpack.c.b16 %v1060, %v1059
        %v1245 = vpack.c.b16 %v1062, %v1061
        %v1246 = vpack.c.b16 %v1064, %v1063
        %v1247 = vpack.c.b16 %v1066, %v1065
        %v1248 = vpack.c.b16 %v1068, %v1067
        %v1249 = vpack.c.b16 %v1070, %v1069
        %v1250 = vpack.c.b16 %v1072, %v1071
        %v1251 = vpack.c.b16 %v1074, %v1073
        %v1252 = vpack.c.b16 %v1076, %v1075
        %v1253 = vpack.c.b16 %v1078, %v1077
        %v1254 = vpack.c.b16 %v1080, %v1079
        %v1255 = vpack.c.b16 %v1082, %v1081
        %v1256 = vpack.c.b16 %v1084, %v1083
        %v1257 = vpack.c.b16 %v1086, %v1085
        %v1258 = vpack.c.b16 %v1088, %v1087
        %v1259 = vpack.c.b16 %v1090, %v1089
        %v1260 = vpack.c.b16 %v1092, %v1091
        %v1261 = vpack.c.b16 %v1094, %v1093
        %v1262 = vpack.c.b16 %v1096, %v1095
        %v1263 = vpack.c.b16 %v1098, %v1097
        %v1264 = vpack.c.b16 %v1100, %v1099
        %v1265 = vpack.c.b16 %v1102, %v1101
        %v1266 = vpack.c.b16 %v1104, %v1103
        %v1267 = vpack.c.b16 %v1106, %v1105
        %v1268 = vpack.c.b16 %v1108, %v1107
        %v1269 = vpack.c.b16 %v1110, %v1109
        %v1270 = vpack.c.b16 %v1112, %v1111
        %v1271 = vpack.c.b16 %v1114, %v1113
        %v1272 = vpack.c.b16 %v1116, %v1115
        %v1273 = vpack.c.b16 %v1118, %v1117
        %v1274 = vpack.c.b16 %v1120, %v1119
        %v1275 = vpack.c.b16 %v1122, %v1121
        %v1276 = vpack.c.b16 %v1124, %v1123
        %v1277 = vpack.c.b16 %v1126, %v1125
        %v1278 = vpack.c.b16 %v1128, %v1127
        %v1279 = vpack.c.b16 %v1130, %v1129
        %v1280 = vpack.c.b16 %v1132, %v1131
        %v1281 = vpack.c.b16 %v1134, %v1133
        %v1282 = vpack.c.b16 %v1136, %v1135
        %v1283 = vpack.c.b16 %v1138, %v1137
        %v1284 = vpack.c.b16 %v1140, %v1139
        %v1285 = vpack.c.b16 %v1142, %v1141
        %v1286 = vpack.c.b16 %v1144, %v1143
        %v1287 = vpack.c.b16 %v1146, %v1145
        %v1288 = vpack.c.b16 %v1148, %v1147
        %v1289 = vpack.c.b16 %v1150, %v1149
        %v1290 = vpack.c.b16 %v1152, %v1151
        %v1291 = vpack.c.b16 %v1154, %v1153
        %v1292 = vpack.c.b16 %v1156, %v1155
        %v1293 = vpack.c.b16 %v1158, %v1157
        %v1294 = vpack.c.b16 %v1160, %v1159
        %v1295 = vpack.c.b16 %v1162, %v1161
        %v1296 = vpack.c.b16 %v1164, %v1163
        %v1297 = vpack.c.b16 %v1166, %v1165
        %v1298 = vpack.c.b16 %v1168, %v1167
        %v1299 = vpack.c.b16 %v1170, %v1169
        %v1300 = vpack.c.b16 %v1172, %v1171
        %vm1301 = vcmask 261120
        %v1303 = vsel %vm1301, %v653, 0
        %v1306 = vsel %vm1301, %v654, 0
        %v1309 = vsel %vm1301, %v655, 0
        %v1312 = vsel %vm1301, %v656, 0
        %v1315 = vsel %vm1301, %v657, 0
        %v1318 = vsel %vm1301, %v658, 0
        %v1321 = vsel %vm1301, %v659, 0
        %v1324 = vsel %vm1301, %v660, 0
        %v1327 = vsel %vm1301, %v1173, 0
        %v1330 = vsel %vm1301, %v1174, 0
        %v1333 = vsel %vm1301, %v1175, 0
        %v1336 = vsel %vm1301, %v1176, 0
        %v1339 = vsel %vm1301, %v1177, 0
        %v1342 = vsel %vm1301, %v1178, 0
        %v1345 = vsel %vm1301, %v1179, 0
        %v1348 = vsel %vm1301, %v1180, 0
        %v1351 = vsel %vm1301, %v1181, 0
        %v1354 = vsel %vm1301, %v1182, 0
        %v1357 = vsel %vm1301, %v1183, 0
        %v1360 = vsel %vm1301, %v1184, 0
        %v1363 = vsel %vm1301, %v1185, 0
        %v1366 = vsel %vm1301, %v1186, 0
        %v1369 = vsel %vm1301, %v1187, 0
        %v1372 = vsel %vm1301, %v1188, 0
        %v1375 = vsel %vm1301, %v1189, 0
        %v1378 = vsel %vm1301, %v1190, 0
        %v1381 = vsel %vm1301, %v1191, 0
        %v1384 = vsel %vm1301, %v1192, 0
        %v1387 = vsel %vm1301, %v1193, 0
        %v1390 = vsel %vm1301, %v1194, 0
        %v1393 = vsel %vm1301, %v1195, 0
        %v1396 = vsel %vm1301, %v1196, 0
        %v1399 = vsel %vm1301, %v1197, 0
        %v1402 = vsel %vm1301, %v1198, 0
        %v1405 = vsel %vm1301, %v1199, 0
        %v1408 = vsel %vm1301, %v1200, 0
        %v1411 = vsel %vm1301, %v1201, 0
        %v1414 = vsel %vm1301, %v1202, 0
        %v1417 = vsel %vm1301, %v1203, 0
        %v1420 = vsel %vm1301, %v1204, 0
        %v1423 = vsel %vm1301, %v1205, 0
        %v1426 = vsel %vm1301, %v1206, 0
        %v1429 = vsel %vm1301, %v1207, 0
        %v1432 = vsel %vm1301, %v1208, 0
        %v1435 = vsel %vm1301, %v1209, 0
        %v1438 = vsel %vm1301, %v1210, 0
        %v1441 = vsel %vm1301, %v1211, 0
        %v1444 = vsel %vm1301, %v1212, 0
        %v1447 = vsel %vm1301, %v1213, 0
        %v1450 = vsel %vm1301, %v1214, 0
        %v1453 = vsel %vm1301, %v1215, 0
        %v1456 = vsel %vm1301, %v1216, 0
        %v1459 = vsel %vm1301, %v1217, 0
        %v1462 = vsel %vm1301, %v1218, 0
        %v1465 = vsel %vm1301, %v1219, 0
        %v1468 = vsel %vm1301, %v1220, 0
        %v1471 = vsel %vm1301, %v1221, 0
        %v1474 = vsel %vm1301, %v1222, 0
        %v1477 = vsel %vm1301, %v1223, 0
        %v1480 = vsel %vm1301, %v1224, 0
        %v1483 = vsel %vm1301, %v1225, 0
        %v1486 = vsel %vm1301, %v1226, 0
        %v1489 = vsel %vm1301, %v1227, 0
        %v1492 = vsel %vm1301, %v1228, 0
        %v1495 = vsel %vm1301, %v1229, 0
        %v1498 = vsel %vm1301, %v1230, 0
        %v1501 = vsel %vm1301, %v1231, 0
        %v1504 = vsel %vm1301, %v1232, 0
        %v1507 = vsel %vm1301, %v1233, 0
        %v1510 = vsel %vm1301, %v1234, 0
        %v1513 = vsel %vm1301, %v1235, 0
        %v1516 = vsel %vm1301, %v1236, 0
        %v1519 = vsel %vm1301, %v1237, 0
        %v1522 = vsel %vm1301, %v1238, 0
        %v1525 = vsel %vm1301, %v1239, 0
        %v1528 = vsel %vm1301, %v1240, 0
        %v1531 = vsel %vm1301, %v1241, 0
        %v1534 = vsel %vm1301, %v1242, 0
        %v1537 = vsel %vm1301, %v1243, 0
        %v1540 = vsel %vm1301, %v1244, 0
        %v1543 = vsel %vm1301, %v1245, 0
        %v1546 = vsel %vm1301, %v1246, 0
        %v1549 = vsel %vm1301, %v1247, 0
        %v1552 = vsel %vm1301, %v1248, 0
        %v1555 = vsel %vm1301, %v1249, 0
        %v1558 = vsel %vm1301, %v1250, 0
        %v1561 = vsel %vm1301, %v1251, 0
        %v1564 = vsel %vm1301, %v1252, 0
        %v1567 = vsel %vm1301, %v1253, 0
        %v1570 = vsel %vm1301, %v1254, 0
        %v1573 = vsel %vm1301, %v1255, 0
        %v1576 = vsel %vm1301, %v1256, 0
        %v1579 = vsel %vm1301, %v1257, 0
        %v1582 = vsel %vm1301, %v1258, 0
        %v1585 = vsel %vm1301, %v1259, 0
        %v1588 = vsel %vm1301, %v1260, 0
        %v1591 = vsel %vm1301, %v1261, 0
        %v1594 = vsel %vm1301, %v1262, 0
        %v1597 = vsel %vm1301, %v1263, 0
        %v1600 = vsel %vm1301, %v1264, 0
        %v1603 = vsel %vm1301, %v1265, 0
        %v1606 = vsel %vm1301, %v1266, 0
        %v1609 = vsel %vm1301, %v1267, 0
        %v1612 = vsel %vm1301, %v1268, 0
        %v1615 = vsel %vm1301, %v1269, 0
        %v1618 = vsel %vm1301, %v1270, 0
        %v1621 = vsel %vm1301, %v1271, 0
        %v1624 = vsel %vm1301, %v1272, 0
        %v1627 = vsel %vm1301, %v1273, 0
        %v1630 = vsel %vm1301, %v1274, 0
        %v1633 = vsel %vm1301, %v1275, 0
        %v1636 = vsel %vm1301, %v1276, 0
        %v1639 = vsel %vm1301, %v1277, 0
        %v1642 = vsel %vm1301, %v1278, 0
        %v1645 = vsel %vm1301, %v1279, 0
        %v1648 = vsel %vm1301, %v1280, 0
        %v1651 = vsel %vm1301, %v1281, 0
        %v1654 = vsel %vm1301, %v1282, 0
        %v1657 = vsel %vm1301, %v1283, 0
        %v1660 = vsel %vm1301, %v1284, 0
        %v1663 = vsel %vm1301, %v1285, 0
        %v1666 = vsel %vm1301, %v1286, 0
        %v1669 = vsel %vm1301, %v1287, 0
        %v1672 = vsel %vm1301, %v1288, 0
        %v1675 = vsel %vm1301, %v1289, 0
        %v1678 = vsel %vm1301, %v1290, 0
        %v1681 = vsel %vm1301, %v1291, 0
        %v1684 = vsel %vm1301, %v1292, 0
        %v1687 = vsel %vm1301, %v1293, 0
        %v1690 = vsel %vm1301, %v1294, 0
        %v1693 = vsel %vm1301, %v1295, 0
        %v1696 = vsel %vm1301, %v1296, 0
        %v1699 = vsel %vm1301, %v1297, 0
        %v1702 = vsel %vm1301, %v1298, 0
        %v1705 = vsel %vm1301, %v1299, 0
        %v1708 = vsel %vm1301, %v1300, 0
        %1710 = vmatprep.subr.bf16.mxu0 0
        %1711 = vmatpush1.bf16.xpose.msra.mxu0 %v1327
        %1712 = vmatprep.subr.bf16.mxu0 0
        %1713 = vmatpush1.bf16.xpose.msra.mxu0 %v1330
        %1714 = vmatprep.subr.bf16.mxu0 0
        %1715 = vmatpush1.bf16.xpose.msra.mxu0 %v1333
        %1716 = vmatprep.subr.bf16.mxu0 0
        %1717 = vmatpush1.bf16.xpose.msra.mxu0 %v1336
        %1718 = vmatprep.subr.bf16.mxu0 0
        %1719 = vmatpush1.bf16.xpose.msra.mxu0 %v1339
        %1720 = vmatprep.subr.bf16.mxu0 0
        %1721 = vmatpush1.bf16.xpose.msra.mxu0 %v1342
        %1722 = vmatprep.subr.bf16.mxu0 0
        %1723 = vmatpush1.bf16.xpose.msra.mxu0 %v1345
        %1724 = vmatprep.subr.bf16.mxu0 0
        %1725 = vmatpush1.bf16.xpose.msra.mxu0 %v1348
        %1726 = vmatprep.subr.bf16.mxu0 0
        %1727 = vmatpush1.bf16.xpose.msra.mxu0 %v1351
        %1728 = vmatprep.subr.bf16.mxu0 0
        %1729 = vmatpush1.bf16.xpose.msra.mxu0 %v1354
        %1730 = vmatprep.subr.bf16.mxu0 0
        %1731 = vmatpush1.bf16.xpose.msra.mxu0 %v1357
        %1732 = vmatprep.subr.bf16.mxu0 0
        %1733 = vmatpush1.bf16.xpose.msra.mxu0 %v1360
        %1734 = vmatprep.subr.bf16.mxu0 0
        %1735 = vmatpush1.bf16.xpose.msra.mxu0 %v1363
        %1736 = vmatprep.subr.bf16.mxu0 0
        %1737 = vmatpush1.bf16.xpose.msra.mxu0 %v1366
        %1738 = vmatprep.subr.bf16.mxu0 0
        %1739 = vmatpush1.bf16.xpose.msra.mxu0 %v1369
        %1740 = vmatprep.subr.bf16.mxu0 0
        %1741 = vmatpush1.bf16.xpose.msra.mxu0 %v1372
        %1742 = vmatprep.mubr.bf16.mxu0 0
        %1743 = vmatmul.mubr.bf16.gmra.mrb[0].mxu0 %v1303
        %v1744 = vpop.f32.mrb[0].mxu0
        %v1745 = vadd.f32 0.0, %v1744
        %v1746 = vpop.f32.mrb[0].mxu0
        %v1747 = vadd.f32 0.0, %v1746
        %v1748 = vpop.f32.mrb[0].mxu0
        %v1749 = vadd.f32 0.0, %v1748
        %v1750 = vpop.f32.mrb[0].mxu0
        %v1751 = vadd.f32 0.0, %v1750
        %1752 = vmatprep.mubr.bf16.mxu0 0
        %1753 = vmatmul.mubr.bf16.gmra.mrb[0].mxu0 %v1306
        %v1754 = vpop.f32.mrb[0].mxu0
        %v1755 = vadd.f32 0.0, %v1754
        %v1756 = vpop.f32.mrb[0].mxu0
        %v1757 = vadd.f32 0.0, %v1756
        %v1758 = vpop.f32.mrb[0].mxu0
        %v1759 = vadd.f32 0.0, %v1758
        %v1760 = vpop.f32.mrb[0].mxu0
        %v1761 = vadd.f32 0.0, %v1760
        %1762 = vmatprep.mubr.bf16.mxu0 0
        %1763 = vmatmul.mubr.bf16.gmra.mrb[0].mxu0 %v1309
        %v1764 = vpop.f32.mrb[0].mxu0
        %v1765 = vadd.f32 0.0, %v1764
        %v1766 = vpop.f32.mrb[0].mxu0
        %v1767 = vadd.f32 0.0, %v1766
        %v1768 = vpop.f32.mrb[0].mxu0
        %v1769 = vadd.f32 0.0, %v1768
        %v1770 = vpop.f32.mrb[0].mxu0
        %v1771 = vadd.f32 0.0, %v1770
        %1772 = vmatprep.mubr.bf16.mxu0 0
        %1773 = vmatmul.mubr.bf16.gmra.mrb[0].mxu0 %v1312
        %v1774 = vpop.f32.mrb[0].mxu0
        %v1775 = vadd.f32 0.0, %v1774
        %v1776 = vpop.f32.mrb[0].mxu0
        %v1777 = vadd.f32 0.0, %v1776
        %v1778 = vpop.f32.mrb[0].mxu0
        %v1779 = vadd.f32 0.0, %v1778
        %v1780 = vpop.f32.mrb[0].mxu0
        %v1781 = vadd.f32 0.0, %v1780
        %1782 = vmatprep.mubr.bf16.mxu0 0
        %1783 = vmatmul.mubr.bf16.gmra.mrb[0].mxu0 %v1315
        %v1784 = vpop.f32.mrb[0].mxu0
        %v1785 = vadd.f32 0.0, %v1784
        %v1786 = vpop.f32.mrb[0].mxu0
        %v1787 = vadd.f32 0.0, %v1786
        %v1788 = vpop.f32.mrb[0].mxu0
        %v1789 = vadd.f32 0.0, %v1788
        %v1790 = vpop.f32.mrb[0].mxu0
        %v1791 = vadd.f32 0.0, %v1790
        %1792 = vmatprep.mubr.bf16.mxu0 0
        %1793 = vmatmul.mubr.bf16.gmra.mrb[0].mxu0 %v1318
        %v1794 = vpop.f32.mrb[0].mxu0
        %v1795 = vadd.f32 0.0, %v1794
        %v1796 = vpop.f32.mrb[0].mxu0
        %v1797 = vadd.f32 0.0, %v1796
        %v1798 = vpop.f32.mrb[0].mxu0
        %v1799 = vadd.f32 0.0, %v1798
        %v1800 = vpop.f32.mrb[0].mxu0
        %v1801 = vadd.f32 0.0, %v1800
        %1802 = vmatprep.mubr.bf16.mxu0 0
        %1803 = vmatmul.mubr.bf16.gmra.mrb[0].mxu0 %v1321
        %v1804 = vpop.f32.mrb[0].mxu0
        %v1805 = vadd.f32 0.0, %v1804
        %v1806 = vpop.f32.mrb[0].mxu0
        %v1807 = vadd.f32 0.0, %v1806
        %v1808 = vpop.f32.mrb[0].mxu0
        %v1809 = vadd.f32 0.0, %v1808
        %v1810 = vpop.f32.mrb[0].mxu0
        %v1811 = vadd.f32 0.0, %v1810
        %1812 = vmatprep.mubr.bf16.mxu0 0
        %1813 = vmatmul.mubr.bf16.gmra.mrb[0].mxu0 %v1324
        %v1814 = vpop.f32.mrb[0].mxu0
        %v1815 = vadd.f32 0.0, %v1814
        %v1816 = vpop.f32.mrb[0].mxu0
        %v1817 = vadd.f32 0.0, %v1816
        %v1818 = vpop.f32.mrb[0].mxu0
        %v1819 = vadd.f32 0.0, %v1818
        %v1820 = vpop.f32.mrb[0].mxu0
        %v1821 = vadd.f32 0.0, %v1820
        %1822 = vdwg.mxu0
        %1823 = vmatprep.subr.bf16.mxu0 0
        %1824 = vmatpush1.bf16.xpose.msra.mxu0 %v1375
        %1825 = vmatprep.subr.bf16.mxu0 0
        %1826 = vmatpush1.bf16.xpose.msra.mxu0 %v1378
        %1827 = vmatprep.subr.bf16.mxu0 0
        %1828 = vmatpush1.bf16.xpose.msra.mxu0 %v1381
        %1829 = vmatprep.subr.bf16.mxu0 0
        %1830 = vmatpush1.bf16.xpose.msra.mxu0 %v1384
        %1831 = vmatprep.subr.bf16.mxu0 0
        %1832 = vmatpush1.bf16.xpose.msra.mxu0 %v1387
        %1833 = vmatprep.subr.bf16.mxu0 0
        %1834 = vmatpush1.bf16.xpose.msra.mxu0 %v1390
        %1835 = vmatprep.subr.bf16.mxu0 0
        %1836 = vmatpush1.bf16.xpose.msra.mxu0 %v1393
        %1837 = vmatprep.subr.bf16.mxu0 0
        %1838 = vmatpush1.bf16.xpose.msra.mxu0 %v1396
        %1839 = vmatprep.subr.bf16.mxu0 0
        %1840 = vmatpush1.bf16.xpose.msra.mxu0 %v1399
        %1841 = vmatprep.subr.bf16.mxu0 0
        %1842 = vmatpush1.bf16.xpose.msra.mxu0 %v1402
        %1843 = vmatprep.subr.bf16.mxu0 0
        %1844 = vmatpush1.bf16.xpose.msra.mxu0 %v1405
        %1845 = vmatprep.subr.bf16.mxu0 0
        %1846 = vmatpush1.bf16.xpose.msra.mxu0 %v1408
        %1847 = vmatprep.subr.bf16.mxu0 0
        %1848 = vmatpush1.bf16.xpose.msra.mxu0 %v1411
        %1849 = vmatprep.subr.bf16.mxu0 0
        %1850 = vmatpush1.bf16.xpose.msra.mxu0 %v1414
        %1851 = vmatprep.subr.bf16.mxu0 0
        %1852 = vmatpush1.bf16.xpose.msra.mxu0 %v1417
        %1853 = vmatprep.subr.bf16.mxu0 0
        %1854 = vmatpush1.bf16.xpose.msra.mxu0 %v1420
        %1855 = vmatprep.mubr.bf16.mxu0 0
        %1856 = vmatmul.mubr.bf16.gmra.mrb[0].mxu0 %v1303
        %v1857 = vpop.f32.mrb[0].mxu0
        %v1858 = vadd.f32 0.0, %v1857
        %v1859 = vpop.f32.mrb[0].mxu0
        %v1860 = vadd.f32 0.0, %v1859
        %v1861 = vpop.f32.mrb[0].mxu0
        %v1862 = vadd.f32 0.0, %v1861
        %v1863 = vpop.f32.mrb[0].mxu0
        %v1864 = vadd.f32 0.0, %v1863
        %1865 = vmatprep.mubr.bf16.mxu0 0
        %1866 = vmatmul.mubr.bf16.gmra.mrb[0].mxu0 %v1306
        %v1867 = vpop.f32.mrb[0].mxu0
        %v1868 = vadd.f32 0.0, %v1867
        %v1869 = vpop.f32.mrb[0].mxu0
        %v1870 = vadd.f32 0.0, %v1869
        %v1871 = vpop.f32.mrb[0].mxu0
        %v1872 = vadd.f32 0.0, %v1871
        %v1873 = vpop.f32.mrb[0].mxu0
        %v1874 = vadd.f32 0.0, %v1873
        %1875 = vmatprep.mubr.bf16.mxu0 0
        %1876 = vmatmul.mubr.bf16.gmra.mrb[0].mxu0 %v1309
        %v1877 = vpop.f32.mrb[0].mxu0
        %v1878 = vadd.f32 0.0, %v1877
        %v1879 = vpop.f32.mrb[0].mxu0
        %v1880 = vadd.f32 0.0, %v1879
        %v1881 = vpop.f32.mrb[0].mxu0
        %v1882 = vadd.f32 0.0, %v1881
        %v1883 = vpop.f32.mrb[0].mxu0
        %v1884 = vadd.f32 0.0, %v1883
        %1885 = vmatprep.mubr.bf16.mxu0 0
        %1886 = vmatmul.mubr.bf16.gmra.mrb[0].mxu0 %v1312
        %v1887 = vpop.f32.mrb[0].mxu0
        %v1888 = vadd.f32 0.0, %v1887
        %v1889 = vpop.f32.mrb[0].mxu0
        %v1890 = vadd.f32 0.0, %v1889
        %v1891 = vpop.f32.mrb[0].mxu0
        %v1892 = vadd.f32 0.0, %v1891
        %v1893 = vpop.f32.mrb[0].mxu0
        %v1894 = vadd.f32 0.0, %v1893
        %1895 = vmatprep.mubr.bf16.mxu0 0
        %1896 = vmatmul.mubr.bf16.gmra.mrb[0].mxu0 %v1315
        %v1897 = vpop.f32.mrb[0].mxu0
        %v1898 = vadd.f32 0.0, %v1897
        %v1899 = vpop.f32.mrb[0].mxu0
        %v1900 = vadd.f32 0.0, %v1899
        %v1901 = vpop.f32.mrb[0].mxu0
        %v1902 = vadd.f32 0.0, %v1901
        %v1903 = vpop.f32.mrb[0].mxu0
        %v1904 = vadd.f32 0.0, %v1903
        %1905 = vmatprep.mubr.bf16.mxu0 0
        %1906 = vmatmul.mubr.bf16.gmra.mrb[0].mxu0 %v1318
        %v1907 = vpop.f32.mrb[0].mxu0
        %v1908 = vadd.f32 0.0, %v1907
        %v1909 = vpop.f32.mrb[0].mxu0
        %v1910 = vadd.f32 0.0, %v1909
        %v1911 = vpop.f32.mrb[0].mxu0
        %v1912 = vadd.f32 0.0, %v1911
        %v1913 = vpop.f32.mrb[0].mxu0
        %v1914 = vadd.f32 0.0, %v1913
        %1915 = vmatprep.mubr.bf16.mxu0 0
        %1916 = vmatmul.mubr.bf16.gmra.mrb[0].mxu0 %v1321
        %v1917 = vpop.f32.mrb[0].mxu0
        %v1918 = vadd.f32 0.0, %v1917
        %v1919 = vpop.f32.mrb[0].mxu0
        %v1920 = vadd.f32 0.0, %v1919
        %v1921 = vpop.f32.mrb[0].mxu0
        %v1922 = vadd.f32 0.0, %v1921
        %v1923 = vpop.f32.mrb[0].mxu0
        %v1924 = vadd.f32 0.0, %v1923
        %1925 = vmatprep.mubr.bf16.mxu0 0
        %1926 = vmatmul.mubr.bf16.gmra.mrb[0].mxu0 %v1324
        %v1927 = vpop.f32.mrb[0].mxu0
        %v1928 = vadd.f32 0.0, %v1927
        %v1929 = vpop.f32.mrb[0].mxu0
        %v1930 = vadd.f32 0.0, %v1929
        %v1931 = vpop.f32.mrb[0].mxu0
        %v1932 = vadd.f32 0.0, %v1931
        %v1933 = vpop.f32.mrb[0].mxu0
        %v1934 = vadd.f32 0.0, %v1933
        %1935 = vdwg.mxu0
        %1936 = vmatprep.subr.bf16.mxu0 0
        %1937 = vmatpush1.bf16.xpose.msra.mxu0 %v1423
        %1938 = vmatprep.subr.bf16.mxu0 0
        %1939 = vmatpush1.bf16.xpose.msra.mxu0 %v1426
        %1940 = vmatprep.subr.bf16.mxu0 0
        %1941 = vmatpush1.bf16.xpose.msra.mxu0 %v1429
        %1942 = vmatprep.subr.bf16.mxu0 0
        %1943 = vmatpush1.bf16.xpose.msra.mxu0 %v1432
        %1944 = vmatprep.subr.bf16.mxu0 0
        %1945 = vmatpush1.bf16.xpose.msra.mxu0 %v1435
        %1946 = vmatprep.subr.bf16.mxu0 0
        %1947 = vmatpush1.bf16.xpose.msra.mxu0 %v1438
        %1948 = vmatprep.subr.bf16.mxu0 0
        %1949 = vmatpush1.bf16.xpose.msra.mxu0 %v1441
        %1950 = vmatprep.subr.bf16.mxu0 0
        %1951 = vmatpush1.bf16.xpose.msra.mxu0 %v1444
        %1952 = vmatprep.subr.bf16.mxu0 0
        %1953 = vmatpush1.bf16.xpose.msra.mxu0 %v1447
        %1954 = vmatprep.subr.bf16.mxu0 0
        %1955 = vmatpush1.bf16.xpose.msra.mxu0 %v1450
        %1956 = vmatprep.subr.bf16.mxu0 0
        %1957 = vmatpush1.bf16.xpose.msra.mxu0 %v1453
        %1958 = vmatprep.subr.bf16.mxu0 0
        %1959 = vmatpush1.bf16.xpose.msra.mxu0 %v1456
        %1960 = vmatprep.subr.bf16.mxu0 0
        %1961 = vmatpush1.bf16.xpose.msra.mxu0 %v1459
        %1962 = vmatprep.subr.bf16.mxu0 0
        %1963 = vmatpush1.bf16.xpose.msra.mxu0 %v1462
        %1964 = vmatprep.subr.bf16.mxu0 0
        %1965 = vmatpush1.bf16.xpose.msra.mxu0 %v1465
        %1966 = vmatprep.subr.bf16.mxu0 0
        %1967 = vmatpush1.bf16.xpose.msra.mxu0 %v1468
        %1968 = vmatprep.mubr.bf16.mxu0 0
        %1969 = vmatmul.mubr.bf16.gmra.mrb[0].mxu0 %v1303
        %v1970 = vpop.f32.mrb[0].mxu0
        %v1971 = vadd.f32 0.0, %v1970
        %v1972 = vpop.f32.mrb[0].mxu0
        %v1973 = vadd.f32 0.0, %v1972
        %v1974 = vpop.f32.mrb[0].mxu0
        %v1975 = vadd.f32 0.0, %v1974
        %v1976 = vpop.f32.mrb[0].mxu0
        %v1977 = vadd.f32 0.0, %v1976
        %1978 = vmatprep.mubr.bf16.mxu0 0
        %1979 = vmatmul.mubr.bf16.gmra.mrb[0].mxu0 %v1306
        %v1980 = vpop.f32.mrb[0].mxu0
        %v1981 = vadd.f32 0.0, %v1980
        %v1982 = vpop.f32.mrb[0].mxu0
        %v1983 = vadd.f32 0.0, %v1982
        %v1984 = vpop.f32.mrb[0].mxu0
        %v1985 = vadd.f32 0.0, %v1984
        %v1986 = vpop.f32.mrb[0].mxu0
        %v1987 = vadd.f32 0.0, %v1986
        %1988 = vmatprep.mubr.bf16.mxu0 0
        %1989 = vmatmul.mubr.bf16.gmra.mrb[0].mxu0 %v1309
        %v1990 = vpop.f32.mrb[0].mxu0
        %v1991 = vadd.f32 0.0, %v1990
        %v1992 = vpop.f32.mrb[0].mxu0
        %v1993 = vadd.f32 0.0, %v1992
        %v1994 = vpop.f32.mrb[0].mxu0
        %v1995 = vadd.f32 0.0, %v1994
        %v1996 = vpop.f32.mrb[0].mxu0
        %v1997 = vadd.f32 0.0, %v1996
        %1998 = vmatprep.mubr.bf16.mxu0 0
        %1999 = vmatmul.mubr.bf16.gmra.mrb[0].mxu0 %v1312
        %v2000 = vpop.f32.mrb[0].mxu0
        %v2001 = vadd.f32 0.0, %v2000
        %v2002 = vpop.f32.mrb[0].mxu0
        %v2003 = vadd.f32 0.0, %v2002
        %v2004 = vpop.f32.mrb[0].mxu0
        %v2005 = vadd.f32 0.0, %v2004
        %v2006 = vpop.f32.mrb[0].mxu0
        %v2007 = vadd.f32 0.0, %v2006
        %2008 = vmatprep.mubr.bf16.mxu0 0
        %2009 = vmatmul.mubr.bf16.gmra.mrb[0].mxu0 %v1315
        %v2010 = vpop.f32.mrb[0].mxu0
        %v2011 = vadd.f32 0.0, %v2010
        %v2012 = vpop.f32.mrb[0].mxu0
        %v2013 = vadd.f32 0.0, %v2012
        %v2014 = vpop.f32.mrb[0].mxu0
        %v2015 = vadd.f32 0.0, %v2014
        %v2016 = vpop.f32.mrb[0].mxu0
        %v2017 = vadd.f32 0.0, %v2016
        %2018 = vmatprep.mubr.bf16.mxu0 0
        %2019 = vmatmul.mubr.bf16.gmra.mrb[0].mxu0 %v1318
        %v2020 = vpop.f32.mrb[0].mxu0
        %v2021 = vadd.f32 0.0, %v2020
        %v2022 = vpop.f32.mrb[0].mxu0
        %v2023 = vadd.f32 0.0, %v2022
        %v2024 = vpop.f32.mrb[0].mxu0
        %v2025 = vadd.f32 0.0, %v2024
        %v2026 = vpop.f32.mrb[0].mxu0
        %v2027 = vadd.f32 0.0, %v2026
        %2028 = vmatprep.mubr.bf16.mxu0 0
        %2029 = vmatmul.mubr.bf16.gmra.mrb[0].mxu0 %v1321
        %v2030 = vpop.f32.mrb[0].mxu0
        %v2031 = vadd.f32 0.0, %v2030
        %v2032 = vpop.f32.mrb[0].mxu0
        %v2033 = vadd.f32 0.0, %v2032
        %v2034 = vpop.f32.mrb[0].mxu0
        %v2035 = vadd.f32 0.0, %v2034
        %v2036 = vpop.f32.mrb[0].mxu0
        %v2037 = vadd.f32 0.0, %v2036
        %2038 = vmatprep.mubr.bf16.mxu0 0
        %2039 = vmatmul.mubr.bf16.gmra.mrb[0].mxu0 %v1324
        %v2040 = vpop.f32.mrb[0].mxu0
        %v2041 = vadd.f32 0.0, %v2040
        %v2042 = vpop.f32.mrb[0].mxu0
        %v2043 = vadd.f32 0.0, %v2042
        %v2044 = vpop.f32.mrb[0].mxu0
        %v2045 = vadd.f32 0.0, %v2044
        %v2046 = vpop.f32.mrb[0].mxu0
        %v2047 = vadd.f32 0.0, %v2046
        %2048 = vdwg.mxu0
        %2049 = vmatprep.subr.bf16.mxu0 0
        %2050 = vmatpush1.bf16.xpose.msra.mxu0 %v1471
        %2051 = vmatprep.subr.bf16.mxu0 0
        %2052 = vmatpush1.bf16.xpose.msra.mxu0 %v1474
        %2053 = vmatprep.subr.bf16.mxu0 0
        %2054 = vmatpush1.bf16.xpose.msra.mxu0 %v1477
        %2055 = vmatprep.subr.bf16.mxu0 0
        %2056 = vmatpush1.bf16.xpose.msra.mxu0 %v1480
        %2057 = vmatprep.subr.bf16.mxu0 0
        %2058 = vmatpush1.bf16.xpose.msra.mxu0 %v1483
        %2059 = vmatprep.subr.bf16.mxu0 0
        %2060 = vmatpush1.bf16.xpose.msra.mxu0 %v1486
        %2061 = vmatprep.subr.bf16.mxu0 0
        %2062 = vmatpush1.bf16.xpose.msra.mxu0 %v1489
        %2063 = vmatprep.subr.bf16.mxu0 0
        %2064 = vmatpush1.bf16.xpose.msra.mxu0 %v1492
        %2065 = vmatprep.subr.bf16.mxu0 0
        %2066 = vmatpush1.bf16.xpose.msra.mxu0 %v1495
        %2067 = vmatprep.subr.bf16.mxu0 0
        %2068 = vmatpush1.bf16.xpose.msra.mxu0 %v1498
        %2069 = vmatprep.subr.bf16.mxu0 0
        %2070 = vmatpush1.bf16.xpose.msra.mxu0 %v1501
        %2071 = vmatprep.subr.bf16.mxu0 0
        %2072 = vmatpush1.bf16.xpose.msra.mxu0 %v1504
        %2073 = vmatprep.subr.bf16.mxu0 0
        %2074 = vmatpush1.bf16.xpose.msra.mxu0 %v1507
        %2075 = vmatprep.subr.bf16.mxu0 0
        %2076 = vmatpush1.bf16.xpose.msra.mxu0 %v1510
        %2077 = vmatprep.subr.bf16.mxu0 0
        %2078 = vmatpush1.bf16.xpose.msra.mxu0 %v1513
        %2079 = vmatprep.subr.bf16.mxu0 0
        %2080 = vmatpush1.bf16.xpose.msra.mxu0 %v1516
        %2081 = vmatprep.mubr.bf16.mxu0 0
        %2082 = vmatmul.mubr.bf16.gmra.mrb[0].mxu0 %v1303
        %v2083 = vpop.f32.mrb[0].mxu0
        %v2084 = vadd.f32 0.0, %v2083
        %v2085 = vpop.f32.mrb[0].mxu0
        %v2086 = vadd.f32 0.0, %v2085
        %v2087 = vpop.f32.mrb[0].mxu0
        %v2088 = vadd.f32 0.0, %v2087
        %v2089 = vpop.f32.mrb[0].mxu0
        %v2090 = vadd.f32 0.0, %v2089
        %2091 = vmatprep.mubr.bf16.mxu0 0
        %2092 = vmatmul.mubr.bf16.gmra.mrb[0].mxu0 %v1306
        %v2093 = vpop.f32.mrb[0].mxu0
        %v2094 = vadd.f32 0.0, %v2093
        %v2095 = vpop.f32.mrb[0].mxu0
        %v2096 = vadd.f32 0.0, %v2095
        %v2097 = vpop.f32.mrb[0].mxu0
        %v2098 = vadd.f32 0.0, %v2097
        %v2099 = vpop.f32.mrb[0].mxu0
        %v2100 = vadd.f32 0.0, %v2099
        %2101 = vmatprep.mubr.bf16.mxu0 0
        %2102 = vmatmul.mubr.bf16.gmra.mrb[0].mxu0 %v1309
        %v2103 = vpop.f32.mrb[0].mxu0
        %v2104 = vadd.f32 0.0, %v2103
        %v2105 = vpop.f32.mrb[0].mxu0
        %v2106 = vadd.f32 0.0, %v2105
        %v2107 = vpop.f32.mrb[0].mxu0
        %v2108 = vadd.f32 0.0, %v2107
        %v2109 = vpop.f32.mrb[0].mxu0
        %v2110 = vadd.f32 0.0, %v2109
        %2111 = vmatprep.mubr.bf16.mxu0 0
        %2112 = vmatmul.mubr.bf16.gmra.mrb[0].mxu0 %v1312
        %v2113 = vpop.f32.mrb[0].mxu0
        %v2114 = vadd.f32 0.0, %v2113
        %v2115 = vpop.f32.mrb[0].mxu0
        %v2116 = vadd.f32 0.0, %v2115
        %v2117 = vpop.f32.mrb[0].mxu0
        %v2118 = vadd.f32 0.0, %v2117
        %v2119 = vpop.f32.mrb[0].mxu0
        %v2120 = vadd.f32 0.0, %v2119
        %2121 = vmatprep.mubr.bf16.mxu0 0
        %2122 = vmatmul.mubr.bf16.gmra.mrb[0].mxu0 %v1315
        %v2123 = vpop.f32.mrb[0].mxu0
        %v2124 = vadd.f32 0.0, %v2123
        %v2125 = vpop.f32.mrb[0].mxu0
        %v2126 = vadd.f32 0.0, %v2125
        %v2127 = vpop.f32.mrb[0].mxu0
        %v2128 = vadd.f32 0.0, %v2127
        %v2129 = vpop.f32.mrb[0].mxu0
        %v2130 = vadd.f32 0.0, %v2129
        %2131 = vmatprep.mubr.bf16.mxu0 0
        %2132 = vmatmul.mubr.bf16.gmra.mrb[0].mxu0 %v1318
        %v2133 = vpop.f32.mrb[0].mxu0
        %v2134 = vadd.f32 0.0, %v2133
        %v2135 = vpop.f32.mrb[0].mxu0
        %v2136 = vadd.f32 0.0, %v2135
        %v2137 = vpop.f32.mrb[0].mxu0
        %v2138 = vadd.f32 0.0, %v2137
        %v2139 = vpop.f32.mrb[0].mxu0
        %v2140 = vadd.f32 0.0, %v2139
        %2141 = vmatprep.mubr.bf16.mxu0 0
        %2142 = vmatmul.mubr.bf16.gmra.mrb[0].mxu0 %v1321
        %v2143 = vpop.f32.mrb[0].mxu0
        %v2144 = vadd.f32 0.0, %v2143
        %v2145 = vpop.f32.mrb[0].mxu0
        %v2146 = vadd.f32 0.0, %v2145
        %v2147 = vpop.f32.mrb[0].mxu0
        %v2148 = vadd.f32 0.0, %v2147
        %v2149 = vpop.f32.mrb[0].mxu0
        %v2150 = vadd.f32 0.0, %v2149
        %2151 = vmatprep.mubr.bf16.mxu0 0
        %2152 = vmatmul.mubr.bf16.gmra.mrb[0].mxu0 %v1324
        %v2153 = vpop.f32.mrb[0].mxu0
        %v2154 = vadd.f32 0.0, %v2153
        %v2155 = vpop.f32.mrb[0].mxu0
        %v2156 = vadd.f32 0.0, %v2155
        %v2157 = vpop.f32.mrb[0].mxu0
        %v2158 = vadd.f32 0.0, %v2157
        %v2159 = vpop.f32.mrb[0].mxu0
        %v2160 = vadd.f32 0.0, %v2159
        %2161 = vdwg.mxu0
        %2162 = vmatprep.subr.bf16.mxu0 0
        %2163 = vmatpush1.bf16.xpose.msra.mxu0 %v1519
        %2164 = vmatprep.subr.bf16.mxu0 0
        %2165 = vmatpush1.bf16.xpose.msra.mxu0 %v1522
        %2166 = vmatprep.subr.bf16.mxu0 0
        %2167 = vmatpush1.bf16.xpose.msra.mxu0 %v1525
        %2168 = vmatprep.subr.bf16.mxu0 0
        %2169 = vmatpush1.bf16.xpose.msra.mxu0 %v1528
        %2170 = vmatprep.subr.bf16.mxu0 0
        %2171 = vmatpush1.bf16.xpose.msra.mxu0 %v1531
        %2172 = vmatprep.subr.bf16.mxu0 0
        %2173 = vmatpush1.bf16.xpose.msra.mxu0 %v1534
        %2174 = vmatprep.subr.bf16.mxu0 0
        %2175 = vmatpush1.bf16.xpose.msra.mxu0 %v1537
        %2176 = vmatprep.subr.bf16.mxu0 0
        %2177 = vmatpush1.bf16.xpose.msra.mxu0 %v1540
        %2178 = vmatprep.subr.bf16.mxu0 0
        %2179 = vmatpush1.bf16.xpose.msra.mxu0 %v1543
        %2180 = vmatprep.subr.bf16.mxu0 0
        %2181 = vmatpush1.bf16.xpose.msra.mxu0 %v1546
        %2182 = vmatprep.subr.bf16.mxu0 0
        %2183 = vmatpush1.bf16.xpose.msra.mxu0 %v1549
        %2184 = vmatprep.subr.bf16.mxu0 0
        %2185 = vmatpush1.bf16.xpose.msra.mxu0 %v1552
        %2186 = vmatprep.subr.bf16.mxu0 0
        %2187 = vmatpush1.bf16.xpose.msra.mxu0 %v1555
        %2188 = vmatprep.subr.bf16.mxu0 0
        %2189 = vmatpush1.bf16.xpose.msra.mxu0 %v1558
        %2190 = vmatprep.subr.bf16.mxu0 0
        %2191 = vmatpush1.bf16.xpose.msra.mxu0 %v1561
        %2192 = vmatprep.subr.bf16.mxu0 0
        %2193 = vmatpush1.bf16.xpose.msra.mxu0 %v1564
        %2194 = vmatprep.mubr.bf16.mxu0 0
        %2195 = vmatmul.mubr.bf16.gmra.mrb[0].mxu0 %v1303
        %v2196 = vpop.f32.mrb[0].mxu0
        %v2197 = vadd.f32 0.0, %v2196
        %v2198 = vpop.f32.mrb[0].mxu0
        %v2199 = vadd.f32 0.0, %v2198
        %v2200 = vpop.f32.mrb[0].mxu0
        %v2201 = vadd.f32 0.0, %v2200
        %v2202 = vpop.f32.mrb[0].mxu0
        %v2203 = vadd.f32 0.0, %v2202
        %2204 = vmatprep.mubr.bf16.mxu0 0
        %2205 = vmatmul.mubr.bf16.gmra.mrb[0].mxu0 %v1306
        %v2206 = vpop.f32.mrb[0].mxu0
        %v2207 = vadd.f32 0.0, %v2206
        %v2208 = vpop.f32.mrb[0].mxu0
        %v2209 = vadd.f32 0.0, %v2208
        %v2210 = vpop.f32.mrb[0].mxu0
        %v2211 = vadd.f32 0.0, %v2210
        %v2212 = vpop.f32.mrb[0].mxu0
        %v2213 = vadd.f32 0.0, %v2212
        %2214 = vmatprep.mubr.bf16.mxu0 0
        %2215 = vmatmul.mubr.bf16.gmra.mrb[0].mxu0 %v1309
        %v2216 = vpop.f32.mrb[0].mxu0
        %v2217 = vadd.f32 0.0, %v2216
        %v2218 = vpop.f32.mrb[0].mxu0
        %v2219 = vadd.f32 0.0, %v2218
        %v2220 = vpop.f32.mrb[0].mxu0
        %v2221 = vadd.f32 0.0, %v2220
        %v2222 = vpop.f32.mrb[0].mxu0
        %v2223 = vadd.f32 0.0, %v2222
        %2224 = vmatprep.mubr.bf16.mxu0 0
        %2225 = vmatmul.mubr.bf16.gmra.mrb[0].mxu0 %v1312
        %v2226 = vpop.f32.mrb[0].mxu0
        %v2227 = vadd.f32 0.0, %v2226
        %v2228 = vpop.f32.mrb[0].mxu0
        %v2229 = vadd.f32 0.0, %v2228
        %v2230 = vpop.f32.mrb[0].mxu0
        %v2231 = vadd.f32 0.0, %v2230
        %v2232 = vpop.f32.mrb[0].mxu0
        %v2233 = vadd.f32 0.0, %v2232
        %2234 = vmatprep.mubr.bf16.mxu0 0
        %2235 = vmatmul.mubr.bf16.gmra.mrb[0].mxu0 %v1315
        %v2236 = vpop.f32.mrb[0].mxu0
        %v2237 = vadd.f32 0.0, %v2236
        %v2238 = vpop.f32.mrb[0].mxu0
        %v2239 = vadd.f32 0.0, %v2238
        %v2240 = vpop.f32.mrb[0].mxu0
        %v2241 = vadd.f32 0.0, %v2240
        %v2242 = vpop.f32.mrb[0].mxu0
        %v2243 = vadd.f32 0.0, %v2242
        %2244 = vmatprep.mubr.bf16.mxu0 0
        %2245 = vmatmul.mubr.bf16.gmra.mrb[0].mxu0 %v1318
        %v2246 = vpop.f32.mrb[0].mxu0
        %v2247 = vadd.f32 0.0, %v2246
        %v2248 = vpop.f32.mrb[0].mxu0
        %v2249 = vadd.f32 0.0, %v2248
        %v2250 = vpop.f32.mrb[0].mxu0
        %v2251 = vadd.f32 0.0, %v2250
        %v2252 = vpop.f32.mrb[0].mxu0
        %v2253 = vadd.f32 0.0, %v2252
        %2254 = vmatprep.mubr.bf16.mxu0 0
        %2255 = vmatmul.mubr.bf16.gmra.mrb[0].mxu0 %v1321
        %v2256 = vpop.f32.mrb[0].mxu0
        %v2257 = vadd.f32 0.0, %v2256
        %v2258 = vpop.f32.mrb[0].mxu0
        %v2259 = vadd.f32 0.0, %v2258
        %v2260 = vpop.f32.mrb[0].mxu0
        %v2261 = vadd.f32 0.0, %v2260
        %v2262 = vpop.f32.mrb[0].mxu0
        %v2263 = vadd.f32 0.0, %v2262
        %2264 = vmatprep.mubr.bf16.mxu0 0
        %2265 = vmatmul.mubr.bf16.gmra.mrb[0].mxu0 %v1324
        %v2266 = vpop.f32.mrb[0].mxu0
        %v2267 = vadd.f32 0.0, %v2266
        %v2268 = vpop.f32.mrb[0].mxu0
        %v2269 = vadd.f32 0.0, %v2268
        %v2270 = vpop.f32.mrb[0].mxu0
        %v2271 = vadd.f32 0.0, %v2270
        %v2272 = vpop.f32.mrb[0].mxu0
        %v2273 = vadd.f32 0.0, %v2272
        %2274 = vdwg.mxu0
        %2275 = vmatprep.subr.bf16.mxu0 0
        %2276 = vmatpush1.bf16.xpose.msra.mxu0 %v1567
        %2277 = vmatprep.subr.bf16.mxu0 0
        %2278 = vmatpush1.bf16.xpose.msra.mxu0 %v1570
        %2279 = vmatprep.subr.bf16.mxu0 0
        %2280 = vmatpush1.bf16.xpose.msra.mxu0 %v1573
        %2281 = vmatprep.subr.bf16.mxu0 0
        %2282 = vmatpush1.bf16.xpose.msra.mxu0 %v1576
        %2283 = vmatprep.subr.bf16.mxu0 0
        %2284 = vmatpush1.bf16.xpose.msra.mxu0 %v1579
        %2285 = vmatprep.subr.bf16.mxu0 0
        %2286 = vmatpush1.bf16.xpose.msra.mxu0 %v1582
        %2287 = vmatprep.subr.bf16.mxu0 0
        %2288 = vmatpush1.bf16.xpose.msra.mxu0 %v1585
        %2289 = vmatprep.subr.bf16.mxu0 0
        %2290 = vmatpush1.bf16.xpose.msra.mxu0 %v1588
        %2291 = vmatprep.subr.bf16.mxu0 0
        %2292 = vmatpush1.bf16.xpose.msra.mxu0 %v1591
        %2293 = vmatprep.subr.bf16.mxu0 0
        %2294 = vmatpush1.bf16.xpose.msra.mxu0 %v1594
        %2295 = vmatprep.subr.bf16.mxu0 0
        %2296 = vmatpush1.bf16.xpose.msra.mxu0 %v1597
        %2297 = vmatprep.subr.bf16.mxu0 0
        %2298 = vmatpush1.bf16.xpose.msra.mxu0 %v1600
        %2299 = vmatprep.subr.bf16.mxu0 0
        %2300 = vmatpush1.bf16.xpose.msra.mxu0 %v1603
        %2301 = vmatprep.subr.bf16.mxu0 0
        %2302 = vmatpush1.bf16.xpose.msra.mxu0 %v1606
        %2303 = vmatprep.subr.bf16.mxu0 0
        %2304 = vmatpush1.bf16.xpose.msra.mxu0 %v1609
        %2305 = vmatprep.subr.bf16.mxu0 0
        %2306 = vmatpush1.bf16.xpose.msra.mxu0 %v1612
        %2307 = vmatprep.mubr.bf16.mxu0 0
        %2308 = vmatmul.mubr.bf16.gmra.mrb[0].mxu0 %v1303
        %v2309 = vpop.f32.mrb[0].mxu0
        %v2310 = vadd.f32 0.0, %v2309
        %v2311 = vpop.f32.mrb[0].mxu0
        %v2312 = vadd.f32 0.0, %v2311
        %v2313 = vpop.f32.mrb[0].mxu0
        %v2314 = vadd.f32 0.0, %v2313
        %v2315 = vpop.f32.mrb[0].mxu0
        %v2316 = vadd.f32 0.0, %v2315
        %2317 = vmatprep.mubr.bf16.mxu0 0
        %2318 = vmatmul.mubr.bf16.gmra.mrb[0].mxu0 %v1306
        %v2319 = vpop.f32.mrb[0].mxu0
        %v2320 = vadd.f32 0.0, %v2319
        %v2321 = vpop.f32.mrb[0].mxu0
        %v2322 = vadd.f32 0.0, %v2321
        %v2323 = vpop.f32.mrb[0].mxu0
        %v2324 = vadd.f32 0.0, %v2323
        %v2325 = vpop.f32.mrb[0].mxu0
        %v2326 = vadd.f32 0.0, %v2325
        %2327 = vmatprep.mubr.bf16.mxu0 0
        %2328 = vmatmul.mubr.bf16.gmra.mrb[0].mxu0 %v1309
        %v2329 = vpop.f32.mrb[0].mxu0
        %v2330 = vadd.f32 0.0, %v2329
        %v2331 = vpop.f32.mrb[0].mxu0
        %v2332 = vadd.f32 0.0, %v2331
        %v2333 = vpop.f32.mrb[0].mxu0
        %v2334 = vadd.f32 0.0, %v2333
        %v2335 = vpop.f32.mrb[0].mxu0
        %v2336 = vadd.f32 0.0, %v2335
        %2337 = vmatprep.mubr.bf16.mxu0 0
        %2338 = vmatmul.mubr.bf16.gmra.mrb[0].mxu0 %v1312
        %v2339 = vpop.f32.mrb[0].mxu0
        %v2340 = vadd.f32 0.0, %v2339
        %v2341 = vpop.f32.mrb[0].mxu0
        %v2342 = vadd.f32 0.0, %v2341
        %v2343 = vpop.f32.mrb[0].mxu0
        %v2344 = vadd.f32 0.0, %v2343
        %v2345 = vpop.f32.mrb[0].mxu0
        %v2346 = vadd.f32 0.0, %v2345
        %2347 = vmatprep.mubr.bf16.mxu0 0
        %2348 = vmatmul.mubr.bf16.gmra.mrb[0].mxu0 %v1315
        %v2349 = vpop.f32.mrb[0].mxu0
        %v2350 = vadd.f32 0.0, %v2349
        %v2351 = vpop.f32.mrb[0].mxu0
        %v2352 = vadd.f32 0.0, %v2351
        %v2353 = vpop.f32.mrb[0].mxu0
        %v2354 = vadd.f32 0.0, %v2353
        %v2355 = vpop.f32.mrb[0].mxu0
        %v2356 = vadd.f32 0.0, %v2355
        %2357 = vmatprep.mubr.bf16.mxu0 0
        %2358 = vmatmul.mubr.bf16.gmra.mrb[0].mxu0 %v1318
        %v2359 = vpop.f32.mrb[0].mxu0
        %v2360 = vadd.f32 0.0, %v2359
        %v2361 = vpop.f32.mrb[0].mxu0
        %v2362 = vadd.f32 0.0, %v2361
        %v2363 = vpop.f32.mrb[0].mxu0
        %v2364 = vadd.f32 0.0, %v2363
        %v2365 = vpop.f32.mrb[0].mxu0
        %v2366 = vadd.f32 0.0, %v2365
        %2367 = vmatprep.mubr.bf16.mxu0 0
        %2368 = vmatmul.mubr.bf16.gmra.mrb[0].mxu0 %v1321
        %v2369 = vpop.f32.mrb[0].mxu0
        %v2370 = vadd.f32 0.0, %v2369
        %v2371 = vpop.f32.mrb[0].mxu0
        %v2372 = vadd.f32 0.0, %v2371
        %v2373 = vpop.f32.mrb[0].mxu0
        %v2374 = vadd.f32 0.0, %v2373
        %v2375 = vpop.f32.mrb[0].mxu0
        %v2376 = vadd.f32 0.0, %v2375
        %2377 = vmatprep.mubr.bf16.mxu0 0
        %2378 = vmatmul.mubr.bf16.gmra.mrb[0].mxu0 %v1324
        %v2379 = vpop.f32.mrb[0].mxu0
        %v2380 = vadd.f32 0.0, %v2379
        %v2381 = vpop.f32.mrb[0].mxu0
        %v2382 = vadd.f32 0.0, %v2381
        %v2383 = vpop.f32.mrb[0].mxu0
        %v2384 = vadd.f32 0.0, %v2383
        %v2385 = vpop.f32.mrb[0].mxu0
        %v2386 = vadd.f32 0.0, %v2385
        %2387 = vdwg.mxu0
        %2388 = vmatprep.subr.bf16.mxu0 0
        %2389 = vmatpush1.bf16.xpose.msra.mxu0 %v1615
        %2390 = vmatprep.subr.bf16.mxu0 0
        %2391 = vmatpush1.bf16.xpose.msra.mxu0 %v1618
        %2392 = vmatprep.subr.bf16.mxu0 0
        %2393 = vmatpush1.bf16.xpose.msra.mxu0 %v1621
        %2394 = vmatprep.subr.bf16.mxu0 0
        %2395 = vmatpush1.bf16.xpose.msra.mxu0 %v1624
        %2396 = vmatprep.subr.bf16.mxu0 0
        %2397 = vmatpush1.bf16.xpose.msra.mxu0 %v1627
        %2398 = vmatprep.subr.bf16.mxu0 0
        %2399 = vmatpush1.bf16.xpose.msra.mxu0 %v1630
        %2400 = vmatprep.subr.bf16.mxu0 0
        %2401 = vmatpush1.bf16.xpose.msra.mxu0 %v1633
        %2402 = vmatprep.subr.bf16.mxu0 0
        %2403 = vmatpush1.bf16.xpose.msra.mxu0 %v1636
        %2404 = vmatprep.subr.bf16.mxu0 0
        %2405 = vmatpush1.bf16.xpose.msra.mxu0 %v1639
        %2406 = vmatprep.subr.bf16.mxu0 0
        %2407 = vmatpush1.bf16.xpose.msra.mxu0 %v1642
        %2408 = vmatprep.subr.bf16.mxu0 0
        %2409 = vmatpush1.bf16.xpose.msra.mxu0 %v1645
        %2410 = vmatprep.subr.bf16.mxu0 0
        %2411 = vmatpush1.bf16.xpose.msra.mxu0 %v1648
        %2412 = vmatprep.subr.bf16.mxu0 0
        %2413 = vmatpush1.bf16.xpose.msra.mxu0 %v1651
        %2414 = vmatprep.subr.bf16.mxu0 0
        %2415 = vmatpush1.bf16.xpose.msra.mxu0 %v1654
        %2416 = vmatprep.subr.bf16.mxu0 0
        %2417 = vmatpush1.bf16.xpose.msra.mxu0 %v1657
        %2418 = vmatprep.subr.bf16.mxu0 0
        %2419 = vmatpush1.bf16.xpose.msra.mxu0 %v1660
        %2420 = vmatprep.mubr.bf16.mxu0 0
        %2421 = vmatmul.mubr.bf16.gmra.mrb[0].mxu0 %v1303
        %v2422 = vpop.f32.mrb[0].mxu0
        %v2423 = vadd.f32 0.0, %v2422
        %v2424 = vpop.f32.mrb[0].mxu0
        %v2425 = vadd.f32 0.0, %v2424
        %v2426 = vpop.f32.mrb[0].mxu0
        %v2427 = vadd.f32 0.0, %v2426
        %v2428 = vpop.f32.mrb[0].mxu0
        %v2429 = vadd.f32 0.0, %v2428
        %2430 = vmatprep.mubr.bf16.mxu0 0
        %2431 = vmatmul.mubr.bf16.gmra.mrb[0].mxu0 %v1306
        %v2432 = vpop.f32.mrb[0].mxu0
        %v2433 = vadd.f32 0.0, %v2432
        %v2434 = vpop.f32.mrb[0].mxu0
        %v2435 = vadd.f32 0.0, %v2434
        %v2436 = vpop.f32.mrb[0].mxu0
        %v2437 = vadd.f32 0.0, %v2436
        %v2438 = vpop.f32.mrb[0].mxu0
        %v2439 = vadd.f32 0.0, %v2438
        %2440 = vmatprep.mubr.bf16.mxu0 0
        %2441 = vmatmul.mubr.bf16.gmra.mrb[0].mxu0 %v1309
        %v2442 = vpop.f32.mrb[0].mxu0
        %v2443 = vadd.f32 0.0, %v2442
        %v2444 = vpop.f32.mrb[0].mxu0
        %v2445 = vadd.f32 0.0, %v2444
        %v2446 = vpop.f32.mrb[0].mxu0
        %v2447 = vadd.f32 0.0, %v2446
        %v2448 = vpop.f32.mrb[0].mxu0
        %v2449 = vadd.f32 0.0, %v2448
        %2450 = vmatprep.mubr.bf16.mxu0 0
        %2451 = vmatmul.mubr.bf16.gmra.mrb[0].mxu0 %v1312
        %v2452 = vpop.f32.mrb[0].mxu0
        %v2453 = vadd.f32 0.0, %v2452
        %v2454 = vpop.f32.mrb[0].mxu0
        %v2455 = vadd.f32 0.0, %v2454
        %v2456 = vpop.f32.mrb[0].mxu0
        %v2457 = vadd.f32 0.0, %v2456
        %v2458 = vpop.f32.mrb[0].mxu0
        %v2459 = vadd.f32 0.0, %v2458
        %2460 = vmatprep.mubr.bf16.mxu0 0
        %2461 = vmatmul.mubr.bf16.gmra.mrb[0].mxu0 %v1315
        %v2462 = vpop.f32.mrb[0].mxu0
        %v2463 = vadd.f32 0.0, %v2462
        %v2464 = vpop.f32.mrb[0].mxu0
        %v2465 = vadd.f32 0.0, %v2464
        %v2466 = vpop.f32.mrb[0].mxu0
        %v2467 = vadd.f32 0.0, %v2466
        %v2468 = vpop.f32.mrb[0].mxu0
        %v2469 = vadd.f32 0.0, %v2468
        %2470 = vmatprep.mubr.bf16.mxu0 0
        %2471 = vmatmul.mubr.bf16.gmra.mrb[0].mxu0 %v1318
        %v2472 = vpop.f32.mrb[0].mxu0
        %v2473 = vadd.f32 0.0, %v2472
        %v2474 = vpop.f32.mrb[0].mxu0
        %v2475 = vadd.f32 0.0, %v2474
        %v2476 = vpop.f32.mrb[0].mxu0
        %v2477 = vadd.f32 0.0, %v2476
        %v2478 = vpop.f32.mrb[0].mxu0
        %v2479 = vadd.f32 0.0, %v2478
        %2480 = vmatprep.mubr.bf16.mxu0 0
        %2481 = vmatmul.mubr.bf16.gmra.mrb[0].mxu0 %v1321
        %v2482 = vpop.f32.mrb[0].mxu0
        %v2483 = vadd.f32 0.0, %v2482
        %v2484 = vpop.f32.mrb[0].mxu0
        %v2485 = vadd.f32 0.0, %v2484
        %v2486 = vpop.f32.mrb[0].mxu0
        %v2487 = vadd.f32 0.0, %v2486
        %v2488 = vpop.f32.mrb[0].mxu0
        %v2489 = vadd.f32 0.0, %v2488
        %2490 = vmatprep.mubr.bf16.mxu0 0
        %2491 = vmatmul.mubr.bf16.gmra.mrb[0].mxu0 %v1324
        %v2492 = vpop.f32.mrb[0].mxu0
        %v2493 = vadd.f32 0.0, %v2492
        %v2494 = vpop.f32.mrb[0].mxu0
        %v2495 = vadd.f32 0.0, %v2494
        %v2496 = vpop.f32.mrb[0].mxu0
        %v2497 = vadd.f32 0.0, %v2496
        %v2498 = vpop.f32.mrb[0].mxu0
        %v2499 = vadd.f32 0.0, %v2498
        %2500 = vdwg.mxu0
        %2501 = vmatprep.subr.bf16.mxu0 0
        %2502 = vmatpush1.bf16.xpose.msra.mxu0 %v1663
        %2503 = vmatprep.subr.bf16.mxu0 0
        %2504 = vmatpush1.bf16.xpose.msra.mxu0 %v1666
        %2505 = vmatprep.subr.bf16.mxu0 0
        %2506 = vmatpush1.bf16.xpose.msra.mxu0 %v1669
        %2507 = vmatprep.subr.bf16.mxu0 0
        %2508 = vmatpush1.bf16.xpose.msra.mxu0 %v1672
        %2509 = vmatprep.subr.bf16.mxu0 0
        %2510 = vmatpush1.bf16.xpose.msra.mxu0 %v1675
        %2511 = vmatprep.subr.bf16.mxu0 0
        %2512 = vmatpush1.bf16.xpose.msra.mxu0 %v1678
        %2513 = vmatprep.subr.bf16.mxu0 0
        %2514 = vmatpush1.bf16.xpose.msra.mxu0 %v1681
        %2515 = vmatprep.subr.bf16.mxu0 0
        %2516 = vmatpush1.bf16.xpose.msra.mxu0 %v1684
        %2517 = vmatprep.subr.bf16.mxu0 0
        %2518 = vmatpush1.bf16.xpose.msra.mxu0 %v1687
        %2519 = vmatprep.subr.bf16.mxu0 0
        %2520 = vmatpush1.bf16.xpose.msra.mxu0 %v1690
        %2521 = vmatprep.subr.bf16.mxu0 0
        %2522 = vmatpush1.bf16.xpose.msra.mxu0 %v1693
        %2523 = vmatprep.subr.bf16.mxu0 0
        %2524 = vmatpush1.bf16.xpose.msra.mxu0 %v1696
        %2525 = vmatprep.subr.bf16.mxu0 0
        %2526 = vmatpush1.bf16.xpose.msra.mxu0 %v1699
        %2527 = vmatprep.subr.bf16.mxu0 0
        %2528 = vmatpush1.bf16.xpose.msra.mxu0 %v1702
        %2529 = vmatprep.subr.bf16.mxu0 0
        %2530 = vmatpush1.bf16.xpose.msra.mxu0 %v1705
        %2531 = vmatprep.subr.bf16.mxu0 0
        %2532 = vmatpush1.bf16.xpose.msra.mxu0 %v1708
        %2533 = vmatprep.mubr.bf16.mxu0 0
        %2534 = vmatmul.mubr.bf16.gmra.mrb[0].mxu0 %v1303
        %v2535 = vpop.f32.mrb[0].mxu0
        %v2536 = vadd.f32 0.0, %v2535
        %v2537 = vpop.f32.mrb[0].mxu0
        %v2538 = vadd.f32 0.0, %v2537
        %v2539 = vpop.f32.mrb[0].mxu0
        %v2540 = vadd.f32 0.0, %v2539
        %v2541 = vpop.f32.mrb[0].mxu0
        %v2542 = vadd.f32 0.0, %v2541
        %2543 = vmatprep.mubr.bf16.mxu0 0
        %2544 = vmatmul.mubr.bf16.gmra.mrb[0].mxu0 %v1306
        %v2545 = vpop.f32.mrb[0].mxu0
        %v2546 = vadd.f32 0.0, %v2545
        %v2547 = vpop.f32.mrb[0].mxu0
        %v2548 = vadd.f32 0.0, %v2547
        %v2549 = vpop.f32.mrb[0].mxu0
        %v2550 = vadd.f32 0.0, %v2549
        %v2551 = vpop.f32.mrb[0].mxu0
        %v2552 = vadd.f32 0.0, %v2551
        %2553 = vmatprep.mubr.bf16.mxu0 0
        %2554 = vmatmul.mubr.bf16.gmra.mrb[0].mxu0 %v1309
        %v2555 = vpop.f32.mrb[0].mxu0
        %v2556 = vadd.f32 0.0, %v2555
        %v2557 = vpop.f32.mrb[0].mxu0
        %v2558 = vadd.f32 0.0, %v2557
        %v2559 = vpop.f32.mrb[0].mxu0
        %v2560 = vadd.f32 0.0, %v2559
        %v2561 = vpop.f32.mrb[0].mxu0
        %v2562 = vadd.f32 0.0, %v2561
        %2563 = vmatprep.mubr.bf16.mxu0 0
        %2564 = vmatmul.mubr.bf16.gmra.mrb[0].mxu0 %v1312
        %v2565 = vpop.f32.mrb[0].mxu0
        %v2566 = vadd.f32 0.0, %v2565
        %v2567 = vpop.f32.mrb[0].mxu0
        %v2568 = vadd.f32 0.0, %v2567
        %v2569 = vpop.f32.mrb[0].mxu0
        %v2570 = vadd.f32 0.0, %v2569
        %v2571 = vpop.f32.mrb[0].mxu0
        %v2572 = vadd.f32 0.0, %v2571
        %2573 = vmatprep.mubr.bf16.mxu0 0
        %2574 = vmatmul.mubr.bf16.gmra.mrb[0].mxu0 %v1315
        %v2575 = vpop.f32.mrb[0].mxu0
        %v2576 = vadd.f32 0.0, %v2575
        %v2577 = vpop.f32.mrb[0].mxu0
        %v2578 = vadd.f32 0.0, %v2577
        %v2579 = vpop.f32.mrb[0].mxu0
        %v2580 = vadd.f32 0.0, %v2579
        %v2581 = vpop.f32.mrb[0].mxu0
        %v2582 = vadd.f32 0.0, %v2581
        %2583 = vmatprep.mubr.bf16.mxu0 0
        %2584 = vmatmul.mubr.bf16.gmra.mrb[0].mxu0 %v1318
        %v2585 = vpop.f32.mrb[0].mxu0
        %v2586 = vadd.f32 0.0, %v2585
        %v2587 = vpop.f32.mrb[0].mxu0
        %v2588 = vadd.f32 0.0, %v2587
        %v2589 = vpop.f32.mrb[0].mxu0
        %v2590 = vadd.f32 0.0, %v2589
        %v2591 = vpop.f32.mrb[0].mxu0
        %v2592 = vadd.f32 0.0, %v2591
        %2593 = vmatprep.mubr.bf16.mxu0 0
        %2594 = vmatmul.mubr.bf16.gmra.mrb[0].mxu0 %v1321
        %v2595 = vpop.f32.mrb[0].mxu0
        %v2596 = vadd.f32 0.0, %v2595
        %v2597 = vpop.f32.mrb[0].mxu0
        %v2598 = vadd.f32 0.0, %v2597
        %v2599 = vpop.f32.mrb[0].mxu0
        %v2600 = vadd.f32 0.0, %v2599
        %v2601 = vpop.f32.mrb[0].mxu0
        %v2602 = vadd.f32 0.0, %v2601
        %2603 = vmatprep.mubr.bf16.mxu0 0
        %2604 = vmatmul.mubr.bf16.gmra.mrb[0].mxu0 %v1324
        %v2605 = vpop.f32.mrb[0].mxu0
        %v2606 = vadd.f32 0.0, %v2605
        %v2607 = vpop.f32.mrb[0].mxu0
        %v2608 = vadd.f32 0.0, %v2607
        %v2609 = vpop.f32.mrb[0].mxu0
        %v2610 = vadd.f32 0.0, %v2609
        %v2611 = vpop.f32.mrb[0].mxu0
        %v2612 = vadd.f32 0.0, %v2611
        %2613 = vdwg.mxu0
        %v2614 = vmax.f32 %v1745, 0.0
        %v2615 = vmax.f32 %v1747, 0.0
        %v2616 = vmax.f32 %v1858, 0.0
        %v2617 = vmax.f32 %v1860, 0.0
        %v2618 = vmax.f32 %v1971, 0.0
        %v2619 = vmax.f32 %v1973, 0.0
        %v2620 = vmax.f32 %v2084, 0.0
        %v2621 = vmax.f32 %v2086, 0.0
        %v2622 = vmax.f32 %v2197, 0.0
        %v2623 = vmax.f32 %v2199, 0.0
        %v2624 = vmax.f32 %v2310, 0.0
        %v2625 = vmax.f32 %v2312, 0.0
        %v2626 = vmax.f32 %v2423, 0.0
        %v2627 = vmax.f32 %v2425, 0.0
        %v2628 = vmax.f32 %v2536, 0.0
        %v2629 = vmax.f32 %v2538, 0.0
        %v2630 = vmax.f32 %v1749, 0.0
        %v2631 = vmax.f32 %v1751, 0.0
        %v2632 = vmax.f32 %v1862, 0.0
        %v2633 = vmax.f32 %v1864, 0.0
        %v2634 = vmax.f32 %v1975, 0.0
        %v2635 = vmax.f32 %v1977, 0.0
        %v2636 = vmax.f32 %v2088, 0.0
        %v2637 = vmax.f32 %v2090, 0.0
        %v2638 = vmax.f32 %v2201, 0.0
        %v2639 = vmax.f32 %v2203, 0.0
        %v2640 = vmax.f32 %v2314, 0.0
        %v2641 = vmax.f32 %v2316, 0.0
        %v2642 = vmax.f32 %v2427, 0.0
        %v2643 = vmax.f32 %v2429, 0.0
        %v2644 = vmax.f32 %v2540, 0.0
        %v2645 = vmax.f32 %v2542, 0.0
        %v2646 = vmax.f32 %v1755, 0.0
        %v2647 = vmax.f32 %v1757, 0.0
        %v2648 = vmax.f32 %v1868, 0.0
        %v2649 = vmax.f32 %v1870, 0.0
        %v2650 = vmax.f32 %v1981, 0.0
        %v2651 = vmax.f32 %v1983, 0.0
        %v2652 = vmax.f32 %v2094, 0.0
        %v2653 = vmax.f32 %v2096, 0.0
        %v2654 = vmax.f32 %v2207, 0.0
        %v2655 = vmax.f32 %v2209, 0.0
        %v2656 = vmax.f32 %v2320, 0.0
        %v2657 = vmax.f32 %v2322, 0.0
        %v2658 = vmax.f32 %v2433, 0.0
        %v2659 = vmax.f32 %v2435, 0.0
        %v2660 = vmax.f32 %v2546, 0.0
        %v2661 = vmax.f32 %v2548, 0.0
        %v2662 = vmax.f32 %v1759, 0.0
        %v2663 = vmax.f32 %v1761, 0.0
        %v2664 = vmax.f32 %v1872, 0.0
        %v2665 = vmax.f32 %v1874, 0.0
        %v2666 = vmax.f32 %v1985, 0.0
        %v2667 = vmax.f32 %v1987, 0.0
        %v2668 = vmax.f32 %v2098, 0.0
        %v2669 = vmax.f32 %v2100, 0.0
        %v2670 = vmax.f32 %v2211, 0.0
        %v2671 = vmax.f32 %v2213, 0.0
        %v2672 = vmax.f32 %v2324, 0.0
        %v2673 = vmax.f32 %v2326, 0.0
        %v2674 = vmax.f32 %v2437, 0.0
        %v2675 = vmax.f32 %v2439, 0.0
        %v2676 = vmax.f32 %v2550, 0.0
        %v2677 = vmax.f32 %v2552, 0.0
        %v2678 = vmax.f32 %v1765, 0.0
        %v2679 = vmax.f32 %v1767, 0.0
        %v2680 = vmax.f32 %v1878, 0.0
        %v2681 = vmax.f32 %v1880, 0.0
        %v2682 = vmax.f32 %v1991, 0.0
        %v2683 = vmax.f32 %v1993, 0.0
        %v2684 = vmax.f32 %v2104, 0.0
        %v2685 = vmax.f32 %v2106, 0.0
        %v2686 = vmax.f32 %v2217, 0.0
        %v2687 = vmax.f32 %v2219, 0.0
        %v2688 = vmax.f32 %v2330, 0.0
        %v2689 = vmax.f32 %v2332, 0.0
        %v2690 = vmax.f32 %v2443, 0.0
        %v2691 = vmax.f32 %v2445, 0.0
        %v2692 = vmax.f32 %v2556, 0.0
        %v2693 = vmax.f32 %v2558, 0.0
        %v2694 = vmax.f32 %v1769, 0.0
        %v2695 = vmax.f32 %v1771, 0.0
        %v2696 = vmax.f32 %v1882, 0.0
        %v2697 = vmax.f32 %v1884, 0.0
        %v2698 = vmax.f32 %v1995, 0.0
        %v2699 = vmax.f32 %v1997, 0.0
        %v2700 = vmax.f32 %v2108, 0.0
        %v2701 = vmax.f32 %v2110, 0.0
        %v2702 = vmax.f32 %v2221, 0.0
        %v2703 = vmax.f32 %v2223, 0.0
        %v2704 = vmax.f32 %v2334, 0.0
        %v2705 = vmax.f32 %v2336, 0.0
        %v2706 = vmax.f32 %v2447, 0.0
        %v2707 = vmax.f32 %v2449, 0.0
        %v2708 = vmax.f32 %v2560, 0.0
        %v2709 = vmax.f32 %v2562, 0.0
        %v2710 = vmax.f32 %v1775, 0.0
        %v2711 = vmax.f32 %v1777, 0.0
        %v2712 = vmax.f32 %v1888, 0.0
        %v2713 = vmax.f32 %v1890, 0.0
        %v2714 = vmax.f32 %v2001, 0.0
        %v2715 = vmax.f32 %v2003, 0.0
        %v2716 = vmax.f32 %v2114, 0.0
        %v2717 = vmax.f32 %v2116, 0.0
        %v2718 = vmax.f32 %v2227, 0.0
        %v2719 = vmax.f32 %v2229, 0.0
        %v2720 = vmax.f32 %v2340, 0.0
        %v2721 = vmax.f32 %v2342, 0.0
        %v2722 = vmax.f32 %v2453, 0.0
        %v2723 = vmax.f32 %v2455, 0.0
        %v2724 = vmax.f32 %v2566, 0.0
        %v2725 = vmax.f32 %v2568, 0.0
        %v2726 = vmax.f32 %v1779, 0.0
        %v2727 = vmax.f32 %v1781, 0.0
        %v2728 = vmax.f32 %v1892, 0.0
        %v2729 = vmax.f32 %v1894, 0.0
        %v2730 = vmax.f32 %v2005, 0.0
        %v2731 = vmax.f32 %v2007, 0.0
        %v2732 = vmax.f32 %v2118, 0.0
        %v2733 = vmax.f32 %v2120, 0.0
        %v2734 = vmax.f32 %v2231, 0.0
        %v2735 = vmax.f32 %v2233, 0.0
        %v2736 = vmax.f32 %v2344, 0.0
        %v2737 = vmax.f32 %v2346, 0.0
        %v2738 = vmax.f32 %v2457, 0.0
        %v2739 = vmax.f32 %v2459, 0.0
        %v2740 = vmax.f32 %v2570, 0.0
        %v2741 = vmax.f32 %v2572, 0.0
        %v2742 = vmax.f32 %v1785, 0.0
        %v2743 = vmax.f32 %v1787, 0.0
        %v2744 = vmax.f32 %v1898, 0.0
        %v2745 = vmax.f32 %v1900, 0.0
        %v2746 = vmax.f32 %v2011, 0.0
        %v2747 = vmax.f32 %v2013, 0.0
        %v2748 = vmax.f32 %v2124, 0.0
        %v2749 = vmax.f32 %v2126, 0.0
        %v2750 = vmax.f32 %v2237, 0.0
        %v2751 = vmax.f32 %v2239, 0.0
        %v2752 = vmax.f32 %v2350, 0.0
        %v2753 = vmax.f32 %v2352, 0.0
        %v2754 = vmax.f32 %v2463, 0.0
        %v2755 = vmax.f32 %v2465, 0.0
        %v2756 = vmax.f32 %v2576, 0.0
        %v2757 = vmax.f32 %v2578, 0.0
        %v2758 = vmax.f32 %v1789, 0.0
        %v2759 = vmax.f32 %v1791, 0.0
        %v2760 = vmax.f32 %v1902, 0.0
        %v2761 = vmax.f32 %v1904, 0.0
        %v2762 = vmax.f32 %v2015, 0.0
        %v2763 = vmax.f32 %v2017, 0.0
        %v2764 = vmax.f32 %v2128, 0.0
        %v2765 = vmax.f32 %v2130, 0.0
        %v2766 = vmax.f32 %v2241, 0.0
        %v2767 = vmax.f32 %v2243, 0.0
        %v2768 = vmax.f32 %v2354, 0.0
        %v2769 = vmax.f32 %v2356, 0.0
        %v2770 = vmax.f32 %v2467, 0.0
        %v2771 = vmax.f32 %v2469, 0.0
        %v2772 = vmax.f32 %v2580, 0.0
        %v2773 = vmax.f32 %v2582, 0.0
        %v2774 = vmax.f32 %v1795, 0.0
        %v2775 = vmax.f32 %v1797, 0.0
        %v2776 = vmax.f32 %v1908, 0.0
        %v2777 = vmax.f32 %v1910, 0.0
        %v2778 = vmax.f32 %v2021, 0.0
        %v2779 = vmax.f32 %v2023, 0.0
        %v2780 = vmax.f32 %v2134, 0.0
        %v2781 = vmax.f32 %v2136, 0.0
        %v2782 = vmax.f32 %v2247, 0.0
        %v2783 = vmax.f32 %v2249, 0.0
        %v2784 = vmax.f32 %v2360, 0.0
        %v2785 = vmax.f32 %v2362, 0.0
        %v2786 = vmax.f32 %v2473, 0.0
        %v2787 = vmax.f32 %v2475, 0.0
        %v2788 = vmax.f32 %v2586, 0.0
        %v2789 = vmax.f32 %v2588, 0.0
        %v2790 = vmax.f32 %v1799, 0.0
        %v2791 = vmax.f32 %v1801, 0.0
        %v2792 = vmax.f32 %v1912, 0.0
        %v2793 = vmax.f32 %v1914, 0.0
        %v2794 = vmax.f32 %v2025, 0.0
        %v2795 = vmax.f32 %v2027, 0.0
        %v2796 = vmax.f32 %v2138, 0.0
        %v2797 = vmax.f32 %v2140, 0.0
        %v2798 = vmax.f32 %v2251, 0.0
        %v2799 = vmax.f32 %v2253, 0.0
        %v2800 = vmax.f32 %v2364, 0.0
        %v2801 = vmax.f32 %v2366, 0.0
        %v2802 = vmax.f32 %v2477, 0.0
        %v2803 = vmax.f32 %v2479, 0.0
        %v2804 = vmax.f32 %v2590, 0.0
        %v2805 = vmax.f32 %v2592, 0.0
        %v2806 = vmax.f32 %v1805, 0.0
        %v2807 = vmax.f32 %v1807, 0.0
        %v2808 = vmax.f32 %v1918, 0.0
        %v2809 = vmax.f32 %v1920, 0.0
        %v2810 = vmax.f32 %v2031, 0.0
        %v2811 = vmax.f32 %v2033, 0.0
        %v2812 = vmax.f32 %v2144, 0.0
        %v2813 = vmax.f32 %v2146, 0.0
        %v2814 = vmax.f32 %v2257, 0.0
        %v2815 = vmax.f32 %v2259, 0.0
        %v2816 = vmax.f32 %v2370, 0.0
        %v2817 = vmax.f32 %v2372, 0.0
        %v2818 = vmax.f32 %v2483, 0.0
        %v2819 = vmax.f32 %v2485, 0.0
        %v2820 = vmax.f32 %v2596, 0.0
        %v2821 = vmax.f32 %v2598, 0.0
        %v2822 = vmax.f32 %v1809, 0.0
        %v2823 = vmax.f32 %v1811, 0.0
        %v2824 = vmax.f32 %v1922, 0.0
        %v2825 = vmax.f32 %v1924, 0.0
        %v2826 = vmax.f32 %v2035, 0.0
        %v2827 = vmax.f32 %v2037, 0.0
        %v2828 = vmax.f32 %v2148, 0.0
        %v2829 = vmax.f32 %v2150, 0.0
        %v2830 = vmax.f32 %v2261, 0.0
        %v2831 = vmax.f32 %v2263, 0.0
        %v2832 = vmax.f32 %v2374, 0.0
        %v2833 = vmax.f32 %v2376, 0.0
        %v2834 = vmax.f32 %v2487, 0.0
        %v2835 = vmax.f32 %v2489, 0.0
        %v2836 = vmax.f32 %v2600, 0.0
        %v2837 = vmax.f32 %v2602, 0.0
        %v2838 = vmax.f32 %v1815, 0.0
        %v2839 = vmax.f32 %v1817, 0.0
        %v2840 = vmax.f32 %v1928, 0.0
        %v2841 = vmax.f32 %v1930, 0.0
        %v2842 = vmax.f32 %v2041, 0.0
        %v2843 = vmax.f32 %v2043, 0.0
        %v2844 = vmax.f32 %v2154, 0.0
        %v2845 = vmax.f32 %v2156, 0.0
        %v2846 = vmax.f32 %v2267, 0.0
        %v2847 = vmax.f32 %v2269, 0.0
        %v2848 = vmax.f32 %v2380, 0.0
        %v2849 = vmax.f32 %v2382, 0.0
        %v2850 = vmax.f32 %v2493, 0.0
        %v2851 = vmax.f32 %v2495, 0.0
        %v2852 = vmax.f32 %v2606, 0.0
        %v2853 = vmax.f32 %v2608, 0.0
        %v2854 = vmax.f32 %v1819, 0.0
        %v2855 = vmax.f32 %v1821, 0.0
        %v2856 = vmax.f32 %v1932, 0.0
        %v2857 = vmax.f32 %v1934, 0.0
        %v2858 = vmax.f32 %v2045, 0.0
        %v2859 = vmax.f32 %v2047, 0.0
        %v2860 = vmax.f32 %v2158, 0.0
        %v2861 = vmax.f32 %v2160, 0.0
        %v2862 = vmax.f32 %v2271, 0.0
        %v2863 = vmax.f32 %v2273, 0.0
        %v2864 = vmax.f32 %v2384, 0.0
        %v2865 = vmax.f32 %v2386, 0.0
        %v2866 = vmax.f32 %v2497, 0.0
        %v2867 = vmax.f32 %v2499, 0.0
        %v2868 = vmax.f32 %v2610, 0.0
        %v2869 = vmax.f32 %v2612, 0.0
        %v2870 = vpack.c.bf16 %v2630, %v2614
        %v2871 = vpack.c.bf16 %v2631, %v2615
        %v2872 = vpack.c.bf16 %v2632, %v2616
        %v2873 = vpack.c.bf16 %v2633, %v2617
        %v2874 = vpack.c.bf16 %v2634, %v2618
        %v2875 = vpack.c.bf16 %v2635, %v2619
        %v2876 = vpack.c.bf16 %v2636, %v2620
        %v2877 = vpack.c.bf16 %v2637, %v2621
        %v2878 = vpack.c.bf16 %v2638, %v2622
        %v2879 = vpack.c.bf16 %v2639, %v2623
        %v2880 = vpack.c.bf16 %v2640, %v2624
        %v2881 = vpack.c.bf16 %v2641, %v2625
        %v2882 = vpack.c.bf16 %v2642, %v2626
        %v2883 = vpack.c.bf16 %v2643, %v2627
        %v2884 = vpack.c.bf16 %v2644, %v2628
        %v2885 = vpack.c.bf16 %v2645, %v2629
        %v2886 = vpack.c.bf16 %v2662, %v2646
        %v2887 = vpack.c.bf16 %v2663, %v2647
        %v2888 = vpack.c.bf16 %v2664, %v2648
        %v2889 = vpack.c.bf16 %v2665, %v2649
        %v2890 = vpack.c.bf16 %v2666, %v2650
        %v2891 = vpack.c.bf16 %v2667, %v2651
        %v2892 = vpack.c.bf16 %v2668, %v2652
        %v2893 = vpack.c.bf16 %v2669, %v2653
        %v2894 = vpack.c.bf16 %v2670, %v2654
        %v2895 = vpack.c.bf16 %v2671, %v2655
        %v2896 = vpack.c.bf16 %v2672, %v2656
        %v2897 = vpack.c.bf16 %v2673, %v2657
        %v2898 = vpack.c.bf16 %v2674, %v2658
        %v2899 = vpack.c.bf16 %v2675, %v2659
        %v2900 = vpack.c.bf16 %v2676, %v2660
        %v2901 = vpack.c.bf16 %v2677, %v2661
        %v2902 = vpack.c.bf16 %v2694, %v2678
        %v2903 = vpack.c.bf16 %v2695, %v2679
        %v2904 = vpack.c.bf16 %v2696, %v2680
        %v2905 = vpack.c.bf16 %v2697, %v2681
        %v2906 = vpack.c.bf16 %v2698, %v2682
        %v2907 = vpack.c.bf16 %v2699, %v2683
        %v2908 = vpack.c.bf16 %v2700, %v2684
        %v2909 = vpack.c.bf16 %v2701, %v2685
        %v2910 = vpack.c.bf16 %v2702, %v2686
        %v2911 = vpack.c.bf16 %v2703, %v2687
        %v2912 = vpack.c.bf16 %v2704, %v2688
        %v2913 = vpack.c.bf16 %v2705, %v2689
        %v2914 = vpack.c.bf16 %v2706, %v2690
        %v2915 = vpack.c.bf16 %v2707, %v2691
        %v2916 = vpack.c.bf16 %v2708, %v2692
        %v2917 = vpack.c.bf16 %v2709, %v2693
        %v2918 = vpack.c.bf16 %v2726, %v2710
        %v2919 = vpack.c.bf16 %v2727, %v2711
        %v2920 = vpack.c.bf16 %v2728, %v2712
        %v2921 = vpack.c.bf16 %v2729, %v2713
        %v2922 = vpack.c.bf16 %v2730, %v2714
        %v2923 = vpack.c.bf16 %v2731, %v2715
        %v2924 = vpack.c.bf16 %v2732, %v2716
        %v2925 = vpack.c.bf16 %v2733, %v2717
        %v2926 = vpack.c.bf16 %v2734, %v2718
        %v2927 = vpack.c.bf16 %v2735, %v2719
        %v2928 = vpack.c.bf16 %v2736, %v2720
        %v2929 = vpack.c.bf16 %v2737, %v2721
        %v2930 = vpack.c.bf16 %v2738, %v2722
        %v2931 = vpack.c.bf16 %v2739, %v2723
        %v2932 = vpack.c.bf16 %v2740, %v2724
        %v2933 = vpack.c.bf16 %v2741, %v2725
        %v2934 = vpack.c.bf16 %v2758, %v2742
        %v2935 = vpack.c.bf16 %v2759, %v2743
        %v2936 = vpack.c.bf16 %v2760, %v2744
        %v2937 = vpack.c.bf16 %v2761, %v2745
        %v2938 = vpack.c.bf16 %v2762, %v2746
        %v2939 = vpack.c.bf16 %v2763, %v2747
        %v2940 = vpack.c.bf16 %v2764, %v2748
        %v2941 = vpack.c.bf16 %v2765, %v2749
        %v2942 = vpack.c.bf16 %v2766, %v2750
        %v2943 = vpack.c.bf16 %v2767, %v2751
        %v2944 = vpack.c.bf16 %v2768, %v2752
        %v2945 = vpack.c.bf16 %v2769, %v2753
        %v2946 = vpack.c.bf16 %v2770, %v2754
        %v2947 = vpack.c.bf16 %v2771, %v2755
        %v2948 = vpack.c.bf16 %v2772, %v2756
        %v2949 = vpack.c.bf16 %v2773, %v2757
        %v2950 = vpack.c.bf16 %v2790, %v2774
        %v2951 = vpack.c.bf16 %v2791, %v2775
        %v2952 = vpack.c.bf16 %v2792, %v2776
        %v2953 = vpack.c.bf16 %v2793, %v2777
        %v2954 = vpack.c.bf16 %v2794, %v2778
        %v2955 = vpack.c.bf16 %v2795, %v2779
        %v2956 = vpack.c.bf16 %v2796, %v2780
        %v2957 = vpack.c.bf16 %v2797, %v2781
        %v2958 = vpack.c.bf16 %v2798, %v2782
        %v2959 = vpack.c.bf16 %v2799, %v2783
        %v2960 = vpack.c.bf16 %v2800, %v2784
        %v2961 = vpack.c.bf16 %v2801, %v2785
        %v2962 = vpack.c.bf16 %v2802, %v2786
        %v2963 = vpack.c.bf16 %v2803, %v2787
        %v2964 = vpack.c.bf16 %v2804, %v2788
        %v2965 = vpack.c.bf16 %v2805, %v2789
        %v2966 = vpack.c.bf16 %v2822, %v2806
        %v2967 = vpack.c.bf16 %v2823, %v2807
        %v2968 = vpack.c.bf16 %v2824, %v2808
        %v2969 = vpack.c.bf16 %v2825, %v2809
        %v2970 = vpack.c.bf16 %v2826, %v2810
        %v2971 = vpack.c.bf16 %v2827, %v2811
        %v2972 = vpack.c.bf16 %v2828, %v2812
        %v2973 = vpack.c.bf16 %v2829, %v2813
        %v2974 = vpack.c.bf16 %v2830, %v2814
        %v2975 = vpack.c.bf16 %v2831, %v2815
        %v2976 = vpack.c.bf16 %v2832, %v2816
        %v2977 = vpack.c.bf16 %v2833, %v2817
        %v2978 = vpack.c.bf16 %v2834, %v2818
        %v2979 = vpack.c.bf16 %v2835, %v2819
        %v2980 = vpack.c.bf16 %v2836, %v2820
        %v2981 = vpack.c.bf16 %v2837, %v2821
        %v2982 = vpack.c.bf16 %v2854, %v2838
        %v2983 = vpack.c.bf16 %v2855, %v2839
        %v2984 = vpack.c.bf16 %v2856, %v2840
        %v2985 = vpack.c.bf16 %v2857, %v2841
        %v2986 = vpack.c.bf16 %v2858, %v2842
        %v2987 = vpack.c.bf16 %v2859, %v2843
        %v2988 = vpack.c.bf16 %v2860, %v2844
        %v2989 = vpack.c.bf16 %v2861, %v2845
        %v2990 = vpack.c.bf16 %v2862, %v2846
        %v2991 = vpack.c.bf16 %v2863, %v2847
        %v2992 = vpack.c.bf16 %v2864, %v2848
        %v2993 = vpack.c.bf16 %v2865, %v2849
        %v2994 = vpack.c.bf16 %v2866, %v2850
        %v2995 = vpack.c.bf16 %v2867, %v2851
        %v2996 = vpack.c.bf16 %v2868, %v2852
        %v2997 = vpack.c.bf16 %v2869, %v2853
        %v2998 = vld [vmem:[%s290] sm:$0x77]
        %v2999 = vld [vmem:[%s290 + $0x8] sm:$0x77]
        %v3000 = vld [vmem:[%s290 + $0x10] sm:$0x77]
        %v3001 = vld [vmem:[%s290 + $0x18] sm:$0x77]
        %v3002 = vld [vmem:[%s290 + $0x20] sm:$0x77]
        %v3003 = vld [vmem:[%s290 + $0x28] sm:$0x77]
        %v3004 = vld [vmem:[%s290 + $0x30] sm:$0x77]
        %v3005 = vld [vmem:[%s290 + $0x38] sm:$0x77]
        %v3014 = vrot.slane %v2998, 5
        %v3015 = vrot.slane %v3014, 4
        %v3016 = vrot.slane %v2999, 5
        %v3017 = vrot.slane %v3016, 4
        %v3018 = vrot.slane %v3000, 5
        %v3019 = vrot.slane %v3018, 4
        %v3020 = vrot.slane %v3001, 5
        %v3021 = vrot.slane %v3020, 4
        %v3022 = vrot.slane %v3002, 5
        %v3023 = vrot.slane %v3022, 4
        %v3024 = vrot.slane %v3003, 5
        %v3025 = vrot.slane %v3024, 4
        %v3026 = vrot.slane %v3004, 5
        %v3027 = vrot.slane %v3026, 4
        %v3028 = vrot.slane %v3005, 5
        %v3029 = vrot.slane %v3028, 4
        %v3038 = vmul.f32 %v2998, %v3015
        %v3039 = vmul.f32 %v2999, %v3017
        %v3040 = vmul.f32 %v3000, %v3019
        %v3041 = vmul.f32 %v3001, %v3021
        %v3042 = vmul.f32 %v3002, %v3023
        %v3043 = vmul.f32 %v3003, %v3025
        %v3044 = vmul.f32 %v3004, %v3027
        %v3045 = vmul.f32 %v3005, %v3029
        %v3046 = vrot.slane %v2998, 6
        %v3047 = vrot.slane %v3046, 4
        %v3048 = vrot.slane %v2999, 6
        %v3049 = vrot.slane %v3048, 4
        %v3050 = vrot.slane %v3000, 6
        %v3051 = vrot.slane %v3050, 4
        %v3052 = vrot.slane %v3001, 6
        %v3053 = vrot.slane %v3052, 4
        %v3054 = vrot.slane %v3002, 6
        %v3055 = vrot.slane %v3054, 4
        %v3056 = vrot.slane %v3003, 6
        %v3057 = vrot.slane %v3056, 4
        %v3058 = vrot.slane %v3004, 6
        %v3059 = vrot.slane %v3058, 4
        %v3060 = vrot.slane %v3005, 6
        %v3061 = vrot.slane %v3060, 4
        %v3070 = vmul.f32 %v2998, %v3047
        %v3071 = vmul.f32 %v2999, %v3049
        %v3072 = vmul.f32 %v3000, %v3051
        %v3073 = vmul.f32 %v3001, %v3053
        %v3074 = vmul.f32 %v3002, %v3055
        %v3075 = vmul.f32 %v3003, %v3057
        %v3076 = vmul.f32 %v3004, %v3059
        %v3077 = vmul.f32 %v3005, %v3061
        %v3078 = vmul.f32 %v2998, %v2998
        %v3079 = vmul.f32 %v2999, %v2999
        %v3080 = vmul.f32 %v3000, %v3000
        %v3081 = vmul.f32 %v3001, %v3001
        %v3082 = vmul.f32 %v3002, %v3002
        %v3083 = vmul.f32 %v3003, %v3003
        %v3084 = vmul.f32 %v3004, %v3004
        %v3085 = vmul.f32 %v3005, %v3005
        %v3086 = vmul.f32 %v2998, -0.48860252
        %v3087 = vmul.f32 %v2999, -0.48860252
        %v3088 = vmul.f32 %v3000, -0.48860252
        %v3089 = vmul.f32 %v3001, -0.48860252
        %v3090 = vmul.f32 %v3002, -0.48860252
        %v3091 = vmul.f32 %v3003, -0.48860252
        %v3092 = vmul.f32 %v3004, -0.48860252
        %v3093 = vmul.f32 %v3005, -0.48860252
        %v3094 = vmul.f32 %v2998, 0.48860252
        %v3095 = vmul.f32 %v2999, 0.48860252
        %v3096 = vmul.f32 %v3000, 0.48860252
        %v3097 = vmul.f32 %v3001, 0.48860252
        %v3098 = vmul.f32 %v3002, 0.48860252
        %v3099 = vmul.f32 %v3003, 0.48860252
        %v3100 = vmul.f32 %v3004, 0.48860252
        %v3101 = vmul.f32 %v3005, 0.48860252
        %v3102 = vmul.f32 %v3038, 1.0925485
        %v3103 = vmul.f32 %v3039, 1.0925485
        %v3104 = vmul.f32 %v3040, 1.0925485
        %v3105 = vmul.f32 %v3041, 1.0925485
        %v3106 = vmul.f32 %v3042, 1.0925485
        %v3107 = vmul.f32 %v3043, 1.0925485
        %v3108 = vmul.f32 %v3044, 1.0925485
        %v3109 = vmul.f32 %v3045, 1.0925485
        %v3110 = vmul.f32 %v3038, -1.0925485
        %v3111 = vmul.f32 %v3039, -1.0925485
        %v3112 = vmul.f32 %v3040, -1.0925485
        %v3113 = vmul.f32 %v3041, -1.0925485
        %v3114 = vmul.f32 %v3042, -1.0925485
        %v3115 = vmul.f32 %v3043, -1.0925485
        %v3116 = vmul.f32 %v3044, -1.0925485
        %v3117 = vmul.f32 %v3045, -1.0925485
        %v3118 = vmul.f32 %v3078, 0.9461747
        %v3119 = vmul.f32 %v3079, 0.9461747
        %v3120 = vmul.f32 %v3080, 0.9461747
        %v3121 = vmul.f32 %v3081, 0.9461747
        %v3122 = vmul.f32 %v3082, 0.9461747
        %v3123 = vmul.f32 %v3083, 0.9461747
        %v3124 = vmul.f32 %v3084, 0.9461747
        %v3125 = vmul.f32 %v3085, 0.9461747
        %v3126 = vsub.f32 %v3118, 0.31539157
        %v3127 = vsub.f32 %v3119, 0.31539157
        %v3128 = vsub.f32 %v3120, 0.31539157
        %v3129 = vsub.f32 %v3121, 0.31539157
        %v3130 = vsub.f32 %v3122, 0.31539157
        %v3131 = vsub.f32 %v3123, 0.31539157
        %v3132 = vsub.f32 %v3124, 0.31539157
        %v3133 = vsub.f32 %v3125, 0.31539157
        %v3134 = vmul.f32 %v3070, -1.0925485
        %v3135 = vmul.f32 %v3071, -1.0925485
        %v3136 = vmul.f32 %v3072, -1.0925485
        %v3137 = vmul.f32 %v3073, -1.0925485
        %v3138 = vmul.f32 %v3074, -1.0925485
        %v3139 = vmul.f32 %v3075, -1.0925485
        %v3140 = vmul.f32 %v3076, -1.0925485
        %v3141 = vmul.f32 %v3077, -1.0925485
        %v3142 = vmul.f32 %v3078, 0.54627424
        %v3143 = vmul.f32 %v3079, 0.54627424
        %v3144 = vmul.f32 %v3080, 0.54627424
        %v3145 = vmul.f32 %v3081, 0.54627424
        %v3146 = vmul.f32 %v3082, 0.54627424
        %v3147 = vmul.f32 %v3083, 0.54627424
        %v3148 = vmul.f32 %v3084, 0.54627424
        %v3149 = vmul.f32 %v3085, 0.54627424
        %v3158 = vrot.slane %v3142, 5
        %v3159 = vrot.slane %v3158, 4
        %v3160 = vrot.slane %v3143, 5
        %v3161 = vrot.slane %v3160, 4
        %v3162 = vrot.slane %v3144, 5
        %v3163 = vrot.slane %v3162, 4
        %v3164 = vrot.slane %v3145, 5
        %v3165 = vrot.slane %v3164, 4
        %v3166 = vrot.slane %v3146, 5
        %v3167 = vrot.slane %v3166, 4
        %v3168 = vrot.slane %v3147, 5
        %v3169 = vrot.slane %v3168, 4
        %v3170 = vrot.slane %v3148, 5
        %v3171 = vrot.slane %v3170, 4
        %v3172 = vrot.slane %v3149, 5
        %v3173 = vrot.slane %v3172, 4
        %v3182 = vsub.f32 %v3142, %v3159
        %v3183 = vsub.f32 %v3143, %v3161
        %v3184 = vsub.f32 %v3144, %v3163
        %v3185 = vsub.f32 %v3145, %v3165
        %v3186 = vsub.f32 %v3146, %v3167
        %v3187 = vsub.f32 %v3147, %v3169
        %v3188 = vsub.f32 %v3148, %v3171
        %v3189 = vsub.f32 %v3149, %v3173
        %v3190 = vmul.f32 %v2998, 0.5900436
        %v3191 = vmul.f32 %v2999, 0.5900436
        %v3192 = vmul.f32 %v3000, 0.5900436
        %v3193 = vmul.f32 %v3001, 0.5900436
        %v3194 = vmul.f32 %v3002, 0.5900436
        %v3195 = vmul.f32 %v3003, 0.5900436
        %v3196 = vmul.f32 %v3004, 0.5900436
        %v3197 = vmul.f32 %v3005, 0.5900436
        %v3198 = vmul.f32 %v3078, -3.0
        %v3199 = vmul.f32 %v3079, -3.0
        %v3200 = vmul.f32 %v3080, -3.0
        %v3201 = vmul.f32 %v3081, -3.0
        %v3202 = vmul.f32 %v3082, -3.0
        %v3203 = vmul.f32 %v3083, -3.0
        %v3204 = vmul.f32 %v3084, -3.0
        %v3205 = vmul.f32 %v3085, -3.0
        %v3214 = vrot.slane %v3078, 5
        %v3215 = vrot.slane %v3214, 4
        %v3216 = vrot.slane %v3079, 5
        %v3217 = vrot.slane %v3216, 4
        %v3218 = vrot.slane %v3080, 5
        %v3219 = vrot.slane %v3218, 4
        %v3220 = vrot.slane %v3081, 5
        %v3221 = vrot.slane %v3220, 4
        %v3222 = vrot.slane %v3082, 5
        %v3223 = vrot.slane %v3222, 4
        %v3224 = vrot.slane %v3083, 5
        %v3225 = vrot.slane %v3224, 4
        %v3226 = vrot.slane %v3084, 5
        %v3227 = vrot.slane %v3226, 4
        %v3228 = vrot.slane %v3085, 5
        %v3229 = vrot.slane %v3228, 4
        %v3238 = vadd.f32 %v3198, %v3215
        %v3239 = vadd.f32 %v3199, %v3217
        %v3240 = vadd.f32 %v3200, %v3219
        %v3241 = vadd.f32 %v3201, %v3221
        %v3242 = vadd.f32 %v3202, %v3223
        %v3243 = vadd.f32 %v3203, %v3225
        %v3244 = vadd.f32 %v3204, %v3227
        %v3245 = vadd.f32 %v3205, %v3229
        %v3254 = vrot.slane %v3238, 7
        %v3255 = vrot.slane %v3239, 7
        %v3256 = vrot.slane %v3240, 7
        %v3257 = vrot.slane %v3241, 7
        %v3258 = vrot.slane %v3242, 7
        %v3259 = vrot.slane %v3243, 7
        %v3260 = vrot.slane %v3244, 7
        %v3261 = vrot.slane %v3245, 7
        %v3270 = vmul.f32 %v3190, %v3254
        %v3271 = vmul.f32 %v3191, %v3255
        %v3272 = vmul.f32 %v3192, %v3256
        %v3273 = vmul.f32 %v3193, %v3257
        %v3274 = vmul.f32 %v3194, %v3258
        %v3275 = vmul.f32 %v3195, %v3259
        %v3276 = vmul.f32 %v3196, %v3260
        %v3277 = vmul.f32 %v3197, %v3261
        %v3278 = vmul.f32 %v3038, 2.8906114
        %v3279 = vmul.f32 %v3039, 2.8906114
        %v3280 = vmul.f32 %v3040, 2.8906114
        %v3281 = vmul.f32 %v3041, 2.8906114
        %v3282 = vmul.f32 %v3042, 2.8906114
        %v3283 = vmul.f32 %v3043, 2.8906114
        %v3284 = vmul.f32 %v3044, 2.8906114
        %v3285 = vmul.f32 %v3045, 2.8906114
        %v3286 = vmul.f32 %v3278, %v3047
        %v3287 = vmul.f32 %v3279, %v3049
        %v3288 = vmul.f32 %v3280, %v3051
        %v3289 = vmul.f32 %v3281, %v3053
        %v3290 = vmul.f32 %v3282, %v3055
        %v3291 = vmul.f32 %v3283, %v3057
        %v3292 = vmul.f32 %v3284, %v3059
        %v3293 = vmul.f32 %v3285, %v3061
        %v3294 = vmul.f32 %v2998, 0.4570458
        %v3295 = vmul.f32 %v2999, 0.4570458
        %v3296 = vmul.f32 %v3000, 0.4570458
        %v3297 = vmul.f32 %v3001, 0.4570458
        %v3298 = vmul.f32 %v3002, 0.4570458
        %v3299 = vmul.f32 %v3003, 0.4570458
        %v3300 = vmul.f32 %v3004, 0.4570458
        %v3301 = vmul.f32 %v3005, 0.4570458
        %v3302 = vmul.f32 %v3078, 5.0
        %v3303 = vmul.f32 %v3079, 5.0
        %v3304 = vmul.f32 %v3080, 5.0
        %v3305 = vmul.f32 %v3081, 5.0
        %v3306 = vmul.f32 %v3082, 5.0
        %v3307 = vmul.f32 %v3083, 5.0
        %v3308 = vmul.f32 %v3084, 5.0
        %v3309 = vmul.f32 %v3085, 5.0
        %v3310 = vsub.f32 1.0, %v3302
        %v3311 = vsub.f32 1.0, %v3303
        %v3312 = vsub.f32 1.0, %v3304
        %v3313 = vsub.f32 1.0, %v3305
        %v3314 = vsub.f32 1.0, %v3306
        %v3315 = vsub.f32 1.0, %v3307
        %v3316 = vsub.f32 1.0, %v3308
        %v3317 = vsub.f32 1.0, %v3309
        %v3326 = vrot.slane %v3310, 5
        %v3327 = vrot.slane %v3326, 4
        %v3328 = vrot.slane %v3311, 5
        %v3329 = vrot.slane %v3328, 4
        %v3330 = vrot.slane %v3312, 5
        %v3331 = vrot.slane %v3330, 4
        %v3332 = vrot.slane %v3313, 5
        %v3333 = vrot.slane %v3332, 4
        %v3334 = vrot.slane %v3314, 5
        %v3335 = vrot.slane %v3334, 4
        %v3336 = vrot.slane %v3315, 5
        %v3337 = vrot.slane %v3336, 4
        %v3338 = vrot.slane %v3316, 5
        %v3339 = vrot.slane %v3338, 4
        %v3340 = vrot.slane %v3317, 5
        %v3341 = vrot.slane %v3340, 4
        %v3350 = vmul.f32 %v3294, %v3327
        %v3351 = vmul.f32 %v3295, %v3329
        %v3352 = vmul.f32 %v3296, %v3331
        %v3353 = vmul.f32 %v3297, %v3333
        %v3354 = vmul.f32 %v3298, %v3335
        %v3355 = vmul.f32 %v3299, %v3337
        %v3356 = vmul.f32 %v3300, %v3339
        %v3357 = vmul.f32 %v3301, %v3341
        %v3358 = vmul.f32 %v2998, 0.37317634
        %v3359 = vmul.f32 %v2999, 0.37317634
        %v3360 = vmul.f32 %v3000, 0.37317634
        %v3361 = vmul.f32 %v3001, 0.37317634
        %v3362 = vmul.f32 %v3002, 0.37317634
        %v3363 = vmul.f32 %v3003, 0.37317634
        %v3364 = vmul.f32 %v3004, 0.37317634
        %v3365 = vmul.f32 %v3005, 0.37317634
        %v3366 = vsub.f32 %v3302, 3.0
        %v3367 = vsub.f32 %v3303, 3.0
        %v3368 = vsub.f32 %v3304, 3.0
        %v3369 = vsub.f32 %v3305, 3.0
        %v3370 = vsub.f32 %v3306, 3.0
        %v3371 = vsub.f32 %v3307, 3.0
        %v3372 = vsub.f32 %v3308, 3.0
        %v3373 = vsub.f32 %v3309, 3.0
        %v3374 = vmul.f32 %v3358, %v3366
        %v3375 = vmul.f32 %v3359, %v3367
        %v3376 = vmul.f32 %v3360, %v3368
        %v3377 = vmul.f32 %v3361, %v3369
        %v3378 = vmul.f32 %v3362, %v3370
        %v3379 = vmul.f32 %v3363, %v3371
        %v3380 = vmul.f32 %v3364, %v3372
        %v3381 = vmul.f32 %v3365, %v3373
        %v3382 = vrot.slane %v3310, 6
        %v3383 = vrot.slane %v3382, 4
        %v3384 = vrot.slane %v3311, 6
        %v3385 = vrot.slane %v3384, 4
        %v3386 = vrot.slane %v3312, 6
        %v3387 = vrot.slane %v3386, 4
        %v3388 = vrot.slane %v3313, 6
        %v3389 = vrot.slane %v3388, 4
        %v3390 = vrot.slane %v3314, 6
        %v3391 = vrot.slane %v3390, 4
        %v3392 = vrot.slane %v3315, 6
        %v3393 = vrot.slane %v3392, 4
        %v3394 = vrot.slane %v3316, 6
        %v3395 = vrot.slane %v3394, 4
        %v3396 = vrot.slane %v3317, 6
        %v3397 = vrot.slane %v3396, 4
        %v3406 = vmul.f32 %v3294, %v3383
        %v3407 = vmul.f32 %v3295, %v3385
        %v3408 = vmul.f32 %v3296, %v3387
        %v3409 = vmul.f32 %v3297, %v3389
        %v3410 = vmul.f32 %v3298, %v3391
        %v3411 = vmul.f32 %v3299, %v3393
        %v3412 = vmul.f32 %v3300, %v3395
        %v3413 = vmul.f32 %v3301, %v3397
        %v3414 = vmul.f32 %v2998, 1.4453057
        %v3415 = vmul.f32 %v2999, 1.4453057
        %v3416 = vmul.f32 %v3000, 1.4453057
        %v3417 = vmul.f32 %v3001, 1.4453057
        %v3418 = vmul.f32 %v3002, 1.4453057
        %v3419 = vmul.f32 %v3003, 1.4453057
        %v3420 = vmul.f32 %v3004, 1.4453057
        %v3421 = vmul.f32 %v3005, 1.4453057
        %v3422 = vsub.f32 %v3078, %v3215
        %v3423 = vsub.f32 %v3079, %v3217
        %v3424 = vsub.f32 %v3080, %v3219
        %v3425 = vsub.f32 %v3081, %v3221
        %v3426 = vsub.f32 %v3082, %v3223
        %v3427 = vsub.f32 %v3083, %v3225
        %v3428 = vsub.f32 %v3084, %v3227
        %v3429 = vsub.f32 %v3085, %v3229
        %v3438 = vrot.slane %v3422, 6
        %v3439 = vrot.slane %v3423, 6
        %v3440 = vrot.slane %v3424, 6
        %v3441 = vrot.slane %v3425, 6
        %v3442 = vrot.slane %v3426, 6
        %v3443 = vrot.slane %v3427, 6
        %v3444 = vrot.slane %v3428, 6
        %v3445 = vrot.slane %v3429, 6
        %v3454 = vmul.f32 %v3414, %v3438
        %v3455 = vmul.f32 %v3415, %v3439
        %v3456 = vmul.f32 %v3416, %v3440
        %v3457 = vmul.f32 %v3417, %v3441
        %v3458 = vmul.f32 %v3418, %v3442
        %v3459 = vmul.f32 %v3419, %v3443
        %v3460 = vmul.f32 %v3420, %v3444
        %v3461 = vmul.f32 %v3421, %v3445
        %v3462 = vsub.f32 0.0, %v3078
        %v3463 = vsub.f32 0.0, %v3079
        %v3464 = vsub.f32 0.0, %v3080
        %v3465 = vsub.f32 0.0, %v3081
        %v3466 = vsub.f32 0.0, %v3082
        %v3467 = vsub.f32 0.0, %v3083
        %v3468 = vsub.f32 0.0, %v3084
        %v3469 = vsub.f32 0.0, %v3085
        %v3470 = vmul.f32 %v3078, 3.0
        %v3471 = vmul.f32 %v3079, 3.0
        %v3472 = vmul.f32 %v3080, 3.0
        %v3473 = vmul.f32 %v3081, 3.0
        %v3474 = vmul.f32 %v3082, 3.0
        %v3475 = vmul.f32 %v3083, 3.0
        %v3476 = vmul.f32 %v3084, 3.0
        %v3477 = vmul.f32 %v3085, 3.0
        %v3486 = vrot.slane %v3470, 5
        %v3487 = vrot.slane %v3486, 4
        %v3488 = vrot.slane %v3471, 5
        %v3489 = vrot.slane %v3488, 4
        %v3490 = vrot.slane %v3472, 5
        %v3491 = vrot.slane %v3490, 4
        %v3492 = vrot.slane %v3473, 5
        %v3493 = vrot.slane %v3492, 4
        %v3494 = vrot.slane %v3474, 5
        %v3495 = vrot.slane %v3494, 4
        %v3496 = vrot.slane %v3475, 5
        %v3497 = vrot.slane %v3496, 4
        %v3498 = vrot.slane %v3476, 5
        %v3499 = vrot.slane %v3498, 4
        %v3500 = vrot.slane %v3477, 5
        %v3501 = vrot.slane %v3500, 4
        %v3510 = vadd.f32 %v3462, %v3487
        %v3511 = vadd.f32 %v3463, %v3489
        %v3512 = vadd.f32 %v3464, %v3491
        %v3513 = vadd.f32 %v3465, %v3493
        %v3514 = vadd.f32 %v3466, %v3495
        %v3515 = vadd.f32 %v3467, %v3497
        %v3516 = vadd.f32 %v3468, %v3499
        %v3517 = vadd.f32 %v3469, %v3501
        %v3518 = vmul.f32 %v3190, %v3510
        %v3519 = vmul.f32 %v3191, %v3511
        %v3520 = vmul.f32 %v3192, %v3512
        %v3521 = vmul.f32 %v3193, %v3513
        %v3522 = vmul.f32 %v3194, %v3514
        %v3523 = vmul.f32 %v3195, %v3515
        %v3524 = vmul.f32 %v3196, %v3516
        %v3525 = vmul.f32 %v3197, %v3517
        %v3534 = vlaneseq
        %v3535 = vshrl.u32 %v3534, 7
        %v3536 = vsub.s32 1, %v3535
        %v3537 = vrot.slane %v3086, %v3536
        %v3538 = vlaneseq
        %v3539 = vshrl.u32 %v3538, 7
        %v3540 = vsub.s32 5, %v3539
        %v3541 = vrot.slane %v3086, %v3540
        %v3542 = vlaneseq
        %v3543 = vshrl.u32 %v3542, 7
        %v3544 = vsub.s32 1, %v3543
        %v3545 = vrot.slane %v3087, %v3544
        %v3546 = vlaneseq
        %v3547 = vshrl.u32 %v3546, 7
        %v3548 = vsub.s32 5, %v3547
        %v3549 = vrot.slane %v3087, %v3548
        %v3550 = vlaneseq
        %v3551 = vshrl.u32 %v3550, 7
        %v3552 = vsub.s32 1, %v3551
        %v3553 = vrot.slane %v3088, %v3552
        %v3554 = vlaneseq
        %v3555 = vshrl.u32 %v3554, 7
        %v3556 = vsub.s32 5, %v3555
        %v3557 = vrot.slane %v3088, %v3556
        %v3558 = vlaneseq
        %v3559 = vshrl.u32 %v3558, 7
        %v3560 = vsub.s32 1, %v3559
        %v3561 = vrot.slane %v3089, %v3560
        %v3562 = vlaneseq
        %v3563 = vshrl.u32 %v3562, 7
        %v3564 = vsub.s32 5, %v3563
        %v3565 = vrot.slane %v3089, %v3564
        %v3566 = vlaneseq
        %v3567 = vshrl.u32 %v3566, 7
        %v3568 = vsub.s32 1, %v3567
        %v3569 = vrot.slane %v3090, %v3568
        %v3570 = vlaneseq
        %v3571 = vshrl.u32 %v3570, 7
        %v3572 = vsub.s32 5, %v3571
        %v3573 = vrot.slane %v3090, %v3572
        %v3574 = vlaneseq
        %v3575 = vshrl.u32 %v3574, 7
        %v3576 = vsub.s32 1, %v3575
        %v3577 = vrot.slane %v3091, %v3576
        %v3578 = vlaneseq
        %v3579 = vshrl.u32 %v3578, 7
        %v3580 = vsub.s32 5, %v3579
        %v3581 = vrot.slane %v3091, %v3580
        %v3582 = vlaneseq
        %v3583 = vshrl.u32 %v3582, 7
        %v3584 = vsub.s32 1, %v3583
        %v3585 = vrot.slane %v3092, %v3584
        %v3586 = vlaneseq
        %v3587 = vshrl.u32 %v3586, 7
        %v3588 = vsub.s32 5, %v3587
        %v3589 = vrot.slane %v3092, %v3588
        %v3590 = vlaneseq
        %v3591 = vshrl.u32 %v3590, 7
        %v3592 = vsub.s32 1, %v3591
        %v3593 = vrot.slane %v3093, %v3592
        %v3594 = vlaneseq
        %v3595 = vshrl.u32 %v3594, 7
        %v3596 = vsub.s32 5, %v3595
        %v3597 = vrot.slane %v3093, %v3596
        %v3622 = vlaneseq
        %v3623 = vshrl.u32 %v3622, 7
        %v3624 = vsub.s32 2, %v3623
        %v3625 = vrot.slane %v3094, %v3624
        %v3626 = vlaneseq
        %v3627 = vshrl.u32 %v3626, 7
        %v3628 = vsub.s32 6, %v3627
        %v3629 = vrot.slane %v3094, %v3628
        %v3630 = vlaneseq
        %v3631 = vshrl.u32 %v3630, 7
        %v3632 = vsub.s32 2, %v3631
        %v3633 = vrot.slane %v3095, %v3632
        %v3634 = vlaneseq
        %v3635 = vshrl.u32 %v3634, 7
        %v3636 = vsub.s32 6, %v3635
        %v3637 = vrot.slane %v3095, %v3636
        %v3638 = vlaneseq
        %v3639 = vshrl.u32 %v3638, 7
        %v3640 = vsub.s32 2, %v3639
        %v3641 = vrot.slane %v3096, %v3640
        %v3642 = vlaneseq
        %v3643 = vshrl.u32 %v3642, 7
        %v3644 = vsub.s32 6, %v3643
        %v3645 = vrot.slane %v3096, %v3644
        %v3646 = vlaneseq
        %v3647 = vshrl.u32 %v3646, 7
        %v3648 = vsub.s32 2, %v3647
        %v3649 = vrot.slane %v3097, %v3648
        %v3650 = vlaneseq
        %v3651 = vshrl.u32 %v3650, 7
        %v3652 = vsub.s32 6, %v3651
        %v3653 = vrot.slane %v3097, %v3652
        %v3654 = vlaneseq
        %v3655 = vshrl.u32 %v3654, 7
        %v3656 = vsub.s32 2, %v3655
        %v3657 = vrot.slane %v3098, %v3656
        %v3658 = vlaneseq
        %v3659 = vshrl.u32 %v3658, 7
        %v3660 = vsub.s32 6, %v3659
        %v3661 = vrot.slane %v3098, %v3660
        %v3662 = vlaneseq
        %v3663 = vshrl.u32 %v3662, 7
        %v3664 = vsub.s32 2, %v3663
        %v3665 = vrot.slane %v3099, %v3664
        %v3666 = vlaneseq
        %v3667 = vshrl.u32 %v3666, 7
        %v3668 = vsub.s32 6, %v3667
        %v3669 = vrot.slane %v3099, %v3668
        %v3670 = vlaneseq
        %v3671 = vshrl.u32 %v3670, 7
        %v3672 = vsub.s32 2, %v3671
        %v3673 = vrot.slane %v3100, %v3672
        %v3674 = vlaneseq
        %v3675 = vshrl.u32 %v3674, 7
        %v3676 = vsub.s32 6, %v3675
        %v3677 = vrot.slane %v3100, %v3676
        %v3678 = vlaneseq
        %v3679 = vshrl.u32 %v3678, 7
        %v3680 = vsub.s32 2, %v3679
        %v3681 = vrot.slane %v3101, %v3680
        %v3682 = vlaneseq
        %v3683 = vshrl.u32 %v3682, 7
        %v3684 = vsub.s32 6, %v3683
        %v3685 = vrot.slane %v3101, %v3684
        %v3702 = vlaneseq
        %v3703 = vshrl.u32 %v3702, 7
        %v3704 = vsub.s32 0, %v3703
        %v3705 = vrot.slane %v3086, %v3704
        %v3706 = vlaneseq
        %v3707 = vshrl.u32 %v3706, 7
        %v3708 = vsub.s32 4, %v3707
        %v3709 = vrot.slane %v3086, %v3708
        %v3710 = vlaneseq
        %v3711 = vshrl.u32 %v3710, 7
        %v3712 = vsub.s32 0, %v3711
        %v3713 = vrot.slane %v3087, %v3712
        %v3714 = vlaneseq
        %v3715 = vshrl.u32 %v3714, 7
        %v3716 = vsub.s32 4, %v3715
        %v3717 = vrot.slane %v3087, %v3716
        %v3718 = vlaneseq
        %v3719 = vshrl.u32 %v3718, 7
        %v3720 = vsub.s32 0, %v3719
        %v3721 = vrot.slane %v3088, %v3720
        %v3722 = vlaneseq
        %v3723 = vshrl.u32 %v3722, 7
        %v3724 = vsub.s32 4, %v3723
        %v3725 = vrot.slane %v3088, %v3724
        %v3726 = vlaneseq
        %v3727 = vshrl.u32 %v3726, 7
        %v3728 = vsub.s32 0, %v3727
        %v3729 = vrot.slane %v3089, %v3728
        %v3730 = vlaneseq
        %v3731 = vshrl.u32 %v3730, 7
        %v3732 = vsub.s32 4, %v3731
        %v3733 = vrot.slane %v3089, %v3732
        %v3734 = vlaneseq
        %v3735 = vshrl.u32 %v3734, 7
        %v3736 = vsub.s32 0, %v3735
        %v3737 = vrot.slane %v3090, %v3736
        %v3738 = vlaneseq
        %v3739 = vshrl.u32 %v3738, 7
        %v3740 = vsub.s32 4, %v3739
        %v3741 = vrot.slane %v3090, %v3740
        %v3742 = vlaneseq
        %v3743 = vshrl.u32 %v3742, 7
        %v3744 = vsub.s32 0, %v3743
        %v3745 = vrot.slane %v3091, %v3744
        %v3746 = vlaneseq
        %v3747 = vshrl.u32 %v3746, 7
        %v3748 = vsub.s32 4, %v3747
        %v3749 = vrot.slane %v3091, %v3748
        %v3750 = vlaneseq
        %v3751 = vshrl.u32 %v3750, 7
        %v3752 = vsub.s32 0, %v3751
        %v3753 = vrot.slane %v3092, %v3752
        %v3754 = vlaneseq
        %v3755 = vshrl.u32 %v3754, 7
        %v3756 = vsub.s32 4, %v3755
        %v3757 = vrot.slane %v3092, %v3756
        %v3758 = vlaneseq
        %v3759 = vshrl.u32 %v3758, 7
        %v3760 = vsub.s32 0, %v3759
        %v3761 = vrot.slane %v3093, %v3760
        %v3762 = vlaneseq
        %v3763 = vshrl.u32 %v3762, 7
        %v3764 = vsub.s32 4, %v3763
        %v3765 = vrot.slane %v3093, %v3764
        %v3790 = vlaneseq
        %v3791 = vshrl.u32 %v3790, 7
        %v3792 = vsub.s32 0, %v3791
        %v3793 = vrot.slane %v3102, %v3792
        %v3794 = vlaneseq
        %v3795 = vshrl.u32 %v3794, 7
        %v3796 = vsub.s32 4, %v3795
        %v3797 = vrot.slane %v3102, %v3796
        %v3798 = vlaneseq
        %v3799 = vshrl.u32 %v3798, 7
        %v3800 = vsub.s32 0, %v3799
        %v3801 = vrot.slane %v3103, %v3800
        %v3802 = vlaneseq
        %v3803 = vshrl.u32 %v3802, 7
        %v3804 = vsub.s32 4, %v3803
        %v3805 = vrot.slane %v3103, %v3804
        %v3806 = vlaneseq
        %v3807 = vshrl.u32 %v3806, 7
        %v3808 = vsub.s32 0, %v3807
        %v3809 = vrot.slane %v3104, %v3808
        %v3810 = vlaneseq
        %v3811 = vshrl.u32 %v3810, 7
        %v3812 = vsub.s32 4, %v3811
        %v3813 = vrot.slane %v3104, %v3812
        %v3814 = vlaneseq
        %v3815 = vshrl.u32 %v3814, 7
        %v3816 = vsub.s32 0, %v3815
        %v3817 = vrot.slane %v3105, %v3816
        %v3818 = vlaneseq
        %v3819 = vshrl.u32 %v3818, 7
        %v3820 = vsub.s32 4, %v3819
        %v3821 = vrot.slane %v3105, %v3820
        %v3822 = vlaneseq
        %v3823 = vshrl.u32 %v3822, 7
        %v3824 = vsub.s32 0, %v3823
        %v3825 = vrot.slane %v3106, %v3824
        %v3826 = vlaneseq
        %v3827 = vshrl.u32 %v3826, 7
        %v3828 = vsub.s32 4, %v3827
        %v3829 = vrot.slane %v3106, %v3828
        %v3830 = vlaneseq
        %v3831 = vshrl.u32 %v3830, 7
        %v3832 = vsub.s32 0, %v3831
        %v3833 = vrot.slane %v3107, %v3832
        %v3834 = vlaneseq
        %v3835 = vshrl.u32 %v3834, 7
        %v3836 = vsub.s32 4, %v3835
        %v3837 = vrot.slane %v3107, %v3836
        %v3838 = vlaneseq
        %v3839 = vshrl.u32 %v3838, 7
        %v3840 = vsub.s32 0, %v3839
        %v3841 = vrot.slane %v3108, %v3840
        %v3842 = vlaneseq
        %v3843 = vshrl.u32 %v3842, 7
        %v3844 = vsub.s32 4, %v3843
        %v3845 = vrot.slane %v3108, %v3844
        %v3846 = vlaneseq
        %v3847 = vshrl.u32 %v3846, 7
        %v3848 = vsub.s32 0, %v3847
        %v3849 = vrot.slane %v3109, %v3848
        %v3850 = vlaneseq
        %v3851 = vshrl.u32 %v3850, 7
        %v3852 = vsub.s32 4, %v3851
        %v3853 = vrot.slane %v3109, %v3852
        %v3878 = vlaneseq
        %v3879 = vshrl.u32 %v3878, 7
        %v3880 = vsub.s32 1, %v3879
        %v3881 = vrot.slane %v3110, %v3880
        %v3882 = vlaneseq
        %v3883 = vshrl.u32 %v3882, 7
        %v3884 = vsub.s32 5, %v3883
        %v3885 = vrot.slane %v3110, %v3884
        %v3886 = vlaneseq
        %v3887 = vshrl.u32 %v3886, 7
        %v3888 = vsub.s32 1, %v3887
        %v3889 = vrot.slane %v3111, %v3888
        %v3890 = vlaneseq
        %v3891 = vshrl.u32 %v3890, 7
        %v3892 = vsub.s32 5, %v3891
        %v3893 = vrot.slane %v3111, %v3892
        %v3894 = vlaneseq
        %v3895 = vshrl.u32 %v3894, 7
        %v3896 = vsub.s32 1, %v3895
        %v3897 = vrot.slane %v3112, %v3896
        %v3898 = vlaneseq
        %v3899 = vshrl.u32 %v3898, 7
        %v3900 = vsub.s32 5, %v3899
        %v3901 = vrot.slane %v3112, %v3900
        %v3902 = vlaneseq
        %v3903 = vshrl.u32 %v3902, 7
        %v3904 = vsub.s32 1, %v3903
        %v3905 = vrot.slane %v3113, %v3904
        %v3906 = vlaneseq
        %v3907 = vshrl.u32 %v3906, 7
        %v3908 = vsub.s32 5, %v3907
        %v3909 = vrot.slane %v3113, %v3908
        %v3910 = vlaneseq
        %v3911 = vshrl.u32 %v3910, 7
        %v3912 = vsub.s32 1, %v3911
        %v3913 = vrot.slane %v3114, %v3912
        %v3914 = vlaneseq
        %v3915 = vshrl.u32 %v3914, 7
        %v3916 = vsub.s32 5, %v3915
        %v3917 = vrot.slane %v3114, %v3916
        %v3918 = vlaneseq
        %v3919 = vshrl.u32 %v3918, 7
        %v3920 = vsub.s32 1, %v3919
        %v3921 = vrot.slane %v3115, %v3920
        %v3922 = vlaneseq
        %v3923 = vshrl.u32 %v3922, 7
        %v3924 = vsub.s32 5, %v3923
        %v3925 = vrot.slane %v3115, %v3924
        %v3926 = vlaneseq
        %v3927 = vshrl.u32 %v3926, 7
        %v3928 = vsub.s32 1, %v3927
        %v3929 = vrot.slane %v3116, %v3928
        %v3930 = vlaneseq
        %v3931 = vshrl.u32 %v3930, 7
        %v3932 = vsub.s32 5, %v3931
        %v3933 = vrot.slane %v3116, %v3932
        %v3934 = vlaneseq
        %v3935 = vshrl.u32 %v3934, 7
        %v3936 = vsub.s32 1, %v3935
        %v3937 = vrot.slane %v3117, %v3936
        %v3938 = vlaneseq
        %v3939 = vshrl.u32 %v3938, 7
        %v3940 = vsub.s32 5, %v3939
        %v3941 = vrot.slane %v3117, %v3940
        %v3966 = vlaneseq
        %v3967 = vshrl.u32 %v3966, 7
        %v3968 = vsub.s32 2, %v3967
        %v3969 = vrot.slane %v3126, %v3968
        %v3970 = vlaneseq
        %v3971 = vshrl.u32 %v3970, 7
        %v3972 = vsub.s32 6, %v3971
        %v3973 = vrot.slane %v3126, %v3972
        %v3974 = vlaneseq
        %v3975 = vshrl.u32 %v3974, 7
        %v3976 = vsub.s32 2, %v3975
        %v3977 = vrot.slane %v3127, %v3976
        %v3978 = vlaneseq
        %v3979 = vshrl.u32 %v3978, 7
        %v3980 = vsub.s32 6, %v3979
        %v3981 = vrot.slane %v3127, %v3980
        %v3982 = vlaneseq
        %v3983 = vshrl.u32 %v3982, 7
        %v3984 = vsub.s32 2, %v3983
        %v3985 = vrot.slane %v3128, %v3984
        %v3986 = vlaneseq
        %v3987 = vshrl.u32 %v3986, 7
        %v3988 = vsub.s32 6, %v3987
        %v3989 = vrot.slane %v3128, %v3988
        %v3990 = vlaneseq
        %v3991 = vshrl.u32 %v3990, 7
        %v3992 = vsub.s32 2, %v3991
        %v3993 = vrot.slane %v3129, %v3992
        %v3994 = vlaneseq
        %v3995 = vshrl.u32 %v3994, 7
        %v3996 = vsub.s32 6, %v3995
        %v3997 = vrot.slane %v3129, %v3996
        %v3998 = vlaneseq
        %v3999 = vshrl.u32 %v3998, 7
        %v4000 = vsub.s32 2, %v3999
        %v4001 = vrot.slane %v3130, %v4000
        %v4002 = vlaneseq
        %v4003 = vshrl.u32 %v4002, 7
        %v4004 = vsub.s32 6, %v4003
        %v4005 = vrot.slane %v3130, %v4004
        %v4006 = vlaneseq
        %v4007 = vshrl.u32 %v4006, 7
        %v4008 = vsub.s32 2, %v4007
        %v4009 = vrot.slane %v3131, %v4008
        %v4010 = vlaneseq
        %v4011 = vshrl.u32 %v4010, 7
        %v4012 = vsub.s32 6, %v4011
        %v4013 = vrot.slane %v3131, %v4012
        %v4014 = vlaneseq
        %v4015 = vshrl.u32 %v4014, 7
        %v4016 = vsub.s32 2, %v4015
        %v4017 = vrot.slane %v3132, %v4016
        %v4018 = vlaneseq
        %v4019 = vshrl.u32 %v4018, 7
        %v4020 = vsub.s32 6, %v4019
        %v4021 = vrot.slane %v3132, %v4020
        %v4022 = vlaneseq
        %v4023 = vshrl.u32 %v4022, 7
        %v4024 = vsub.s32 2, %v4023
        %v4025 = vrot.slane %v3133, %v4024
        %v4026 = vlaneseq
        %v4027 = vshrl.u32 %v4026, 7
        %v4028 = vsub.s32 6, %v4027
        %v4029 = vrot.slane %v3133, %v4028
        %v4054 = vlaneseq
        %v4055 = vshrl.u32 %v4054, 7
        %v4056 = vsub.s32 0, %v4055
        %v4057 = vrot.slane %v3134, %v4056
        %v4058 = vlaneseq
        %v4059 = vshrl.u32 %v4058, 7
        %v4060 = vsub.s32 4, %v4059
        %v4061 = vrot.slane %v3134, %v4060
        %v4062 = vlaneseq
        %v4063 = vshrl.u32 %v4062, 7
        %v4064 = vsub.s32 0, %v4063
        %v4065 = vrot.slane %v3135, %v4064
        %v4066 = vlaneseq
        %v4067 = vshrl.u32 %v4066, 7
        %v4068 = vsub.s32 4, %v4067
        %v4069 = vrot.slane %v3135, %v4068
        %v4070 = vlaneseq
        %v4071 = vshrl.u32 %v4070, 7
        %v4072 = vsub.s32 0, %v4071
        %v4073 = vrot.slane %v3136, %v4072
        %v4074 = vlaneseq
        %v4075 = vshrl.u32 %v4074, 7
        %v4076 = vsub.s32 4, %v4075
        %v4077 = vrot.slane %v3136, %v4076
        %v4078 = vlaneseq
        %v4079 = vshrl.u32 %v4078, 7
        %v4080 = vsub.s32 0, %v4079
        %v4081 = vrot.slane %v3137, %v4080
        %v4082 = vlaneseq
        %v4083 = vshrl.u32 %v4082, 7
        %v4084 = vsub.s32 4, %v4083
        %v4085 = vrot.slane %v3137, %v4084
        %v4086 = vlaneseq
        %v4087 = vshrl.u32 %v4086, 7
        %v4088 = vsub.s32 0, %v4087
        %v4089 = vrot.slane %v3138, %v4088
        %v4090 = vlaneseq
        %v4091 = vshrl.u32 %v4090, 7
        %v4092 = vsub.s32 4, %v4091
        %v4093 = vrot.slane %v3138, %v4092
        %v4094 = vlaneseq
        %v4095 = vshrl.u32 %v4094, 7
        %v4096 = vsub.s32 0, %v4095
        %v4097 = vrot.slane %v3139, %v4096
        %v4098 = vlaneseq
        %v4099 = vshrl.u32 %v4098, 7
        %v4100 = vsub.s32 4, %v4099
        %v4101 = vrot.slane %v3139, %v4100
        %v4102 = vlaneseq
        %v4103 = vshrl.u32 %v4102, 7
        %v4104 = vsub.s32 0, %v4103
        %v4105 = vrot.slane %v3140, %v4104
        %v4106 = vlaneseq
        %v4107 = vshrl.u32 %v4106, 7
        %v4108 = vsub.s32 4, %v4107
        %v4109 = vrot.slane %v3140, %v4108
        %v4110 = vlaneseq
        %v4111 = vshrl.u32 %v4110, 7
        %v4112 = vsub.s32 0, %v4111
        %v4113 = vrot.slane %v3141, %v4112
        %v4114 = vlaneseq
        %v4115 = vshrl.u32 %v4114, 7
        %v4116 = vsub.s32 4, %v4115
        %v4117 = vrot.slane %v3141, %v4116
        %v4142 = vlaneseq
        %v4143 = vshrl.u32 %v4142, 7
        %v4144 = vsub.s32 0, %v4143
        %v4145 = vrot.slane %v3182, %v4144
        %v4146 = vlaneseq
        %v4147 = vshrl.u32 %v4146, 7
        %v4148 = vsub.s32 4, %v4147
        %v4149 = vrot.slane %v3182, %v4148
        %v4150 = vlaneseq
        %v4151 = vshrl.u32 %v4150, 7
        %v4152 = vsub.s32 0, %v4151
        %v4153 = vrot.slane %v3183, %v4152
        %v4154 = vlaneseq
        %v4155 = vshrl.u32 %v4154, 7
        %v4156 = vsub.s32 4, %v4155
        %v4157 = vrot.slane %v3183, %v4156
        %v4158 = vlaneseq
        %v4159 = vshrl.u32 %v4158, 7
        %v4160 = vsub.s32 0, %v4159
        %v4161 = vrot.slane %v3184, %v4160
        %v4162 = vlaneseq
        %v4163 = vshrl.u32 %v4162, 7
        %v4164 = vsub.s32 4, %v4163
        %v4165 = vrot.slane %v3184, %v4164
        %v4166 = vlaneseq
        %v4167 = vshrl.u32 %v4166, 7
        %v4168 = vsub.s32 0, %v4167
        %v4169 = vrot.slane %v3185, %v4168
        %v4170 = vlaneseq
        %v4171 = vshrl.u32 %v4170, 7
        %v4172 = vsub.s32 4, %v4171
        %v4173 = vrot.slane %v3185, %v4172
        %v4174 = vlaneseq
        %v4175 = vshrl.u32 %v4174, 7
        %v4176 = vsub.s32 0, %v4175
        %v4177 = vrot.slane %v3186, %v4176
        %v4178 = vlaneseq
        %v4179 = vshrl.u32 %v4178, 7
        %v4180 = vsub.s32 4, %v4179
        %v4181 = vrot.slane %v3186, %v4180
        %v4182 = vlaneseq
        %v4183 = vshrl.u32 %v4182, 7
        %v4184 = vsub.s32 0, %v4183
        %v4185 = vrot.slane %v3187, %v4184
        %v4186 = vlaneseq
        %v4187 = vshrl.u32 %v4186, 7
        %v4188 = vsub.s32 4, %v4187
        %v4189 = vrot.slane %v3187, %v4188
        %v4190 = vlaneseq
        %v4191 = vshrl.u32 %v4190, 7
        %v4192 = vsub.s32 0, %v4191
        %v4193 = vrot.slane %v3188, %v4192
        %v4194 = vlaneseq
        %v4195 = vshrl.u32 %v4194, 7
        %v4196 = vsub.s32 4, %v4195
        %v4197 = vrot.slane %v3188, %v4196
        %v4198 = vlaneseq
        %v4199 = vshrl.u32 %v4198, 7
        %v4200 = vsub.s32 0, %v4199
        %v4201 = vrot.slane %v3189, %v4200
        %v4202 = vlaneseq
        %v4203 = vshrl.u32 %v4202, 7
        %v4204 = vsub.s32 4, %v4203
        %v4205 = vrot.slane %v3189, %v4204
        %v4230 = vlaneseq
        %v4231 = vshrl.u32 %v4230, 7
        %v4232 = vsub.s32 1, %v4231
        %v4233 = vrot.slane %v3270, %v4232
        %v4234 = vlaneseq
        %v4235 = vshrl.u32 %v4234, 7
        %v4236 = vsub.s32 5, %v4235
        %v4237 = vrot.slane %v3270, %v4236
        %v4238 = vlaneseq
        %v4239 = vshrl.u32 %v4238, 7
        %v4240 = vsub.s32 1, %v4239
        %v4241 = vrot.slane %v3271, %v4240
        %v4242 = vlaneseq
        %v4243 = vshrl.u32 %v4242, 7
        %v4244 = vsub.s32 5, %v4243
        %v4245 = vrot.slane %v3271, %v4244
        %v4246 = vlaneseq
        %v4247 = vshrl.u32 %v4246, 7
        %v4248 = vsub.s32 1, %v4247
        %v4249 = vrot.slane %v3272, %v4248
        %v4250 = vlaneseq
        %v4251 = vshrl.u32 %v4250, 7
        %v4252 = vsub.s32 5, %v4251
        %v4253 = vrot.slane %v3272, %v4252
        %v4254 = vlaneseq
        %v4255 = vshrl.u32 %v4254, 7
        %v4256 = vsub.s32 1, %v4255
        %v4257 = vrot.slane %v3273, %v4256
        %v4258 = vlaneseq
        %v4259 = vshrl.u32 %v4258, 7
        %v4260 = vsub.s32 5, %v4259
        %v4261 = vrot.slane %v3273, %v4260
        %v4262 = vlaneseq
        %v4263 = vshrl.u32 %v4262, 7
        %v4264 = vsub.s32 1, %v4263
        %v4265 = vrot.slane %v3274, %v4264
        %v4266 = vlaneseq
        %v4267 = vshrl.u32 %v4266, 7
        %v4268 = vsub.s32 5, %v4267
        %v4269 = vrot.slane %v3274, %v4268
        %v4270 = vlaneseq
        %v4271 = vshrl.u32 %v4270, 7
        %v4272 = vsub.s32 1, %v4271
        %v4273 = vrot.slane %v3275, %v4272
        %v4274 = vlaneseq
        %v4275 = vshrl.u32 %v4274, 7
        %v4276 = vsub.s32 5, %v4275
        %v4277 = vrot.slane %v3275, %v4276
        %v4278 = vlaneseq
        %v4279 = vshrl.u32 %v4278, 7
        %v4280 = vsub.s32 1, %v4279
        %v4281 = vrot.slane %v3276, %v4280
        %v4282 = vlaneseq
        %v4283 = vshrl.u32 %v4282, 7
        %v4284 = vsub.s32 5, %v4283
        %v4285 = vrot.slane %v3276, %v4284
        %v4286 = vlaneseq
        %v4287 = vshrl.u32 %v4286, 7
        %v4288 = vsub.s32 1, %v4287
        %v4289 = vrot.slane %v3277, %v4288
        %v4290 = vlaneseq
        %v4291 = vshrl.u32 %v4290, 7
        %v4292 = vsub.s32 5, %v4291
        %v4293 = vrot.slane %v3277, %v4292
        %v4318 = vlaneseq
        %v4319 = vshrl.u32 %v4318, 7
        %v4320 = vsub.s32 0, %v4319
        %v4321 = vrot.slane %v3286, %v4320
        %v4322 = vlaneseq
        %v4323 = vshrl.u32 %v4322, 7
        %v4324 = vsub.s32 4, %v4323
        %v4325 = vrot.slane %v3286, %v4324
        %v4326 = vlaneseq
        %v4327 = vshrl.u32 %v4326, 7
        %v4328 = vsub.s32 0, %v4327
        %v4329 = vrot.slane %v3287, %v4328
        %v4330 = vlaneseq
        %v4331 = vshrl.u32 %v4330, 7
        %v4332 = vsub.s32 4, %v4331
        %v4333 = vrot.slane %v3287, %v4332
        %v4334 = vlaneseq
        %v4335 = vshrl.u32 %v4334, 7
        %v4336 = vsub.s32 0, %v4335
        %v4337 = vrot.slane %v3288, %v4336
        %v4338 = vlaneseq
        %v4339 = vshrl.u32 %v4338, 7
        %v4340 = vsub.s32 4, %v4339
        %v4341 = vrot.slane %v3288, %v4340
        %v4342 = vlaneseq
        %v4343 = vshrl.u32 %v4342, 7
        %v4344 = vsub.s32 0, %v4343
        %v4345 = vrot.slane %v3289, %v4344
        %v4346 = vlaneseq
        %v4347 = vshrl.u32 %v4346, 7
        %v4348 = vsub.s32 4, %v4347
        %v4349 = vrot.slane %v3289, %v4348
        %v4350 = vlaneseq
        %v4351 = vshrl.u32 %v4350, 7
        %v4352 = vsub.s32 0, %v4351
        %v4353 = vrot.slane %v3290, %v4352
        %v4354 = vlaneseq
        %v4355 = vshrl.u32 %v4354, 7
        %v4356 = vsub.s32 4, %v4355
        %v4357 = vrot.slane %v3290, %v4356
        %v4358 = vlaneseq
        %v4359 = vshrl.u32 %v4358, 7
        %v4360 = vsub.s32 0, %v4359
        %v4361 = vrot.slane %v3291, %v4360
        %v4362 = vlaneseq
        %v4363 = vshrl.u32 %v4362, 7
        %v4364 = vsub.s32 4, %v4363
        %v4365 = vrot.slane %v3291, %v4364
        %v4366 = vlaneseq
        %v4367 = vshrl.u32 %v4366, 7
        %v4368 = vsub.s32 0, %v4367
        %v4369 = vrot.slane %v3292, %v4368
        %v4370 = vlaneseq
        %v4371 = vshrl.u32 %v4370, 7
        %v4372 = vsub.s32 4, %v4371
        %v4373 = vrot.slane %v3292, %v4372
        %v4374 = vlaneseq
        %v4375 = vshrl.u32 %v4374, 7
        %v4376 = vsub.s32 0, %v4375
        %v4377 = vrot.slane %v3293, %v4376
        %v4378 = vlaneseq
        %v4379 = vshrl.u32 %v4378, 7
        %v4380 = vsub.s32 4, %v4379
        %v4381 = vrot.slane %v3293, %v4380
        %v4406 = vlaneseq
        %v4407 = vshrl.u32 %v4406, 7
        %v4408 = vsub.s32 1, %v4407
        %v4409 = vrot.slane %v3350, %v4408
        %v4410 = vlaneseq
        %v4411 = vshrl.u32 %v4410, 7
        %v4412 = vsub.s32 5, %v4411
        %v4413 = vrot.slane %v3350, %v4412
        %v4414 = vlaneseq
        %v4415 = vshrl.u32 %v4414, 7
        %v4416 = vsub.s32 1, %v4415
        %v4417 = vrot.slane %v3351, %v4416
        %v4418 = vlaneseq
        %v4419 = vshrl.u32 %v4418, 7
        %v4420 = vsub.s32 5, %v4419
        %v4421 = vrot.slane %v3351, %v4420
        %v4422 = vlaneseq
        %v4423 = vshrl.u32 %v4422, 7
        %v4424 = vsub.s32 1, %v4423
        %v4425 = vrot.slane %v3352, %v4424
        %v4426 = vlaneseq
        %v4427 = vshrl.u32 %v4426, 7
        %v4428 = vsub.s32 5, %v4427
        %v4429 = vrot.slane %v3352, %v4428
        %v4430 = vlaneseq
        %v4431 = vshrl.u32 %v4430, 7
        %v4432 = vsub.s32 1, %v4431
        %v4433 = vrot.slane %v3353, %v4432
        %v4434 = vlaneseq
        %v4435 = vshrl.u32 %v4434, 7
        %v4436 = vsub.s32 5, %v4435
        %v4437 = vrot.slane %v3353, %v4436
        %v4438 = vlaneseq
        %v4439 = vshrl.u32 %v4438, 7
        %v4440 = vsub.s32 1, %v4439
        %v4441 = vrot.slane %v3354, %v4440
        %v4442 = vlaneseq
        %v4443 = vshrl.u32 %v4442, 7
        %v4444 = vsub.s32 5, %v4443
        %v4445 = vrot.slane %v3354, %v4444
        %v4446 = vlaneseq
        %v4447 = vshrl.u32 %v4446, 7
        %v4448 = vsub.s32 1, %v4447
        %v4449 = vrot.slane %v3355, %v4448
        %v4450 = vlaneseq
        %v4451 = vshrl.u32 %v4450, 7
        %v4452 = vsub.s32 5, %v4451
        %v4453 = vrot.slane %v3355, %v4452
        %v4454 = vlaneseq
        %v4455 = vshrl.u32 %v4454, 7
        %v4456 = vsub.s32 1, %v4455
        %v4457 = vrot.slane %v3356, %v4456
        %v4458 = vlaneseq
        %v4459 = vshrl.u32 %v4458, 7
        %v4460 = vsub.s32 5, %v4459
        %v4461 = vrot.slane %v3356, %v4460
        %v4462 = vlaneseq
        %v4463 = vshrl.u32 %v4462, 7
        %v4464 = vsub.s32 1, %v4463
        %v4465 = vrot.slane %v3357, %v4464
        %v4466 = vlaneseq
        %v4467 = vshrl.u32 %v4466, 7
        %v4468 = vsub.s32 5, %v4467
        %v4469 = vrot.slane %v3357, %v4468
        %v4494 = vlaneseq
        %v4495 = vshrl.u32 %v4494, 7
        %v4496 = vsub.s32 2, %v4495
        %v4497 = vrot.slane %v3374, %v4496
        %v4498 = vlaneseq
        %v4499 = vshrl.u32 %v4498, 7
        %v4500 = vsub.s32 6, %v4499
        %v4501 = vrot.slane %v3374, %v4500
        %v4502 = vlaneseq
        %v4503 = vshrl.u32 %v4502, 7
        %v4504 = vsub.s32 2, %v4503
        %v4505 = vrot.slane %v3375, %v4504
        %v4506 = vlaneseq
        %v4507 = vshrl.u32 %v4506, 7
        %v4508 = vsub.s32 6, %v4507
        %v4509 = vrot.slane %v3375, %v4508
        %v4510 = vlaneseq
        %v4511 = vshrl.u32 %v4510, 7
        %v4512 = vsub.s32 2, %v4511
        %v4513 = vrot.slane %v3376, %v4512
        %v4514 = vlaneseq
        %v4515 = vshrl.u32 %v4514, 7
        %v4516 = vsub.s32 6, %v4515
        %v4517 = vrot.slane %v3376, %v4516
        %v4518 = vlaneseq
        %v4519 = vshrl.u32 %v4518, 7
        %v4520 = vsub.s32 2, %v4519
        %v4521 = vrot.slane %v3377, %v4520
        %v4522 = vlaneseq
        %v4523 = vshrl.u32 %v4522, 7
        %v4524 = vsub.s32 6, %v4523
        %v4525 = vrot.slane %v3377, %v4524
        %v4526 = vlaneseq
        %v4527 = vshrl.u32 %v4526, 7
        %v4528 = vsub.s32 2, %v4527
        %v4529 = vrot.slane %v3378, %v4528
        %v4530 = vlaneseq
        %v4531 = vshrl.u32 %v4530, 7
        %v4532 = vsub.s32 6, %v4531
        %v4533 = vrot.slane %v3378, %v4532
        %v4534 = vlaneseq
        %v4535 = vshrl.u32 %v4534, 7
        %v4536 = vsub.s32 2, %v4535
        %v4537 = vrot.slane %v3379, %v4536
        %v4538 = vlaneseq
        %v4539 = vshrl.u32 %v4538, 7
        %v4540 = vsub.s32 6, %v4539
        %v4541 = vrot.slane %v3379, %v4540
        %v4542 = vlaneseq
        %v4543 = vshrl.u32 %v4542, 7
        %v4544 = vsub.s32 2, %v4543
        %v4545 = vrot.slane %v3380, %v4544
        %v4546 = vlaneseq
        %v4547 = vshrl.u32 %v4546, 7
        %v4548 = vsub.s32 6, %v4547
        %v4549 = vrot.slane %v3380, %v4548
        %v4550 = vlaneseq
        %v4551 = vshrl.u32 %v4550, 7
        %v4552 = vsub.s32 2, %v4551
        %v4553 = vrot.slane %v3381, %v4552
        %v4554 = vlaneseq
        %v4555 = vshrl.u32 %v4554, 7
        %v4556 = vsub.s32 6, %v4555
        %v4557 = vrot.slane %v3381, %v4556
        %v4582 = vlaneseq
        %v4583 = vshrl.u32 %v4582, 7
        %v4584 = vsub.s32 0, %v4583
        %v4585 = vrot.slane %v3406, %v4584
        %v4586 = vlaneseq
        %v4587 = vshrl.u32 %v4586, 7
        %v4588 = vsub.s32 4, %v4587
        %v4589 = vrot.slane %v3406, %v4588
        %v4590 = vlaneseq
        %v4591 = vshrl.u32 %v4590, 7
        %v4592 = vsub.s32 0, %v4591
        %v4593 = vrot.slane %v3407, %v4592
        %v4594 = vlaneseq
        %v4595 = vshrl.u32 %v4594, 7
        %v4596 = vsub.s32 4, %v4595
        %v4597 = vrot.slane %v3407, %v4596
        %v4598 = vlaneseq
        %v4599 = vshrl.u32 %v4598, 7
        %v4600 = vsub.s32 0, %v4599
        %v4601 = vrot.slane %v3408, %v4600
        %v4602 = vlaneseq
        %v4603 = vshrl.u32 %v4602, 7
        %v4604 = vsub.s32 4, %v4603
        %v4605 = vrot.slane %v3408, %v4604
        %v4606 = vlaneseq
        %v4607 = vshrl.u32 %v4606, 7
        %v4608 = vsub.s32 0, %v4607
        %v4609 = vrot.slane %v3409, %v4608
        %v4610 = vlaneseq
        %v4611 = vshrl.u32 %v4610, 7
        %v4612 = vsub.s32 4, %v4611
        %v4613 = vrot.slane %v3409, %v4612
        %v4614 = vlaneseq
        %v4615 = vshrl.u32 %v4614, 7
        %v4616 = vsub.s32 0, %v4615
        %v4617 = vrot.slane %v3410, %v4616
        %v4618 = vlaneseq
        %v4619 = vshrl.u32 %v4618, 7
        %v4620 = vsub.s32 4, %v4619
        %v4621 = vrot.slane %v3410, %v4620
        %v4622 = vlaneseq
        %v4623 = vshrl.u32 %v4622, 7
        %v4624 = vsub.s32 0, %v4623
        %v4625 = vrot.slane %v3411, %v4624
        %v4626 = vlaneseq
        %v4627 = vshrl.u32 %v4626, 7
        %v4628 = vsub.s32 4, %v4627
        %v4629 = vrot.slane %v3411, %v4628
        %v4630 = vlaneseq
        %v4631 = vshrl.u32 %v4630, 7
        %v4632 = vsub.s32 0, %v4631
        %v4633 = vrot.slane %v3412, %v4632
        %v4634 = vlaneseq
        %v4635 = vshrl.u32 %v4634, 7
        %v4636 = vsub.s32 4, %v4635
        %v4637 = vrot.slane %v3412, %v4636
        %v4638 = vlaneseq
        %v4639 = vshrl.u32 %v4638, 7
        %v4640 = vsub.s32 0, %v4639
        %v4641 = vrot.slane %v3413, %v4640
        %v4642 = vlaneseq
        %v4643 = vshrl.u32 %v4642, 7
        %v4644 = vsub.s32 4, %v4643
        %v4645 = vrot.slane %v3413, %v4644
        %v4670 = vlaneseq
        %v4671 = vshrl.u32 %v4670, 7
        %v4672 = vsub.s32 2, %v4671
        %v4673 = vrot.slane %v3454, %v4672
        %v4674 = vlaneseq
        %v4675 = vshrl.u32 %v4674, 7
        %v4676 = vsub.s32 6, %v4675
        %v4677 = vrot.slane %v3454, %v4676
        %v4678 = vlaneseq
        %v4679 = vshrl.u32 %v4678, 7
        %v4680 = vsub.s32 2, %v4679
        %v4681 = vrot.slane %v3455, %v4680
        %v4682 = vlaneseq
        %v4683 = vshrl.u32 %v4682, 7
        %v4684 = vsub.s32 6, %v4683
        %v4685 = vrot.slane %v3455, %v4684
        %v4686 = vlaneseq
        %v4687 = vshrl.u32 %v4686, 7
        %v4688 = vsub.s32 2, %v4687
        %v4689 = vrot.slane %v3456, %v4688
        %v4690 = vlaneseq
        %v4691 = vshrl.u32 %v4690, 7
        %v4692 = vsub.s32 6, %v4691
        %v4693 = vrot.slane %v3456, %v4692
        %v4694 = vlaneseq
        %v4695 = vshrl.u32 %v4694, 7
        %v4696 = vsub.s32 2, %v4695
        %v4697 = vrot.slane %v3457, %v4696
        %v4698 = vlaneseq
        %v4699 = vshrl.u32 %v4698, 7
        %v4700 = vsub.s32 6, %v4699
        %v4701 = vrot.slane %v3457, %v4700
        %v4702 = vlaneseq
        %v4703 = vshrl.u32 %v4702, 7
        %v4704 = vsub.s32 2, %v4703
        %v4705 = vrot.slane %v3458, %v4704
        %v4706 = vlaneseq
        %v4707 = vshrl.u32 %v4706, 7
        %v4708 = vsub.s32 6, %v4707
        %v4709 = vrot.slane %v3458, %v4708
        %v4710 = vlaneseq
        %v4711 = vshrl.u32 %v4710, 7
        %v4712 = vsub.s32 2, %v4711
        %v4713 = vrot.slane %v3459, %v4712
        %v4714 = vlaneseq
        %v4715 = vshrl.u32 %v4714, 7
        %v4716 = vsub.s32 6, %v4715
        %v4717 = vrot.slane %v3459, %v4716
        %v4718 = vlaneseq
        %v4719 = vshrl.u32 %v4718, 7
        %v4720 = vsub.s32 2, %v4719
        %v4721 = vrot.slane %v3460, %v4720
        %v4722 = vlaneseq
        %v4723 = vshrl.u32 %v4722, 7
        %v4724 = vsub.s32 6, %v4723
        %v4725 = vrot.slane %v3460, %v4724
        %v4726 = vlaneseq
        %v4727 = vshrl.u32 %v4726, 7
        %v4728 = vsub.s32 2, %v4727
        %v4729 = vrot.slane %v3461, %v4728
        %v4730 = vlaneseq
        %v4731 = vshrl.u32 %v4730, 7
        %v4732 = vsub.s32 6, %v4731
        %v4733 = vrot.slane %v3461, %v4732
        %v4758 = vlaneseq
        %v4759 = vshrl.u32 %v4758, 7
        %v4760 = vsub.s32 0, %v4759
        %v4761 = vrot.slane %v3518, %v4760
        %v4762 = vlaneseq
        %v4763 = vshrl.u32 %v4762, 7
        %v4764 = vsub.s32 4, %v4763
        %v4765 = vrot.slane %v3518, %v4764
        %v4766 = vlaneseq
        %v4767 = vshrl.u32 %v4766, 7
        %v4768 = vsub.s32 0, %v4767
        %v4769 = vrot.slane %v3519, %v4768
        %v4770 = vlaneseq
        %v4771 = vshrl.u32 %v4770, 7
        %v4772 = vsub.s32 4, %v4771
        %v4773 = vrot.slane %v3519, %v4772
        %v4774 = vlaneseq
        %v4775 = vshrl.u32 %v4774, 7
        %v4776 = vsub.s32 0, %v4775
        %v4777 = vrot.slane %v3520, %v4776
        %v4778 = vlaneseq
        %v4779 = vshrl.u32 %v4778, 7
        %v4780 = vsub.s32 4, %v4779
        %v4781 = vrot.slane %v3520, %v4780
        %v4782 = vlaneseq
        %v4783 = vshrl.u32 %v4782, 7
        %v4784 = vsub.s32 0, %v4783
        %v4785 = vrot.slane %v3521, %v4784
        %v4786 = vlaneseq
        %v4787 = vshrl.u32 %v4786, 7
        %v4788 = vsub.s32 4, %v4787
        %v4789 = vrot.slane %v3521, %v4788
        %v4790 = vlaneseq
        %v4791 = vshrl.u32 %v4790, 7
        %v4792 = vsub.s32 0, %v4791
        %v4793 = vrot.slane %v3522, %v4792
        %v4794 = vlaneseq
        %v4795 = vshrl.u32 %v4794, 7
        %v4796 = vsub.s32 4, %v4795
        %v4797 = vrot.slane %v3522, %v4796
        %v4798 = vlaneseq
        %v4799 = vshrl.u32 %v4798, 7
        %v4800 = vsub.s32 0, %v4799
        %v4801 = vrot.slane %v3523, %v4800
        %v4802 = vlaneseq
        %v4803 = vshrl.u32 %v4802, 7
        %v4804 = vsub.s32 4, %v4803
        %v4805 = vrot.slane %v3523, %v4804
        %v4806 = vlaneseq
        %v4807 = vshrl.u32 %v4806, 7
        %v4808 = vsub.s32 0, %v4807
        %v4809 = vrot.slane %v3524, %v4808
        %v4810 = vlaneseq
        %v4811 = vshrl.u32 %v4810, 7
        %v4812 = vsub.s32 4, %v4811
        %v4813 = vrot.slane %v3524, %v4812
        %v4814 = vlaneseq
        %v4815 = vshrl.u32 %v4814, 7
        %v4816 = vsub.s32 0, %v4815
        %v4817 = vrot.slane %v3525, %v4816
        %v4818 = vlaneseq
        %v4819 = vshrl.u32 %v4818, 7
        %v4820 = vsub.s32 4, %v4819
        %v4821 = vrot.slane %v3525, %v4820
        %vm4838 = vcmask 1040384
        %v4839 = vsel %vm4838, 0.2820948, %v3537
        %v4840 = vsel %vm4838, 0.2820948, %v3541
        %v4841 = vsel %vm4838, 0.2820948, %v3545
        %v4842 = vsel %vm4838, 0.2820948, %v3549
        %v4843 = vsel %vm4838, 0.2820948, %v3553
        %v4844 = vsel %vm4838, 0.2820948, %v3557
        %v4845 = vsel %vm4838, 0.2820948, %v3561
        %v4846 = vsel %vm4838, 0.2820948, %v3565
        %v4847 = vsel %vm4838, 0.2820948, %v3569
        %v4848 = vsel %vm4838, 0.2820948, %v3573
        %v4849 = vsel %vm4838, 0.2820948, %v3577
        %v4850 = vsel %vm4838, 0.2820948, %v3581
        %v4851 = vsel %vm4838, 0.2820948, %v3585
        %v4852 = vsel %vm4838, 0.2820948, %v3589
        %v4853 = vsel %vm4838, 0.2820948, %v3593
        %v4854 = vsel %vm4838, 0.2820948, %v3597
        %vm4855 = vcmask 1041408
        %v4856 = vsel %vm4855, %v4839, %v3625
        %v4857 = vsel %vm4855, %v4840, %v3629
        %v4858 = vsel %vm4855, %v4841, %v3633
        %v4859 = vsel %vm4855, %v4842, %v3637
        %v4860 = vsel %vm4855, %v4843, %v3641
        %v4861 = vsel %vm4855, %v4844, %v3645
        %v4862 = vsel %vm4855, %v4845, %v3649
        %v4863 = vsel %vm4855, %v4846, %v3653
        %v4864 = vsel %vm4855, %v4847, %v3657
        %v4865 = vsel %vm4855, %v4848, %v3661
        %v4866 = vsel %vm4855, %v4849, %v3665
        %v4867 = vsel %vm4855, %v4850, %v3669
        %v4868 = vsel %vm4855, %v4851, %v3673
        %v4869 = vsel %vm4855, %v4852, %v3677
        %v4870 = vsel %vm4855, %v4853, %v3681
        %v4871 = vsel %vm4855, %v4854, %v3685
        %vm4872 = vcmask 1042432
        %v4873 = vsel %vm4872, %v4856, %v3705
        %v4874 = vsel %vm4872, %v4857, %v3709
        %v4875 = vsel %vm4872, %v4858, %v3713
        %v4876 = vsel %vm4872, %v4859, %v3717
        %v4877 = vsel %vm4872, %v4860, %v3721
        %v4878 = vsel %vm4872, %v4861, %v3725
        %v4879 = vsel %vm4872, %v4862, %v3729
        %v4880 = vsel %vm4872, %v4863, %v3733
        %v4881 = vsel %vm4872, %v4864, %v3737
        %v4882 = vsel %vm4872, %v4865, %v3741
        %v4883 = vsel %vm4872, %v4866, %v3745
        %v4884 = vsel %vm4872, %v4867, %v3749
        %v4885 = vsel %vm4872, %v4868, %v3753
        %v4886 = vsel %vm4872, %v4869, %v3757
        %v4887 = vsel %vm4872, %v4870, %v3761
        %v4888 = vsel %vm4872, %v4871, %v3765
        %vm4889 = vcmask 1043456
        %v4890 = vsel %vm4889, %v4873, %v3793
        %v4891 = vsel %vm4889, %v4874, %v3797
        %v4892 = vsel %vm4889, %v4875, %v3801
        %v4893 = vsel %vm4889, %v4876, %v3805
        %v4894 = vsel %vm4889, %v4877, %v3809
        %v4895 = vsel %vm4889, %v4878, %v3813
        %v4896 = vsel %vm4889, %v4879, %v3817
        %v4897 = vsel %vm4889, %v4880, %v3821
        %v4898 = vsel %vm4889, %v4881, %v3825
        %v4899 = vsel %vm4889, %v4882, %v3829
        %v4900 = vsel %vm4889, %v4883, %v3833
        %v4901 = vsel %vm4889, %v4884, %v3837
        %v4902 = vsel %vm4889, %v4885, %v3841
        %v4903 = vsel %vm4889, %v4886, %v3845
        %v4904 = vsel %vm4889, %v4887, %v3849
        %v4905 = vsel %vm4889, %v4888, %v3853
        %vm4906 = vcmask 1044480
        %v4907 = vsel %vm4906, %v4890, %v3881
        %v4908 = vsel %vm4906, %v4891, %v3885
        %v4909 = vsel %vm4906, %v4892, %v3889
        %v4910 = vsel %vm4906, %v4893, %v3893
        %v4911 = vsel %vm4906, %v4894, %v3897
        %v4912 = vsel %vm4906, %v4895, %v3901
        %v4913 = vsel %vm4906, %v4896, %v3905
        %v4914 = vsel %vm4906, %v4897, %v3909
        %v4915 = vsel %vm4906, %v4898, %v3913
        %v4916 = vsel %vm4906, %v4899, %v3917
        %v4917 = vsel %vm4906, %v4900, %v3921
        %v4918 = vsel %vm4906, %v4901, %v3925
        %v4919 = vsel %vm4906, %v4902, %v3929
        %v4920 = vsel %vm4906, %v4903, %v3933
        %v4921 = vsel %vm4906, %v4904, %v3937
        %v4922 = vsel %vm4906, %v4905, %v3941
        %vm4923 = vcmask 1045504
        %v4924 = vsel %vm4923, %v4907, %v3969
        %v4925 = vsel %vm4923, %v4908, %v3973
        %v4926 = vsel %vm4923, %v4909, %v3977
        %v4927 = vsel %vm4923, %v4910, %v3981
        %v4928 = vsel %vm4923, %v4911, %v3985
        %v4929 = vsel %vm4923, %v4912, %v3989
        %v4930 = vsel %vm4923, %v4913, %v3993
        %v4931 = vsel %vm4923, %v4914, %v3997
        %v4932 = vsel %vm4923, %v4915, %v4001
        %v4933 = vsel %vm4923, %v4916, %v4005
        %v4934 = vsel %vm4923, %v4917, %v4009
        %v4935 = vsel %vm4923, %v4918, %v4013
        %v4936 = vsel %vm4923, %v4919, %v4017
        %v4937 = vsel %vm4923, %v4920, %v4021
        %v4938 = vsel %vm4923, %v4921, %v4025
        %v4939 = vsel %vm4923, %v4922, %v4029
        %vm4940 = vcmask 1046528
        %v4941 = vsel %vm4940, %v4924, %v4057
        %v4942 = vsel %vm4940, %v4925, %v4061
        %v4943 = vsel %vm4940, %v4926, %v4065
        %v4944 = vsel %vm4940, %v4927, %v4069
        %v4945 = vsel %vm4940, %v4928, %v4073
        %v4946 = vsel %vm4940, %v4929, %v4077
        %v4947 = vsel %vm4940, %v4930, %v4081
        %v4948 = vsel %vm4940, %v4931, %v4085
        %v4949 = vsel %vm4940, %v4932, %v4089
        %v4950 = vsel %vm4940, %v4933, %v4093
        %v4951 = vsel %vm4940, %v4934, %v4097
        %v4952 = vsel %vm4940, %v4935, %v4101
        %v4953 = vsel %vm4940, %v4936, %v4105
        %v4954 = vsel %vm4940, %v4937, %v4109
        %v4955 = vsel %vm4940, %v4938, %v4113
        %v4956 = vsel %vm4940, %v4939, %v4117
        %v4957 = vsel %vm4838, %v4145, %v4233
        %v4958 = vsel %vm4838, %v4149, %v4237
        %v4959 = vsel %vm4838, %v4153, %v4241
        %v4960 = vsel %vm4838, %v4157, %v4245
        %v4961 = vsel %vm4838, %v4161, %v4249
        %v4962 = vsel %vm4838, %v4165, %v4253
        %v4963 = vsel %vm4838, %v4169, %v4257
        %v4964 = vsel %vm4838, %v4173, %v4261
        %v4965 = vsel %vm4838, %v4177, %v4265
        %v4966 = vsel %vm4838, %v4181, %v4269
        %v4967 = vsel %vm4838, %v4185, %v4273
        %v4968 = vsel %vm4838, %v4189, %v4277
        %v4969 = vsel %vm4838, %v4193, %v4281
        %v4970 = vsel %vm4838, %v4197, %v4285
        %v4971 = vsel %vm4838, %v4201, %v4289
        %v4972 = vsel %vm4838, %v4205, %v4293
        %v4973 = vsel %vm4855, %v4957, %v4321
        %v4974 = vsel %vm4855, %v4958, %v4325
        %v4975 = vsel %vm4855, %v4959, %v4329
        %v4976 = vsel %vm4855, %v4960, %v4333
        %v4977 = vsel %vm4855, %v4961, %v4337
        %v4978 = vsel %vm4855, %v4962, %v4341
        %v4979 = vsel %vm4855, %v4963, %v4345
        %v4980 = vsel %vm4855, %v4964, %v4349
        %v4981 = vsel %vm4855, %v4965, %v4353
        %v4982 = vsel %vm4855, %v4966, %v4357
        %v4983 = vsel %vm4855, %v4967, %v4361
        %v4984 = vsel %vm4855, %v4968, %v4365
        %v4985 = vsel %vm4855, %v4969, %v4369
        %v4986 = vsel %vm4855, %v4970, %v4373
        %v4987 = vsel %vm4855, %v4971, %v4377
        %v4988 = vsel %vm4855, %v4972, %v4381
        %v4989 = vsel %vm4872, %v4973, %v4409
        %v4990 = vsel %vm4872, %v4974, %v4413
        %v4991 = vsel %vm4872, %v4975, %v4417
        %v4992 = vsel %vm4872, %v4976, %v4421
        %v4993 = vsel %vm4872, %v4977, %v4425
        %v4994 = vsel %vm4872, %v4978, %v4429
        %v4995 = vsel %vm4872, %v4979, %v4433
        %v4996 = vsel %vm4872, %v4980, %v4437
        %v4997 = vsel %vm4872, %v4981, %v4441
        %v4998 = vsel %vm4872, %v4982, %v4445
        %v4999 = vsel %vm4872, %v4983, %v4449
        %v5000 = vsel %vm4872, %v4984, %v4453
        %v5001 = vsel %vm4872, %v4985, %v4457
        %v5002 = vsel %vm4872, %v4986, %v4461
        %v5003 = vsel %vm4872, %v4987, %v4465
        %v5004 = vsel %vm4872, %v4988, %v4469
        %v5005 = vsel %vm4889, %v4989, %v4497
        %v5006 = vsel %vm4889, %v4990, %v4501
        %v5007 = vsel %vm4889, %v4991, %v4505
        %v5008 = vsel %vm4889, %v4992, %v4509
        %v5009 = vsel %vm4889, %v4993, %v4513
        %v5010 = vsel %vm4889, %v4994, %v4517
        %v5011 = vsel %vm4889, %v4995, %v4521
        %v5012 = vsel %vm4889, %v4996, %v4525
        %v5013 = vsel %vm4889, %v4997, %v4529
        %v5014 = vsel %vm4889, %v4998, %v4533
        %v5015 = vsel %vm4889, %v4999, %v4537
        %v5016 = vsel %vm4889, %v5000, %v4541
        %v5017 = vsel %vm4889, %v5001, %v4545
        %v5018 = vsel %vm4889, %v5002, %v4549
        %v5019 = vsel %vm4889, %v5003, %v4553
        %v5020 = vsel %vm4889, %v5004, %v4557
        %v5021 = vsel %vm4906, %v5005, %v4585
        %v5022 = vsel %vm4906, %v5006, %v4589
        %v5023 = vsel %vm4906, %v5007, %v4593
        %v5024 = vsel %vm4906, %v5008, %v4597
        %v5025 = vsel %vm4906, %v5009, %v4601
        %v5026 = vsel %vm4906, %v5010, %v4605
        %v5027 = vsel %vm4906, %v5011, %v4609
        %v5028 = vsel %vm4906, %v5012, %v4613
        %v5029 = vsel %vm4906, %v5013, %v4617
        %v5030 = vsel %vm4906, %v5014, %v4621
        %v5031 = vsel %vm4906, %v5015, %v4625
        %v5032 = vsel %vm4906, %v5016, %v4629
        %v5033 = vsel %vm4906, %v5017, %v4633
        %v5034 = vsel %vm4906, %v5018, %v4637
        %v5035 = vsel %vm4906, %v5019, %v4641
        %v5036 = vsel %vm4906, %v5020, %v4645
        %v5037 = vsel %vm4923, %v5021, %v4673
        %v5038 = vsel %vm4923, %v5022, %v4677
        %v5039 = vsel %vm4923, %v5023, %v4681
        %v5040 = vsel %vm4923, %v5024, %v4685
        %v5041 = vsel %vm4923, %v5025, %v4689
        %v5042 = vsel %vm4923, %v5026, %v4693
        %v5043 = vsel %vm4923, %v5027, %v4697
        %v5044 = vsel %vm4923, %v5028, %v4701
        %v5045 = vsel %vm4923, %v5029, %v4705
        %v5046 = vsel %vm4923, %v5030, %v4709
        %v5047 = vsel %vm4923, %v5031, %v4713
        %v5048 = vsel %vm4923, %v5032, %v4717
        %v5049 = vsel %vm4923, %v5033, %v4721
        %v5050 = vsel %vm4923, %v5034, %v4725
        %v5051 = vsel %vm4923, %v5035, %v4729
        %v5052 = vsel %vm4923, %v5036, %v4733
        %v5053 = vsel %vm4940, %v5037, %v4761
        %v5054 = vsel %vm4940, %v5038, %v4765
        %v5055 = vsel %vm4940, %v5039, %v4769
        %v5056 = vsel %vm4940, %v5040, %v4773
        %v5057 = vsel %vm4940, %v5041, %v4777
        %v5058 = vsel %vm4940, %v5042, %v4781
        %v5059 = vsel %vm4940, %v5043, %v4785
        %v5060 = vsel %vm4940, %v5044, %v4789
        %v5061 = vsel %vm4940, %v5045, %v4793
        %v5062 = vsel %vm4940, %v5046, %v4797
        %v5063 = vsel %vm4940, %v5047, %v4801
        %v5064 = vsel %vm4940, %v5048, %v4805
        %v5065 = vsel %vm4940, %v5049, %v4809
        %v5066 = vsel %vm4940, %v5050, %v4813
        %v5067 = vsel %vm4940, %v5051, %v4817
        %v5068 = vsel %vm4940, %v5052, %v4821
        %v5069 = vpack.c.bf16 %v5053, %v4941
        %v5070 = vpack.c.bf16 %v5054, %v4942
        %v5071 = vpack.c.bf16 %v5055, %v4943
        %v5072 = vpack.c.bf16 %v5056, %v4944
        %v5073 = vpack.c.bf16 %v5057, %v4945
        %v5074 = vpack.c.bf16 %v5058, %v4946
        %v5075 = vpack.c.bf16 %v5059, %v4947
        %v5076 = vpack.c.bf16 %v5060, %v4948
        %v5077 = vpack.c.bf16 %v5061, %v4949
        %v5078 = vpack.c.bf16 %v5062, %v4950
        %v5079 = vpack.c.bf16 %v5063, %v4951
        %v5080 = vpack.c.bf16 %v5064, %v4952
        %v5081 = vpack.c.bf16 %v5065, %v4953
        %v5082 = vpack.c.bf16 %v5066, %v4954
        %v5083 = vpack.c.bf16 %v5067, %v4955
        %v5084 = vpack.c.bf16 %v5068, %v4956
        %v5085 = vld [vmem:[#allocation7] sm:$0xff]
        %v5086 = vld [vmem:[#allocation7 + $0x8] sm:$0xff]
        %v5087 = vld [vmem:[#allocation7 + $0x10] sm:$0xff]
        %v5088 = vld [vmem:[#allocation7 + $0x18] sm:$0xff]
        %v5089 = vld [vmem:[#allocation7 + $0x20] sm:$0xff]
        %v5090 = vld [vmem:[#allocation7 + $0x28] sm:$0xff]
        %v5091 = vld [vmem:[#allocation7 + $0x30] sm:$0xff]
        %v5092 = vld [vmem:[#allocation7 + $0x38] sm:$0xff]
        %v5093 = vld [vmem:[#allocation7 + $0x40] sm:$0x11]
        %v5103 = vunpack.c.l.b16 %v5085
        %v5104 = vunpack.c.h.b16 %v5085
        %v5105 = vunpack.c.l.b16 %v5086
        %v5106 = vunpack.c.h.b16 %v5086
        %v5107 = vunpack.c.l.b16 %v5087
        %v5108 = vunpack.c.h.b16 %v5087
        %v5109 = vunpack.c.l.b16 %v5088
        %v5110 = vunpack.c.h.b16 %v5088
        %v5111 = vunpack.c.l.b16 %v5089
        %v5112 = vunpack.c.h.b16 %v5089
        %v5113 = vunpack.c.l.b16 %v5090
        %v5114 = vunpack.c.h.b16 %v5090
        %v5115 = vunpack.c.l.b16 %v5091
        %v5116 = vunpack.c.h.b16 %v5091
        %v5117 = vunpack.c.l.b16 %v5092
        %v5118 = vunpack.c.h.b16 %v5092
        %v5119 = vunpack.c.l.b16 %v5093
        %v5120 = vunpack.c.h.b16 %v5093
        %v5121 = vpack.c.b16 %v5105, %v5103
        %v5122 = vpack.c.b16 %v5106, %v5104
        %v5123 = vpack.c.b16 %v5109, %v5107
        %v5124 = vpack.c.b16 %v5110, %v5108
        %v5125 = vpack.c.b16 %v5113, %v5111
        %v5126 = vpack.c.b16 %v5114, %v5112
        %v5127 = vpack.c.b16 %v5117, %v5115
        %v5128 = vpack.c.b16 %v5118, %v5116
        %v5129 = vpack.c.b16 %v5119, %v5119
        %v5130 = vpack.c.b16 %v5120, %v5120
        %vm5136 = vcmask 130048
        %v5138 = vsel %vm5136, %v5122, 0
        %v5141 = vsel %vm5136, %v5124, 0
        %v5144 = vsel %vm5136, %v5126, 0
        %v5147 = vsel %vm5136, %v5128, 0
        %v5150 = vsel %vm5136, %v5130, 0
        %5152 = vmatprep.subr.bf16.mxu0 %v2871
        %5153 = vmatpush1.bf16.msra.mxu0 %v2870
        %5154 = vmatprep.subr.bf16.mxu0 %v2887
        %5155 = vmatpush1.bf16.msra.mxu0 %v2886
        %5156 = vmatprep.subr.bf16.mxu0 %v2903
        %5157 = vmatpush1.bf16.msra.mxu0 %v2902
        %5158 = vmatprep.subr.bf16.mxu0 %v2919
        %5159 = vmatpush1.bf16.msra.mxu0 %v2918
        %5160 = vmatprep.subr.bf16.mxu0 %v2935
        %5161 = vmatpush1.bf16.msra.mxu0 %v2934
        %5162 = vmatprep.subr.bf16.mxu0 %v2951
        %5163 = vmatpush1.bf16.msra.mxu0 %v2950
        %5164 = vmatprep.subr.bf16.mxu0 %v2967
        %5165 = vmatpush1.bf16.msra.mxu0 %v2966
        %5166 = vmatprep.subr.bf16.mxu0 %v2983
        %5167 = vmatpush1.bf16.msra.mxu0 %v2982
        %5168 = vmatprep.subr.bf16.mxu0 %v5070
        %5169 = vmatpush1.bf16.msra.mxu0 %v5069
        %5170 = vmatprep.subr.bf16.mxu0 0
        %5171 = vmatpush1.bf16.msra.mxu0 0
        %5172 = vmatprep.subr.bf16.mxu0 0
        %5173 = vmatpush1.bf16.msra.mxu0 0
        %5174 = vmatprep.subr.bf16.mxu0 0
        %5175 = vmatpush1.bf16.msra.mxu0 0
        %5176 = vmatprep.subr.bf16.mxu0 0
        %5177 = vmatpush1.bf16.msra.mxu0 0
        %5178 = vmatprep.subr.bf16.mxu0 0
        %5179 = vmatpush1.bf16.msra.mxu0 0
        %5180 = vmatprep.subr.bf16.mxu0 0
        %5181 = vmatpush1.bf16.msra.mxu0 0
        %5182 = vmatprep.subr.bf16.mxu0 0
        %5183 = vmatpush1.bf16.msra.mxu0 0
        %5184 = vmatprep.mubr.bf16.mxu0 %v5138
        %5185 = vmatmul.mubr.bf16.gmra.mrb[0].mxu0 %v5121
        %v5186 = vpop.f32.mrb[0].mxu0
        %v5187 = vadd.f32 0.0, %v5186
        %v5188 = vpop.f32.mrb[0].mxu0
        %v5189 = vadd.f32 0.0, %v5188
        %v5190 = vpop.f32.mrb[0].mxu0
        %v5191 = vadd.f32 0.0, %v5190
        %v5192 = vpop.f32.mrb[0].mxu0
        %v5193 = vadd.f32 0.0, %v5192
        %5194 = vmatprep.mubr.bf16.mxu0 %v5141
        %5195 = vmatmul.mubr.bf16.gmra.mrb[0].mxu0 %v5123
        %v5196 = vpop.f32.mrb[0].mxu0
        %v5197 = vadd.f32 0.0, %v5196
        %v5198 = vpop.f32.mrb[0].mxu0
        %v5199 = vadd.f32 0.0, %v5198
        %v5200 = vpop.f32.mrb[0].mxu0
        %v5201 = vadd.f32 0.0, %v5200
        %v5202 = vpop.f32.mrb[0].mxu0
        %v5203 = vadd.f32 0.0, %v5202
        %5204 = vmatprep.mubr.bf16.mxu0 %v5144
        %5205 = vmatmul.mubr.bf16.gmra.mrb[0].mxu0 %v5125
        %v5206 = vpop.f32.mrb[0].mxu0
        %v5207 = vadd.f32 0.0, %v5206
        %v5208 = vpop.f32.mrb[0].mxu0
        %v5209 = vadd.f32 0.0, %v5208
        %v5210 = vpop.f32.mrb[0].mxu0
        %v5211 = vadd.f32 0.0, %v5210
        %v5212 = vpop.f32.mrb[0].mxu0
        %v5213 = vadd.f32 0.0, %v5212
        %5214 = vmatprep.mubr.bf16.mxu0 %v5147
        %5215 = vmatmul.mubr.bf16.gmra.mrb[0].mxu0 %v5127
        %v5216 = vpop.f32.mrb[0].mxu0
        %v5217 = vadd.f32 0.0, %v5216
        %v5218 = vpop.f32.mrb[0].mxu0
        %v5219 = vadd.f32 0.0, %v5218
        %v5220 = vpop.f32.mrb[0].mxu0
        %v5221 = vadd.f32 0.0, %v5220
        %v5222 = vpop.f32.mrb[0].mxu0
        %v5223 = vadd.f32 0.0, %v5222
        %5224 = vmatprep.mubr.bf16.mxu0 %v5150
        %5225 = vmatmul.mubr.bf16.gmra.mrb[0].mxu0 %v5129
        %v5226 = vpop.f32.mrb[0].mxu0
        %v5227 = vadd.f32 0.0, %v5226
        %v5228 = vpop.f32.mrb[0].mxu0
        %v5229 = vadd.f32 0.0, %v5228
        %v5230 = vpop.f32.mrb[0].mxu0
        %v5231 = vpop.f32.mrb[0].mxu0
        %5232 = vdwg.mxu0
        %5233 = vmatprep.subr.bf16.mxu0 %v2873
        %5234 = vmatpush1.bf16.msra.mxu0 %v2872
        %5235 = vmatprep.subr.bf16.mxu0 %v2889
        %5236 = vmatpush1.bf16.msra.mxu0 %v2888
        %5237 = vmatprep.subr.bf16.mxu0 %v2905
        %5238 = vmatpush1.bf16.msra.mxu0 %v2904
        %5239 = vmatprep.subr.bf16.mxu0 %v2921
        %5240 = vmatpush1.bf16.msra.mxu0 %v2920
        %5241 = vmatprep.subr.bf16.mxu0 %v2937
        %5242 = vmatpush1.bf16.msra.mxu0 %v2936
        %5243 = vmatprep.subr.bf16.mxu0 %v2953
        %5244 = vmatpush1.bf16.msra.mxu0 %v2952
        %5245 = vmatprep.subr.bf16.mxu0 %v2969
        %5246 = vmatpush1.bf16.msra.mxu0 %v2968
        %5247 = vmatprep.subr.bf16.mxu0 %v2985
        %5248 = vmatpush1.bf16.msra.mxu0 %v2984
        %5249 = vmatprep.subr.bf16.mxu0 %v5072
        %5250 = vmatpush1.bf16.msra.mxu0 %v5071
        %5251 = vmatprep.subr.bf16.mxu0 0
        %5252 = vmatpush1.bf16.msra.mxu0 0
        %5253 = vmatprep.subr.bf16.mxu0 0
        %5254 = vmatpush1.bf16.msra.mxu0 0
        %5255 = vmatprep.subr.bf16.mxu0 0
        %5256 = vmatpush1.bf16.msra.mxu0 0
        %5257 = vmatprep.subr.bf16.mxu0 0
        %5258 = vmatpush1.bf16.msra.mxu0 0
        %5259 = vmatprep.subr.bf16.mxu0 0
        %5260 = vmatpush1.bf16.msra.mxu0 0
        %5261 = vmatprep.subr.bf16.mxu0 0
        %5262 = vmatpush1.bf16.msra.mxu0 0
        %5263 = vmatprep.subr.bf16.mxu0 0
        %5264 = vmatpush1.bf16.msra.mxu0 0
        %5265 = vmatprep.mubr.bf16.mxu0 %v5138
        %5266 = vmatmul.mubr.bf16.gmra.mrb[0].mxu0 %v5121
        %v5267 = vpop.f32.mrb[0].mxu0
        %v5268 = vadd.f32 0.0, %v5267
        %v5269 = vpop.f32.mrb[0].mxu0
        %v5270 = vadd.f32 0.0, %v5269
        %v5271 = vpop.f32.mrb[0].mxu0
        %v5272 = vadd.f32 0.0, %v5271
        %v5273 = vpop.f32.mrb[0].mxu0
        %v5274 = vadd.f32 0.0, %v5273
        %5275 = vmatprep.mubr.bf16.mxu0 %v5141
        %5276 = vmatmul.mubr.bf16.gmra.mrb[0].mxu0 %v5123
        %v5277 = vpop.f32.mrb[0].mxu0
        %v5278 = vadd.f32 0.0, %v5277
        %v5279 = vpop.f32.mrb[0].mxu0
        %v5280 = vadd.f32 0.0, %v5279
        %v5281 = vpop.f32.mrb[0].mxu0
        %v5282 = vadd.f32 0.0, %v5281
        %v5283 = vpop.f32.mrb[0].mxu0
        %v5284 = vadd.f32 0.0, %v5283
        %5285 = vmatprep.mubr.bf16.mxu0 %v5144
        %5286 = vmatmul.mubr.bf16.gmra.mrb[0].mxu0 %v5125
        %v5287 = vpop.f32.mrb[0].mxu0
        %v5288 = vadd.f32 0.0, %v5287
        %v5289 = vpop.f32.mrb[0].mxu0
        %v5290 = vadd.f32 0.0, %v5289
        %v5291 = vpop.f32.mrb[0].mxu0
        %v5292 = vadd.f32 0.0, %v5291
        %v5293 = vpop.f32.mrb[0].mxu0
        %v5294 = vadd.f32 0.0, %v5293
        %5295 = vmatprep.mubr.bf16.mxu0 %v5147
        %5296 = vmatmul.mubr.bf16.gmra.mrb[0].mxu0 %v5127
        %v5297 = vpop.f32.mrb[0].mxu0
        %v5298 = vadd.f32 0.0, %v5297
        %v5299 = vpop.f32.mrb[0].mxu0
        %v5300 = vadd.f32 0.0, %v5299
        %v5301 = vpop.f32.mrb[0].mxu0
        %v5302 = vadd.f32 0.0, %v5301
        %v5303 = vpop.f32.mrb[0].mxu0
        %v5304 = vadd.f32 0.0, %v5303
        %5305 = vmatprep.mubr.bf16.mxu0 %v5150
        %5306 = vmatmul.mubr.bf16.gmra.mrb[0].mxu0 %v5129
        %v5307 = vpop.f32.mrb[0].mxu0
        %v5308 = vadd.f32 0.0, %v5307
        %v5309 = vpop.f32.mrb[0].mxu0
        %v5310 = vadd.f32 0.0, %v5309
        %v5311 = vpop.f32.mrb[0].mxu0
        %v5312 = vpop.f32.mrb[0].mxu0
        %5313 = vdwg.mxu0
        %5314 = vmatprep.subr.bf16.mxu0 %v2875
        %5315 = vmatpush1.bf16.msra.mxu0 %v2874
        %5316 = vmatprep.subr.bf16.mxu0 %v2891
        %5317 = vmatpush1.bf16.msra.mxu0 %v2890
        %5318 = vmatprep.subr.bf16.mxu0 %v2907
        %5319 = vmatpush1.bf16.msra.mxu0 %v2906
        %5320 = vmatprep.subr.bf16.mxu0 %v2923
        %5321 = vmatpush1.bf16.msra.mxu0 %v2922
        %5322 = vmatprep.subr.bf16.mxu0 %v2939
        %5323 = vmatpush1.bf16.msra.mxu0 %v2938
        %5324 = vmatprep.subr.bf16.mxu0 %v2955
        %5325 = vmatpush1.bf16.msra.mxu0 %v2954
        %5326 = vmatprep.subr.bf16.mxu0 %v2971
        %5327 = vmatpush1.bf16.msra.mxu0 %v2970
        %5328 = vmatprep.subr.bf16.mxu0 %v2987
        %5329 = vmatpush1.bf16.msra.mxu0 %v2986
        %5330 = vmatprep.subr.bf16.mxu0 %v5074
        %5331 = vmatpush1.bf16.msra.mxu0 %v5073
        %5332 = vmatprep.subr.bf16.mxu0 0
        %5333 = vmatpush1.bf16.msra.mxu0 0
        %5334 = vmatprep.subr.bf16.mxu0 0
        %5335 = vmatpush1.bf16.msra.mxu0 0
        %5336 = vmatprep.subr.bf16.mxu0 0
        %5337 = vmatpush1.bf16.msra.mxu0 0
        %5338 = vmatprep.subr.bf16.mxu0 0
        %5339 = vmatpush1.bf16.msra.mxu0 0
        %5340 = vmatprep.subr.bf16.mxu0 0
        %5341 = vmatpush1.bf16.msra.mxu0 0
        %5342 = vmatprep.subr.bf16.mxu0 0
        %5343 = vmatpush1.bf16.msra.mxu0 0
        %5344 = vmatprep.subr.bf16.mxu0 0
        %5345 = vmatpush1.bf16.msra.mxu0 0
        %5346 = vmatprep.mubr.bf16.mxu0 %v5138
        %5347 = vmatmul.mubr.bf16.gmra.mrb[0].mxu0 %v5121
        %v5348 = vpop.f32.mrb[0].mxu0
        %v5349 = vadd.f32 0.0, %v5348
        %v5350 = vpop.f32.mrb[0].mxu0
        %v5351 = vadd.f32 0.0, %v5350
        %v5352 = vpop.f32.mrb[0].mxu0
        %v5353 = vadd.f32 0.0, %v5352
        %v5354 = vpop.f32.mrb[0].mxu0
        %v5355 = vadd.f32 0.0, %v5354
        %5356 = vmatprep.mubr.bf16.mxu0 %v5141
        %5357 = vmatmul.mubr.bf16.gmra.mrb[0].mxu0 %v5123
        %v5358 = vpop.f32.mrb[0].mxu0
        %v5359 = vadd.f32 0.0, %v5358
        %v5360 = vpop.f32.mrb[0].mxu0
        %v5361 = vadd.f32 0.0, %v5360
        %v5362 = vpop.f32.mrb[0].mxu0
        %v5363 = vadd.f32 0.0, %v5362
        %v5364 = vpop.f32.mrb[0].mxu0
        %v5365 = vadd.f32 0.0, %v5364
        %5366 = vmatprep.mubr.bf16.mxu0 %v5144
        %5367 = vmatmul.mubr.bf16.gmra.mrb[0].mxu0 %v5125
        %v5368 = vpop.f32.mrb[0].mxu0
        %v5369 = vadd.f32 0.0, %v5368
        %v5370 = vpop.f32.mrb[0].mxu0
        %v5371 = vadd.f32 0.0, %v5370
        %v5372 = vpop.f32.mrb[0].mxu0
        %v5373 = vadd.f32 0.0, %v5372
        %v5374 = vpop.f32.mrb[0].mxu0
        %v5375 = vadd.f32 0.0, %v5374
        %5376 = vmatprep.mubr.bf16.mxu0 %v5147
        %5377 = vmatmul.mubr.bf16.gmra.mrb[0].mxu0 %v5127
        %v5378 = vpop.f32.mrb[0].mxu0
        %v5379 = vadd.f32 0.0, %v5378
        %v5380 = vpop.f32.mrb[0].mxu0
        %v5381 = vadd.f32 0.0, %v5380
        %v5382 = vpop.f32.mrb[0].mxu0
        %v5383 = vadd.f32 0.0, %v5382
        %v5384 = vpop.f32.mrb[0].mxu0
        %v5385 = vadd.f32 0.0, %v5384
        %5386 = vmatprep.mubr.bf16.mxu0 %v5150
        %5387 = vmatmul.mubr.bf16.gmra.mrb[0].mxu0 %v5129
        %v5388 = vpop.f32.mrb[0].mxu0
        %v5389 = vadd.f32 0.0, %v5388
        %v5390 = vpop.f32.mrb[0].mxu0
        %v5391 = vadd.f32 0.0, %v5390
        %v5392 = vpop.f32.mrb[0].mxu0
        %v5393 = vpop.f32.mrb[0].mxu0
        %5394 = vdwg.mxu0
        %5395 = vmatprep.subr.bf16.mxu0 %v2877
        %5396 = vmatpush1.bf16.msra.mxu0 %v2876
        %5397 = vmatprep.subr.bf16.mxu0 %v2893
        %5398 = vmatpush1.bf16.msra.mxu0 %v2892
        %5399 = vmatprep.subr.bf16.mxu0 %v2909
        %5400 = vmatpush1.bf16.msra.mxu0 %v2908
        %5401 = vmatprep.subr.bf16.mxu0 %v2925
        %5402 = vmatpush1.bf16.msra.mxu0 %v2924
        %5403 = vmatprep.subr.bf16.mxu0 %v2941
        %5404 = vmatpush1.bf16.msra.mxu0 %v2940
        %5405 = vmatprep.subr.bf16.mxu0 %v2957
        %5406 = vmatpush1.bf16.msra.mxu0 %v2956
        %5407 = vmatprep.subr.bf16.mxu0 %v2973
        %5408 = vmatpush1.bf16.msra.mxu0 %v2972
        %5409 = vmatprep.subr.bf16.mxu0 %v2989
        %5410 = vmatpush1.bf16.msra.mxu0 %v2988
        %5411 = vmatprep.subr.bf16.mxu0 %v5076
        %5412 = vmatpush1.bf16.msra.mxu0 %v5075
        %5413 = vmatprep.subr.bf16.mxu0 0
        %5414 = vmatpush1.bf16.msra.mxu0 0
        %5415 = vmatprep.subr.bf16.mxu0 0
        %5416 = vmatpush1.bf16.msra.mxu0 0
        %5417 = vmatprep.subr.bf16.mxu0 0
        %5418 = vmatpush1.bf16.msra.mxu0 0
        %5419 = vmatprep.subr.bf16.mxu0 0
        %5420 = vmatpush1.bf16.msra.mxu0 0
        %5421 = vmatprep.subr.bf16.mxu0 0
        %5422 = vmatpush1.bf16.msra.mxu0 0
        %5423 = vmatprep.subr.bf16.mxu0 0
        %5424 = vmatpush1.bf16.msra.mxu0 0
        %5425 = vmatprep.subr.bf16.mxu0 0
        %5426 = vmatpush1.bf16.msra.mxu0 0
        %5427 = vmatprep.mubr.bf16.mxu0 %v5138
        %5428 = vmatmul.mubr.bf16.gmra.mrb[0].mxu0 %v5121
        %v5429 = vpop.f32.mrb[0].mxu0
        %v5430 = vadd.f32 0.0, %v5429
        %v5431 = vpop.f32.mrb[0].mxu0
        %v5432 = vadd.f32 0.0, %v5431
        %v5433 = vpop.f32.mrb[0].mxu0
        %v5434 = vadd.f32 0.0, %v5433
        %v5435 = vpop.f32.mrb[0].mxu0
        %v5436 = vadd.f32 0.0, %v5435
        %5437 = vmatprep.mubr.bf16.mxu0 %v5141
        %5438 = vmatmul.mubr.bf16.gmra.mrb[0].mxu0 %v5123
        %v5439 = vpop.f32.mrb[0].mxu0
        %v5440 = vadd.f32 0.0, %v5439
        %v5441 = vpop.f32.mrb[0].mxu0
        %v5442 = vadd.f32 0.0, %v5441
        %v5443 = vpop.f32.mrb[0].mxu0
        %v5444 = vadd.f32 0.0, %v5443
        %v5445 = vpop.f32.mrb[0].mxu0
        %v5446 = vadd.f32 0.0, %v5445
        %5447 = vmatprep.mubr.bf16.mxu0 %v5144
        %5448 = vmatmul.mubr.bf16.gmra.mrb[0].mxu0 %v5125
        %v5449 = vpop.f32.mrb[0].mxu0
        %v5450 = vadd.f32 0.0, %v5449
        %v5451 = vpop.f32.mrb[0].mxu0
        %v5452 = vadd.f32 0.0, %v5451
        %v5453 = vpop.f32.mrb[0].mxu0
        %v5454 = vadd.f32 0.0, %v5453
        %v5455 = vpop.f32.mrb[0].mxu0
        %v5456 = vadd.f32 0.0, %v5455
        %5457 = vmatprep.mubr.bf16.mxu0 %v5147
        %5458 = vmatmul.mubr.bf16.gmra.mrb[0].mxu0 %v5127
        %v5459 = vpop.f32.mrb[0].mxu0
        %v5460 = vadd.f32 0.0, %v5459
        %v5461 = vpop.f32.mrb[0].mxu0
        %v5462 = vadd.f32 0.0, %v5461
        %v5463 = vpop.f32.mrb[0].mxu0
        %v5464 = vadd.f32 0.0, %v5463
        %v5465 = vpop.f32.mrb[0].mxu0
        %v5466 = vadd.f32 0.0, %v5465
        %5467 = vmatprep.mubr.bf16.mxu0 %v5150
        %5468 = vmatmul.mubr.bf16.gmra.mrb[0].mxu0 %v5129
        %v5469 = vpop.f32.mrb[0].mxu0
        %v5470 = vadd.f32 0.0, %v5469
        %v5471 = vpop.f32.mrb[0].mxu0
        %v5472 = vadd.f32 0.0, %v5471
        %v5473 = vpop.f32.mrb[0].mxu0
        %v5474 = vpop.f32.mrb[0].mxu0
        %5475 = vdwg.mxu0
        %5476 = vmatprep.subr.bf16.mxu0 %v2879
        %5477 = vmatpush1.bf16.msra.mxu0 %v2878
        %5478 = vmatprep.subr.bf16.mxu0 %v2895
        %5479 = vmatpush1.bf16.msra.mxu0 %v2894
        %5480 = vmatprep.subr.bf16.mxu0 %v2911
        %5481 = vmatpush1.bf16.msra.mxu0 %v2910
        %5482 = vmatprep.subr.bf16.mxu0 %v2927
        %5483 = vmatpush1.bf16.msra.mxu0 %v2926
        %5484 = vmatprep.subr.bf16.mxu0 %v2943
        %5485 = vmatpush1.bf16.msra.mxu0 %v2942
        %5486 = vmatprep.subr.bf16.mxu0 %v2959
        %5487 = vmatpush1.bf16.msra.mxu0 %v2958
        %5488 = vmatprep.subr.bf16.mxu0 %v2975
        %5489 = vmatpush1.bf16.msra.mxu0 %v2974
        %5490 = vmatprep.subr.bf16.mxu0 %v2991
        %5491 = vmatpush1.bf16.msra.mxu0 %v2990
        %5492 = vmatprep.subr.bf16.mxu0 %v5078
        %5493 = vmatpush1.bf16.msra.mxu0 %v5077
        %5494 = vmatprep.subr.bf16.mxu0 0
        %5495 = vmatpush1.bf16.msra.mxu0 0
        %5496 = vmatprep.subr.bf16.mxu0 0
        %5497 = vmatpush1.bf16.msra.mxu0 0
        %5498 = vmatprep.subr.bf16.mxu0 0
        %5499 = vmatpush1.bf16.msra.mxu0 0
        %5500 = vmatprep.subr.bf16.mxu0 0
        %5501 = vmatpush1.bf16.msra.mxu0 0
        %5502 = vmatprep.subr.bf16.mxu0 0
        %5503 = vmatpush1.bf16.msra.mxu0 0
        %5504 = vmatprep.subr.bf16.mxu0 0
        %5505 = vmatpush1.bf16.msra.mxu0 0
        %5506 = vmatprep.subr.bf16.mxu0 0
        %5507 = vmatpush1.bf16.msra.mxu0 0
        %5508 = vmatprep.mubr.bf16.mxu0 %v5138
        %5509 = vmatmul.mubr.bf16.gmra.mrb[0].mxu0 %v5121
        %v5510 = vpop.f32.mrb[0].mxu0
        %v5511 = vadd.f32 0.0, %v5510
        %v5512 = vpop.f32.mrb[0].mxu0
        %v5513 = vadd.f32 0.0, %v5512
        %v5514 = vpop.f32.mrb[0].mxu0
        %v5515 = vadd.f32 0.0, %v5514
        %v5516 = vpop.f32.mrb[0].mxu0
        %v5517 = vadd.f32 0.0, %v5516
        %5518 = vmatprep.mubr.bf16.mxu0 %v5141
        %5519 = vmatmul.mubr.bf16.gmra.mrb[0].mxu0 %v5123
        %v5520 = vpop.f32.mrb[0].mxu0
        %v5521 = vadd.f32 0.0, %v5520
        %v5522 = vpop.f32.mrb[0].mxu0
        %v5523 = vadd.f32 0.0, %v5522
        %v5524 = vpop.f32.mrb[0].mxu0
        %v5525 = vadd.f32 0.0, %v5524
        %v5526 = vpop.f32.mrb[0].mxu0
        %v5527 = vadd.f32 0.0, %v5526
        %5528 = vmatprep.mubr.bf16.mxu0 %v5144
        %5529 = vmatmul.mubr.bf16.gmra.mrb[0].mxu0 %v5125
        %v5530 = vpop.f32.mrb[0].mxu0
        %v5531 = vadd.f32 0.0, %v5530
        %v5532 = vpop.f32.mrb[0].mxu0
        %v5533 = vadd.f32 0.0, %v5532
        %v5534 = vpop.f32.mrb[0].mxu0
        %v5535 = vadd.f32 0.0, %v5534
        %v5536 = vpop.f32.mrb[0].mxu0
        %v5537 = vadd.f32 0.0, %v5536
        %5538 = vmatprep.mubr.bf16.mxu0 %v5147
        %5539 = vmatmul.mubr.bf16.gmra.mrb[0].mxu0 %v5127
        %v5540 = vpop.f32.mrb[0].mxu0
        %v5541 = vadd.f32 0.0, %v5540
        %v5542 = vpop.f32.mrb[0].mxu0
        %v5543 = vadd.f32 0.0, %v5542
        %v5544 = vpop.f32.mrb[0].mxu0
        %v5545 = vadd.f32 0.0, %v5544
        %v5546 = vpop.f32.mrb[0].mxu0
        %v5547 = vadd.f32 0.0, %v5546
        %5548 = vmatprep.mubr.bf16.mxu0 %v5150
        %5549 = vmatmul.mubr.bf16.gmra.mrb[0].mxu0 %v5129
        %v5550 = vpop.f32.mrb[0].mxu0
        %v5551 = vadd.f32 0.0, %v5550
        %v5552 = vpop.f32.mrb[0].mxu0
        %v5553 = vadd.f32 0.0, %v5552
        %v5554 = vpop.f32.mrb[0].mxu0
        %v5555 = vpop.f32.mrb[0].mxu0
        %5556 = vdwg.mxu0
        %5557 = vmatprep.subr.bf16.mxu0 %v2881
        %5558 = vmatpush1.bf16.msra.mxu0 %v2880
        %5559 = vmatprep.subr.bf16.mxu0 %v2897
        %5560 = vmatpush1.bf16.msra.mxu0 %v2896
        %5561 = vmatprep.subr.bf16.mxu0 %v2913
        %5562 = vmatpush1.bf16.msra.mxu0 %v2912
        %5563 = vmatprep.subr.bf16.mxu0 %v2929
        %5564 = vmatpush1.bf16.msra.mxu0 %v2928
        %5565 = vmatprep.subr.bf16.mxu0 %v2945
        %5566 = vmatpush1.bf16.msra.mxu0 %v2944
        %5567 = vmatprep.subr.bf16.mxu0 %v2961
        %5568 = vmatpush1.bf16.msra.mxu0 %v2960
        %5569 = vmatprep.subr.bf16.mxu0 %v2977
        %5570 = vmatpush1.bf16.msra.mxu0 %v2976
        %5571 = vmatprep.subr.bf16.mxu0 %v2993
        %5572 = vmatpush1.bf16.msra.mxu0 %v2992
        %5573 = vmatprep.subr.bf16.mxu0 %v5080
        %5574 = vmatpush1.bf16.msra.mxu0 %v5079
        %5575 = vmatprep.subr.bf16.mxu0 0
        %5576 = vmatpush1.bf16.msra.mxu0 0
        %5577 = vmatprep.subr.bf16.mxu0 0
        %5578 = vmatpush1.bf16.msra.mxu0 0
        %5579 = vmatprep.subr.bf16.mxu0 0
        %5580 = vmatpush1.bf16.msra.mxu0 0
        %5581 = vmatprep.subr.bf16.mxu0 0
        %5582 = vmatpush1.bf16.msra.mxu0 0
        %5583 = vmatprep.subr.bf16.mxu0 0
        %5584 = vmatpush1.bf16.msra.mxu0 0
        %5585 = vmatprep.subr.bf16.mxu0 0
        %5586 = vmatpush1.bf16.msra.mxu0 0
        %5587 = vmatprep.subr.bf16.mxu0 0
        %5588 = vmatpush1.bf16.msra.mxu0 0
        %5589 = vmatprep.mubr.bf16.mxu0 %v5138
        %5590 = vmatmul.mubr.bf16.gmra.mrb[0].mxu0 %v5121
        %v5591 = vpop.f32.mrb[0].mxu0
        %v5592 = vadd.f32 0.0, %v5591
        %v5593 = vpop.f32.mrb[0].mxu0
        %v5594 = vadd.f32 0.0, %v5593
        %v5595 = vpop.f32.mrb[0].mxu0
        %v5596 = vadd.f32 0.0, %v5595
        %v5597 = vpop.f32.mrb[0].mxu0
        %v5598 = vadd.f32 0.0, %v5597
        %5599 = vmatprep.mubr.bf16.mxu0 %v5141
        %5600 = vmatmul.mubr.bf16.gmra.mrb[0].mxu0 %v5123
        %v5601 = vpop.f32.mrb[0].mxu0
        %v5602 = vadd.f32 0.0, %v5601
        %v5603 = vpop.f32.mrb[0].mxu0
        %v5604 = vadd.f32 0.0, %v5603
        %v5605 = vpop.f32.mrb[0].mxu0
        %v5606 = vadd.f32 0.0, %v5605
        %v5607 = vpop.f32.mrb[0].mxu0
        %v5608 = vadd.f32 0.0, %v5607
        %5609 = vmatprep.mubr.bf16.mxu0 %v5144
        %5610 = vmatmul.mubr.bf16.gmra.mrb[0].mxu0 %v5125
        %v5611 = vpop.f32.mrb[0].mxu0
        %v5612 = vadd.f32 0.0, %v5611
        %v5613 = vpop.f32.mrb[0].mxu0
        %v5614 = vadd.f32 0.0, %v5613
        %v5615 = vpop.f32.mrb[0].mxu0
        %v5616 = vadd.f32 0.0, %v5615
        %v5617 = vpop.f32.mrb[0].mxu0
        %v5618 = vadd.f32 0.0, %v5617
        %5619 = vmatprep.mubr.bf16.mxu0 %v5147
        %5620 = vmatmul.mubr.bf16.gmra.mrb[0].mxu0 %v5127
        %v5621 = vpop.f32.mrb[0].mxu0
        %v5622 = vadd.f32 0.0, %v5621
        %v5623 = vpop.f32.mrb[0].mxu0
        %v5624 = vadd.f32 0.0, %v5623
        %v5625 = vpop.f32.mrb[0].mxu0
        %v5626 = vadd.f32 0.0, %v5625
        %v5627 = vpop.f32.mrb[0].mxu0
        %v5628 = vadd.f32 0.0, %v5627
        %5629 = vmatprep.mubr.bf16.mxu0 %v5150
        %5630 = vmatmul.mubr.bf16.gmra.mrb[0].mxu0 %v5129
        %v5631 = vpop.f32.mrb[0].mxu0
        %v5632 = vadd.f32 0.0, %v5631
        %v5633 = vpop.f32.mrb[0].mxu0
        %v5634 = vadd.f32 0.0, %v5633
        %v5635 = vpop.f32.mrb[0].mxu0
        %v5636 = vpop.f32.mrb[0].mxu0
        %5637 = vdwg.mxu0
        %5638 = vmatprep.subr.bf16.mxu0 %v2883
        %5639 = vmatpush1.bf16.msra.mxu0 %v2882
        %5640 = vmatprep.subr.bf16.mxu0 %v2899
        %5641 = vmatpush1.bf16.msra.mxu0 %v2898
        %5642 = vmatprep.subr.bf16.mxu0 %v2915
        %5643 = vmatpush1.bf16.msra.mxu0 %v2914
        %5644 = vmatprep.subr.bf16.mxu0 %v2931
        %5645 = vmatpush1.bf16.msra.mxu0 %v2930
        %5646 = vmatprep.subr.bf16.mxu0 %v2947
        %5647 = vmatpush1.bf16.msra.mxu0 %v2946
        %5648 = vmatprep.subr.bf16.mxu0 %v2963
        %5649 = vmatpush1.bf16.msra.mxu0 %v2962
        %5650 = vmatprep.subr.bf16.mxu0 %v2979
        %5651 = vmatpush1.bf16.msra.mxu0 %v2978
        %5652 = vmatprep.subr.bf16.mxu0 %v2995
        %5653 = vmatpush1.bf16.msra.mxu0 %v2994
        %5654 = vmatprep.subr.bf16.mxu0 %v5082
        %5655 = vmatpush1.bf16.msra.mxu0 %v5081
        %5656 = vmatprep.subr.bf16.mxu0 0
        %5657 = vmatpush1.bf16.msra.mxu0 0
        %5658 = vmatprep.subr.bf16.mxu0 0
        %5659 = vmatpush1.bf16.msra.mxu0 0
        %5660 = vmatprep.subr.bf16.mxu0 0
        %5661 = vmatpush1.bf16.msra.mxu0 0
        %5662 = vmatprep.subr.bf16.mxu0 0
        %5663 = vmatpush1.bf16.msra.mxu0 0
        %5664 = vmatprep.subr.bf16.mxu0 0
        %5665 = vmatpush1.bf16.msra.mxu0 0
        %5666 = vmatprep.subr.bf16.mxu0 0
        %5667 = vmatpush1.bf16.msra.mxu0 0
        %5668 = vmatprep.subr.bf16.mxu0 0
        %5669 = vmatpush1.bf16.msra.mxu0 0
        %5670 = vmatprep.mubr.bf16.mxu0 %v5138
        %5671 = vmatmul.mubr.bf16.gmra.mrb[0].mxu0 %v5121
        %v5672 = vpop.f32.mrb[0].mxu0
        %v5673 = vadd.f32 0.0, %v5672
        %v5674 = vpop.f32.mrb[0].mxu0
        %v5675 = vadd.f32 0.0, %v5674
        %v5676 = vpop.f32.mrb[0].mxu0
        %v5677 = vadd.f32 0.0, %v5676
        %v5678 = vpop.f32.mrb[0].mxu0
        %v5679 = vadd.f32 0.0, %v5678
        %5680 = vmatprep.mubr.bf16.mxu0 %v5141
        %5681 = vmatmul.mubr.bf16.gmra.mrb[0].mxu0 %v5123
        %v5682 = vpop.f32.mrb[0].mxu0
        %v5683 = vadd.f32 0.0, %v5682
        %v5684 = vpop.f32.mrb[0].mxu0
        %v5685 = vadd.f32 0.0, %v5684
        %v5686 = vpop.f32.mrb[0].mxu0
        %v5687 = vadd.f32 0.0, %v5686
        %v5688 = vpop.f32.mrb[0].mxu0
        %v5689 = vadd.f32 0.0, %v5688
        %5690 = vmatprep.mubr.bf16.mxu0 %v5144
        %5691 = vmatmul.mubr.bf16.gmra.mrb[0].mxu0 %v5125
        %v5692 = vpop.f32.mrb[0].mxu0
        %v5693 = vadd.f32 0.0, %v5692
        %v5694 = vpop.f32.mrb[0].mxu0
        %v5695 = vadd.f32 0.0, %v5694
        %v5696 = vpop.f32.mrb[0].mxu0
        %v5697 = vadd.f32 0.0, %v5696
        %v5698 = vpop.f32.mrb[0].mxu0
        %v5699 = vadd.f32 0.0, %v5698
        %5700 = vmatprep.mubr.bf16.mxu0 %v5147
        %5701 = vmatmul.mubr.bf16.gmra.mrb[0].mxu0 %v5127
        %v5702 = vpop.f32.mrb[0].mxu0
        %v5703 = vadd.f32 0.0, %v5702
        %v5704 = vpop.f32.mrb[0].mxu0
        %v5705 = vadd.f32 0.0, %v5704
        %v5706 = vpop.f32.mrb[0].mxu0
        %v5707 = vadd.f32 0.0, %v5706
        %v5708 = vpop.f32.mrb[0].mxu0
        %v5709 = vadd.f32 0.0, %v5708
        %5710 = vmatprep.mubr.bf16.mxu0 %v5150
        %5711 = vmatmul.mubr.bf16.gmra.mrb[0].mxu0 %v5129
        %v5712 = vpop.f32.mrb[0].mxu0
        %v5713 = vadd.f32 0.0, %v5712
        %v5714 = vpop.f32.mrb[0].mxu0
        %v5715 = vadd.f32 0.0, %v5714
        %v5716 = vpop.f32.mrb[0].mxu0
        %v5717 = vpop.f32.mrb[0].mxu0
        %5718 = vdwg.mxu0
        %5719 = vmatprep.subr.bf16.mxu0 %v2885
        %5720 = vmatpush1.bf16.msra.mxu0 %v2884
        %5721 = vmatprep.subr.bf16.mxu0 %v2901
        %5722 = vmatpush1.bf16.msra.mxu0 %v2900
        %5723 = vmatprep.subr.bf16.mxu0 %v2917
        %5724 = vmatpush1.bf16.msra.mxu0 %v2916
        %5725 = vmatprep.subr.bf16.mxu0 %v2933
        %5726 = vmatpush1.bf16.msra.mxu0 %v2932
        %5727 = vmatprep.subr.bf16.mxu0 %v2949
        %5728 = vmatpush1.bf16.msra.mxu0 %v2948
        %5729 = vmatprep.subr.bf16.mxu0 %v2965
        %5730 = vmatpush1.bf16.msra.mxu0 %v2964
        %5731 = vmatprep.subr.bf16.mxu0 %v2981
        %5732 = vmatpush1.bf16.msra.mxu0 %v2980
        %5733 = vmatprep.subr.bf16.mxu0 %v2997
        %5734 = vmatpush1.bf16.msra.mxu0 %v2996
        %5735 = vmatprep.subr.bf16.mxu0 %v5084
        %5736 = vmatpush1.bf16.msra.mxu0 %v5083
        %5737 = vmatprep.subr.bf16.mxu0 0
        %5738 = vmatpush1.bf16.msra.mxu0 0
        %5739 = vmatprep.subr.bf16.mxu0 0
        %5740 = vmatpush1.bf16.msra.mxu0 0
        %5741 = vmatprep.subr.bf16.mxu0 0
        %5742 = vmatpush1.bf16.msra.mxu0 0
        %5743 = vmatprep.subr.bf16.mxu0 0
        %5744 = vmatpush1.bf16.msra.mxu0 0
        %5745 = vmatprep.subr.bf16.mxu0 0
        %5746 = vmatpush1.bf16.msra.mxu0 0
        %5747 = vmatprep.subr.bf16.mxu0 0
        %5748 = vmatpush1.bf16.msra.mxu0 0
        %5749 = vmatprep.subr.bf16.mxu0 0
        %5750 = vmatpush1.bf16.msra.mxu0 0
        %5751 = vmatprep.mubr.bf16.mxu0 %v5138
        %5752 = vmatmul.mubr.bf16.gmra.mrb[0].mxu0 %v5121
        %v5753 = vpop.f32.mrb[0].mxu0
        %v5754 = vadd.f32 0.0, %v5753
        %v5755 = vpop.f32.mrb[0].mxu0
        %v5756 = vadd.f32 0.0, %v5755
        %v5757 = vpop.f32.mrb[0].mxu0
        %v5758 = vadd.f32 0.0, %v5757
        %v5759 = vpop.f32.mrb[0].mxu0
        %v5760 = vadd.f32 0.0, %v5759
        %5761 = vmatprep.mubr.bf16.mxu0 %v5141
        %5762 = vmatmul.mubr.bf16.gmra.mrb[0].mxu0 %v5123
        %v5763 = vpop.f32.mrb[0].mxu0
        %v5764 = vadd.f32 0.0, %v5763
        %v5765 = vpop.f32.mrb[0].mxu0
        %v5766 = vadd.f32 0.0, %v5765
        %v5767 = vpop.f32.mrb[0].mxu0
        %v5768 = vadd.f32 0.0, %v5767
        %v5769 = vpop.f32.mrb[0].mxu0
        %v5770 = vadd.f32 0.0, %v5769
        %5771 = vmatprep.mubr.bf16.mxu0 %v5144
        %5772 = vmatmul.mubr.bf16.gmra.mrb[0].mxu0 %v5125
        %v5773 = vpop.f32.mrb[0].mxu0
        %v5774 = vadd.f32 0.0, %v5773
        %v5775 = vpop.f32.mrb[0].mxu0
        %v5776 = vadd.f32 0.0, %v5775
        %v5777 = vpop.f32.mrb[0].mxu0
        %v5778 = vadd.f32 0.0, %v5777
        %v5779 = vpop.f32.mrb[0].mxu0
        %v5780 = vadd.f32 0.0, %v5779
        %5781 = vmatprep.mubr.bf16.mxu0 %v5147
        %5782 = vmatmul.mubr.bf16.gmra.mrb[0].mxu0 %v5127
        %v5783 = vpop.f32.mrb[0].mxu0
        %v5784 = vadd.f32 0.0, %v5783
        %v5785 = vpop.f32.mrb[0].mxu0
        %v5786 = vadd.f32 0.0, %v5785
        %v5787 = vpop.f32.mrb[0].mxu0
        %v5788 = vadd.f32 0.0, %v5787
        %v5789 = vpop.f32.mrb[0].mxu0
        %v5790 = vadd.f32 0.0, %v5789
        %5791 = vmatprep.mubr.bf16.mxu0 %v5150
        %5792 = vmatmul.mubr.bf16.gmra.mrb[0].mxu0 %v5129
        %v5793 = vpop.f32.mrb[0].mxu0
        %v5794 = vadd.f32 0.0, %v5793
        %v5795 = vpop.f32.mrb[0].mxu0
        %v5796 = vadd.f32 0.0, %v5795
        %v5797 = vpop.f32.mrb[0].mxu0
        %v5798 = vpop.f32.mrb[0].mxu0
        %5799 = vdwg.mxu0
        %v5800 = vmax.f32 %v5187, 0.0
        %v5801 = vmax.f32 %v5189, 0.0
        %v5802 = vmax.f32 %v5268, 0.0
        %v5803 = vmax.f32 %v5270, 0.0
        %v5804 = vmax.f32 %v5349, 0.0
        %v5805 = vmax.f32 %v5351, 0.0
        %v5806 = vmax.f32 %v5430, 0.0
        %v5807 = vmax.f32 %v5432, 0.0
        %v5808 = vmax.f32 %v5511, 0.0
        %v5809 = vmax.f32 %v5513, 0.0
        %v5810 = vmax.f32 %v5592, 0.0
        %v5811 = vmax.f32 %v5594, 0.0
        %v5812 = vmax.f32 %v5673, 0.0
        %v5813 = vmax.f32 %v5675, 0.0
        %v5814 = vmax.f32 %v5754, 0.0
        %v5815 = vmax.f32 %v5756, 0.0
        %v5816 = vmax.f32 %v5191, 0.0
        %v5817 = vmax.f32 %v5193, 0.0
        %v5818 = vmax.f32 %v5272, 0.0
        %v5819 = vmax.f32 %v5274, 0.0
        %v5820 = vmax.f32 %v5353, 0.0
        %v5821 = vmax.f32 %v5355, 0.0
        %v5822 = vmax.f32 %v5434, 0.0
        %v5823 = vmax.f32 %v5436, 0.0
        %v5824 = vmax.f32 %v5515, 0.0
        %v5825 = vmax.f32 %v5517, 0.0
        %v5826 = vmax.f32 %v5596, 0.0
        %v5827 = vmax.f32 %v5598, 0.0
        %v5828 = vmax.f32 %v5677, 0.0
        %v5829 = vmax.f32 %v5679, 0.0
        %v5830 = vmax.f32 %v5758, 0.0
        %v5831 = vmax.f32 %v5760, 0.0
        %v5832 = vmax.f32 %v5197, 0.0
        %v5833 = vmax.f32 %v5199, 0.0
        %v5834 = vmax.f32 %v5278, 0.0
        %v5835 = vmax.f32 %v5280, 0.0
        %v5836 = vmax.f32 %v5359, 0.0
        %v5837 = vmax.f32 %v5361, 0.0
        %v5838 = vmax.f32 %v5440, 0.0
        %v5839 = vmax.f32 %v5442, 0.0
        %v5840 = vmax.f32 %v5521, 0.0
        %v5841 = vmax.f32 %v5523, 0.0
        %v5842 = vmax.f32 %v5602, 0.0
        %v5843 = vmax.f32 %v5604, 0.0
        %v5844 = vmax.f32 %v5683, 0.0
        %v5845 = vmax.f32 %v5685, 0.0
        %v5846 = vmax.f32 %v5764, 0.0
        %v5847 = vmax.f32 %v5766, 0.0
        %v5848 = vmax.f32 %v5201, 0.0
        %v5849 = vmax.f32 %v5203, 0.0
        %v5850 = vmax.f32 %v5282, 0.0
        %v5851 = vmax.f32 %v5284, 0.0
        %v5852 = vmax.f32 %v5363, 0.0
        %v5853 = vmax.f32 %v5365, 0.0
        %v5854 = vmax.f32 %v5444, 0.0
        %v5855 = vmax.f32 %v5446, 0.0
        %v5856 = vmax.f32 %v5525, 0.0
        %v5857 = vmax.f32 %v5527, 0.0
        %v5858 = vmax.f32 %v5606, 0.0
        %v5859 = vmax.f32 %v5608, 0.0
        %v5860 = vmax.f32 %v5687, 0.0
        %v5861 = vmax.f32 %v5689, 0.0
        %v5862 = vmax.f32 %v5768, 0.0
        %v5863 = vmax.f32 %v5770, 0.0
        %v5864 = vmax.f32 %v5207, 0.0
        %v5865 = vmax.f32 %v5209, 0.0
        %v5866 = vmax.f32 %v5288, 0.0
        %v5867 = vmax.f32 %v5290, 0.0
        %v5868 = vmax.f32 %v5369, 0.0
        %v5869 = vmax.f32 %v5371, 0.0
        %v5870 = vmax.f32 %v5450, 0.0
        %v5871 = vmax.f32 %v5452, 0.0
        %v5872 = vmax.f32 %v5531, 0.0
        %v5873 = vmax.f32 %v5533, 0.0
        %v5874 = vmax.f32 %v5612, 0.0
        %v5875 = vmax.f32 %v5614, 0.0
        %v5876 = vmax.f32 %v5693, 0.0
        %v5877 = vmax.f32 %v5695, 0.0
        %v5878 = vmax.f32 %v5774, 0.0
        %v5879 = vmax.f32 %v5776, 0.0
        %v5880 = vmax.f32 %v5211, 0.0
        %v5881 = vmax.f32 %v5213, 0.0
        %v5882 = vmax.f32 %v5292, 0.0
        %v5883 = vmax.f32 %v5294, 0.0
        %v5884 = vmax.f32 %v5373, 0.0
        %v5885 = vmax.f32 %v5375, 0.0
        %v5886 = vmax.f32 %v5454, 0.0
        %v5887 = vmax.f32 %v5456, 0.0
        %v5888 = vmax.f32 %v5535, 0.0
        %v5889 = vmax.f32 %v5537, 0.0
        %v5890 = vmax.f32 %v5616, 0.0
        %v5891 = vmax.f32 %v5618, 0.0
        %v5892 = vmax.f32 %v5697, 0.0
        %v5893 = vmax.f32 %v5699, 0.0
        %v5894 = vmax.f32 %v5778, 0.0
        %v5895 = vmax.f32 %v5780, 0.0
        %v5896 = vmax.f32 %v5217, 0.0
        %v5897 = vmax.f32 %v5219, 0.0
        %v5898 = vmax.f32 %v5298, 0.0
        %v5899 = vmax.f32 %v5300, 0.0
        %v5900 = vmax.f32 %v5379, 0.0
        %v5901 = vmax.f32 %v5381, 0.0
        %v5902 = vmax.f32 %v5460, 0.0
        %v5903 = vmax.f32 %v5462, 0.0
        %v5904 = vmax.f32 %v5541, 0.0
        %v5905 = vmax.f32 %v5543, 0.0
        %v5906 = vmax.f32 %v5622, 0.0
        %v5907 = vmax.f32 %v5624, 0.0
        %v5908 = vmax.f32 %v5703, 0.0
        %v5909 = vmax.f32 %v5705, 0.0
        %v5910 = vmax.f32 %v5784, 0.0
        %v5911 = vmax.f32 %v5786, 0.0
        %v5912 = vmax.f32 %v5221, 0.0
        %v5913 = vmax.f32 %v5223, 0.0
        %v5914 = vmax.f32 %v5302, 0.0
        %v5915 = vmax.f32 %v5304, 0.0
        %v5916 = vmax.f32 %v5383, 0.0
        %v5917 = vmax.f32 %v5385, 0.0
        %v5918 = vmax.f32 %v5464, 0.0
        %v5919 = vmax.f32 %v5466, 0.0
        %v5920 = vmax.f32 %v5545, 0.0
        %v5921 = vmax.f32 %v5547, 0.0
        %v5922 = vmax.f32 %v5626, 0.0
        %v5923 = vmax.f32 %v5628, 0.0
        %v5924 = vmax.f32 %v5707, 0.0
        %v5925 = vmax.f32 %v5709, 0.0
        %v5926 = vmax.f32 %v5788, 0.0
        %v5927 = vmax.f32 %v5790, 0.0
        %v5928 = vpack.c.bf16 %v5816, %v5800
        %v5929 = vpack.c.bf16 %v5817, %v5801
        %v5930 = vpack.c.bf16 %v5818, %v5802
        %v5931 = vpack.c.bf16 %v5819, %v5803
        %v5932 = vpack.c.bf16 %v5820, %v5804
        %v5933 = vpack.c.bf16 %v5821, %v5805
        %v5934 = vpack.c.bf16 %v5822, %v5806
        %v5935 = vpack.c.bf16 %v5823, %v5807
        %v5936 = vpack.c.bf16 %v5824, %v5808
        %v5937 = vpack.c.bf16 %v5825, %v5809
        %v5938 = vpack.c.bf16 %v5826, %v5810
        %v5939 = vpack.c.bf16 %v5827, %v5811
        %v5940 = vpack.c.bf16 %v5828, %v5812
        %v5941 = vpack.c.bf16 %v5829, %v5813
        %v5942 = vpack.c.bf16 %v5830, %v5814
        %v5943 = vpack.c.bf16 %v5831, %v5815
        %v5944 = vpack.c.bf16 %v5848, %v5832
        %v5945 = vpack.c.bf16 %v5849, %v5833
        %v5946 = vpack.c.bf16 %v5850, %v5834
        %v5947 = vpack.c.bf16 %v5851, %v5835
        %v5948 = vpack.c.bf16 %v5852, %v5836
        %v5949 = vpack.c.bf16 %v5853, %v5837
        %v5950 = vpack.c.bf16 %v5854, %v5838
        %v5951 = vpack.c.bf16 %v5855, %v5839
        %v5952 = vpack.c.bf16 %v5856, %v5840
        %v5953 = vpack.c.bf16 %v5857, %v5841
        %v5954 = vpack.c.bf16 %v5858, %v5842
        %v5955 = vpack.c.bf16 %v5859, %v5843
        %v5956 = vpack.c.bf16 %v5860, %v5844
        %v5957 = vpack.c.bf16 %v5861, %v5845
        %v5958 = vpack.c.bf16 %v5862, %v5846
        %v5959 = vpack.c.bf16 %v5863, %v5847
        %v5960 = vpack.c.bf16 %v5880, %v5864
        %v5961 = vpack.c.bf16 %v5881, %v5865
        %v5962 = vpack.c.bf16 %v5882, %v5866
        %v5963 = vpack.c.bf16 %v5883, %v5867
        %v5964 = vpack.c.bf16 %v5884, %v5868
        %v5965 = vpack.c.bf16 %v5885, %v5869
        %v5966 = vpack.c.bf16 %v5886, %v5870
        %v5967 = vpack.c.bf16 %v5887, %v5871
        %v5968 = vpack.c.bf16 %v5888, %v5872
        %v5969 = vpack.c.bf16 %v5889, %v5873
        %v5970 = vpack.c.bf16 %v5890, %v5874
        %v5971 = vpack.c.bf16 %v5891, %v5875
        %v5972 = vpack.c.bf16 %v5892, %v5876
        %v5973 = vpack.c.bf16 %v5893, %v5877
        %v5974 = vpack.c.bf16 %v5894, %v5878
        %v5975 = vpack.c.bf16 %v5895, %v5879
        %v5976 = vpack.c.bf16 %v5912, %v5896
        %v5977 = vpack.c.bf16 %v5913, %v5897
        %v5978 = vpack.c.bf16 %v5914, %v5898
        %v5979 = vpack.c.bf16 %v5915, %v5899
        %v5980 = vpack.c.bf16 %v5916, %v5900
        %v5981 = vpack.c.bf16 %v5917, %v5901
        %v5982 = vpack.c.bf16 %v5918, %v5902
        %v5983 = vpack.c.bf16 %v5919, %v5903
        %v5984 = vpack.c.bf16 %v5920, %v5904
        %v5985 = vpack.c.bf16 %v5921, %v5905
        %v5986 = vpack.c.bf16 %v5922, %v5906
        %v5987 = vpack.c.bf16 %v5923, %v5907
        %v5988 = vpack.c.bf16 %v5924, %v5908
        %v5989 = vpack.c.bf16 %v5925, %v5909
        %v5990 = vpack.c.bf16 %v5926, %v5910
        %v5991 = vpack.c.bf16 %v5927, %v5911
        %v5992 = vld [vmem:[#allocation8] sm:$0xf]
        %v5993 = vld [vmem:[#allocation8 + $0x4] sm:$0xf]
        %v5994 = vld [vmem:[#allocation8 + $0x8] sm:$0xf]
        %v5995 = vld [vmem:[#allocation8 + $0xc] sm:$0xf]
        %v5996 = vld [vmem:[#allocation8 + $0x10] sm:$0xf]
        %v5997 = vld [vmem:[#allocation8 + $0x14] sm:$0xf]
        %v5998 = vld [vmem:[#allocation8 + $0x18] sm:$0xf]
        %v5999 = vld [vmem:[#allocation8 + $0x1c] sm:$0xf]
        %v6008 = vunpack.c.l.b16 %v5992
        %v6009 = vunpack.c.l.b16 %v5993
        %v6010 = vunpack.c.l.b16 %v5994
        %v6011 = vunpack.c.l.b16 %v5995
        %v6012 = vunpack.c.l.b16 %v5996
        %v6013 = vunpack.c.l.b16 %v5997
        %v6014 = vunpack.c.l.b16 %v5998
        %v6015 = vunpack.c.l.b16 %v5999
        %v6016 = vpack.c.b16 %v6009, %v6008
        %v6017 = vpack.c.b16 %v6011, %v6010
        %v6018 = vpack.c.b16 %v6013, %v6012
        %v6019 = vpack.c.b16 %v6015, %v6014
        %vm6020 = vcmask 523264
        %v6022 = vsel %vm6020, %v6016, 0
        %v6025 = vsel %vm6020, %v6017, 0
        %v6028 = vsel %vm6020, %v6018, 0
        %v6031 = vsel %vm6020, %v6019, 0
        %6033 = vmatprep.subr.bf16.mxu0 %v5929
        %6034 = vmatpush1.bf16.msra.mxu0 %v5928
        %6035 = vmatprep.subr.bf16.mxu0 %v5945
        %6036 = vmatpush1.bf16.msra.mxu0 %v5944
        %6037 = vmatprep.subr.bf16.mxu0 %v5961
        %6038 = vmatpush1.bf16.msra.mxu0 %v5960
        %6039 = vmatprep.subr.bf16.mxu0 %v5977
        %6040 = vmatpush1.bf16.msra.mxu0 %v5976
        %6041 = vmatprep.subr.bf16.mxu0 0
        %6042 = vmatpush1.bf16.msra.mxu0 0
        %6043 = vmatprep.subr.bf16.mxu0 0
        %6044 = vmatpush1.bf16.msra.mxu0 0
        %6045 = vmatprep.subr.bf16.mxu0 0
        %6046 = vmatpush1.bf16.msra.mxu0 0
        %6047 = vmatprep.subr.bf16.mxu0 0
        %6048 = vmatpush1.bf16.msra.mxu0 0
        %6049 = vmatprep.subr.bf16.mxu0 0
        %6050 = vmatpush1.bf16.msra.mxu0 0
        %6051 = vmatprep.subr.bf16.mxu0 0
        %6052 = vmatpush1.bf16.msra.mxu0 0
        %6053 = vmatprep.subr.bf16.mxu0 0
        %6054 = vmatpush1.bf16.msra.mxu0 0
        %6055 = vmatprep.subr.bf16.mxu0 0
        %6056 = vmatpush1.bf16.msra.mxu0 0
        %6057 = vmatprep.subr.bf16.mxu0 0
        %6058 = vmatpush1.bf16.msra.mxu0 0
        %6059 = vmatprep.subr.bf16.mxu0 0
        %6060 = vmatpush1.bf16.msra.mxu0 0
        %6061 = vmatprep.subr.bf16.mxu0 0
        %6062 = vmatpush1.bf16.msra.mxu0 0
        %6063 = vmatprep.subr.bf16.mxu0 0
        %6064 = vmatpush1.bf16.msra.mxu0 0
        %6065 = vmatprep.mubr.bf16.mxu0 0
        %6066 = vmatmul.mubr.bf16.gmra.mrb[0].mxu0 %v6022
        %v6067 = vpop.f32.mrb[0].mxu0
        %v6068 = vadd.f32 0.0, %v6067
        %v6069 = vpop.f32.mrb[0].mxu0
        %v6070 = vadd.f32 0.0, %v6069
        %v6071 = vpop.f32.mrb[0].mxu0
        %v6072 = vadd.f32 0.0, %v6071
        %v6073 = vpop.f32.mrb[0].mxu0
        %v6074 = vadd.f32 0.0, %v6073
        %6075 = vmatprep.mubr.bf16.mxu0 0
        %6076 = vmatmul.mubr.bf16.gmra.mrb[0].mxu0 %v6025
        %v6077 = vpop.f32.mrb[0].mxu0
        %v6078 = vadd.f32 0.0, %v6077
        %v6079 = vpop.f32.mrb[0].mxu0
        %v6080 = vadd.f32 0.0, %v6079
        %v6081 = vpop.f32.mrb[0].mxu0
        %v6082 = vadd.f32 0.0, %v6081
        %v6083 = vpop.f32.mrb[0].mxu0
        %v6084 = vadd.f32 0.0, %v6083
        %6085 = vmatprep.mubr.bf16.mxu0 0
        %6086 = vmatmul.mubr.bf16.gmra.mrb[0].mxu0 %v6028
        %v6087 = vpop.f32.mrb[0].mxu0
        %v6088 = vadd.f32 0.0, %v6087
        %v6089 = vpop.f32.mrb[0].mxu0
        %v6090 = vadd.f32 0.0, %v6089
        %v6091 = vpop.f32.mrb[0].mxu0
        %v6092 = vadd.f32 0.0, %v6091
        %v6093 = vpop.f32.mrb[0].mxu0
        %v6094 = vadd.f32 0.0, %v6093
        %6095 = vmatprep.mubr.bf16.mxu0 0
        %6096 = vmatmul.mubr.bf16.gmra.mrb[0].mxu0 %v6031
        %v6097 = vpop.f32.mrb[0].mxu0
        %v6098 = vadd.f32 0.0, %v6097
        %v6099 = vpop.f32.mrb[0].mxu0
        %v6100 = vadd.f32 0.0, %v6099
        %v6101 = vpop.f32.mrb[0].mxu0
        %v6102 = vadd.f32 0.0, %v6101
        %v6103 = vpop.f32.mrb[0].mxu0
        %v6104 = vadd.f32 0.0, %v6103
        %6105 = vdwg.mxu0
        %6106 = vmatprep.subr.bf16.mxu0 %v5931
        %6107 = vmatpush1.bf16.msra.mxu0 %v5930
        %6108 = vmatprep.subr.bf16.mxu0 %v5947
        %6109 = vmatpush1.bf16.msra.mxu0 %v5946
        %6110 = vmatprep.subr.bf16.mxu0 %v5963
        %6111 = vmatpush1.bf16.msra.mxu0 %v5962
        %6112 = vmatprep.subr.bf16.mxu0 %v5979
        %6113 = vmatpush1.bf16.msra.mxu0 %v5978
        %6114 = vmatprep.subr.bf16.mxu0 0
        %6115 = vmatpush1.bf16.msra.mxu0 0
        %6116 = vmatprep.subr.bf16.mxu0 0
        %6117 = vmatpush1.bf16.msra.mxu0 0
        %6118 = vmatprep.subr.bf16.mxu0 0
        %6119 = vmatpush1.bf16.msra.mxu0 0
        %6120 = vmatprep.subr.bf16.mxu0 0
        %6121 = vmatpush1.bf16.msra.mxu0 0
        %6122 = vmatprep.subr.bf16.mxu0 0
        %6123 = vmatpush1.bf16.msra.mxu0 0
        %6124 = vmatprep.subr.bf16.mxu0 0
        %6125 = vmatpush1.bf16.msra.mxu0 0
        %6126 = vmatprep.subr.bf16.mxu0 0
        %6127 = vmatpush1.bf16.msra.mxu0 0
        %6128 = vmatprep.subr.bf16.mxu0 0
        %6129 = vmatpush1.bf16.msra.mxu0 0
        %6130 = vmatprep.subr.bf16.mxu0 0
        %6131 = vmatpush1.bf16.msra.mxu0 0
        %6132 = vmatprep.subr.bf16.mxu0 0
        %6133 = vmatpush1.bf16.msra.mxu0 0
        %6134 = vmatprep.subr.bf16.mxu0 0
        %6135 = vmatpush1.bf16.msra.mxu0 0
        %6136 = vmatprep.subr.bf16.mxu0 0
        %6137 = vmatpush1.bf16.msra.mxu0 0
        %6138 = vmatprep.mubr.bf16.mxu0 0
        %6139 = vmatmul.mubr.bf16.gmra.mrb[0].mxu0 %v6022
        %v6140 = vpop.f32.mrb[0].mxu0
        %v6141 = vadd.f32 0.0, %v6140
        %v6142 = vpop.f32.mrb[0].mxu0
        %v6143 = vadd.f32 0.0, %v6142
        %v6144 = vpop.f32.mrb[0].mxu0
        %v6145 = vadd.f32 0.0, %v6144
        %v6146 = vpop.f32.mrb[0].mxu0
        %v6147 = vadd.f32 0.0, %v6146
        %6148 = vmatprep.mubr.bf16.mxu0 0
        %6149 = vmatmul.mubr.bf16.gmra.mrb[0].mxu0 %v6025
        %v6150 = vpop.f32.mrb[0].mxu0
        %v6151 = vadd.f32 0.0, %v6150
        %v6152 = vpop.f32.mrb[0].mxu0
        %v6153 = vadd.f32 0.0, %v6152
        %v6154 = vpop.f32.mrb[0].mxu0
        %v6155 = vadd.f32 0.0, %v6154
        %v6156 = vpop.f32.mrb[0].mxu0
        %v6157 = vadd.f32 0.0, %v6156
        %6158 = vmatprep.mubr.bf16.mxu0 0
        %6159 = vmatmul.mubr.bf16.gmra.mrb[0].mxu0 %v6028
        %v6160 = vpop.f32.mrb[0].mxu0
        %v6161 = vadd.f32 0.0, %v6160
        %v6162 = vpop.f32.mrb[0].mxu0
        %v6163 = vadd.f32 0.0, %v6162
        %v6164 = vpop.f32.mrb[0].mxu0
        %v6165 = vadd.f32 0.0, %v6164
        %v6166 = vpop.f32.mrb[0].mxu0
        %v6167 = vadd.f32 0.0, %v6166
        %6168 = vmatprep.mubr.bf16.mxu0 0
        %6169 = vmatmul.mubr.bf16.gmra.mrb[0].mxu0 %v6031
        %v6170 = vpop.f32.mrb[0].mxu0
        %v6171 = vadd.f32 0.0, %v6170
        %v6172 = vpop.f32.mrb[0].mxu0
        %v6173 = vadd.f32 0.0, %v6172
        %v6174 = vpop.f32.mrb[0].mxu0
        %v6175 = vadd.f32 0.0, %v6174
        %v6176 = vpop.f32.mrb[0].mxu0
        %v6177 = vadd.f32 0.0, %v6176
        %6178 = vdwg.mxu0
        %6179 = vmatprep.subr.bf16.mxu0 %v5933
        %6180 = vmatpush1.bf16.msra.mxu0 %v5932
        %6181 = vmatprep.subr.bf16.mxu0 %v5949
        %6182 = vmatpush1.bf16.msra.mxu0 %v5948
        %6183 = vmatprep.subr.bf16.mxu0 %v5965
        %6184 = vmatpush1.bf16.msra.mxu0 %v5964
        %6185 = vmatprep.subr.bf16.mxu0 %v5981
        %6186 = vmatpush1.bf16.msra.mxu0 %v5980
        %6187 = vmatprep.subr.bf16.mxu0 0
        %6188 = vmatpush1.bf16.msra.mxu0 0
        %6189 = vmatprep.subr.bf16.mxu0 0
        %6190 = vmatpush1.bf16.msra.mxu0 0
        %6191 = vmatprep.subr.bf16.mxu0 0
        %6192 = vmatpush1.bf16.msra.mxu0 0
        %6193 = vmatprep.subr.bf16.mxu0 0
        %6194 = vmatpush1.bf16.msra.mxu0 0
        %6195 = vmatprep.subr.bf16.mxu0 0
        %6196 = vmatpush1.bf16.msra.mxu0 0
        %6197 = vmatprep.subr.bf16.mxu0 0
        %6198 = vmatpush1.bf16.msra.mxu0 0
        %6199 = vmatprep.subr.bf16.mxu0 0
        %6200 = vmatpush1.bf16.msra.mxu0 0
        %6201 = vmatprep.subr.bf16.mxu0 0
        %6202 = vmatpush1.bf16.msra.mxu0 0
        %6203 = vmatprep.subr.bf16.mxu0 0
        %6204 = vmatpush1.bf16.msra.mxu0 0
        %6205 = vmatprep.subr.bf16.mxu0 0
        %6206 = vmatpush1.bf16.msra.mxu0 0
        %6207 = vmatprep.subr.bf16.mxu0 0
        %6208 = vmatpush1.bf16.msra.mxu0 0
        %6209 = vmatprep.subr.bf16.mxu0 0
        %6210 = vmatpush1.bf16.msra.mxu0 0
        %6211 = vmatprep.mubr.bf16.mxu0 0
        %6212 = vmatmul.mubr.bf16.gmra.mrb[0].mxu0 %v6022
        %v6213 = vpop.f32.mrb[0].mxu0
        %v6214 = vadd.f32 0.0, %v6213
        %v6215 = vpop.f32.mrb[0].mxu0
        %v6216 = vadd.f32 0.0, %v6215
        %v6217 = vpop.f32.mrb[0].mxu0
        %v6218 = vadd.f32 0.0, %v6217
        %v6219 = vpop.f32.mrb[0].mxu0
        %v6220 = vadd.f32 0.0, %v6219
        %6221 = vmatprep.mubr.bf16.mxu0 0
        %6222 = vmatmul.mubr.bf16.gmra.mrb[0].mxu0 %v6025
        %v6223 = vpop.f32.mrb[0].mxu0
        %v6224 = vadd.f32 0.0, %v6223
        %v6225 = vpop.f32.mrb[0].mxu0
        %v6226 = vadd.f32 0.0, %v6225
        %v6227 = vpop.f32.mrb[0].mxu0
        %v6228 = vadd.f32 0.0, %v6227
        %v6229 = vpop.f32.mrb[0].mxu0
        %v6230 = vadd.f32 0.0, %v6229
        %6231 = vmatprep.mubr.bf16.mxu0 0
        %6232 = vmatmul.mubr.bf16.gmra.mrb[0].mxu0 %v6028
        %v6233 = vpop.f32.mrb[0].mxu0
        %v6234 = vadd.f32 0.0, %v6233
        %v6235 = vpop.f32.mrb[0].mxu0
        %v6236 = vadd.f32 0.0, %v6235
        %v6237 = vpop.f32.mrb[0].mxu0
        %v6238 = vadd.f32 0.0, %v6237
        %v6239 = vpop.f32.mrb[0].mxu0
        %v6240 = vadd.f32 0.0, %v6239
        %6241 = vmatprep.mubr.bf16.mxu0 0
        %6242 = vmatmul.mubr.bf16.gmra.mrb[0].mxu0 %v6031
        %v6243 = vpop.f32.mrb[0].mxu0
        %v6244 = vadd.f32 0.0, %v6243
        %v6245 = vpop.f32.mrb[0].mxu0
        %v6246 = vadd.f32 0.0, %v6245
        %v6247 = vpop.f32.mrb[0].mxu0
        %v6248 = vadd.f32 0.0, %v6247
        %v6249 = vpop.f32.mrb[0].mxu0
        %v6250 = vadd.f32 0.0, %v6249
        %6251 = vdwg.mxu0
        %6252 = vmatprep.subr.bf16.mxu0 %v5935
        %6253 = vmatpush1.bf16.msra.mxu0 %v5934
        %6254 = vmatprep.subr.bf16.mxu0 %v5951
        %6255 = vmatpush1.bf16.msra.mxu0 %v5950
        %6256 = vmatprep.subr.bf16.mxu0 %v5967
        %6257 = vmatpush1.bf16.msra.mxu0 %v5966
        %6258 = vmatprep.subr.bf16.mxu0 %v5983
        %6259 = vmatpush1.bf16.msra.mxu0 %v5982
        %6260 = vmatprep.subr.bf16.mxu0 0
        %6261 = vmatpush1.bf16.msra.mxu0 0
        %6262 = vmatprep.subr.bf16.mxu0 0
        %6263 = vmatpush1.bf16.msra.mxu0 0
        %6264 = vmatprep.subr.bf16.mxu0 0
        %6265 = vmatpush1.bf16.msra.mxu0 0
        %6266 = vmatprep.subr.bf16.mxu0 0
        %6267 = vmatpush1.bf16.msra.mxu0 0
        %6268 = vmatprep.subr.bf16.mxu0 0
        %6269 = vmatpush1.bf16.msra.mxu0 0
        %6270 = vmatprep.subr.bf16.mxu0 0
        %6271 = vmatpush1.bf16.msra.mxu0 0
        %6272 = vmatprep.subr.bf16.mxu0 0
        %6273 = vmatpush1.bf16.msra.mxu0 0
        %6274 = vmatprep.subr.bf16.mxu0 0
        %6275 = vmatpush1.bf16.msra.mxu0 0
        %6276 = vmatprep.subr.bf16.mxu0 0
        %6277 = vmatpush1.bf16.msra.mxu0 0
        %6278 = vmatprep.subr.bf16.mxu0 0
        %6279 = vmatpush1.bf16.msra.mxu0 0
        %6280 = vmatprep.subr.bf16.mxu0 0
        %6281 = vmatpush1.bf16.msra.mxu0 0
        %6282 = vmatprep.subr.bf16.mxu0 0
        %6283 = vmatpush1.bf16.msra.mxu0 0
        %6284 = vmatprep.mubr.bf16.mxu0 0
        %6285 = vmatmul.mubr.bf16.gmra.mrb[0].mxu0 %v6022
        %v6286 = vpop.f32.mrb[0].mxu0
        %v6287 = vadd.f32 0.0, %v6286
        %v6288 = vpop.f32.mrb[0].mxu0
        %v6289 = vadd.f32 0.0, %v6288
        %v6290 = vpop.f32.mrb[0].mxu0
        %v6291 = vadd.f32 0.0, %v6290
        %v6292 = vpop.f32.mrb[0].mxu0
        %v6293 = vadd.f32 0.0, %v6292
        %6294 = vmatprep.mubr.bf16.mxu0 0
        %6295 = vmatmul.mubr.bf16.gmra.mrb[0].mxu0 %v6025
        %v6296 = vpop.f32.mrb[0].mxu0
        %v6297 = vadd.f32 0.0, %v6296
        %v6298 = vpop.f32.mrb[0].mxu0
        %v6299 = vadd.f32 0.0, %v6298
        %v6300 = vpop.f32.mrb[0].mxu0
        %v6301 = vadd.f32 0.0, %v6300
        %v6302 = vpop.f32.mrb[0].mxu0
        %v6303 = vadd.f32 0.0, %v6302
        %6304 = vmatprep.mubr.bf16.mxu0 0
        %6305 = vmatmul.mubr.bf16.gmra.mrb[0].mxu0 %v6028
        %v6306 = vpop.f32.mrb[0].mxu0
        %v6307 = vadd.f32 0.0, %v6306
        %v6308 = vpop.f32.mrb[0].mxu0
        %v6309 = vadd.f32 0.0, %v6308
        %v6310 = vpop.f32.mrb[0].mxu0
        %v6311 = vadd.f32 0.0, %v6310
        %v6312 = vpop.f32.mrb[0].mxu0
        %v6313 = vadd.f32 0.0, %v6312
        %6314 = vmatprep.mubr.bf16.mxu0 0
        %6315 = vmatmul.mubr.bf16.gmra.mrb[0].mxu0 %v6031
        %v6316 = vpop.f32.mrb[0].mxu0
        %v6317 = vadd.f32 0.0, %v6316
        %v6318 = vpop.f32.mrb[0].mxu0
        %v6319 = vadd.f32 0.0, %v6318
        %v6320 = vpop.f32.mrb[0].mxu0
        %v6321 = vadd.f32 0.0, %v6320
        %v6322 = vpop.f32.mrb[0].mxu0
        %v6323 = vadd.f32 0.0, %v6322
        %6324 = vdwg.mxu0
        %6325 = vmatprep.subr.bf16.mxu0 %v5937
        %6326 = vmatpush1.bf16.msra.mxu0 %v5936
        %6327 = vmatprep.subr.bf16.mxu0 %v5953
        %6328 = vmatpush1.bf16.msra.mxu0 %v5952
        %6329 = vmatprep.subr.bf16.mxu0 %v5969
        %6330 = vmatpush1.bf16.msra.mxu0 %v5968
        %6331 = vmatprep.subr.bf16.mxu0 %v5985
        %6332 = vmatpush1.bf16.msra.mxu0 %v5984
        %6333 = vmatprep.subr.bf16.mxu0 0
        %6334 = vmatpush1.bf16.msra.mxu0 0
        %6335 = vmatprep.subr.bf16.mxu0 0
        %6336 = vmatpush1.bf16.msra.mxu0 0
        %6337 = vmatprep.subr.bf16.mxu0 0
        %6338 = vmatpush1.bf16.msra.mxu0 0
        %6339 = vmatprep.subr.bf16.mxu0 0
        %6340 = vmatpush1.bf16.msra.mxu0 0
        %6341 = vmatprep.subr.bf16.mxu0 0
        %6342 = vmatpush1.bf16.msra.mxu0 0
        %6343 = vmatprep.subr.bf16.mxu0 0
        %6344 = vmatpush1.bf16.msra.mxu0 0
        %6345 = vmatprep.subr.bf16.mxu0 0
        %6346 = vmatpush1.bf16.msra.mxu0 0
        %6347 = vmatprep.subr.bf16.mxu0 0
        %6348 = vmatpush1.bf16.msra.mxu0 0
        %6349 = vmatprep.subr.bf16.mxu0 0
        %6350 = vmatpush1.bf16.msra.mxu0 0
        %6351 = vmatprep.subr.bf16.mxu0 0
        %6352 = vmatpush1.bf16.msra.mxu0 0
        %6353 = vmatprep.subr.bf16.mxu0 0
        %6354 = vmatpush1.bf16.msra.mxu0 0
        %6355 = vmatprep.subr.bf16.mxu0 0
        %6356 = vmatpush1.bf16.msra.mxu0 0
        %6357 = vmatprep.mubr.bf16.mxu0 0
        %6358 = vmatmul.mubr.bf16.gmra.mrb[0].mxu0 %v6022
        %v6359 = vpop.f32.mrb[0].mxu0
        %v6360 = vadd.f32 0.0, %v6359
        %v6361 = vpop.f32.mrb[0].mxu0
        %v6362 = vadd.f32 0.0, %v6361
        %v6363 = vpop.f32.mrb[0].mxu0
        %v6364 = vadd.f32 0.0, %v6363
        %v6365 = vpop.f32.mrb[0].mxu0
        %v6366 = vadd.f32 0.0, %v6365
        %6367 = vmatprep.mubr.bf16.mxu0 0
        %6368 = vmatmul.mubr.bf16.gmra.mrb[0].mxu0 %v6025
        %v6369 = vpop.f32.mrb[0].mxu0
        %v6370 = vadd.f32 0.0, %v6369
        %v6371 = vpop.f32.mrb[0].mxu0
        %v6372 = vadd.f32 0.0, %v6371
        %v6373 = vpop.f32.mrb[0].mxu0
        %v6374 = vadd.f32 0.0, %v6373
        %v6375 = vpop.f32.mrb[0].mxu0
        %v6376 = vadd.f32 0.0, %v6375
        %6377 = vmatprep.mubr.bf16.mxu0 0
        %6378 = vmatmul.mubr.bf16.gmra.mrb[0].mxu0 %v6028
        %v6379 = vpop.f32.mrb[0].mxu0
        %v6380 = vadd.f32 0.0, %v6379
        %v6381 = vpop.f32.mrb[0].mxu0
        %v6382 = vadd.f32 0.0, %v6381
        %v6383 = vpop.f32.mrb[0].mxu0
        %v6384 = vadd.f32 0.0, %v6383
        %v6385 = vpop.f32.mrb[0].mxu0
        %v6386 = vadd.f32 0.0, %v6385
        %6387 = vmatprep.mubr.bf16.mxu0 0
        %6388 = vmatmul.mubr.bf16.gmra.mrb[0].mxu0 %v6031
        %v6389 = vpop.f32.mrb[0].mxu0
        %v6390 = vadd.f32 0.0, %v6389
        %v6391 = vpop.f32.mrb[0].mxu0
        %v6392 = vadd.f32 0.0, %v6391
        %v6393 = vpop.f32.mrb[0].mxu0
        %v6394 = vadd.f32 0.0, %v6393
        %v6395 = vpop.f32.mrb[0].mxu0
        %v6396 = vadd.f32 0.0, %v6395
        %6397 = vdwg.mxu0
        %6398 = vmatprep.subr.bf16.mxu0 %v5939
        %6399 = vmatpush1.bf16.msra.mxu0 %v5938
        %6400 = vmatprep.subr.bf16.mxu0 %v5955
        %6401 = vmatpush1.bf16.msra.mxu0 %v5954
        %6402 = vmatprep.subr.bf16.mxu0 %v5971
        %6403 = vmatpush1.bf16.msra.mxu0 %v5970
        %6404 = vmatprep.subr.bf16.mxu0 %v5987
        %6405 = vmatpush1.bf16.msra.mxu0 %v5986
        %6406 = vmatprep.subr.bf16.mxu0 0
        %6407 = vmatpush1.bf16.msra.mxu0 0
        %6408 = vmatprep.subr.bf16.mxu0 0
        %6409 = vmatpush1.bf16.msra.mxu0 0
        %6410 = vmatprep.subr.bf16.mxu0 0
        %6411 = vmatpush1.bf16.msra.mxu0 0
        %6412 = vmatprep.subr.bf16.mxu0 0
        %6413 = vmatpush1.bf16.msra.mxu0 0
        %6414 = vmatprep.subr.bf16.mxu0 0
        %6415 = vmatpush1.bf16.msra.mxu0 0
        %6416 = vmatprep.subr.bf16.mxu0 0
        %6417 = vmatpush1.bf16.msra.mxu0 0
        %6418 = vmatprep.subr.bf16.mxu0 0
        %6419 = vmatpush1.bf16.msra.mxu0 0
        %6420 = vmatprep.subr.bf16.mxu0 0
        %6421 = vmatpush1.bf16.msra.mxu0 0
        %6422 = vmatprep.subr.bf16.mxu0 0
        %6423 = vmatpush1.bf16.msra.mxu0 0
        %6424 = vmatprep.subr.bf16.mxu0 0
        %6425 = vmatpush1.bf16.msra.mxu0 0
        %6426 = vmatprep.subr.bf16.mxu0 0
        %6427 = vmatpush1.bf16.msra.mxu0 0
        %6428 = vmatprep.subr.bf16.mxu0 0
        %6429 = vmatpush1.bf16.msra.mxu0 0
        %6430 = vmatprep.mubr.bf16.mxu0 0
        %6431 = vmatmul.mubr.bf16.gmra.mrb[0].mxu0 %v6022
        %v6432 = vpop.f32.mrb[0].mxu0
        %v6433 = vadd.f32 0.0, %v6432
        %v6434 = vpop.f32.mrb[0].mxu0
        %v6435 = vadd.f32 0.0, %v6434
        %v6436 = vpop.f32.mrb[0].mxu0
        %v6437 = vadd.f32 0.0, %v6436
        %v6438 = vpop.f32.mrb[0].mxu0
        %v6439 = vadd.f32 0.0, %v6438
        %6440 = vmatprep.mubr.bf16.mxu0 0
        %6441 = vmatmul.mubr.bf16.gmra.mrb[0].mxu0 %v6025
        %v6442 = vpop.f32.mrb[0].mxu0
        %v6443 = vadd.f32 0.0, %v6442
        %v6444 = vpop.f32.mrb[0].mxu0
        %v6445 = vadd.f32 0.0, %v6444
        %v6446 = vpop.f32.mrb[0].mxu0
        %v6447 = vadd.f32 0.0, %v6446
        %v6448 = vpop.f32.mrb[0].mxu0
        %v6449 = vadd.f32 0.0, %v6448
        %6450 = vmatprep.mubr.bf16.mxu0 0
        %6451 = vmatmul.mubr.bf16.gmra.mrb[0].mxu0 %v6028
        %v6452 = vpop.f32.mrb[0].mxu0
        %v6453 = vadd.f32 0.0, %v6452
        %v6454 = vpop.f32.mrb[0].mxu0
        %v6455 = vadd.f32 0.0, %v6454
        %v6456 = vpop.f32.mrb[0].mxu0
        %v6457 = vadd.f32 0.0, %v6456
        %v6458 = vpop.f32.mrb[0].mxu0
        %v6459 = vadd.f32 0.0, %v6458
        %6460 = vmatprep.mubr.bf16.mxu0 0
        %6461 = vmatmul.mubr.bf16.gmra.mrb[0].mxu0 %v6031
        %v6462 = vpop.f32.mrb[0].mxu0
        %v6463 = vadd.f32 0.0, %v6462
        %v6464 = vpop.f32.mrb[0].mxu0
        %v6465 = vadd.f32 0.0, %v6464
        %v6466 = vpop.f32.mrb[0].mxu0
        %v6467 = vadd.f32 0.0, %v6466
        %v6468 = vpop.f32.mrb[0].mxu0
        %v6469 = vadd.f32 0.0, %v6468
        %6470 = vdwg.mxu0
        %6471 = vmatprep.subr.bf16.mxu0 %v5941
        %6472 = vmatpush1.bf16.msra.mxu0 %v5940
        %6473 = vmatprep.subr.bf16.mxu0 %v5957
        %6474 = vmatpush1.bf16.msra.mxu0 %v5956
        %6475 = vmatprep.subr.bf16.mxu0 %v5973
        %6476 = vmatpush1.bf16.msra.mxu0 %v5972
        %6477 = vmatprep.subr.bf16.mxu0 %v5989
        %6478 = vmatpush1.bf16.msra.mxu0 %v5988
        %6479 = vmatprep.subr.bf16.mxu0 0
        %6480 = vmatpush1.bf16.msra.mxu0 0
        %6481 = vmatprep.subr.bf16.mxu0 0
        %6482 = vmatpush1.bf16.msra.mxu0 0
        %6483 = vmatprep.subr.bf16.mxu0 0
        %6484 = vmatpush1.bf16.msra.mxu0 0
        %6485 = vmatprep.subr.bf16.mxu0 0
        %6486 = vmatpush1.bf16.msra.mxu0 0
        %6487 = vmatprep.subr.bf16.mxu0 0
        %6488 = vmatpush1.bf16.msra.mxu0 0
        %6489 = vmatprep.subr.bf16.mxu0 0
        %6490 = vmatpush1.bf16.msra.mxu0 0
        %6491 = vmatprep.subr.bf16.mxu0 0
        %6492 = vmatpush1.bf16.msra.mxu0 0
        %6493 = vmatprep.subr.bf16.mxu0 0
        %6494 = vmatpush1.bf16.msra.mxu0 0
        %6495 = vmatprep.subr.bf16.mxu0 0
        %6496 = vmatpush1.bf16.msra.mxu0 0
        %6497 = vmatprep.subr.bf16.mxu0 0
        %6498 = vmatpush1.bf16.msra.mxu0 0
        %6499 = vmatprep.subr.bf16.mxu0 0
        %6500 = vmatpush1.bf16.msra.mxu0 0
        %6501 = vmatprep.subr.bf16.mxu0 0
        %6502 = vmatpush1.bf16.msra.mxu0 0
        %6503 = vmatprep.mubr.bf16.mxu0 0
        %6504 = vmatmul.mubr.bf16.gmra.mrb[0].mxu0 %v6022
        %v6505 = vpop.f32.mrb[0].mxu0
        %v6506 = vadd.f32 0.0, %v6505
        %v6507 = vpop.f32.mrb[0].mxu0
        %v6508 = vadd.f32 0.0, %v6507
        %v6509 = vpop.f32.mrb[0].mxu0
        %v6510 = vadd.f32 0.0, %v6509
        %v6511 = vpop.f32.mrb[0].mxu0
        %v6512 = vadd.f32 0.0, %v6511
        %6513 = vmatprep.mubr.bf16.mxu0 0
        %6514 = vmatmul.mubr.bf16.gmra.mrb[0].mxu0 %v6025
        %v6515 = vpop.f32.mrb[0].mxu0
        %v6516 = vadd.f32 0.0, %v6515
        %v6517 = vpop.f32.mrb[0].mxu0
        %v6518 = vadd.f32 0.0, %v6517
        %v6519 = vpop.f32.mrb[0].mxu0
        %v6520 = vadd.f32 0.0, %v6519
        %v6521 = vpop.f32.mrb[0].mxu0
        %v6522 = vadd.f32 0.0, %v6521
        %6523 = vmatprep.mubr.bf16.mxu0 0
        %6524 = vmatmul.mubr.bf16.gmra.mrb[0].mxu0 %v6028
        %v6525 = vpop.f32.mrb[0].mxu0
        %v6526 = vadd.f32 0.0, %v6525
        %v6527 = vpop.f32.mrb[0].mxu0
        %v6528 = vadd.f32 0.0, %v6527
        %v6529 = vpop.f32.mrb[0].mxu0
        %v6530 = vadd.f32 0.0, %v6529
        %v6531 = vpop.f32.mrb[0].mxu0
        %v6532 = vadd.f32 0.0, %v6531
        %6533 = vmatprep.mubr.bf16.mxu0 0
        %6534 = vmatmul.mubr.bf16.gmra.mrb[0].mxu0 %v6031
        %v6535 = vpop.f32.mrb[0].mxu0
        %v6536 = vadd.f32 0.0, %v6535
        %v6537 = vpop.f32.mrb[0].mxu0
        %v6538 = vadd.f32 0.0, %v6537
        %v6539 = vpop.f32.mrb[0].mxu0
        %v6540 = vadd.f32 0.0, %v6539
        %v6541 = vpop.f32.mrb[0].mxu0
        %v6542 = vadd.f32 0.0, %v6541
        %6543 = vdwg.mxu0
        %6544 = vmatprep.subr.bf16.mxu0 %v5943
        %6545 = vmatpush1.bf16.msra.mxu0 %v5942
        %6546 = vmatprep.subr.bf16.mxu0 %v5959
        %6547 = vmatpush1.bf16.msra.mxu0 %v5958
        %6548 = vmatprep.subr.bf16.mxu0 %v5975
        %6549 = vmatpush1.bf16.msra.mxu0 %v5974
        %6550 = vmatprep.subr.bf16.mxu0 %v5991
        %6551 = vmatpush1.bf16.msra.mxu0 %v5990
        %6552 = vmatprep.subr.bf16.mxu0 0
        %6553 = vmatpush1.bf16.msra.mxu0 0
        %6554 = vmatprep.subr.bf16.mxu0 0
        %6555 = vmatpush1.bf16.msra.mxu0 0
        %6556 = vmatprep.subr.bf16.mxu0 0
        %6557 = vmatpush1.bf16.msra.mxu0 0
        %6558 = vmatprep.subr.bf16.mxu0 0
        %6559 = vmatpush1.bf16.msra.mxu0 0
        %6560 = vmatprep.subr.bf16.mxu0 0
        %6561 = vmatpush1.bf16.msra.mxu0 0
        %6562 = vmatprep.subr.bf16.mxu0 0
        %6563 = vmatpush1.bf16.msra.mxu0 0
        %6564 = vmatprep.subr.bf16.mxu0 0
        %6565 = vmatpush1.bf16.msra.mxu0 0
        %6566 = vmatprep.subr.bf16.mxu0 0
        %6567 = vmatpush1.bf16.msra.mxu0 0
        %6568 = vmatprep.subr.bf16.mxu0 0
        %6569 = vmatpush1.bf16.msra.mxu0 0
        %6570 = vmatprep.subr.bf16.mxu0 0
        %6571 = vmatpush1.bf16.msra.mxu0 0
        %6572 = vmatprep.subr.bf16.mxu0 0
        %6573 = vmatpush1.bf16.msra.mxu0 0
        %6574 = vmatprep.subr.bf16.mxu0 0
        %6575 = vmatpush1.bf16.msra.mxu0 0
        %6576 = vmatprep.mubr.bf16.mxu0 0
        %6577 = vmatmul.mubr.bf16.gmra.mrb[0].mxu0 %v6022
        %v6578 = vpop.f32.mrb[0].mxu0
        %v6579 = vadd.f32 0.0, %v6578
        %v6580 = vpop.f32.mrb[0].mxu0
        %v6581 = vadd.f32 0.0, %v6580
        %v6582 = vpop.f32.mrb[0].mxu0
        %v6583 = vadd.f32 0.0, %v6582
        %v6584 = vpop.f32.mrb[0].mxu0
        %v6585 = vadd.f32 0.0, %v6584
        %6586 = vmatprep.mubr.bf16.mxu0 0
        %6587 = vmatmul.mubr.bf16.gmra.mrb[0].mxu0 %v6025
        %v6588 = vpop.f32.mrb[0].mxu0
        %v6589 = vadd.f32 0.0, %v6588
        %v6590 = vpop.f32.mrb[0].mxu0
        %v6591 = vadd.f32 0.0, %v6590
        %v6592 = vpop.f32.mrb[0].mxu0
        %v6593 = vadd.f32 0.0, %v6592
        %v6594 = vpop.f32.mrb[0].mxu0
        %v6595 = vadd.f32 0.0, %v6594
        %6596 = vmatprep.mubr.bf16.mxu0 0
        %6597 = vmatmul.mubr.bf16.gmra.mrb[0].mxu0 %v6028
        %v6598 = vpop.f32.mrb[0].mxu0
        %v6599 = vadd.f32 0.0, %v6598
        %v6600 = vpop.f32.mrb[0].mxu0
        %v6601 = vadd.f32 0.0, %v6600
        %v6602 = vpop.f32.mrb[0].mxu0
        %v6603 = vadd.f32 0.0, %v6602
        %v6604 = vpop.f32.mrb[0].mxu0
        %v6605 = vadd.f32 0.0, %v6604
        %6606 = vmatprep.mubr.bf16.mxu0 0
        %6607 = vmatmul.mubr.bf16.gmra.mrb[0].mxu0 %v6031
        %v6608 = vpop.f32.mrb[0].mxu0
        %v6609 = vadd.f32 0.0, %v6608
        %v6610 = vpop.f32.mrb[0].mxu0
        %v6611 = vadd.f32 0.0, %v6610
        %v6612 = vpop.f32.mrb[0].mxu0
        %v6613 = vadd.f32 0.0, %v6612
        %v6614 = vpop.f32.mrb[0].mxu0
        %v6615 = vadd.f32 0.0, %v6614
        %6616 = vdwg.mxu0
        %v6617 = vmax.f32 %v6068, 0.0
        %v6618 = vmax.f32 %v6070, 0.0
        %v6619 = vmax.f32 %v6141, 0.0
        %v6620 = vmax.f32 %v6143, 0.0
        %v6621 = vmax.f32 %v6214, 0.0
        %v6622 = vmax.f32 %v6216, 0.0
        %v6623 = vmax.f32 %v6287, 0.0
        %v6624 = vmax.f32 %v6289, 0.0
        %v6625 = vmax.f32 %v6360, 0.0
        %v6626 = vmax.f32 %v6362, 0.0
        %v6627 = vmax.f32 %v6433, 0.0
        %v6628 = vmax.f32 %v6435, 0.0
        %v6629 = vmax.f32 %v6506, 0.0
        %v6630 = vmax.f32 %v6508, 0.0
        %v6631 = vmax.f32 %v6579, 0.0
        %v6632 = vmax.f32 %v6581, 0.0
        %v6633 = vmax.f32 %v6072, 0.0
        %v6634 = vmax.f32 %v6074, 0.0
        %v6635 = vmax.f32 %v6145, 0.0
        %v6636 = vmax.f32 %v6147, 0.0
        %v6637 = vmax.f32 %v6218, 0.0
        %v6638 = vmax.f32 %v6220, 0.0
        %v6639 = vmax.f32 %v6291, 0.0
        %v6640 = vmax.f32 %v6293, 0.0
        %v6641 = vmax.f32 %v6364, 0.0
        %v6642 = vmax.f32 %v6366, 0.0
        %v6643 = vmax.f32 %v6437, 0.0
        %v6644 = vmax.f32 %v6439, 0.0
        %v6645 = vmax.f32 %v6510, 0.0
        %v6646 = vmax.f32 %v6512, 0.0
        %v6647 = vmax.f32 %v6583, 0.0
        %v6648 = vmax.f32 %v6585, 0.0
        %v6649 = vmax.f32 %v6078, 0.0
        %v6650 = vmax.f32 %v6080, 0.0
        %v6651 = vmax.f32 %v6151, 0.0
        %v6652 = vmax.f32 %v6153, 0.0
        %v6653 = vmax.f32 %v6224, 0.0
        %v6654 = vmax.f32 %v6226, 0.0
        %v6655 = vmax.f32 %v6297, 0.0
        %v6656 = vmax.f32 %v6299, 0.0
        %v6657 = vmax.f32 %v6370, 0.0
        %v6658 = vmax.f32 %v6372, 0.0
        %v6659 = vmax.f32 %v6443, 0.0
        %v6660 = vmax.f32 %v6445, 0.0
        %v6661 = vmax.f32 %v6516, 0.0
        %v6662 = vmax.f32 %v6518, 0.0
        %v6663 = vmax.f32 %v6589, 0.0
        %v6664 = vmax.f32 %v6591, 0.0
        %v6665 = vmax.f32 %v6082, 0.0
        %v6666 = vmax.f32 %v6084, 0.0
        %v6667 = vmax.f32 %v6155, 0.0
        %v6668 = vmax.f32 %v6157, 0.0
        %v6669 = vmax.f32 %v6228, 0.0
        %v6670 = vmax.f32 %v6230, 0.0
        %v6671 = vmax.f32 %v6301, 0.0
        %v6672 = vmax.f32 %v6303, 0.0
        %v6673 = vmax.f32 %v6374, 0.0
        %v6674 = vmax.f32 %v6376, 0.0
        %v6675 = vmax.f32 %v6447, 0.0
        %v6676 = vmax.f32 %v6449, 0.0
        %v6677 = vmax.f32 %v6520, 0.0
        %v6678 = vmax.f32 %v6522, 0.0
        %v6679 = vmax.f32 %v6593, 0.0
        %v6680 = vmax.f32 %v6595, 0.0
        %v6681 = vmax.f32 %v6088, 0.0
        %v6682 = vmax.f32 %v6090, 0.0
        %v6683 = vmax.f32 %v6161, 0.0
        %v6684 = vmax.f32 %v6163, 0.0
        %v6685 = vmax.f32 %v6234, 0.0
        %v6686 = vmax.f32 %v6236, 0.0
        %v6687 = vmax.f32 %v6307, 0.0
        %v6688 = vmax.f32 %v6309, 0.0
        %v6689 = vmax.f32 %v6380, 0.0
        %v6690 = vmax.f32 %v6382, 0.0
        %v6691 = vmax.f32 %v6453, 0.0
        %v6692 = vmax.f32 %v6455, 0.0
        %v6693 = vmax.f32 %v6526, 0.0
        %v6694 = vmax.f32 %v6528, 0.0
        %v6695 = vmax.f32 %v6599, 0.0
        %v6696 = vmax.f32 %v6601, 0.0
        %v6697 = vmax.f32 %v6092, 0.0
        %v6698 = vmax.f32 %v6094, 0.0
        %v6699 = vmax.f32 %v6165, 0.0
        %v6700 = vmax.f32 %v6167, 0.0
        %v6701 = vmax.f32 %v6238, 0.0
        %v6702 = vmax.f32 %v6240, 0.0
        %v6703 = vmax.f32 %v6311, 0.0
        %v6704 = vmax.f32 %v6313, 0.0
        %v6705 = vmax.f32 %v6384, 0.0
        %v6706 = vmax.f32 %v6386, 0.0
        %v6707 = vmax.f32 %v6457, 0.0
        %v6708 = vmax.f32 %v6459, 0.0
        %v6709 = vmax.f32 %v6530, 0.0
        %v6710 = vmax.f32 %v6532, 0.0
        %v6711 = vmax.f32 %v6603, 0.0
        %v6712 = vmax.f32 %v6605, 0.0
        %v6713 = vmax.f32 %v6098, 0.0
        %v6714 = vmax.f32 %v6100, 0.0
        %v6715 = vmax.f32 %v6171, 0.0
        %v6716 = vmax.f32 %v6173, 0.0
        %v6717 = vmax.f32 %v6244, 0.0
        %v6718 = vmax.f32 %v6246, 0.0
        %v6719 = vmax.f32 %v6317, 0.0
        %v6720 = vmax.f32 %v6319, 0.0
        %v6721 = vmax.f32 %v6390, 0.0
        %v6722 = vmax.f32 %v6392, 0.0
        %v6723 = vmax.f32 %v6463, 0.0
        %v6724 = vmax.f32 %v6465, 0.0
        %v6725 = vmax.f32 %v6536, 0.0
        %v6726 = vmax.f32 %v6538, 0.0
        %v6727 = vmax.f32 %v6609, 0.0
        %v6728 = vmax.f32 %v6611, 0.0
        %v6729 = vmax.f32 %v6102, 0.0
        %v6730 = vmax.f32 %v6104, 0.0
        %v6731 = vmax.f32 %v6175, 0.0
        %v6732 = vmax.f32 %v6177, 0.0
        %v6733 = vmax.f32 %v6248, 0.0
        %v6734 = vmax.f32 %v6250, 0.0
        %v6735 = vmax.f32 %v6321, 0.0
        %v6736 = vmax.f32 %v6323, 0.0
        %v6737 = vmax.f32 %v6394, 0.0
        %v6738 = vmax.f32 %v6396, 0.0
        %v6739 = vmax.f32 %v6467, 0.0
        %v6740 = vmax.f32 %v6469, 0.0
        %v6741 = vmax.f32 %v6540, 0.0
        %v6742 = vmax.f32 %v6542, 0.0
        %v6743 = vmax.f32 %v6613, 0.0
        %v6744 = vmax.f32 %v6615, 0.0
        %v6745 = vld [vmem:[#allocation10] sm:$0x3]
        %v6746 = vpack.c.bf16 %v6633, %v6617
        %v6747 = vpack.c.bf16 %v6634, %v6618
        %v6748 = vpack.c.bf16 %v6635, %v6619
        %v6749 = vpack.c.bf16 %v6636, %v6620
        %v6750 = vpack.c.bf16 %v6637, %v6621
        %v6751 = vpack.c.bf16 %v6638, %v6622
        %v6752 = vpack.c.bf16 %v6639, %v6623
        %v6753 = vpack.c.bf16 %v6640, %v6624
        %v6754 = vpack.c.bf16 %v6641, %v6625
        %v6755 = vpack.c.bf16 %v6642, %v6626
        %v6756 = vpack.c.bf16 %v6643, %v6627
        %v6757 = vpack.c.bf16 %v6644, %v6628
        %v6758 = vpack.c.bf16 %v6645, %v6629
        %v6759 = vpack.c.bf16 %v6646, %v6630
        %v6760 = vpack.c.bf16 %v6647, %v6631
        %v6761 = vpack.c.bf16 %v6648, %v6632
        %v6762 = vpack.c.bf16 %v6665, %v6649
        %v6763 = vpack.c.bf16 %v6666, %v6650
        %v6764 = vpack.c.bf16 %v6667, %v6651
        %v6765 = vpack.c.bf16 %v6668, %v6652
        %v6766 = vpack.c.bf16 %v6669, %v6653
        %v6767 = vpack.c.bf16 %v6670, %v6654
        %v6768 = vpack.c.bf16 %v6671, %v6655
        %v6769 = vpack.c.bf16 %v6672, %v6656
        %v6770 = vpack.c.bf16 %v6673, %v6657
        %v6771 = vpack.c.bf16 %v6674, %v6658
        %v6772 = vpack.c.bf16 %v6675, %v6659
        %v6773 = vpack.c.bf16 %v6676, %v6660
        %v6774 = vpack.c.bf16 %v6677, %v6661
        %v6775 = vpack.c.bf16 %v6678, %v6662
        %v6776 = vpack.c.bf16 %v6679, %v6663
        %v6777 = vpack.c.bf16 %v6680, %v6664
        %v6778 = vpack.c.bf16 %v6697, %v6681
        %v6779 = vpack.c.bf16 %v6698, %v6682
        %v6780 = vpack.c.bf16 %v6699, %v6683
        %v6781 = vpack.c.bf16 %v6700, %v6684
        %v6782 = vpack.c.bf16 %v6701, %v6685
        %v6783 = vpack.c.bf16 %v6702, %v6686
        %v6784 = vpack.c.bf16 %v6703, %v6687
        %v6785 = vpack.c.bf16 %v6704, %v6688
        %v6786 = vpack.c.bf16 %v6705, %v6689
        %v6787 = vpack.c.bf16 %v6706, %v6690
        %v6788 = vpack.c.bf16 %v6707, %v6691
        %v6789 = vpack.c.bf16 %v6708, %v6692
        %v6790 = vpack.c.bf16 %v6709, %v6693
        %v6791 = vpack.c.bf16 %v6710, %v6694
        %v6792 = vpack.c.bf16 %v6711, %v6695
        %v6793 = vpack.c.bf16 %v6712, %v6696
        %v6794 = vpack.c.bf16 %v6729, %v6713
        %v6795 = vpack.c.bf16 %v6730, %v6714
        %v6796 = vpack.c.bf16 %v6731, %v6715
        %v6797 = vpack.c.bf16 %v6732, %v6716
        %v6798 = vpack.c.bf16 %v6733, %v6717
        %v6799 = vpack.c.bf16 %v6734, %v6718
        %v6800 = vpack.c.bf16 %v6735, %v6719
        %v6801 = vpack.c.bf16 %v6736, %v6720
        %v6802 = vpack.c.bf16 %v6737, %v6721
        %v6803 = vpack.c.bf16 %v6738, %v6722
        %v6804 = vpack.c.bf16 %v6739, %v6723
        %v6805 = vpack.c.bf16 %v6740, %v6724
        %v6806 = vpack.c.bf16 %v6741, %v6725
        %v6807 = vpack.c.bf16 %v6742, %v6726
        %v6808 = vpack.c.bf16 %v6743, %v6727
        %v6809 = vpack.c.bf16 %v6744, %v6728
        %v6811 = vsel %vm6020, %v6745, 0
        %6813 = vmatprep.subr.bf16.mxu0 %v6747
        %6814 = vmatpush1.bf16.msra.mxu0 %v6746
        %6815 = vmatprep.subr.bf16.mxu0 %v6763
        %6816 = vmatpush1.bf16.msra.mxu0 %v6762
        %6817 = vmatprep.subr.bf16.mxu0 %v6779
        %6818 = vmatpush1.bf16.msra.mxu0 %v6778
        %6819 = vmatprep.subr.bf16.mxu0 %v6795
        %6820 = vmatpush1.bf16.msra.mxu0 %v6794
        %6821 = vmatprep.subr.bf16.mxu0 0
        %6822 = vmatpush1.bf16.msra.mxu0 0
        %6823 = vmatprep.subr.bf16.mxu0 0
        %6824 = vmatpush1.bf16.msra.mxu0 0
        %6825 = vmatprep.subr.bf16.mxu0 0
        %6826 = vmatpush1.bf16.msra.mxu0 0
        %6827 = vmatprep.subr.bf16.mxu0 0
        %6828 = vmatpush1.bf16.msra.mxu0 0
        %6829 = vmatprep.subr.bf16.mxu0 0
        %6830 = vmatpush1.bf16.msra.mxu0 0
        %6831 = vmatprep.subr.bf16.mxu0 0
        %6832 = vmatpush1.bf16.msra.mxu0 0
        %6833 = vmatprep.subr.bf16.mxu0 0
        %6834 = vmatpush1.bf16.msra.mxu0 0
        %6835 = vmatprep.subr.bf16.mxu0 0
        %6836 = vmatpush1.bf16.msra.mxu0 0
        %6837 = vmatprep.subr.bf16.mxu0 0
        %6838 = vmatpush1.bf16.msra.mxu0 0
        %6839 = vmatprep.subr.bf16.mxu0 0
        %6840 = vmatpush1.bf16.msra.mxu0 0
        %6841 = vmatprep.subr.bf16.mxu0 0
        %6842 = vmatpush1.bf16.msra.mxu0 0
        %6843 = vmatprep.subr.bf16.mxu0 0
        %6844 = vmatpush1.bf16.msra.mxu0 0
        %6845 = vmatprep.mubr.bf16.mxu0 0
        %6846 = vmatmul.mubr.bf16.gmra.mrb[0].mxu0 %v6811
        %v6847 = vpop.f32.mrb[0].mxu0
        %v6848 = vadd.f32 0.0, %v6847
        %v6849 = vpop.f32.mrb[0].mxu0
        %v6850 = vadd.f32 0.0, %v6849
        %v6851 = vpop.f32.mrb[0].mxu0
        %v6852 = vpop.f32.mrb[0].mxu0
        %6853 = vdwg.mxu0
        %6854 = vmatprep.subr.bf16.mxu0 %v6749
        %6855 = vmatpush1.bf16.msra.mxu0 %v6748
        %6856 = vmatprep.subr.bf16.mxu0 %v6765
        %6857 = vmatpush1.bf16.msra.mxu0 %v6764
        %6858 = vmatprep.subr.bf16.mxu0 %v6781
        %6859 = vmatpush1.bf16.msra.mxu0 %v6780
        %6860 = vmatprep.subr.bf16.mxu0 %v6797
        %6861 = vmatpush1.bf16.msra.mxu0 %v6796
        %6862 = vmatprep.subr.bf16.mxu0 0
        %6863 = vmatpush1.bf16.msra.mxu0 0
        %6864 = vmatprep.subr.bf16.mxu0 0
        %6865 = vmatpush1.bf16.msra.mxu0 0
        %6866 = vmatprep.subr.bf16.mxu0 0
        %6867 = vmatpush1.bf16.msra.mxu0 0
        %6868 = vmatprep.subr.bf16.mxu0 0
        %6869 = vmatpush1.bf16.msra.mxu0 0
        %6870 = vmatprep.subr.bf16.mxu0 0
        %6871 = vmatpush1.bf16.msra.mxu0 0
        %6872 = vmatprep.subr.bf16.mxu0 0
        %6873 = vmatpush1.bf16.msra.mxu0 0
        %6874 = vmatprep.subr.bf16.mxu0 0
        %6875 = vmatpush1.bf16.msra.mxu0 0
        %6876 = vmatprep.subr.bf16.mxu0 0
        %6877 = vmatpush1.bf16.msra.mxu0 0
        %6878 = vmatprep.subr.bf16.mxu0 0
        %6879 = vmatpush1.bf16.msra.mxu0 0
        %6880 = vmatprep.subr.bf16.mxu0 0
        %6881 = vmatpush1.bf16.msra.mxu0 0
        %6882 = vmatprep.subr.bf16.mxu0 0
        %6883 = vmatpush1.bf16.msra.mxu0 0
        %6884 = vmatprep.subr.bf16.mxu0 0
        %6885 = vmatpush1.bf16.msra.mxu0 0
        %6886 = vmatprep.mubr.bf16.mxu0 0
        %6887 = vmatmul.mubr.bf16.gmra.mrb[0].mxu0 %v6811
        %v6888 = vpop.f32.mrb[0].mxu0
        %v6889 = vadd.f32 0.0, %v6888
        %v6890 = vpop.f32.mrb[0].mxu0
        %v6891 = vadd.f32 0.0, %v6890
        %v6892 = vpop.f32.mrb[0].mxu0
        %v6893 = vpop.f32.mrb[0].mxu0
        %6894 = vdwg.mxu0
        %6895 = vmatprep.subr.bf16.mxu0 %v6751
        %6896 = vmatpush1.bf16.msra.mxu0 %v6750
        %6897 = vmatprep.subr.bf16.mxu0 %v6767
        %6898 = vmatpush1.bf16.msra.mxu0 %v6766
        %6899 = vmatprep.subr.bf16.mxu0 %v6783
        %6900 = vmatpush1.bf16.msra.mxu0 %v6782
        %6901 = vmatprep.subr.bf16.mxu0 %v6799
        %6902 = vmatpush1.bf16.msra.mxu0 %v6798
        %6903 = vmatprep.subr.bf16.mxu0 0
        %6904 = vmatpush1.bf16.msra.mxu0 0
        %6905 = vmatprep.subr.bf16.mxu0 0
        %6906 = vmatpush1.bf16.msra.mxu0 0
        %6907 = vmatprep.subr.bf16.mxu0 0
        %6908 = vmatpush1.bf16.msra.mxu0 0
        %6909 = vmatprep.subr.bf16.mxu0 0
        %6910 = vmatpush1.bf16.msra.mxu0 0
        %6911 = vmatprep.subr.bf16.mxu0 0
        %6912 = vmatpush1.bf16.msra.mxu0 0
        %6913 = vmatprep.subr.bf16.mxu0 0
        %6914 = vmatpush1.bf16.msra.mxu0 0
        %6915 = vmatprep.subr.bf16.mxu0 0
        %6916 = vmatpush1.bf16.msra.mxu0 0
        %6917 = vmatprep.subr.bf16.mxu0 0
        %6918 = vmatpush1.bf16.msra.mxu0 0
        %6919 = vmatprep.subr.bf16.mxu0 0
        %6920 = vmatpush1.bf16.msra.mxu0 0
        %6921 = vmatprep.subr.bf16.mxu0 0
        %6922 = vmatpush1.bf16.msra.mxu0 0
        %6923 = vmatprep.subr.bf16.mxu0 0
        %6924 = vmatpush1.bf16.msra.mxu0 0
        %6925 = vmatprep.subr.bf16.mxu0 0
        %6926 = vmatpush1.bf16.msra.mxu0 0
        %6927 = vmatprep.mubr.bf16.mxu0 0
        %6928 = vmatmul.mubr.bf16.gmra.mrb[0].mxu0 %v6811
        %v6929 = vpop.f32.mrb[0].mxu0
        %v6930 = vadd.f32 0.0, %v6929
        %v6931 = vpop.f32.mrb[0].mxu0
        %v6932 = vadd.f32 0.0, %v6931
        %v6933 = vpop.f32.mrb[0].mxu0
        %v6934 = vpop.f32.mrb[0].mxu0
        %6935 = vdwg.mxu0
        %6936 = vmatprep.subr.bf16.mxu0 %v6753
        %6937 = vmatpush1.bf16.msra.mxu0 %v6752
        %6938 = vmatprep.subr.bf16.mxu0 %v6769
        %6939 = vmatpush1.bf16.msra.mxu0 %v6768
        %6940 = vmatprep.subr.bf16.mxu0 %v6785
        %6941 = vmatpush1.bf16.msra.mxu0 %v6784
        %6942 = vmatprep.subr.bf16.mxu0 %v6801
        %6943 = vmatpush1.bf16.msra.mxu0 %v6800
        %6944 = vmatprep.subr.bf16.mxu0 0
        %6945 = vmatpush1.bf16.msra.mxu0 0
        %6946 = vmatprep.subr.bf16.mxu0 0
        %6947 = vmatpush1.bf16.msra.mxu0 0
        %6948 = vmatprep.subr.bf16.mxu0 0
        %6949 = vmatpush1.bf16.msra.mxu0 0
        %6950 = vmatprep.subr.bf16.mxu0 0
        %6951 = vmatpush1.bf16.msra.mxu0 0
        %6952 = vmatprep.subr.bf16.mxu0 0
        %6953 = vmatpush1.bf16.msra.mxu0 0
        %6954 = vmatprep.subr.bf16.mxu0 0
        %6955 = vmatpush1.bf16.msra.mxu0 0
        %6956 = vmatprep.subr.bf16.mxu0 0
        %6957 = vmatpush1.bf16.msra.mxu0 0
        %6958 = vmatprep.subr.bf16.mxu0 0
        %6959 = vmatpush1.bf16.msra.mxu0 0
        %6960 = vmatprep.subr.bf16.mxu0 0
        %6961 = vmatpush1.bf16.msra.mxu0 0
        %6962 = vmatprep.subr.bf16.mxu0 0
        %6963 = vmatpush1.bf16.msra.mxu0 0
        %6964 = vmatprep.subr.bf16.mxu0 0
        %6965 = vmatpush1.bf16.msra.mxu0 0
        %6966 = vmatprep.subr.bf16.mxu0 0
        %6967 = vmatpush1.bf16.msra.mxu0 0
        %6968 = vmatprep.mubr.bf16.mxu0 0
        %6969 = vmatmul.mubr.bf16.gmra.mrb[0].mxu0 %v6811
        %v6970 = vpop.f32.mrb[0].mxu0
        %v6971 = vadd.f32 0.0, %v6970
        %v6972 = vpop.f32.mrb[0].mxu0
        %v6973 = vadd.f32 0.0, %v6972
        %v6974 = vpop.f32.mrb[0].mxu0
        %v6975 = vpop.f32.mrb[0].mxu0
        %6976 = vdwg.mxu0
        %6977 = vmatprep.subr.bf16.mxu0 %v6755
        %6978 = vmatpush1.bf16.msra.mxu0 %v6754
        %6979 = vmatprep.subr.bf16.mxu0 %v6771
        %6980 = vmatpush1.bf16.msra.mxu0 %v6770
        %6981 = vmatprep.subr.bf16.mxu0 %v6787
        %6982 = vmatpush1.bf16.msra.mxu0 %v6786
        %6983 = vmatprep.subr.bf16.mxu0 %v6803
        %6984 = vmatpush1.bf16.msra.mxu0 %v6802
        %6985 = vmatprep.subr.bf16.mxu0 0
        %6986 = vmatpush1.bf16.msra.mxu0 0
        %6987 = vmatprep.subr.bf16.mxu0 0
        %6988 = vmatpush1.bf16.msra.mxu0 0
        %6989 = vmatprep.subr.bf16.mxu0 0
        %6990 = vmatpush1.bf16.msra.mxu0 0
        %6991 = vmatprep.subr.bf16.mxu0 0
        %6992 = vmatpush1.bf16.msra.mxu0 0
        %6993 = vmatprep.subr.bf16.mxu0 0
        %6994 = vmatpush1.bf16.msra.mxu0 0
        %6995 = vmatprep.subr.bf16.mxu0 0
        %6996 = vmatpush1.bf16.msra.mxu0 0
        %6997 = vmatprep.subr.bf16.mxu0 0
        %6998 = vmatpush1.bf16.msra.mxu0 0
        %6999 = vmatprep.subr.bf16.mxu0 0
        %7000 = vmatpush1.bf16.msra.mxu0 0
        %7001 = vmatprep.subr.bf16.mxu0 0
        %7002 = vmatpush1.bf16.msra.mxu0 0
        %7003 = vmatprep.subr.bf16.mxu0 0
        %7004 = vmatpush1.bf16.msra.mxu0 0
        %7005 = vmatprep.subr.bf16.mxu0 0
        %7006 = vmatpush1.bf16.msra.mxu0 0
        %7007 = vmatprep.subr.bf16.mxu0 0
        %7008 = vmatpush1.bf16.msra.mxu0 0
        %7009 = vmatprep.mubr.bf16.mxu0 0
        %7010 = vmatmul.mubr.bf16.gmra.mrb[0].mxu0 %v6811
        %v7011 = vpop.f32.mrb[0].mxu0
        %v7012 = vadd.f32 0.0, %v7011
        %v7013 = vpop.f32.mrb[0].mxu0
        %v7014 = vadd.f32 0.0, %v7013
        %v7015 = vpop.f32.mrb[0].mxu0
        %v7016 = vpop.f32.mrb[0].mxu0
        %7017 = vdwg.mxu0
        %7018 = vmatprep.subr.bf16.mxu0 %v6757
        %7019 = vmatpush1.bf16.msra.mxu0 %v6756
        %7020 = vmatprep.subr.bf16.mxu0 %v6773
        %7021 = vmatpush1.bf16.msra.mxu0 %v6772
        %7022 = vmatprep.subr.bf16.mxu0 %v6789
        %7023 = vmatpush1.bf16.msra.mxu0 %v6788
        %7024 = vmatprep.subr.bf16.mxu0 %v6805
        %7025 = vmatpush1.bf16.msra.mxu0 %v6804
        %7026 = vmatprep.subr.bf16.mxu0 0
        %7027 = vmatpush1.bf16.msra.mxu0 0
        %7028 = vmatprep.subr.bf16.mxu0 0
        %7029 = vmatpush1.bf16.msra.mxu0 0
        %7030 = vmatprep.subr.bf16.mxu0 0
        %7031 = vmatpush1.bf16.msra.mxu0 0
        %7032 = vmatprep.subr.bf16.mxu0 0
        %7033 = vmatpush1.bf16.msra.mxu0 0
        %7034 = vmatprep.subr.bf16.mxu0 0
        %7035 = vmatpush1.bf16.msra.mxu0 0
        %7036 = vmatprep.subr.bf16.mxu0 0
        %7037 = vmatpush1.bf16.msra.mxu0 0
        %7038 = vmatprep.subr.bf16.mxu0 0
        %7039 = vmatpush1.bf16.msra.mxu0 0
        %7040 = vmatprep.subr.bf16.mxu0 0
        %7041 = vmatpush1.bf16.msra.mxu0 0
        %7042 = vmatprep.subr.bf16.mxu0 0
        %7043 = vmatpush1.bf16.msra.mxu0 0
        %7044 = vmatprep.subr.bf16.mxu0 0
        %7045 = vmatpush1.bf16.msra.mxu0 0
        %7046 = vmatprep.subr.bf16.mxu0 0
        %7047 = vmatpush1.bf16.msra.mxu0 0
        %7048 = vmatprep.subr.bf16.mxu0 0
        %7049 = vmatpush1.bf16.msra.mxu0 0
        %7050 = vmatprep.mubr.bf16.mxu0 0
        %7051 = vmatmul.mubr.bf16.gmra.mrb[0].mxu0 %v6811
        %v7052 = vpop.f32.mrb[0].mxu0
        %v7053 = vadd.f32 0.0, %v7052
        %v7054 = vpop.f32.mrb[0].mxu0
        %v7055 = vadd.f32 0.0, %v7054
        %v7056 = vpop.f32.mrb[0].mxu0
        %v7057 = vpop.f32.mrb[0].mxu0
        %7058 = vdwg.mxu0
        %7059 = vmatprep.subr.bf16.mxu0 %v6759
        %7060 = vmatpush1.bf16.msra.mxu0 %v6758
        %7061 = vmatprep.subr.bf16.mxu0 %v6775
        %7062 = vmatpush1.bf16.msra.mxu0 %v6774
        %7063 = vmatprep.subr.bf16.mxu0 %v6791
        %7064 = vmatpush1.bf16.msra.mxu0 %v6790
        %7065 = vmatprep.subr.bf16.mxu0 %v6807
        %7066 = vmatpush1.bf16.msra.mxu0 %v6806
        %7067 = vmatprep.subr.bf16.mxu0 0
        %7068 = vmatpush1.bf16.msra.mxu0 0
        %7069 = vmatprep.subr.bf16.mxu0 0
        %7070 = vmatpush1.bf16.msra.mxu0 0
        %7071 = vmatprep.subr.bf16.mxu0 0
        %7072 = vmatpush1.bf16.msra.mxu0 0
        %7073 = vmatprep.subr.bf16.mxu0 0
        %7074 = vmatpush1.bf16.msra.mxu0 0
        %7075 = vmatprep.subr.bf16.mxu0 0
        %7076 = vmatpush1.bf16.msra.mxu0 0
        %7077 = vmatprep.subr.bf16.mxu0 0
        %7078 = vmatpush1.bf16.msra.mxu0 0
        %7079 = vmatprep.subr.bf16.mxu0 0
        %7080 = vmatpush1.bf16.msra.mxu0 0
        %7081 = vmatprep.subr.bf16.mxu0 0
        %7082 = vmatpush1.bf16.msra.mxu0 0
        %7083 = vmatprep.subr.bf16.mxu0 0
        %7084 = vmatpush1.bf16.msra.mxu0 0
        %7085 = vmatprep.subr.bf16.mxu0 0
        %7086 = vmatpush1.bf16.msra.mxu0 0
        %7087 = vmatprep.subr.bf16.mxu0 0
        %7088 = vmatpush1.bf16.msra.mxu0 0
        %7089 = vmatprep.subr.bf16.mxu0 0
        %7090 = vmatpush1.bf16.msra.mxu0 0
        %7091 = vmatprep.mubr.bf16.mxu0 0
        %7092 = vmatmul.mubr.bf16.gmra.mrb[0].mxu0 %v6811
        %v7093 = vpop.f32.mrb[0].mxu0
        %v7094 = vadd.f32 0.0, %v7093
        %v7095 = vpop.f32.mrb[0].mxu0
        %v7096 = vadd.f32 0.0, %v7095
        %v7097 = vpop.f32.mrb[0].mxu0
        %v7098 = vpop.f32.mrb[0].mxu0
        %7099 = vdwg.mxu0
        %7100 = vmatprep.subr.bf16.mxu0 %v6761
        %7101 = vmatpush1.bf16.msra.mxu0 %v6760
        %7102 = vmatprep.subr.bf16.mxu0 %v6777
        %7103 = vmatpush1.bf16.msra.mxu0 %v6776
        %7104 = vmatprep.subr.bf16.mxu0 %v6793
        %7105 = vmatpush1.bf16.msra.mxu0 %v6792
        %7106 = vmatprep.subr.bf16.mxu0 %v6809
        %7107 = vmatpush1.bf16.msra.mxu0 %v6808
        %7108 = vmatprep.subr.bf16.mxu0 0
        %7109 = vmatpush1.bf16.msra.mxu0 0
        %7110 = vmatprep.subr.bf16.mxu0 0
        %7111 = vmatpush1.bf16.msra.mxu0 0
        %7112 = vmatprep.subr.bf16.mxu0 0
        %7113 = vmatpush1.bf16.msra.mxu0 0
        %7114 = vmatprep.subr.bf16.mxu0 0
        %7115 = vmatpush1.bf16.msra.mxu0 0
        %7116 = vmatprep.subr.bf16.mxu0 0
        %7117 = vmatpush1.bf16.msra.mxu0 0
        %7118 = vmatprep.subr.bf16.mxu0 0
        %7119 = vmatpush1.bf16.msra.mxu0 0
        %7120 = vmatprep.subr.bf16.mxu0 0
        %7121 = vmatpush1.bf16.msra.mxu0 0
        %7122 = vmatprep.subr.bf16.mxu0 0
        %7123 = vmatpush1.bf16.msra.mxu0 0
        %7124 = vmatprep.subr.bf16.mxu0 0
        %7125 = vmatpush1.bf16.msra.mxu0 0
        %7126 = vmatprep.subr.bf16.mxu0 0
        %7127 = vmatpush1.bf16.msra.mxu0 0
        %7128 = vmatprep.subr.bf16.mxu0 0
        %7129 = vmatpush1.bf16.msra.mxu0 0
        %7130 = vmatprep.subr.bf16.mxu0 0
        %7131 = vmatpush1.bf16.msra.mxu0 0
        %7132 = vmatprep.mubr.bf16.mxu0 0
        %7133 = vmatmul.mubr.bf16.gmra.mrb[0].mxu0 %v6811
        %v7134 = vpop.f32.mrb[0].mxu0
        %v7135 = vadd.f32 0.0, %v7134
        %v7136 = vpop.f32.mrb[0].mxu0
        %v7137 = vadd.f32 0.0, %v7136
        %v7138 = vpop.f32.mrb[0].mxu0
        %v7139 = vpop.f32.mrb[0].mxu0
        %7140 = vdwg.mxu0
        %v7141 = vmul.f32 %v6848, 0.5
        %v7142 = vmul.f32 %v6850, 0.5
        %v7143 = vmul.f32 %v6889, 0.5
        %v7144 = vmul.f32 %v6891, 0.5
        %v7145 = vmul.f32 %v6930, 0.5
        %v7146 = vmul.f32 %v6932, 0.5
        %v7147 = vmul.f32 %v6971, 0.5
        %v7148 = vmul.f32 %v6973, 0.5
        %v7149 = vmul.f32 %v7012, 0.5
        %v7150 = vmul.f32 %v7014, 0.5
        %v7151 = vmul.f32 %v7053, 0.5
        %v7152 = vmul.f32 %v7055, 0.5
        %v7153 = vmul.f32 %v7094, 0.5
        %v7154 = vmul.f32 %v7096, 0.5
        %v7155 = vmul.f32 %v7135, 0.5
        %v7156 = vmul.f32 %v7137, 0.5
        %v7157 = vtanh.pop %v7141
        %v7158 = vtanh.pop %v7142
        %v7159 = vtanh.pop %v7143
        %v7160 = vtanh.pop %v7144
        %v7161 = vtanh.pop %v7145
        %v7162 = vtanh.pop %v7146
        %v7163 = vtanh.pop %v7147
        %v7164 = vtanh.pop %v7148
        %v7165 = vtanh.pop %v7149
        %v7166 = vtanh.pop %v7150
        %v7167 = vtanh.pop %v7151
        %v7168 = vtanh.pop %v7152
        %v7169 = vtanh.pop %v7153
        %v7170 = vtanh.pop %v7154
        %v7171 = vtanh.pop %v7155
        %v7172 = vtanh.pop %v7156
        %v7173 = vadd.f32 %v7157, 1.0
        %v7174 = vadd.f32 %v7158, 1.0
        %v7175 = vadd.f32 %v7159, 1.0
        %v7176 = vadd.f32 %v7160, 1.0
        %v7177 = vadd.f32 %v7161, 1.0
        %v7178 = vadd.f32 %v7162, 1.0
        %v7179 = vadd.f32 %v7163, 1.0
        %v7180 = vadd.f32 %v7164, 1.0
        %v7181 = vadd.f32 %v7165, 1.0
        %v7182 = vadd.f32 %v7166, 1.0
        %v7183 = vadd.f32 %v7167, 1.0
        %v7184 = vadd.f32 %v7168, 1.0
        %v7185 = vadd.f32 %v7169, 1.0
        %v7186 = vadd.f32 %v7170, 1.0
        %v7187 = vadd.f32 %v7171, 1.0
        %v7188 = vadd.f32 %v7172, 1.0
        %v7189 = vmul.f32 %v7173, 0.5
        %v7190 = vmul.f32 %v7174, 0.5
        %v7191 = vmul.f32 %v7175, 0.5
        %v7192 = vmul.f32 %v7176, 0.5
        %v7193 = vmul.f32 %v7177, 0.5
        %v7194 = vmul.f32 %v7178, 0.5
        %v7195 = vmul.f32 %v7179, 0.5
        %v7196 = vmul.f32 %v7180, 0.5
        %v7197 = vmul.f32 %v7181, 0.5
        %v7198 = vmul.f32 %v7182, 0.5
        %v7199 = vmul.f32 %v7183, 0.5
        %v7200 = vmul.f32 %v7184, 0.5
        %v7201 = vmul.f32 %v7185, 0.5
        %v7202 = vmul.f32 %v7186, 0.5
        %v7203 = vmul.f32 %v7187, 0.5
        %v7204 = vmul.f32 %v7188, 0.5
        %v7221 = vrot.slane %v5227, 5
        %v7222 = vrot.slane %v5229, 5
        %v7223 = vrot.slane %v5308, 5
        %v7224 = vrot.slane %v5310, 5
        %v7225 = vrot.slane %v5389, 5
        %v7226 = vrot.slane %v5391, 5
        %v7227 = vrot.slane %v5470, 5
        %v7228 = vrot.slane %v5472, 5
        %v7229 = vrot.slane %v5551, 5
        %v7230 = vrot.slane %v5553, 5
        %v7231 = vrot.slane %v5632, 5
        %v7232 = vrot.slane %v5634, 5
        %v7233 = vrot.slane %v5713, 5
        %v7234 = vrot.slane %v5715, 5
        %v7235 = vrot.slane %v5794, 5
        %v7236 = vrot.slane %v5796, 5
        %v7253 = vsel %vm4872, %v7189, %v7221
        %v7254 = vsel %vm4872, %v7190, %v7222
        %v7255 = vsel %vm4872, %v7191, %v7223
        %v7256 = vsel %vm4872, %v7192, %v7224
        %v7257 = vsel %vm4872, %v7193, %v7225
        %v7258 = vsel %vm4872, %v7194, %v7226
        %v7259 = vsel %vm4872, %v7195, %v7227
        %v7260 = vsel %vm4872, %v7196, %v7228
        %v7261 = vsel %vm4872, %v7197, %v7229
        %v7262 = vsel %vm4872, %v7198, %v7230
        %v7263 = vsel %vm4872, %v7199, %v7231
        %v7264 = vsel %vm4872, %v7200, %v7232
        %v7265 = vsel %vm4872, %v7201, %v7233
        %v7266 = vsel %vm4872, %v7202, %v7234
        %v7267 = vsel %vm4872, %v7203, %v7235
        %v7268 = vsel %vm4872, %v7204, %v7236
        %v7285 = vcombine.low %v7253, %v7254
        %v7286 = vcombine.low %v7255, %v7256
        %v7287 = vcombine.low %v7257, %v7258
        %v7288 = vcombine.low %v7259, %v7260
        %v7289 = vcombine.low %v7261, %v7262
        %v7290 = vcombine.low %v7263, %v7264
        %v7291 = vcombine.low %v7265, %v7266
        %v7292 = vcombine.low %v7267, %v7268
        %7301 = vst [vmem:[%s339] sm:$0xff] %v7285
        %7302 = vst [vmem:[%s339 + $0x8] sm:$0xff] %v7286
        %7303 = vst [vmem:[%s339 + $0x10] sm:$0xff] %v7287
        %7304 = vst [vmem:[%s339 + $0x18] sm:$0xff] %v7288
        %7305 = vst [vmem:[%s339 + $0x20] sm:$0xff] %v7289
        %7306 = vst [vmem:[%s339 + $0x28] sm:$0xff] %v7290
        %7307 = vst [vmem:[%s339 + $0x30] sm:$0xff] %v7291
        %7308 = vst [vmem:[%s339 + $0x38] sm:$0xff] %v7292
        %s7309 = sand.u32 %s169, 1
        %s7310 = scalar_lea.sflag [#allocation4], %s7309
        %s7311 = sand.u32 %s169, 1
        %s7312 = smul.addr %s7311, 64
        %s7313 = scalar_lea.vmem [#allocation11], %s7312
        // Predicated region
        $region65: #{nerf_tcnn_forward.1} parent=43 // pred_check
          %p7314 = pneg %p179
        $region66: #{nerf_tcnn_forward.1} parent=43 // pred_check_branch
          %7316 = sbr.rel (%p7314) target = $region68
        $region67: #{nerf_tcnn_forward.1} parent=43 // pred_region
          %s7317 = smul.u32 16, %s25
          %s7319 = ssub.s32 1024, 1024
          %7320 = vsyncadd %s7310, %s7319
          %s7321 = smul.addr %s7317, 64
          %s7322 = scalar_lea.hbm %s6, %s7321
          %s7324 = sshll.u32 %s7313, 4
          %s7325 = int_to_ptr.vmem [resolvable:$true] %s7324
          %7327 = dma.vmem_to_hbm [thread:$0]  %s7325, 1024, %s7322, %s7310
        $region68: #{nerf_tcnn_forward.1} parent=43 // pred_fallthru
          _
      $region44: #{nerf_tcnn_forward.1} parent=5 // pred_fallthru
        _
      %p7328 = scmp.le.s32.totalorder 2, %s20
      // Predicated region
      $region69: #{nerf_tcnn_forward.1} parent=5 // pred_check
        %p7329 = pneg %p7328
      $region70: #{nerf_tcnn_forward.1} parent=5 // pred_check_branch
        %7331 = sbr.rel (%p7329) target = $region72
      $region71: #{nerf_tcnn_forward.1} parent=5 // pred_region
        %s7332 = ssub.s32 %s20, 2
        // Predicated region
        $region73: #{nerf_tcnn_forward.1} parent=71 // pred_check
          %p7333 = pneg %p185
        $region74: #{nerf_tcnn_forward.1} parent=71 // pred_check_branch
          %7335 = sbr.rel (%p7333) target = $region76
        $region75: #{nerf_tcnn_forward.1} parent=71 // pred_region
          %s7336 = sand.u32 %s170, 1
          %s7337 = scalar_lea.sflag [#allocation4], %s7336
          %s7338 = sand.u32 %s170, 1
          %s7339 = smul.addr %s7338, 64
          %s7340 = scalar_lea.vmem [#allocation11], %s7339
          %7341 = dma.done %s7337, 1024
        $region76: #{nerf_tcnn_forward.1} parent=71 // pred_fallthru
          _
      $region72: #{nerf_tcnn_forward.1} parent=5 // pred_fallthru
        _
    $region6: #{nerf_tcnn_forward.1} parent=1 // loop_footer
      %s24 = sadd.s32 1, %s20
    $region7: #{nerf_tcnn_forward.1} parent=1 // loop_footer_branch
      %19 = sbr.rel target = $region3
    $region8: #{nerf_tcnn_forward.1} parent=1 // loop_exit
      _
    %7342 = vsyncpa [#allocation3], 1
    %s7343 = scalar_lea.sflag [#allocation3], 1
    %7344 = vsyncpa %s7343, 1
    %7345 = vsyncpa [#allocation6], 1
    %7346 = vsyncpa [#allocation9], 1
    %7347 = vsyncpa [#allocation4], 1
    %s7348 = scalar_lea.sflag [#allocation4], 1
    %7349 = vsyncpa %s7348, 1

</llo_original>
